<compile_context>
chip_gen: v7x
topology: tpu7x:2x2x1
jax: 0.10.0
libtpu: 0.0.40
codegen_flags: <defaults>
</compile_context>

<pallas_src>
import functools

import numpy as np
import jax
import jax.numpy as jnp
from jax.experimental import pallas as pl
from jax.experimental.pallas import tpu as pltpu

# bf16 operands + f32 accumulation on the MXU; GN stats / softmax / SiLU stay f32.
MATMUL_DTYPE = jnp.bfloat16


# ---------------------------------------------------------------------------
# Fused MidBlock kernel (one grid step = one batch element)
# ---------------------------------------------------------------------------
def _midblock_kernel(x_ref, temb_ref, convw_ref, convb_ref, gnw_ref, gnb_ref,
                     gmat_ref, linw_ref, linb_ref, wqkv_ref, bqkv_ref,
                     wo_ref, bo_ref, o_ref, *, W, groups, num_heads, eps):
    C, S = x_ref.shape                         # input block is (C, S) -- NCHW per image
    pad_rows = max(8, ((W + 1 + 7) // 8) * 8)  # zero-pad rows, 8-aligned, >= |max shift|
    P = 2 * pad_rows + S
    inv_S = 1.0 / S
    # Misaligned-slice relayouts only matter at production C (S,C large); use XLU rolls there.
    # At small C (test shape) the relayout is a few KB, so plain static slices are used.
    use_roll = (C % 128 == 0)

    # ---- constants hoisted once per program --------------------------------
    gmat = gmat_ref[...]                       # (C, C) f32 block-diag 1/group_size (packed)
    gnw = gnw_ref[...]                         # (5, C) f32
    gnb = gnb_ref[...]                         # (5, C) f32
    convb = convb_ref[...]                     # (4, C) f32
    wo = wo_ref[...]                           # (C, C) bf16
    bo = bo_ref[...]                           # (1, C) f32

    # Horizontal boundary masks (vertical boundaries are handled by the zero padding).
    w_pos = jax.lax.broadcasted_iota(jnp.int32, (S, 1), 0) % W
    left_ok = w_pos >= 1                       # dx = -1 neighbour exists
    right_ok = w_pos <= W - 2                  # dx = +1 neighbour exists
    zpad = jnp.zeros((pad_rows, C), jnp.float32)

    def silu(v):
        # x * sigmoid(x); reciprocal runs on the EUP slot.
        return v * pl.reciprocal(1.0 + jnp.exp(-v), approx=True)

    def group_norm(v, gi, ngroups):
        # One pass over the data; stats in f32; normalize folded to scale/shift (2 passes).
        col_mean = jnp.sum(v, axis=0, keepdims=True) * inv_S          # (1, C)
        col_ex2 = jnp.sum(v * v, axis=0, keepdims=True) * inv_S       # (1, C)
        if ngroups == 1:
            mean = jnp.mean(col_mean, axis=1, keepdims=True)          # (1, 1)
            ex2 = jnp.mean(col_ex2, axis=1, keepdims=True)
        else:
            mean = jnp.dot(col_mean, gmat, precision=jax.lax.Precision.HIGHEST,
                           preferred_element_type=jnp.float32)         # (1, C) group means
            ex2 = jnp.dot(col_ex2, gmat, precision=jax.lax.Precision.HIGHEST,
                          preferred_element_type=jnp.float32)
        var = ex2 - mean * mean
        scale = gnw[gi:gi + 1, :] * jax.lax.rsqrt(var + eps)           # (1, C)
        shift = gnb[gi:gi + 1, :] - mean * scale                       # (1, C)
        return v * scale + shift

    def conv3x3(v, wi):
        # v: (S, C) f32.  Weights packed tap-major as (9C, Cout) bf16.
        w_flat = convw_ref[wi]                                         # (9C, Cout) bf16
        bias = convb[wi:wi + 1, :]                                     # (1, Cout)
        vp = jnp.concatenate([zpad, v, zpad], axis=0)                  # (P, C) f32, aligned
        taps = []
        for ky in range(3):
            for kx in range(3):
                d = (ky - 1) * W + (kx - 1)
                if use_roll:
                    # XLU roll + 8-aligned slice (no misaligned-slice relayout copies).
                    t = pltpu.roll(vp, shift=(-d) % P, axis=0)[pad_rows:pad_rows + S, :]
                else:
                    t = vp[pad_rows + d:pad_rows + d + S, :]
                # Mask kept in f32 (v5e has no bf16 VALU); dx==0 taps need no mask.
                if kx == 0:
                    t = jnp.where(left_ok, t, 0.0)
                elif kx == 2:
                    t = jnp.where(right_ok, t, 0.0)
                taps.append(t)
        if C < 128:
            # Small C: one (S, 9C) im2col slab -> single K=9C matmul (cast once).
            cols = jnp.concatenate(taps, axis=1).astype(MATMUL_DTYPE)
            out = jnp.dot(cols, w_flat, preferred_element_type=jnp.float32)
        else:
            # Large C: 9 K=C matmuls; accumulator initialized from the first tap.
            out = jnp.dot(taps[0].astype(MATMUL_DTYPE), w_flat[:C, :],
                          preferred_element_type=jnp.float32)
            for ti in range(1, 9):
                out = out + jnp.dot(taps[ti].astype(MATMUL_DTYPE),
                                    w_flat[ti * C:(ti + 1) * C, :],
                                    preferred_element_type=jnp.float32)
        return out + bias

    def attention_block(v):
        xn = group_norm(v, 2, 1).astype(MATMUL_DTYPE)                  # GN(groups=1) -> bf16
        # Q/K/V as three (S,C)@(C,C) matmuls; 1/sqrt(hs) already folded into W_Q / b_Q.
        q = jnp.dot(xn, wqkv_ref[0], preferred_element_type=jnp.float32) + bqkv_ref[0:1, :]
        k = jnp.dot(xn, wqkv_ref[1], preferred_element_type=jnp.float32) + bqkv_ref[1:2, :]
        vv = jnp.dot(xn, wqkv_ref[2], preferred_element_type=jnp.float32) + bqkv_ref[2:3, :]
        qb = q.astype(MATMUL_DTYPE)
        kT = k.T.astype(MATMUL_DTYPE)          # ONE f32 transpose for all heads -> (C, S)
        vb = vv.astype(MATMUL_DTYPE)
        hs = C // num_heads
        proj = None
        for hh in range(num_heads):
            lo, hi = hh * hs, (hh + 1) * hs
            scores = jnp.dot(qb[:, lo:hi], kT[lo:hi, :],
                             preferred_element_type=jnp.float32)       # (S, S) f32
            m = jnp.max(scores, axis=-1, keepdims=True)
            e = jnp.exp(scores - m)
            p = e * pl.reciprocal(jnp.sum(e, axis=-1, keepdims=True), approx=True)
            head = jnp.dot(p.astype(MATMUL_DTYPE), vb[:, lo:hi],
                           preferred_element_type=jnp.float32)          # (S, hs)
            # Accumulate straight through W_O row-slices (no head concat / relayout).
            contrib = jnp.dot(head.astype(MATMUL_DTYPE), wo[lo:hi, :],
                              preferred_element_type=jnp.float32)       # (S, C)
            proj = contrib if proj is None else proj + contrib
        return v + (proj + bo)

    # ---- time-embedding: both residual blocks in one (1,D)@(D,2C) matmul ---
    temb = temb_ref[...]                                               # (1, D) f32
    steps = jnp.dot(silu(temb).astype(MATMUL_DTYPE), linw_ref[...],
                    preferred_element_type=jnp.float32) + linb_ref[...]  # (1, 2C)
    step1 = steps[:, :C]
    step2 = steps[:, C:]

    def residual_block(v, ci, gi, step):
        h1 = silu(group_norm(conv3x3(v, ci), gi, groups)) + step
        h2 = silu(group_norm(conv3x3(h1, ci + 1), gi + 1, groups))
        return v + h2

    x = x_ref[...].T                           # (C,S) -> (S,C): channels on lanes, on-chip
    h = residual_block(x, 0, 0, step1)         # res1
    h = attention_block(h)                     # attn
    h = residual_block(h, 2, 3, step2)         # res2
    o_ref[...] = h.T                           # back to (C,S): output stays NCHW in HBM


# ---------------------------------------------------------------------------
# One-time parameter packing (all weight transforms hoisted out of the forward)
# ---------------------------------------------------------------------------
def pack_midblock_params(params, *, groups, num_heads):
    r1, at, r2 = params["res1"], params["attn"], params["res2"]
    C = r1["conv1_b"].shape[0]
    gs = C // groups
    hs = C // num_heads
    scale = 1.0 / float(np.sqrt(hs))

    def conv_flat(w):  # (Cout, Cin, 3, 3) -> (9*Cin, Cout), tap-major rows (ky, kx, cin)
        cout, cin = w.shape[0], w.shape[1]
        return jnp.transpose(w, (2, 3, 1, 0)).reshape(9 * cin, cout)

    gidx = np.arange(C) // gs
    gmat = jnp.asarray((gidx[:, None] == gidx[None, :]).astype(np.float32) / gs)

    wqkv_t = at["wqkv"].T                              # (C, 3C): columns [Q | K | V]
    wq = wqkv_t[:, :C] * scale                         # attention scale folded into Q
    wk = wqkv_t[:, C:2 * C]
    wv = wqkv_t[:, 2 * C:]
    bq = at["bqkv"][:C] * scale
    bk = at["bqkv"][C:2 * C]
    bv = at["bqkv"][2 * C:]

    return dict(
        conv_w=jnp.stack([conv_flat(r1["conv1_w"]), conv_flat(r1["conv2_w"]),
                          conv_flat(r2["conv1_w"]), conv_flat(r2["conv2_w"])]
                         ).astype(MATMUL_DTYPE),                       # (4, 9C, C)
        conv_b=jnp.stack([r1["conv1_b"], r1["conv2_b"],
                          r2["conv1_b"], r2["conv2_b"]]),              # (4, C)
        gn_w=jnp.stack([r1["gn1_w"], r1["gn2_w"], at["gn_w"],
                        r2["gn1_w"], r2["gn2_w"]]),                    # (5, C)
        gn_b=jnp.stack([r1["gn1_b"], r1["gn2_b"], at["gn_b"],
                        r2["gn1_b"], r2["gn2_b"]]),                    # (5, C)
        gn_gmat=gmat,                                                  # (C, C)
        lin_w=jnp.concatenate([r1["lin_w"].T, r2["lin_w"].T], axis=1
                              ).astype(MATMUL_DTYPE),                  # (D, 2C)
        lin_b=jnp.concatenate([r1["lin_b"], r2["lin_b"]]).reshape(1, 2 * C),  # (1, 2C)
        wqkv=jnp.stack([wq, wk, wv]).astype(MATMUL_DTYPE),             # (3, C, C)
        bqkv=jnp.stack([bq, bk, bv]),                                  # (3, C)
        wo=at["wo"].T.astype(MATMUL_DTYPE),                            # (C, C)
        bo=at["bo"].reshape(1, C),                                     # (1, C)
    )


# ---------------------------------------------------------------------------
# Forward wrapper: one fused pallas_call, grid over batch, NCHW kept end-to-end
# ---------------------------------------------------------------------------
@functools.partial(jax.jit, static_argnames=("groups", "num_heads"))
def midblock_forward(x_nchw, step_emb, packed, *, groups, num_heads):
    B, C, H, W = x_nchw.shape
    S = H * W
    D = step_emb.shape[-1]
    x_seq = x_nchw.reshape(B, C, S)            # free reshape -- no HBM transpose
    temb = step_emb.reshape(B, 1, D)

    kernel = functools.partial(_midblock_kernel, W=W, groups=groups,
                               num_heads=num_heads, eps=1e-5)
    out = pl.pallas_call(
        kernel,
        out_shape=jax.ShapeDtypeStruct((B, C, S), jnp.float32),
        grid=(B,),
        in_specs=[
            pl.BlockSpec((None, C, S), lambda b: (b, 0, 0)),           # x (C,S) per image
            pl.BlockSpec((None, 1, D), lambda b: (b, 0, 0)),           # temb
            pl.BlockSpec((4, 9 * C, C), lambda b: (0, 0, 0)),          # conv weights (tap-major)
            pl.BlockSpec((4, C), lambda b: (0, 0)),                    # conv biases
            pl.BlockSpec((5, C), lambda b: (0, 0)),                    # GN gammas
            pl.BlockSpec((5, C), lambda b: (0, 0)),                    # GN betas
            pl.BlockSpec((C, C), lambda b: (0, 0)),                    # GN group-avg matrix
            pl.BlockSpec((D, 2 * C), lambda b: (0, 0)),                # temb linear (both blocks)
            pl.BlockSpec((1, 2 * C), lambda b: (0, 0)),                # temb linear biases
            pl.BlockSpec((3, C, C), lambda b: (0, 0, 0)),              # Wq(scaled)/Wk/Wv
            pl.BlockSpec((3, C), lambda b: (0, 0)),                    # bq(scaled)/bk/bv
            pl.BlockSpec((C, C), lambda b: (0, 0)),                    # W_O
            pl.BlockSpec((1, C), lambda b: (0, 0)),                    # b_O
        ],
        out_specs=pl.BlockSpec((None, C, S), lambda b: (b, 0, 0)),
        compiler_params=pltpu.CompilerParams(
            dimension_semantics=("parallel",),                         # batch across TCs (v7x)
        ),
    )(x_seq, temb, packed["conv_w"], packed["conv_b"], packed["gn_w"],
      packed["gn_b"], packed["gn_gmat"], packed["lin_w"], packed["lin_b"],
      packed["wqkv"], packed["bqkv"], packed["wo"], packed["bo"])

    return out.reshape(B, C, H, W)


# ---------------------------------------------------------------------------
# Pure-JAX reference (mirrors the PyTorch module semantics)
# ---------------------------------------------------------------------------
def ref_silu(x):
    return x / (1.0 + jnp.exp(-x))


def ref_groupnorm(x, gamma, beta, num_groups, eps=1e-5):
    B, C, H, W = x.shape
    gs = C // num_groups
    xg = x.reshape(B, num_groups, gs, H, W)
    mu = xg.mean(axis=(2, 3, 4), keepdims=True)
    var = ((xg - mu) ** 2).mean(axis=(2, 3, 4), keepdims=True)
    xn = ((xg - mu) / jnp.sqrt(var + eps)).reshape(B, C, H, W)
    return xn * gamma[None, :, None, None] + beta[None, :, None, None]


def ref_conv3x3(x, w, b):
    y = jax.lax.conv_general_dilated(
        x, w, (1, 1), "SAME", dimension_numbers=("NCHW", "OIHW", "NCHW"))
    return y + b[None, :, None, None]


def ref_residual_block(x, temb, p, *, groups):
    conv1 = ref_conv3x3(x, p["conv1_w"], p["conv1_b"])
    h1 = ref_silu(ref_groupnorm(conv1, p["gn1_w"], p["gn1_b"], groups))
    step = ref_silu(temb) @ p["lin_w"].T + p["lin_b"]
    h1 = h1 + step[:, :, None, None]
    conv2 = ref_conv3x3(h1, p["conv2_w"], p["conv2_b"])
    h2 = ref_silu(ref_groupnorm(conv2, p["gn2_w"], p["gn2_b"], groups))
    return x + h2


def ref_attention_block(x, p, *, num_heads):
    B, C, H, W = x.shape
    xn = ref_groupnorm(x, p["gn_w"], p["gn_b"], 1)
    xs = xn.transpose(0, 2, 3, 1).reshape(B, H * W, C)
    qkv = xs @ p["wqkv"].T + p["bqkv"]
    q, k, v = qkv[..., :C], qkv[..., C:2 * C], qkv[..., 2 * C:]
    hs = C // num_heads

    def split(t):
        return t.reshape(B, H * W, num_heads, hs).transpose(0, 2, 1, 3)

    qh, kh, vh = split(q), split(k), split(v)
    scores = jnp.einsum("bnqd,bnkd->bnqk", qh, kh) / np.sqrt(hs)
    probs = jax.nn.softmax(scores, axis=-1)
    att = jnp.einsum("bnqk,bnkd->bqnd", probs, vh).reshape(B, H * W, C)
    out = att @ p["wo"].T + p["bo"]
    out = out.reshape(B, H, W, C).transpose(0, 3, 1, 2)
    return x + out


def ref_midblock(x, temb, params, *, groups, num_heads=4):
    h = ref_residual_block(x, temb, params["res1"], groups=groups)
    h = ref_attention_block(h, params["attn"], num_heads=num_heads)
    h = ref_residual_block(h, temb, params["res2"], groups=groups)
    return h


# ---------------------------------------------------------------------------
# Deterministic parameter init (shapes as in the PyTorch __init__)
# ---------------------------------------------------------------------------
def _normal(key, shape, scale=0.1):
    return scale * jax.random.normal(key, shape, jnp.float32)


def init_residual_params(key, C, D):
    ks = jax.random.split(key, 10)
    return dict(
        conv1_w=_normal(ks[0], (C, C, 3, 3)), conv1_b=_normal(ks[1], (C,)),
        gn1_w=1.0 + _normal(ks[2], (C,)), gn1_b=_normal(ks[3], (C,)),
        conv2_w=_normal(ks[4], (C, C, 3, 3)), conv2_b=_normal(ks[5], (C,)),
        gn2_w=1.0 + _normal(ks[6], (C,)), gn2_b=_normal(ks[7], (C,)),
        lin_w=_normal(ks[8], (C, D)), lin_b=_normal(ks[9], (C,)),
    )


def init_attn_params(key, C):
    ks = jax.random.split(key, 6)
    return dict(
        gn_w=1.0 + _normal(ks[0], (C,)), gn_b=_normal(ks[1], (C,)),
        wqkv=_normal(ks[2], (3 * C, C)), bqkv=_normal(ks[3], (3 * C,)),
        wo=_normal(ks[4], (C, C)), bo=_normal(ks[5], (C,)),
    )


def init_midblock_params(key, C, D):
    k1, k2, k3 = jax.random.split(key, 3)
    return dict(res1=init_residual_params(k1, C, D),
                attn=init_attn_params(k2, C),
                res2=init_residual_params(k3, C, D))


# ---------------------------------------------------------------------------
if __name__ == "__main__":
    B, C, H, W = 2, 16, 8, 8        # mid_dim=16
    D = 32                          # time_emb_dim=32
    groups = 4
    num_heads = 4

    key = jax.random.PRNGKey(0)
    kx, kt, kp = jax.random.split(key, 3)
    x = jax.random.normal(kx, (B, C, H, W), jnp.float32)
    step_emb = jax.random.normal(kt, (B, D), jnp.float32)
    params = init_midblock_params(kp, C, D)
    packed = pack_midblock_params(params, groups=groups, num_heads=num_heads)

    out = midblock_forward(x, step_emb, packed, groups=groups, num_heads=num_heads)
    out = jax.block_until_ready(out)

    # High-precision reference for validating the bf16-in / f32-accumulate kernel.
    with jax.default_matmul_precision("highest"):
        ref = ref_midblock(x, step_emb, params, groups=groups, num_heads=num_heads)
    ref = jax.block_until_ready(ref)

    assert out.shape == (B, C, H, W)
    err = float(jnp.max(jnp.abs(out - ref)))
    # Tolerance sized for bf16 MXU matmuls (f32 accumulation; GN stats / softmax in f32).
    assert jnp.allclose(out, ref, atol=2e-2, rtol=2e-2), f"max abs err = {err}"

    print("KERNEL_OK")
</pallas_src>

<mosaic_0001>
module attributes {stable_mosaic.version = 11 : i64} {
  func.func @_midblock_kernel(%arg0: i32, %arg1: memref<1x16x64xf32, #tpu.memory_space<vmem>>, %arg2: memref<1x1x32xf32, #tpu.memory_space<vmem>>, %arg3: memref<4x144x16xbf16, #tpu.memory_space<vmem>>, %arg4: memref<4x16xf32, #tpu.memory_space<vmem>>, %arg5: memref<5x16xf32, #tpu.memory_space<vmem>>, %arg6: memref<5x16xf32, #tpu.memory_space<vmem>>, %arg7: memref<16x16xf32, #tpu.memory_space<vmem>>, %arg8: memref<32x32xbf16, #tpu.memory_space<vmem>>, %arg9: memref<1x32xf32, #tpu.memory_space<vmem>>, %arg10: memref<3x16x16xbf16, #tpu.memory_space<vmem>>, %arg11: memref<3x16xf32, #tpu.memory_space<vmem>>, %arg12: memref<16x16xbf16, #tpu.memory_space<vmem>>, %arg13: memref<1x16xf32, #tpu.memory_space<vmem>>, %arg14: memref<1x16x64xf32, #tpu.memory_space<vmem>>) attributes {dimension_semantics = [#tpu.dimension_semantics<parallel>], iteration_bounds = array<i64: 2>, scalar_prefetch = 0 : i64, scratch_operands = 0 : i64, tpu.core_type = #tpu.core_type<tc>, window_params = [{transform_indices = @transform_0, window_bounds = array<i64: 1, 16, 64>}, {transform_indices = @transform_1, window_bounds = array<i64: 1, 1, 32>}, {pipeline_mode = #tpu.pipeline_mode<synchronous>, transform_indices = @transform_2, window_bounds = array<i64: 4, 144, 16>}, {pipeline_mode = #tpu.pipeline_mode<synchronous>, transform_indices = @transform_3, window_bounds = array<i64: 4, 16>}, {pipeline_mode = #tpu.pipeline_mode<synchronous>, transform_indices = @transform_4, window_bounds = array<i64: 5, 16>}, {pipeline_mode = #tpu.pipeline_mode<synchronous>, transform_indices = @transform_5, window_bounds = array<i64: 5, 16>}, {pipeline_mode = #tpu.pipeline_mode<synchronous>, transform_indices = @transform_6, window_bounds = array<i64: 16, 16>}, {pipeline_mode = #tpu.pipeline_mode<synchronous>, transform_indices = @transform_7, window_bounds = array<i64: 32, 32>}, {pipeline_mode = #tpu.pipeline_mode<synchronous>, transform_indices = @transform_8, window_bounds = array<i64: 1, 32>}, {pipeline_mode = #tpu.pipeline_mode<synchronous>, transform_indices = @transform_9, window_bounds = array<i64: 3, 16, 16>}, {pipeline_mode = #tpu.pipeline_mode<synchronous>, transform_indices = @transform_10, window_bounds = array<i64: 3, 16>}, {pipeline_mode = #tpu.pipeline_mode<synchronous>, transform_indices = @transform_11, window_bounds = array<i64: 16, 16>}, {pipeline_mode = #tpu.pipeline_mode<synchronous>, transform_indices = @transform_12, window_bounds = array<i64: 1, 16>}, {transform_indices = @transform_13, window_bounds = array<i64: 1, 16, 64>}]} {
    %c0 = arith.constant 0 : index
    %c0_0 = arith.constant 0 : index
    %0 = vector.load %arg7[%c0, %c0_0] : memref<16x16xf32, #tpu.memory_space<vmem>>, vector<16x16xf32>
    %c0_1 = arith.constant 0 : index
    %c0_2 = arith.constant 0 : index
    %1 = vector.load %arg5[%c0_1, %c0_2] : memref<5x16xf32, #tpu.memory_space<vmem>>, vector<5x16xf32>
    %c0_3 = arith.constant 0 : index
    %c0_4 = arith.constant 0 : index
    %2 = vector.load %arg6[%c0_3, %c0_4] : memref<5x16xf32, #tpu.memory_space<vmem>>, vector<5x16xf32>
    %c0_5 = arith.constant 0 : index
    %c0_6 = arith.constant 0 : index
    %3 = vector.load %arg4[%c0_5, %c0_6] : memref<4x16xf32, #tpu.memory_space<vmem>>, vector<4x16xf32>
    %c0_7 = arith.constant 0 : index
    %c0_8 = arith.constant 0 : index
    %4 = vector.load %arg12[%c0_7, %c0_8] : memref<16x16xbf16, #tpu.memory_space<vmem>>, vector<16x16xbf16>
    %c0_9 = arith.constant 0 : index
    %c0_10 = arith.constant 0 : index
    %5 = vector.load %arg13[%c0_9, %c0_10] : memref<1x16xf32, #tpu.memory_space<vmem>>, vector<1x16xf32>
    %6 = tpu.iota {dimensions = array<i32: 0>} : vector<64x1xi32>
    %c8_i32 = arith.constant 8 : i32
    %c0_i32 = arith.constant 0 : i32
    %7 = arith.cmpi eq, %c8_i32, %c0_i32 : i32
    %c1_i32 = arith.constant 1 : i32
    %8 = arith.select %7, %c1_i32, %c8_i32 : i32
    %9 = vector.broadcast %8 : i32 to vector<64x1xi32>
    %10 = arith.remsi %6, %9 : vector<64x1xi32>
    %c0_i32_11 = arith.constant 0 : i32
    %11 = vector.broadcast %c0_i32_11 : i32 to vector<64x1xi32>
    %12 = arith.cmpi ne, %10, %11 : vector<64x1xi32>
    %c0_i32_12 = arith.constant 0 : i32
    %13 = vector.broadcast %c0_i32_12 : i32 to vector<64x1xi32>
    %14 = arith.cmpi slt, %10, %13 : vector<64x1xi32>
    %c0_i32_13 = arith.constant 0 : i32
    %15 = arith.cmpi slt, %8, %c0_i32_13 : i32
    %16 = vector.broadcast %15 : i1 to vector<64x1xi1>
    %17 = vector.broadcast %16 : vector<64x1xi1> to vector<64x1xi1>
    %18 = arith.xori %14, %17 : vector<64x1xi1>
    %19 = arith.andi %18, %12 : vector<64x1xi1>
    %20 = vector.broadcast %8 : i32 to vector<64x1xi32>
    %21 = arith.addi %10, %20 : vector<64x1xi32>
    %22 = arith.select %19, %21, %10 : vector<64x1xi1>, vector<64x1xi32>
    %c1_i32_14 = arith.constant 1 : i32
    %23 = vector.broadcast %c1_i32_14 : i32 to vector<64x1xi32>
    %24 = arith.cmpi sge, %22, %23 : vector<64x1xi32>
    %c6_i32 = arith.constant 6 : i32
    %25 = vector.broadcast %c6_i32 : i32 to vector<64x1xi32>
    %26 = arith.cmpi sle, %22, %25 : vector<64x1xi32>
    %cst = arith.constant 0.000000e+00 : f32
    %27 = vector.broadcast %cst : f32 to vector<16x16xf32>
    %c0_15 = arith.constant 0 : index
    %c0_16 = arith.constant 0 : index
    %c0_17 = arith.constant 0 : index
    %28 = vector.load %arg2[%c0_15, %c0_16, %c0_17] : memref<1x1x32xf32, #tpu.memory_space<vmem>>, vector<1x1x32xf32>
    %29 = vector.shape_cast %28 : vector<1x1x32xf32> to vector<1x32xf32>
    %cst_18 = arith.constant 0.000000e+00 : f32
    %30 = vector.broadcast %cst_18 : f32 to vector<1x32xf32>
    %31 = arith.subf %30, %29 : vector<1x32xf32>
    %32 = math.exp %31 : vector<1x32xf32>
    %cst_19 = arith.constant 1.000000e+00 : f32
    %33 = vector.broadcast %cst_19 : f32 to vector<1x32xf32>
    %34 = arith.addf %33, %32 : vector<1x32xf32>
    %35 = tpu.reciprocal %34 {approx = true} : vector<1x32xf32> -> vector<1x32xf32>
    %36 = arith.mulf %29, %35 : vector<1x32xf32>
    %37 = arith.truncf %36 : vector<1x32xf32> to vector<1x32xbf16>
    %c0_20 = arith.constant 0 : index
    %c0_21 = arith.constant 0 : index
    %38 = vector.load %arg8[%c0_20, %c0_21] : memref<32x32xbf16, #tpu.memory_space<vmem>>, vector<32x32xbf16>
    %cst_22 = arith.constant dense<0.000000e+00> : vector<1x32xf32>
    %39 = tpu.matmul %37, %38, %cst_22 {dimension_numbers = #tpu.dot_dimension_numbers<[1], [0], [0], [1], [0, 0, 1, 1], [], []>} : vector<1x32xbf16>, vector<32x32xbf16>, vector<1x32xf32> -> vector<1x32xf32>
    %c0_23 = arith.constant 0 : index
    %c0_24 = arith.constant 0 : index
    %40 = vector.load %arg9[%c0_23, %c0_24] : memref<1x32xf32, #tpu.memory_space<vmem>>, vector<1x32xf32>
    %41 = arith.addf %39, %40 : vector<1x32xf32>
    %42 = vector.extract_strided_slice %41 {offsets = [0, 0], sizes = [1, 16], strides = [1, 1]} : vector<1x32xf32> to vector<1x16xf32>
    %43 = vector.extract_strided_slice %41 {offsets = [0, 16], sizes = [1, 16], strides = [1, 1]} : vector<1x32xf32> to vector<1x16xf32>
    %c0_25 = arith.constant 0 : index
    %c0_26 = arith.constant 0 : index
    %c0_27 = arith.constant 0 : index
    %44 = vector.load %arg1[%c0_25, %c0_26, %c0_27] : memref<1x16x64xf32, #tpu.memory_space<vmem>>, vector<1x16x64xf32>
    %45 = vector.shape_cast %44 : vector<1x16x64xf32> to vector<16x64xf32>
    %46 = tpu.transpose %45, [1, 0] : vector<16x64xf32> -> vector<64x16xf32>
    %c0_28 = arith.constant 0 : index
    %c0_29 = arith.constant 0 : index
    %c0_30 = arith.constant 0 : index
    %47 = vector.load %arg3[%c0_28, %c0_29, %c0_30] : memref<4x144x16xbf16, #tpu.memory_space<vmem>>, vector<1x144x16xbf16>
    %48 = vector.shape_cast %47 : vector<1x144x16xbf16> to vector<144x16xbf16>
    %49 = vector.extract_strided_slice %3 {offsets = [0, 0], sizes = [1, 16], strides = [1, 1]} : vector<4x16xf32> to vector<1x16xf32>
    %50 = tpu.concatenate %27, %46, %27 in 0 : vector<16x16xf32>, vector<64x16xf32>, vector<16x16xf32> -> vector<96x16xf32>
    %51 = vector.extract_strided_slice %50 {offsets = [7, 0], sizes = [64, 16], strides = [1, 1]} : vector<96x16xf32> to vector<64x16xf32>
    %cst_31 = arith.constant 0.000000e+00 : f32
    %52 = vector.shape_cast %24 : vector<64x1xi1> to vector<64x1xi1>
    %53 = vector.broadcast %52 : vector<64x1xi1> to vector<64x16xi1>
    %54 = vector.broadcast %cst_31 : f32 to vector<64x16xf32>
    %55 = arith.select %53, %51, %54 : vector<64x16xi1>, vector<64x16xf32>
    %56 = vector.extract_strided_slice %50 {offsets = [8, 0], sizes = [64, 16], strides = [1, 1]} : vector<96x16xf32> to vector<64x16xf32>
    %57 = vector.extract_strided_slice %50 {offsets = [9, 0], sizes = [64, 16], strides = [1, 1]} : vector<96x16xf32> to vector<64x16xf32>
    %cst_32 = arith.constant 0.000000e+00 : f32
    %58 = vector.shape_cast %26 : vector<64x1xi1> to vector<64x1xi1>
    %59 = vector.broadcast %58 : vector<64x1xi1> to vector<64x16xi1>
    %60 = vector.broadcast %cst_32 : f32 to vector<64x16xf32>
    %61 = arith.select %59, %57, %60 : vector<64x16xi1>, vector<64x16xf32>
    %62 = vector.extract_strided_slice %50 {offsets = [15, 0], sizes = [64, 16], strides = [1, 1]} : vector<96x16xf32> to vector<64x16xf32>
    %cst_33 = arith.constant 0.000000e+00 : f32
    %63 = vector.shape_cast %24 : vector<64x1xi1> to vector<64x1xi1>
    %64 = vector.broadcast %63 : vector<64x1xi1> to vector<64x16xi1>
    %65 = vector.broadcast %cst_33 : f32 to vector<64x16xf32>
    %66 = arith.select %64, %62, %65 : vector<64x16xi1>, vector<64x16xf32>
    %67 = vector.extract_strided_slice %50 {offsets = [16, 0], sizes = [64, 16], strides = [1, 1]} : vector<96x16xf32> to vector<64x16xf32>
    %68 = vector.extract_strided_slice %50 {offsets = [17, 0], sizes = [64, 16], strides = [1, 1]} : vector<96x16xf32> to vector<64x16xf32>
    %cst_34 = arith.constant 0.000000e+00 : f32
    %69 = vector.shape_cast %26 : vector<64x1xi1> to vector<64x1xi1>
    %70 = vector.broadcast %69 : vector<64x1xi1> to vector<64x16xi1>
    %71 = vector.broadcast %cst_34 : f32 to vector<64x16xf32>
    %72 = arith.select %70, %68, %71 : vector<64x16xi1>, vector<64x16xf32>
    %73 = vector.extract_strided_slice %50 {offsets = [23, 0], sizes = [64, 16], strides = [1, 1]} : vector<96x16xf32> to vector<64x16xf32>
    %cst_35 = arith.constant 0.000000e+00 : f32
    %74 = vector.shape_cast %24 : vector<64x1xi1> to vector<64x1xi1>
    %75 = vector.broadcast %74 : vector<64x1xi1> to vector<64x16xi1>
    %76 = vector.broadcast %cst_35 : f32 to vector<64x16xf32>
    %77 = arith.select %75, %73, %76 : vector<64x16xi1>, vector<64x16xf32>
    %78 = vector.extract_strided_slice %50 {offsets = [24, 0], sizes = [64, 16], strides = [1, 1]} : vector<96x16xf32> to vector<64x16xf32>
    %79 = vector.extract_strided_slice %50 {offsets = [25, 0], sizes = [64, 16], strides = [1, 1]} : vector<96x16xf32> to vector<64x16xf32>
    %cst_36 = arith.constant 0.000000e+00 : f32
    %80 = vector.shape_cast %26 : vector<64x1xi1> to vector<64x1xi1>
    %81 = vector.broadcast %80 : vector<64x1xi1> to vector<64x16xi1>
    %82 = vector.broadcast %cst_36 : f32 to vector<64x16xf32>
    %83 = arith.select %81, %79, %82 : vector<64x16xi1>, vector<64x16xf32>
    %84 = tpu.concatenate %55, %56, %61, %66, %67, %72, %77, %78, %83 in 1 : vector<64x16xf32>, vector<64x16xf32>, vector<64x16xf32>, vector<64x16xf32>, vector<64x16xf32>, vector<64x16xf32>, vector<64x16xf32>, vector<64x16xf32>, vector<64x16xf32> -> vector<64x144xf32>
    %85 = arith.truncf %84 : vector<64x144xf32> to vector<64x144xbf16>
    %cst_37 = arith.constant dense<0.000000e+00> : vector<64x16xf32>
    %86 = tpu.matmul %85, %48, %cst_37 {dimension_numbers = #tpu.dot_dimension_numbers<[1], [0], [0], [1], [0, 0, 1, 1], [], []>} : vector<64x144xbf16>, vector<144x16xbf16>, vector<64x16xf32> -> vector<64x16xf32>
    %87 = vector.broadcast %49 : vector<1x16xf32> to vector<64x16xf32>
    %88 = arith.addf %86, %87 : vector<64x16xf32>
    %cst_38 = arith.constant dense<0.000000e+00> : vector<16xf32>
    %89 = vector.multi_reduction <add>, %88, %cst_38 [0] : vector<64x16xf32> to vector<16xf32>
    %90 = vector.shape_cast %89 : vector<16xf32> to vector<1x16xf32>
    %cst_39 = arith.constant 1.562500e-02 : f32
    %91 = vector.broadcast %cst_39 : f32 to vector<1x16xf32>
    %92 = arith.mulf %90, %91 : vector<1x16xf32>
    %93 = arith.mulf %88, %88 : vector<64x16xf32>
    %cst_40 = arith.constant dense<0.000000e+00> : vector<16xf32>
    %94 = vector.multi_reduction <add>, %93, %cst_40 [0] : vector<64x16xf32> to vector<16xf32>
    %95 = vector.shape_cast %94 : vector<16xf32> to vector<1x16xf32>
    %cst_41 = arith.constant 1.562500e-02 : f32
    %96 = vector.broadcast %cst_41 : f32 to vector<1x16xf32>
    %97 = arith.mulf %95, %96 : vector<1x16xf32>
    %cst_42 = arith.constant dense<0.000000e+00> : vector<1x16xf32>
    %98 = tpu.matmul %92, %0, %cst_42 {dimension_numbers = #tpu.dot_dimension_numbers<[1], [0], [0], [1], [0, 0, 1, 1], [], []>, precision = #tpu.contract_precision<fp32>} : vector<1x16xf32>, vector<16x16xf32>, vector<1x16xf32> -> vector<1x16xf32>
    %cst_43 = arith.constant dense<0.000000e+00> : vector<1x16xf32>
    %99 = tpu.matmul %97, %0, %cst_43 {dimension_numbers = #tpu.dot_dimension_numbers<[1], [0], [0], [1], [0, 0, 1, 1], [], []>, precision = #tpu.contract_precision<fp32>} : vector<1x16xf32>, vector<16x16xf32>, vector<1x16xf32> -> vector<1x16xf32>
    %100 = arith.mulf %98, %98 : vector<1x16xf32>
    %101 = arith.subf %99, %100 : vector<1x16xf32>
    %102 = vector.extract_strided_slice %1 {offsets = [0, 0], sizes = [1, 16], strides = [1, 1]} : vector<5x16xf32> to vector<1x16xf32>
    %cst_44 = arith.constant 9.99999974E-6 : f32
    %103 = vector.broadcast %cst_44 : f32 to vector<1x16xf32>
    %104 = arith.addf %101, %103 : vector<1x16xf32>
    %105 = math.rsqrt %104 : vector<1x16xf32>
    %106 = arith.mulf %102, %105 : vector<1x16xf32>
    %107 = vector.extract_strided_slice %2 {offsets = [0, 0], sizes = [1, 16], strides = [1, 1]} : vector<5x16xf32> to vector<1x16xf32>
    %108 = arith.mulf %98, %106 : vector<1x16xf32>
    %109 = arith.subf %107, %108 : vector<1x16xf32>
    %110 = vector.broadcast %106 : vector<1x16xf32> to vector<64x16xf32>
    %111 = arith.mulf %88, %110 : vector<64x16xf32>
    %112 = vector.broadcast %109 : vector<1x16xf32> to vector<64x16xf32>
    %113 = arith.addf %111, %112 : vector<64x16xf32>
    %cst_45 = arith.constant 0.000000e+00 : f32
    %114 = vector.broadcast %cst_45 : f32 to vector<64x16xf32>
    %115 = arith.subf %114, %113 : vector<64x16xf32>
    %116 = math.exp %115 : vector<64x16xf32>
    %cst_46 = arith.constant 1.000000e+00 : f32
    %117 = vector.broadcast %cst_46 : f32 to vector<64x16xf32>
    %118 = arith.addf %117, %116 : vector<64x16xf32>
    %119 = tpu.reciprocal %118 {approx = true} : vector<64x16xf32> -> vector<64x16xf32>
    %120 = arith.mulf %113, %119 : vector<64x16xf32>
    %121 = vector.broadcast %42 : vector<1x16xf32> to vector<64x16xf32>
    %122 = arith.addf %120, %121 : vector<64x16xf32>
    %c1 = arith.constant 1 : index
    %c0_47 = arith.constant 0 : index
    %c0_48 = arith.constant 0 : index
    %123 = vector.load %arg3[%c1, %c0_47, %c0_48] : memref<4x144x16xbf16, #tpu.memory_space<vmem>>, vector<1x144x16xbf16>
    %124 = vector.shape_cast %123 : vector<1x144x16xbf16> to vector<144x16xbf16>
    %125 = vector.extract_strided_slice %3 {offsets = [1, 0], sizes = [1, 16], strides = [1, 1]} : vector<4x16xf32> to vector<1x16xf32>
    %126 = tpu.concatenate %27, %122, %27 in 0 : vector<16x16xf32>, vector<64x16xf32>, vector<16x16xf32> -> vector<96x16xf32>
    %127 = vector.extract_strided_slice %126 {offsets = [7, 0], sizes = [64, 16], strides = [1, 1]} : vector<96x16xf32> to vector<64x16xf32>
    %cst_49 = arith.constant 0.000000e+00 : f32
    %128 = vector.shape_cast %24 : vector<64x1xi1> to vector<64x1xi1>
    %129 = vector.broadcast %128 : vector<64x1xi1> to vector<64x16xi1>
    %130 = vector.broadcast %cst_49 : f32 to vector<64x16xf32>
    %131 = arith.select %129, %127, %130 : vector<64x16xi1>, vector<64x16xf32>
    %132 = vector.extract_strided_slice %126 {offsets = [8, 0], sizes = [64, 16], strides = [1, 1]} : vector<96x16xf32> to vector<64x16xf32>
    %133 = vector.extract_strided_slice %126 {offsets = [9, 0], sizes = [64, 16], strides = [1, 1]} : vector<96x16xf32> to vector<64x16xf32>
    %cst_50 = arith.constant 0.000000e+00 : f32
    %134 = vector.shape_cast %26 : vector<64x1xi1> to vector<64x1xi1>
    %135 = vector.broadcast %134 : vector<64x1xi1> to vector<64x16xi1>
    %136 = vector.broadcast %cst_50 : f32 to vector<64x16xf32>
    %137 = arith.select %135, %133, %136 : vector<64x16xi1>, vector<64x16xf32>
    %138 = vector.extract_strided_slice %126 {offsets = [15, 0], sizes = [64, 16], strides = [1, 1]} : vector<96x16xf32> to vector<64x16xf32>
    %cst_51 = arith.constant 0.000000e+00 : f32
    %139 = vector.shape_cast %24 : vector<64x1xi1> to vector<64x1xi1>
    %140 = vector.broadcast %139 : vector<64x1xi1> to vector<64x16xi1>
    %141 = vector.broadcast %cst_51 : f32 to vector<64x16xf32>
    %142 = arith.select %140, %138, %141 : vector<64x16xi1>, vector<64x16xf32>
    %143 = vector.extract_strided_slice %126 {offsets = [16, 0], sizes = [64, 16], strides = [1, 1]} : vector<96x16xf32> to vector<64x16xf32>
    %144 = vector.extract_strided_slice %126 {offsets = [17, 0], sizes = [64, 16], strides = [1, 1]} : vector<96x16xf32> to vector<64x16xf32>
    %cst_52 = arith.constant 0.000000e+00 : f32
    %145 = vector.shape_cast %26 : vector<64x1xi1> to vector<64x1xi1>
    %146 = vector.broadcast %145 : vector<64x1xi1> to vector<64x16xi1>
    %147 = vector.broadcast %cst_52 : f32 to vector<64x16xf32>
    %148 = arith.select %146, %144, %147 : vector<64x16xi1>, vector<64x16xf32>
    %149 = vector.extract_strided_slice %126 {offsets = [23, 0], sizes = [64, 16], strides = [1, 1]} : vector<96x16xf32> to vector<64x16xf32>
    %cst_53 = arith.constant 0.000000e+00 : f32
    %150 = vector.shape_cast %24 : vector<64x1xi1> to vector<64x1xi1>
    %151 = vector.broadcast %150 : vector<64x1xi1> to vector<64x16xi1>
    %152 = vector.broadcast %cst_53 : f32 to vector<64x16xf32>
    %153 = arith.select %151, %149, %152 : vector<64x16xi1>, vector<64x16xf32>
    %154 = vector.extract_strided_slice %126 {offsets = [24, 0], sizes = [64, 16], strides = [1, 1]} : vector<96x16xf32> to vector<64x16xf32>
    %155 = vector.extract_strided_slice %126 {offsets = [25, 0], sizes = [64, 16], strides = [1, 1]} : vector<96x16xf32> to vector<64x16xf32>
    %cst_54 = arith.constant 0.000000e+00 : f32
    %156 = vector.shape_cast %26 : vector<64x1xi1> to vector<64x1xi1>
    %157 = vector.broadcast %156 : vector<64x1xi1> to vector<64x16xi1>
    %158 = vector.broadcast %cst_54 : f32 to vector<64x16xf32>
    %159 = arith.select %157, %155, %158 : vector<64x16xi1>, vector<64x16xf32>
    %160 = tpu.concatenate %131, %132, %137, %142, %143, %148, %153, %154, %159 in 1 : vector<64x16xf32>, vector<64x16xf32>, vector<64x16xf32>, vector<64x16xf32>, vector<64x16xf32>, vector<64x16xf32>, vector<64x16xf32>, vector<64x16xf32>, vector<64x16xf32> -> vector<64x144xf32>
    %161 = arith.truncf %160 : vector<64x144xf32> to vector<64x144xbf16>
    %cst_55 = arith.constant dense<0.000000e+00> : vector<64x16xf32>
    %162 = tpu.matmul %161, %124, %cst_55 {dimension_numbers = #tpu.dot_dimension_numbers<[1], [0], [0], [1], [0, 0, 1, 1], [], []>} : vector<64x144xbf16>, vector<144x16xbf16>, vector<64x16xf32> -> vector<64x16xf32>
    %163 = vector.broadcast %125 : vector<1x16xf32> to vector<64x16xf32>
    %164 = arith.addf %162, %163 : vector<64x16xf32>
    %cst_56 = arith.constant dense<0.000000e+00> : vector<16xf32>
    %165 = vector.multi_reduction <add>, %164, %cst_56 [0] : vector<64x16xf32> to vector<16xf32>
    %166 = vector.shape_cast %165 : vector<16xf32> to vector<1x16xf32>
    %cst_57 = arith.constant 1.562500e-02 : f32
    %167 = vector.broadcast %cst_57 : f32 to vector<1x16xf32>
    %168 = arith.mulf %166, %167 : vector<1x16xf32>
    %169 = arith.mulf %164, %164 : vector<64x16xf32>
    %cst_58 = arith.constant dense<0.000000e+00> : vector<16xf32>
    %170 = vector.multi_reduction <add>, %169, %cst_58 [0] : vector<64x16xf32> to vector<16xf32>
    %171 = vector.shape_cast %170 : vector<16xf32> to vector<1x16xf32>
    %cst_59 = arith.constant 1.562500e-02 : f32
    %172 = vector.broadcast %cst_59 : f32 to vector<1x16xf32>
    %173 = arith.mulf %171, %172 : vector<1x16xf32>
    %cst_60 = arith.constant dense<0.000000e+00> : vector<1x16xf32>
    %174 = tpu.matmul %168, %0, %cst_60 {dimension_numbers = #tpu.dot_dimension_numbers<[1], [0], [0], [1], [0, 0, 1, 1], [], []>, precision = #tpu.contract_precision<fp32>} : vector<1x16xf32>, vector<16x16xf32>, vector<1x16xf32> -> vector<1x16xf32>
    %cst_61 = arith.constant dense<0.000000e+00> : vector<1x16xf32>
    %175 = tpu.matmul %173, %0, %cst_61 {dimension_numbers = #tpu.dot_dimension_numbers<[1], [0], [0], [1], [0, 0, 1, 1], [], []>, precision = #tpu.contract_precision<fp32>} : vector<1x16xf32>, vector<16x16xf32>, vector<1x16xf32> -> vector<1x16xf32>
    %176 = arith.mulf %174, %174 : vector<1x16xf32>
    %177 = arith.subf %175, %176 : vector<1x16xf32>
    %178 = vector.extract_strided_slice %1 {offsets = [1, 0], sizes = [1, 16], strides = [1, 1]} : vector<5x16xf32> to vector<1x16xf32>
    %cst_62 = arith.constant 9.99999974E-6 : f32
    %179 = vector.broadcast %cst_62 : f32 to vector<1x16xf32>
    %180 = arith.addf %177, %179 : vector<1x16xf32>
    %181 = math.rsqrt %180 : vector<1x16xf32>
    %182 = arith.mulf %178, %181 : vector<1x16xf32>
    %183 = vector.extract_strided_slice %2 {offsets = [1, 0], sizes = [1, 16], strides = [1, 1]} : vector<5x16xf32> to vector<1x16xf32>
    %184 = arith.mulf %174, %182 : vector<1x16xf32>
    %185 = arith.subf %183, %184 : vector<1x16xf32>
    %186 = vector.broadcast %182 : vector<1x16xf32> to vector<64x16xf32>
    %187 = arith.mulf %164, %186 : vector<64x16xf32>
    %188 = vector.broadcast %185 : vector<1x16xf32> to vector<64x16xf32>
    %189 = arith.addf %187, %188 : vector<64x16xf32>
    %cst_63 = arith.constant 0.000000e+00 : f32
    %190 = vector.broadcast %cst_63 : f32 to vector<64x16xf32>
    %191 = arith.subf %190, %189 : vector<64x16xf32>
    %192 = math.exp %191 : vector<64x16xf32>
    %cst_64 = arith.constant 1.000000e+00 : f32
    %193 = vector.broadcast %cst_64 : f32 to vector<64x16xf32>
    %194 = arith.addf %193, %192 : vector<64x16xf32>
    %195 = tpu.reciprocal %194 {approx = true} : vector<64x16xf32> -> vector<64x16xf32>
    %196 = arith.mulf %189, %195 : vector<64x16xf32>
    %197 = arith.addf %46, %196 : vector<64x16xf32>
    %cst_65 = arith.constant dense<0.000000e+00> : vector<16xf32>
    %198 = vector.multi_reduction <add>, %197, %cst_65 [0] : vector<64x16xf32> to vector<16xf32>
    %199 = vector.shape_cast %198 : vector<16xf32> to vector<1x16xf32>
    %cst_66 = arith.constant 1.562500e-02 : f32
    %200 = vector.broadcast %cst_66 : f32 to vector<1x16xf32>
    %201 = arith.mulf %199, %200 : vector<1x16xf32>
    %202 = arith.mulf %197, %197 : vector<64x16xf32>
    %cst_67 = arith.constant dense<0.000000e+00> : vector<16xf32>
    %203 = vector.multi_reduction <add>, %202, %cst_67 [0] : vector<64x16xf32> to vector<16xf32>
    %204 = vector.shape_cast %203 : vector<16xf32> to vector<1x16xf32>
    %cst_68 = arith.constant 1.562500e-02 : f32
    %205 = vector.broadcast %cst_68 : f32 to vector<1x16xf32>
    %206 = arith.mulf %204, %205 : vector<1x16xf32>
    %cst_69 = arith.constant dense<0.000000e+00> : vector<1xf32>
    %207 = vector.multi_reduction <add>, %201, %cst_69 [1] : vector<1x16xf32> to vector<1xf32>
    %208 = vector.shape_cast %207 : vector<1xf32> to vector<1x1xf32>
    %cst_70 = arith.constant 1.600000e+01 : f32
    %209 = vector.broadcast %cst_70 : f32 to vector<1x1xf32>
    %210 = arith.divf %208, %209 : vector<1x1xf32>
    %cst_71 = arith.constant dense<0.000000e+00> : vector<1xf32>
    %211 = vector.multi_reduction <add>, %206, %cst_71 [1] : vector<1x16xf32> to vector<1xf32>
    %212 = vector.shape_cast %211 : vector<1xf32> to vector<1x1xf32>
    %cst_72 = arith.constant 1.600000e+01 : f32
    %213 = vector.broadcast %cst_72 : f32 to vector<1x1xf32>
    %214 = arith.divf %212, %213 : vector<1x1xf32>
    %215 = arith.mulf %210, %210 : vector<1x1xf32>
    %216 = arith.subf %214, %215 : vector<1x1xf32>
    %217 = vector.extract_strided_slice %1 {offsets = [2, 0], sizes = [1, 16], strides = [1, 1]} : vector<5x16xf32> to vector<1x16xf32>
    %cst_73 = arith.constant 9.99999974E-6 : f32
    %218 = vector.broadcast %cst_73 : f32 to vector<1x1xf32>
    %219 = arith.addf %216, %218 : vector<1x1xf32>
    %220 = math.rsqrt %219 : vector<1x1xf32>
    %221 = vector.broadcast %220 : vector<1x1xf32> to vector<1x16xf32>
    %222 = arith.mulf %217, %221 : vector<1x16xf32>
    %223 = vector.extract_strided_slice %2 {offsets = [2, 0], sizes = [1, 16], strides = [1, 1]} : vector<5x16xf32> to vector<1x16xf32>
    %224 = vector.broadcast %210 : vector<1x1xf32> to vector<1x16xf32>
    %225 = arith.mulf %224, %222 : vector<1x16xf32>
    %226 = arith.subf %223, %225 : vector<1x16xf32>
    %227 = vector.broadcast %222 : vector<1x16xf32> to vector<64x16xf32>
    %228 = arith.mulf %197, %227 : vector<64x16xf32>
    %229 = vector.broadcast %226 : vector<1x16xf32> to vector<64x16xf32>
    %230 = arith.addf %228, %229 : vector<64x16xf32>
    %231 = arith.truncf %230 : vector<64x16xf32> to vector<64x16xbf16>
    %c0_74 = arith.constant 0 : index
    %c0_75 = arith.constant 0 : index
    %c0_76 = arith.constant 0 : index
    %232 = vector.load %arg10[%c0_74, %c0_75, %c0_76] : memref<3x16x16xbf16, #tpu.memory_space<vmem>>, vector<1x16x16xbf16>
    %233 = vector.shape_cast %232 : vector<1x16x16xbf16> to vector<16x16xbf16>
    %cst_77 = arith.constant dense<0.000000e+00> : vector<64x16xf32>
    %234 = tpu.matmul %231, %233, %cst_77 {dimension_numbers = #tpu.dot_dimension_numbers<[1], [0], [0], [1], [0, 0, 1, 1], [], []>} : vector<64x16xbf16>, vector<16x16xbf16>, vector<64x16xf32> -> vector<64x16xf32>
    %c0_78 = arith.constant 0 : index
    %c0_79 = arith.constant 0 : index
    %235 = vector.load %arg11[%c0_78, %c0_79] : memref<3x16xf32, #tpu.memory_space<vmem>>, vector<1x16xf32>
    %236 = vector.broadcast %235 : vector<1x16xf32> to vector<64x16xf32>
    %237 = arith.addf %234, %236 : vector<64x16xf32>
    %c1_80 = arith.constant 1 : index
    %c0_81 = arith.constant 0 : index
    %c0_82 = arith.constant 0 : index
    %238 = vector.load %arg10[%c1_80, %c0_81, %c0_82] : memref<3x16x16xbf16, #tpu.memory_space<vmem>>, vector<1x16x16xbf16>
    %239 = vector.shape_cast %238 : vector<1x16x16xbf16> to vector<16x16xbf16>
    %cst_83 = arith.constant dense<0.000000e+00> : vector<64x16xf32>
    %240 = tpu.matmul %231, %239, %cst_83 {dimension_numbers = #tpu.dot_dimension_numbers<[1], [0], [0], [1], [0, 0, 1, 1], [], []>} : vector<64x16xbf16>, vector<16x16xbf16>, vector<64x16xf32> -> vector<64x16xf32>
    %c1_84 = arith.constant 1 : index
    %c0_85 = arith.constant 0 : index
    %241 = vector.load %arg11[%c1_84, %c0_85] : memref<3x16xf32, #tpu.memory_space<vmem>>, vector<1x16xf32>
    %242 = vector.broadcast %241 : vector<1x16xf32> to vector<64x16xf32>
    %243 = arith.addf %240, %242 : vector<64x16xf32>
    %c2 = arith.constant 2 : index
    %c0_86 = arith.constant 0 : index
    %c0_87 = arith.constant 0 : index
    %244 = vector.load %arg10[%c2, %c0_86, %c0_87] : memref<3x16x16xbf16, #tpu.memory_space<vmem>>, vector<1x16x16xbf16>
    %245 = vector.shape_cast %244 : vector<1x16x16xbf16> to vector<16x16xbf16>
    %cst_88 = arith.constant dense<0.000000e+00> : vector<64x16xf32>
    %246 = tpu.matmul %231, %245, %cst_88 {dimension_numbers = #tpu.dot_dimension_numbers<[1], [0], [0], [1], [0, 0, 1, 1], [], []>} : vector<64x16xbf16>, vector<16x16xbf16>, vector<64x16xf32> -> vector<64x16xf32>
    %c2_89 = arith.constant 2 : index
    %c0_90 = arith.constant 0 : index
    %247 = vector.load %arg11[%c2_89, %c0_90] : memref<3x16xf32, #tpu.memory_space<vmem>>, vector<1x16xf32>
    %248 = vector.broadcast %247 : vector<1x16xf32> to vector<64x16xf32>
    %249 = arith.addf %246, %248 : vector<64x16xf32>
    %250 = arith.truncf %237 : vector<64x16xf32> to vector<64x16xbf16>
    %251 = tpu.transpose %243, [1, 0] : vector<64x16xf32> -> vector<16x64xf32>
    %252 = arith.truncf %251 : vector<16x64xf32> to vector<16x64xbf16>
    %253 = arith.truncf %249 : vector<64x16xf32> to vector<64x16xbf16>
    %254 = vector.extract_strided_slice %250 {offsets = [0, 0], sizes = [64, 4], strides = [1, 1]} : vector<64x16xbf16> to vector<64x4xbf16>
    %255 = vector.extract_strided_slice %252 {offsets = [0, 0], sizes = [4, 64], strides = [1, 1]} : vector<16x64xbf16> to vector<4x64xbf16>
    %cst_91 = arith.constant dense<0.000000e+00> : vector<64x64xf32>
    %256 = tpu.matmul %254, %255, %cst_91 {dimension_numbers = #tpu.dot_dimension_numbers<[1], [0], [0], [1], [0, 0, 1, 1], [], []>} : vector<64x4xbf16>, vector<4x64xbf16>, vector<64x64xf32> -> vector<64x64xf32>
    %cst_92 = arith.constant dense<0xFF800000> : vector<64xf32>
    %257 = vector.multi_reduction <maximumf>, %256, %cst_92 [1] : vector<64x64xf32> to vector<64xf32>
    %258 = vector.shape_cast %257 : vector<64xf32> to vector<64x1xf32>
    %259 = vector.broadcast %258 : vector<64x1xf32> to vector<64x64xf32>
    %260 = arith.subf %256, %259 : vector<64x64xf32>
    %261 = math.exp %260 : vector<64x64xf32>
    %cst_93 = arith.constant dense<0.000000e+00> : vector<64xf32>
    %262 = vector.multi_reduction <add>, %261, %cst_93 [1] : vector<64x64xf32> to vector<64xf32>
    %263 = vector.shape_cast %262 : vector<64xf32> to vector<64x1xf32>
    %264 = tpu.reciprocal %263 {approx = true} : vector<64x1xf32> -> vector<64x1xf32>
    %265 = vector.broadcast %264 : vector<64x1xf32> to vector<64x64xf32>
    %266 = arith.mulf %261, %265 : vector<64x64xf32>
    %267 = arith.truncf %266 : vector<64x64xf32> to vector<64x64xbf16>
    %268 = vector.extract_strided_slice %253 {offsets = [0, 0], sizes = [64, 4], strides = [1, 1]} : vector<64x16xbf16> to vector<64x4xbf16>
    %cst_94 = arith.constant dense<0.000000e+00> : vector<64x4xf32>
    %269 = tpu.matmul %267, %268, %cst_94 {dimension_numbers = #tpu.dot_dimension_numbers<[1], [0], [0], [1], [0, 0, 1, 1], [], []>} : vector<64x64xbf16>, vector<64x4xbf16>, vector<64x4xf32> -> vector<64x4xf32>
    %270 = arith.truncf %269 : vector<64x4xf32> to vector<64x4xbf16>
    %271 = vector.extract_strided_slice %4 {offsets = [0, 0], sizes = [4, 16], strides = [1, 1]} : vector<16x16xbf16> to vector<4x16xbf16>
    %cst_95 = arith.constant dense<0.000000e+00> : vector<64x16xf32>
    %272 = tpu.matmul %270, %271, %cst_95 {dimension_numbers = #tpu.dot_dimension_numbers<[1], [0], [0], [1], [0, 0, 1, 1], [], []>} : vector<64x4xbf16>, vector<4x16xbf16>, vector<64x16xf32> -> vector<64x16xf32>
    %273 = vector.extract_strided_slice %250 {offsets = [0, 4], sizes = [64, 4], strides = [1, 1]} : vector<64x16xbf16> to vector<64x4xbf16>
    %274 = vector.extract_strided_slice %252 {offsets = [4, 0], sizes = [4, 64], strides = [1, 1]} : vector<16x64xbf16> to vector<4x64xbf16>
    %cst_96 = arith.constant dense<0.000000e+00> : vector<64x64xf32>
    %275 = tpu.matmul %273, %274, %cst_96 {dimension_numbers = #tpu.dot_dimension_numbers<[1], [0], [0], [1], [0, 0, 1, 1], [], []>} : vector<64x4xbf16>, vector<4x64xbf16>, vector<64x64xf32> -> vector<64x64xf32>
    %cst_97 = arith.constant dense<0xFF800000> : vector<64xf32>
    %276 = vector.multi_reduction <maximumf>, %275, %cst_97 [1] : vector<64x64xf32> to vector<64xf32>
    %277 = vector.shape_cast %276 : vector<64xf32> to vector<64x1xf32>
    %278 = vector.broadcast %277 : vector<64x1xf32> to vector<64x64xf32>
    %279 = arith.subf %275, %278 : vector<64x64xf32>
    %280 = math.exp %279 : vector<64x64xf32>
    %cst_98 = arith.constant dense<0.000000e+00> : vector<64xf32>
    %281 = vector.multi_reduction <add>, %280, %cst_98 [1] : vector<64x64xf32> to vector<64xf32>
    %282 = vector.shape_cast %281 : vector<64xf32> to vector<64x1xf32>
    %283 = tpu.reciprocal %282 {approx = true} : vector<64x1xf32> -> vector<64x1xf32>
    %284 = vector.broadcast %283 : vector<64x1xf32> to vector<64x64xf32>
    %285 = arith.mulf %280, %284 : vector<64x64xf32>
    %286 = arith.truncf %285 : vector<64x64xf32> to vector<64x64xbf16>
    %287 = vector.extract_strided_slice %253 {offsets = [0, 4], sizes = [64, 4], strides = [1, 1]} : vector<64x16xbf16> to vector<64x4xbf16>
    %cst_99 = arith.constant dense<0.000000e+00> : vector<64x4xf32>
    %288 = tpu.matmul %286, %287, %cst_99 {dimension_numbers = #tpu.dot_dimension_numbers<[1], [0], [0], [1], [0, 0, 1, 1], [], []>} : vector<64x64xbf16>, vector<64x4xbf16>, vector<64x4xf32> -> vector<64x4xf32>
    %289 = arith.truncf %288 : vector<64x4xf32> to vector<64x4xbf16>
    %290 = vector.extract_strided_slice %4 {offsets = [4, 0], sizes = [4, 16], strides = [1, 1]} : vector<16x16xbf16> to vector<4x16xbf16>
    %cst_100 = arith.constant dense<0.000000e+00> : vector<64x16xf32>
    %291 = tpu.matmul %289, %290, %cst_100 {dimension_numbers = #tpu.dot_dimension_numbers<[1], [0], [0], [1], [0, 0, 1, 1], [], []>} : vector<64x4xbf16>, vector<4x16xbf16>, vector<64x16xf32> -> vector<64x16xf32>
    %292 = arith.addf %272, %291 : vector<64x16xf32>
    %293 = vector.extract_strided_slice %250 {offsets = [0, 8], sizes = [64, 4], strides = [1, 1]} : vector<64x16xbf16> to vector<64x4xbf16>
    %294 = vector.extract_strided_slice %252 {offsets = [8, 0], sizes = [4, 64], strides = [1, 1]} : vector<16x64xbf16> to vector<4x64xbf16>
    %cst_101 = arith.constant dense<0.000000e+00> : vector<64x64xf32>
    %295 = tpu.matmul %293, %294, %cst_101 {dimension_numbers = #tpu.dot_dimension_numbers<[1], [0], [0], [1], [0, 0, 1, 1], [], []>} : vector<64x4xbf16>, vector<4x64xbf16>, vector<64x64xf32> -> vector<64x64xf32>
    %cst_102 = arith.constant dense<0xFF800000> : vector<64xf32>
    %296 = vector.multi_reduction <maximumf>, %295, %cst_102 [1] : vector<64x64xf32> to vector<64xf32>
    %297 = vector.shape_cast %296 : vector<64xf32> to vector<64x1xf32>
    %298 = vector.broadcast %297 : vector<64x1xf32> to vector<64x64xf32>
    %299 = arith.subf %295, %298 : vector<64x64xf32>
    %300 = math.exp %299 : vector<64x64xf32>
    %cst_103 = arith.constant dense<0.000000e+00> : vector<64xf32>
    %301 = vector.multi_reduction <add>, %300, %cst_103 [1] : vector<64x64xf32> to vector<64xf32>
    %302 = vector.shape_cast %301 : vector<64xf32> to vector<64x1xf32>
    %303 = tpu.reciprocal %302 {approx = true} : vector<64x1xf32> -> vector<64x1xf32>
    %304 = vector.broadcast %303 : vector<64x1xf32> to vector<64x64xf32>
    %305 = arith.mulf %300, %304 : vector<64x64xf32>
    %306 = arith.truncf %305 : vector<64x64xf32> to vector<64x64xbf16>
    %307 = vector.extract_strided_slice %253 {offsets = [0, 8], sizes = [64, 4], strides = [1, 1]} : vector<64x16xbf16> to vector<64x4xbf16>
    %cst_104 = arith.constant dense<0.000000e+00> : vector<64x4xf32>
    %308 = tpu.matmul %306, %307, %cst_104 {dimension_numbers = #tpu.dot_dimension_numbers<[1], [0], [0], [1], [0, 0, 1, 1], [], []>} : vector<64x64xbf16>, vector<64x4xbf16>, vector<64x4xf32> -> vector<64x4xf32>
    %309 = arith.truncf %308 : vector<64x4xf32> to vector<64x4xbf16>
    %310 = vector.extract_strided_slice %4 {offsets = [8, 0], sizes = [4, 16], strides = [1, 1]} : vector<16x16xbf16> to vector<4x16xbf16>
    %cst_105 = arith.constant dense<0.000000e+00> : vector<64x16xf32>
    %311 = tpu.matmul %309, %310, %cst_105 {dimension_numbers = #tpu.dot_dimension_numbers<[1], [0], [0], [1], [0, 0, 1, 1], [], []>} : vector<64x4xbf16>, vector<4x16xbf16>, vector<64x16xf32> -> vector<64x16xf32>
    %312 = arith.addf %292, %311 : vector<64x16xf32>
    %313 = vector.extract_strided_slice %250 {offsets = [0, 12], sizes = [64, 4], strides = [1, 1]} : vector<64x16xbf16> to vector<64x4xbf16>
    %314 = vector.extract_strided_slice %252 {offsets = [12, 0], sizes = [4, 64], strides = [1, 1]} : vector<16x64xbf16> to vector<4x64xbf16>
    %cst_106 = arith.constant dense<0.000000e+00> : vector<64x64xf32>
    %315 = tpu.matmul %313, %314, %cst_106 {dimension_numbers = #tpu.dot_dimension_numbers<[1], [0], [0], [1], [0, 0, 1, 1], [], []>} : vector<64x4xbf16>, vector<4x64xbf16>, vector<64x64xf32> -> vector<64x64xf32>
    %cst_107 = arith.constant dense<0xFF800000> : vector<64xf32>
    %316 = vector.multi_reduction <maximumf>, %315, %cst_107 [1] : vector<64x64xf32> to vector<64xf32>
    %317 = vector.shape_cast %316 : vector<64xf32> to vector<64x1xf32>
    %318 = vector.broadcast %317 : vector<64x1xf32> to vector<64x64xf32>
    %319 = arith.subf %315, %318 : vector<64x64xf32>
    %320 = math.exp %319 : vector<64x64xf32>
    %cst_108 = arith.constant dense<0.000000e+00> : vector<64xf32>
    %321 = vector.multi_reduction <add>, %320, %cst_108 [1] : vector<64x64xf32> to vector<64xf32>
    %322 = vector.shape_cast %321 : vector<64xf32> to vector<64x1xf32>
    %323 = tpu.reciprocal %322 {approx = true} : vector<64x1xf32> -> vector<64x1xf32>
    %324 = vector.broadcast %323 : vector<64x1xf32> to vector<64x64xf32>
    %325 = arith.mulf %320, %324 : vector<64x64xf32>
    %326 = arith.truncf %325 : vector<64x64xf32> to vector<64x64xbf16>
    %327 = vector.extract_strided_slice %253 {offsets = [0, 12], sizes = [64, 4], strides = [1, 1]} : vector<64x16xbf16> to vector<64x4xbf16>
    %cst_109 = arith.constant dense<0.000000e+00> : vector<64x4xf32>
    %328 = tpu.matmul %326, %327, %cst_109 {dimension_numbers = #tpu.dot_dimension_numbers<[1], [0], [0], [1], [0, 0, 1, 1], [], []>} : vector<64x64xbf16>, vector<64x4xbf16>, vector<64x4xf32> -> vector<64x4xf32>
    %329 = arith.truncf %328 : vector<64x4xf32> to vector<64x4xbf16>
    %330 = vector.extract_strided_slice %4 {offsets = [12, 0], sizes = [4, 16], strides = [1, 1]} : vector<16x16xbf16> to vector<4x16xbf16>
    %cst_110 = arith.constant dense<0.000000e+00> : vector<64x16xf32>
    %331 = tpu.matmul %329, %330, %cst_110 {dimension_numbers = #tpu.dot_dimension_numbers<[1], [0], [0], [1], [0, 0, 1, 1], [], []>} : vector<64x4xbf16>, vector<4x16xbf16>, vector<64x16xf32> -> vector<64x16xf32>
    %332 = arith.addf %312, %331 : vector<64x16xf32>
    %333 = vector.broadcast %5 : vector<1x16xf32> to vector<64x16xf32>
    %334 = arith.addf %332, %333 : vector<64x16xf32>
    %335 = arith.addf %197, %334 : vector<64x16xf32>
    %c2_111 = arith.constant 2 : index
    %c0_112 = arith.constant 0 : index
    %c0_113 = arith.constant 0 : index
    %336 = vector.load %arg3[%c2_111, %c0_112, %c0_113] : memref<4x144x16xbf16, #tpu.memory_space<vmem>>, vector<1x144x16xbf16>
    %337 = vector.shape_cast %336 : vector<1x144x16xbf16> to vector<144x16xbf16>
    %338 = vector.extract_strided_slice %3 {offsets = [2, 0], sizes = [1, 16], strides = [1, 1]} : vector<4x16xf32> to vector<1x16xf32>
    %339 = tpu.concatenate %27, %335, %27 in 0 : vector<16x16xf32>, vector<64x16xf32>, vector<16x16xf32> -> vector<96x16xf32>
    %340 = vector.extract_strided_slice %339 {offsets = [7, 0], sizes = [64, 16], strides = [1, 1]} : vector<96x16xf32> to vector<64x16xf32>
    %cst_114 = arith.constant 0.000000e+00 : f32
    %341 = vector.shape_cast %24 : vector<64x1xi1> to vector<64x1xi1>
    %342 = vector.broadcast %341 : vector<64x1xi1> to vector<64x16xi1>
    %343 = vector.broadcast %cst_114 : f32 to vector<64x16xf32>
    %344 = arith.select %342, %340, %343 : vector<64x16xi1>, vector<64x16xf32>
    %345 = vector.extract_strided_slice %339 {offsets = [8, 0], sizes = [64, 16], strides = [1, 1]} : vector<96x16xf32> to vector<64x16xf32>
    %346 = vector.extract_strided_slice %339 {offsets = [9, 0], sizes = [64, 16], strides = [1, 1]} : vector<96x16xf32> to vector<64x16xf32>
    %cst_115 = arith.constant 0.000000e+00 : f32
    %347 = vector.shape_cast %26 : vector<64x1xi1> to vector<64x1xi1>
    %348 = vector.broadcast %347 : vector<64x1xi1> to vector<64x16xi1>
    %349 = vector.broadcast %cst_115 : f32 to vector<64x16xf32>
    %350 = arith.select %348, %346, %349 : vector<64x16xi1>, vector<64x16xf32>
    %351 = vector.extract_strided_slice %339 {offsets = [15, 0], sizes = [64, 16], strides = [1, 1]} : vector<96x16xf32> to vector<64x16xf32>
    %cst_116 = arith.constant 0.000000e+00 : f32
    %352 = vector.shape_cast %24 : vector<64x1xi1> to vector<64x1xi1>
    %353 = vector.broadcast %352 : vector<64x1xi1> to vector<64x16xi1>
    %354 = vector.broadcast %cst_116 : f32 to vector<64x16xf32>
    %355 = arith.select %353, %351, %354 : vector<64x16xi1>, vector<64x16xf32>
    %356 = vector.extract_strided_slice %339 {offsets = [16, 0], sizes = [64, 16], strides = [1, 1]} : vector<96x16xf32> to vector<64x16xf32>
    %357 = vector.extract_strided_slice %339 {offsets = [17, 0], sizes = [64, 16], strides = [1, 1]} : vector<96x16xf32> to vector<64x16xf32>
    %cst_117 = arith.constant 0.000000e+00 : f32
    %358 = vector.shape_cast %26 : vector<64x1xi1> to vector<64x1xi1>
    %359 = vector.broadcast %358 : vector<64x1xi1> to vector<64x16xi1>
    %360 = vector.broadcast %cst_117 : f32 to vector<64x16xf32>
    %361 = arith.select %359, %357, %360 : vector<64x16xi1>, vector<64x16xf32>
    %362 = vector.extract_strided_slice %339 {offsets = [23, 0], sizes = [64, 16], strides = [1, 1]} : vector<96x16xf32> to vector<64x16xf32>
    %cst_118 = arith.constant 0.000000e+00 : f32
    %363 = vector.shape_cast %24 : vector<64x1xi1> to vector<64x1xi1>
    %364 = vector.broadcast %363 : vector<64x1xi1> to vector<64x16xi1>
    %365 = vector.broadcast %cst_118 : f32 to vector<64x16xf32>
    %366 = arith.select %364, %362, %365 : vector<64x16xi1>, vector<64x16xf32>
    %367 = vector.extract_strided_slice %339 {offsets = [24, 0], sizes = [64, 16], strides = [1, 1]} : vector<96x16xf32> to vector<64x16xf32>
    %368 = vector.extract_strided_slice %339 {offsets = [25, 0], sizes = [64, 16], strides = [1, 1]} : vector<96x16xf32> to vector<64x16xf32>
    %cst_119 = arith.constant 0.000000e+00 : f32
    %369 = vector.shape_cast %26 : vector<64x1xi1> to vector<64x1xi1>
    %370 = vector.broadcast %369 : vector<64x1xi1> to vector<64x16xi1>
    %371 = vector.broadcast %cst_119 : f32 to vector<64x16xf32>
    %372 = arith.select %370, %368, %371 : vector<64x16xi1>, vector<64x16xf32>
    %373 = tpu.concatenate %344, %345, %350, %355, %356, %361, %366, %367, %372 in 1 : vector<64x16xf32>, vector<64x16xf32>, vector<64x16xf32>, vector<64x16xf32>, vector<64x16xf32>, vector<64x16xf32>, vector<64x16xf32>, vector<64x16xf32>, vector<64x16xf32> -> vector<64x144xf32>
    %374 = arith.truncf %373 : vector<64x144xf32> to vector<64x144xbf16>
    %cst_120 = arith.constant dense<0.000000e+00> : vector<64x16xf32>
    %375 = tpu.matmul %374, %337, %cst_120 {dimension_numbers = #tpu.dot_dimension_numbers<[1], [0], [0], [1], [0, 0, 1, 1], [], []>} : vector<64x144xbf16>, vector<144x16xbf16>, vector<64x16xf32> -> vector<64x16xf32>
    %376 = vector.broadcast %338 : vector<1x16xf32> to vector<64x16xf32>
    %377 = arith.addf %375, %376 : vector<64x16xf32>
    %cst_121 = arith.constant dense<0.000000e+00> : vector<16xf32>
    %378 = vector.multi_reduction <add>, %377, %cst_121 [0] : vector<64x16xf32> to vector<16xf32>
    %379 = vector.shape_cast %378 : vector<16xf32> to vector<1x16xf32>
    %cst_122 = arith.constant 1.562500e-02 : f32
    %380 = vector.broadcast %cst_122 : f32 to vector<1x16xf32>
    %381 = arith.mulf %379, %380 : vector<1x16xf32>
    %382 = arith.mulf %377, %377 : vector<64x16xf32>
    %cst_123 = arith.constant dense<0.000000e+00> : vector<16xf32>
    %383 = vector.multi_reduction <add>, %382, %cst_123 [0] : vector<64x16xf32> to vector<16xf32>
    %384 = vector.shape_cast %383 : vector<16xf32> to vector<1x16xf32>
    %cst_124 = arith.constant 1.562500e-02 : f32
    %385 = vector.broadcast %cst_124 : f32 to vector<1x16xf32>
    %386 = arith.mulf %384, %385 : vector<1x16xf32>
    %cst_125 = arith.constant dense<0.000000e+00> : vector<1x16xf32>
    %387 = tpu.matmul %381, %0, %cst_125 {dimension_numbers = #tpu.dot_dimension_numbers<[1], [0], [0], [1], [0, 0, 1, 1], [], []>, precision = #tpu.contract_precision<fp32>} : vector<1x16xf32>, vector<16x16xf32>, vector<1x16xf32> -> vector<1x16xf32>
    %cst_126 = arith.constant dense<0.000000e+00> : vector<1x16xf32>
    %388 = tpu.matmul %386, %0, %cst_126 {dimension_numbers = #tpu.dot_dimension_numbers<[1], [0], [0], [1], [0, 0, 1, 1], [], []>, precision = #tpu.contract_precision<fp32>} : vector<1x16xf32>, vector<16x16xf32>, vector<1x16xf32> -> vector<1x16xf32>
    %389 = arith.mulf %387, %387 : vector<1x16xf32>
    %390 = arith.subf %388, %389 : vector<1x16xf32>
    %391 = vector.extract_strided_slice %1 {offsets = [3, 0], sizes = [1, 16], strides = [1, 1]} : vector<5x16xf32> to vector<1x16xf32>
    %cst_127 = arith.constant 9.99999974E-6 : f32
    %392 = vector.broadcast %cst_127 : f32 to vector<1x16xf32>
    %393 = arith.addf %390, %392 : vector<1x16xf32>
    %394 = math.rsqrt %393 : vector<1x16xf32>
    %395 = arith.mulf %391, %394 : vector<1x16xf32>
    %396 = vector.extract_strided_slice %2 {offsets = [3, 0], sizes = [1, 16], strides = [1, 1]} : vector<5x16xf32> to vector<1x16xf32>
    %397 = arith.mulf %387, %395 : vector<1x16xf32>
    %398 = arith.subf %396, %397 : vector<1x16xf32>
    %399 = vector.broadcast %395 : vector<1x16xf32> to vector<64x16xf32>
    %400 = arith.mulf %377, %399 : vector<64x16xf32>
    %401 = vector.broadcast %398 : vector<1x16xf32> to vector<64x16xf32>
    %402 = arith.addf %400, %401 : vector<64x16xf32>
    %cst_128 = arith.constant 0.000000e+00 : f32
    %403 = vector.broadcast %cst_128 : f32 to vector<64x16xf32>
    %404 = arith.subf %403, %402 : vector<64x16xf32>
    %405 = math.exp %404 : vector<64x16xf32>
    %cst_129 = arith.constant 1.000000e+00 : f32
    %406 = vector.broadcast %cst_129 : f32 to vector<64x16xf32>
    %407 = arith.addf %406, %405 : vector<64x16xf32>
    %408 = tpu.reciprocal %407 {approx = true} : vector<64x16xf32> -> vector<64x16xf32>
    %409 = arith.mulf %402, %408 : vector<64x16xf32>
    %410 = vector.broadcast %43 : vector<1x16xf32> to vector<64x16xf32>
    %411 = arith.addf %409, %410 : vector<64x16xf32>
    %c3 = arith.constant 3 : index
    %c0_130 = arith.constant 0 : index
    %c0_131 = arith.constant 0 : index
    %412 = vector.load %arg3[%c3, %c0_130, %c0_131] : memref<4x144x16xbf16, #tpu.memory_space<vmem>>, vector<1x144x16xbf16>
    %413 = vector.shape_cast %412 : vector<1x144x16xbf16> to vector<144x16xbf16>
    %414 = vector.extract_strided_slice %3 {offsets = [3, 0], sizes = [1, 16], strides = [1, 1]} : vector<4x16xf32> to vector<1x16xf32>
    %415 = tpu.concatenate %27, %411, %27 in 0 : vector<16x16xf32>, vector<64x16xf32>, vector<16x16xf32> -> vector<96x16xf32>
    %416 = vector.extract_strided_slice %415 {offsets = [7, 0], sizes = [64, 16], strides = [1, 1]} : vector<96x16xf32> to vector<64x16xf32>
    %cst_132 = arith.constant 0.000000e+00 : f32
    %417 = vector.shape_cast %24 : vector<64x1xi1> to vector<64x1xi1>
    %418 = vector.broadcast %417 : vector<64x1xi1> to vector<64x16xi1>
    %419 = vector.broadcast %cst_132 : f32 to vector<64x16xf32>
    %420 = arith.select %418, %416, %419 : vector<64x16xi1>, vector<64x16xf32>
    %421 = vector.extract_strided_slice %415 {offsets = [8, 0], sizes = [64, 16], strides = [1, 1]} : vector<96x16xf32> to vector<64x16xf32>
    %422 = vector.extract_strided_slice %415 {offsets = [9, 0], sizes = [64, 16], strides = [1, 1]} : vector<96x16xf32> to vector<64x16xf32>
    %cst_133 = arith.constant 0.000000e+00 : f32
    %423 = vector.shape_cast %26 : vector<64x1xi1> to vector<64x1xi1>
    %424 = vector.broadcast %423 : vector<64x1xi1> to vector<64x16xi1>
    %425 = vector.broadcast %cst_133 : f32 to vector<64x16xf32>
    %426 = arith.select %424, %422, %425 : vector<64x16xi1>, vector<64x16xf32>
    %427 = vector.extract_strided_slice %415 {offsets = [15, 0], sizes = [64, 16], strides = [1, 1]} : vector<96x16xf32> to vector<64x16xf32>
    %cst_134 = arith.constant 0.000000e+00 : f32
    %428 = vector.shape_cast %24 : vector<64x1xi1> to vector<64x1xi1>
    %429 = vector.broadcast %428 : vector<64x1xi1> to vector<64x16xi1>
    %430 = vector.broadcast %cst_134 : f32 to vector<64x16xf32>
    %431 = arith.select %429, %427, %430 : vector<64x16xi1>, vector<64x16xf32>
    %432 = vector.extract_strided_slice %415 {offsets = [16, 0], sizes = [64, 16], strides = [1, 1]} : vector<96x16xf32> to vector<64x16xf32>
    %433 = vector.extract_strided_slice %415 {offsets = [17, 0], sizes = [64, 16], strides = [1, 1]} : vector<96x16xf32> to vector<64x16xf32>
    %cst_135 = arith.constant 0.000000e+00 : f32
    %434 = vector.shape_cast %26 : vector<64x1xi1> to vector<64x1xi1>
    %435 = vector.broadcast %434 : vector<64x1xi1> to vector<64x16xi1>
    %436 = vector.broadcast %cst_135 : f32 to vector<64x16xf32>
    %437 = arith.select %435, %433, %436 : vector<64x16xi1>, vector<64x16xf32>
    %438 = vector.extract_strided_slice %415 {offsets = [23, 0], sizes = [64, 16], strides = [1, 1]} : vector<96x16xf32> to vector<64x16xf32>
    %cst_136 = arith.constant 0.000000e+00 : f32
    %439 = vector.shape_cast %24 : vector<64x1xi1> to vector<64x1xi1>
    %440 = vector.broadcast %439 : vector<64x1xi1> to vector<64x16xi1>
    %441 = vector.broadcast %cst_136 : f32 to vector<64x16xf32>
    %442 = arith.select %440, %438, %441 : vector<64x16xi1>, vector<64x16xf32>
    %443 = vector.extract_strided_slice %415 {offsets = [24, 0], sizes = [64, 16], strides = [1, 1]} : vector<96x16xf32> to vector<64x16xf32>
    %444 = vector.extract_strided_slice %415 {offsets = [25, 0], sizes = [64, 16], strides = [1, 1]} : vector<96x16xf32> to vector<64x16xf32>
    %cst_137 = arith.constant 0.000000e+00 : f32
    %445 = vector.shape_cast %26 : vector<64x1xi1> to vector<64x1xi1>
    %446 = vector.broadcast %445 : vector<64x1xi1> to vector<64x16xi1>
    %447 = vector.broadcast %cst_137 : f32 to vector<64x16xf32>
    %448 = arith.select %446, %444, %447 : vector<64x16xi1>, vector<64x16xf32>
    %449 = tpu.concatenate %420, %421, %426, %431, %432, %437, %442, %443, %448 in 1 : vector<64x16xf32>, vector<64x16xf32>, vector<64x16xf32>, vector<64x16xf32>, vector<64x16xf32>, vector<64x16xf32>, vector<64x16xf32>, vector<64x16xf32>, vector<64x16xf32> -> vector<64x144xf32>
    %450 = arith.truncf %449 : vector<64x144xf32> to vector<64x144xbf16>
    %cst_138 = arith.constant dense<0.000000e+00> : vector<64x16xf32>
    %451 = tpu.matmul %450, %413, %cst_138 {dimension_numbers = #tpu.dot_dimension_numbers<[1], [0], [0], [1], [0, 0, 1, 1], [], []>} : vector<64x144xbf16>, vector<144x16xbf16>, vector<64x16xf32> -> vector<64x16xf32>
    %452 = vector.broadcast %414 : vector<1x16xf32> to vector<64x16xf32>
    %453 = arith.addf %451, %452 : vector<64x16xf32>
    %cst_139 = arith.constant dense<0.000000e+00> : vector<16xf32>
    %454 = vector.multi_reduction <add>, %453, %cst_139 [0] : vector<64x16xf32> to vector<16xf32>
    %455 = vector.shape_cast %454 : vector<16xf32> to vector<1x16xf32>
    %cst_140 = arith.constant 1.562500e-02 : f32
    %456 = vector.broadcast %cst_140 : f32 to vector<1x16xf32>
    %457 = arith.mulf %455, %456 : vector<1x16xf32>
    %458 = arith.mulf %453, %453 : vector<64x16xf32>
    %cst_141 = arith.constant dense<0.000000e+00> : vector<16xf32>
    %459 = vector.multi_reduction <add>, %458, %cst_141 [0] : vector<64x16xf32> to vector<16xf32>
    %460 = vector.shape_cast %459 : vector<16xf32> to vector<1x16xf32>
    %cst_142 = arith.constant 1.562500e-02 : f32
    %461 = vector.broadcast %cst_142 : f32 to vector<1x16xf32>
    %462 = arith.mulf %460, %461 : vector<1x16xf32>
    %cst_143 = arith.constant dense<0.000000e+00> : vector<1x16xf32>
    %463 = tpu.matmul %457, %0, %cst_143 {dimension_numbers = #tpu.dot_dimension_numbers<[1], [0], [0], [1], [0, 0, 1, 1], [], []>, precision = #tpu.contract_precision<fp32>} : vector<1x16xf32>, vector<16x16xf32>, vector<1x16xf32> -> vector<1x16xf32>
    %cst_144 = arith.constant dense<0.000000e+00> : vector<1x16xf32>
    %464 = tpu.matmul %462, %0, %cst_144 {dimension_numbers = #tpu.dot_dimension_numbers<[1], [0], [0], [1], [0, 0, 1, 1], [], []>, precision = #tpu.contract_precision<fp32>} : vector<1x16xf32>, vector<16x16xf32>, vector<1x16xf32> -> vector<1x16xf32>
    %465 = arith.mulf %463, %463 : vector<1x16xf32>
    %466 = arith.subf %464, %465 : vector<1x16xf32>
    %467 = vector.extract_strided_slice %1 {offsets = [4, 0], sizes = [1, 16], strides = [1, 1]} : vector<5x16xf32> to vector<1x16xf32>
    %cst_145 = arith.constant 9.99999974E-6 : f32
    %468 = vector.broadcast %cst_145 : f32 to vector<1x16xf32>
    %469 = arith.addf %466, %468 : vector<1x16xf32>
    %470 = math.rsqrt %469 : vector<1x16xf32>
    %471 = arith.mulf %467, %470 : vector<1x16xf32>
    %472 = vector.extract_strided_slice %2 {offsets = [4, 0], sizes = [1, 16], strides = [1, 1]} : vector<5x16xf32> to vector<1x16xf32>
    %473 = arith.mulf %463, %471 : vector<1x16xf32>
    %474 = arith.subf %472, %473 : vector<1x16xf32>
    %475 = vector.broadcast %471 : vector<1x16xf32> to vector<64x16xf32>
    %476 = arith.mulf %453, %475 : vector<64x16xf32>
    %477 = vector.broadcast %474 : vector<1x16xf32> to vector<64x16xf32>
    %478 = arith.addf %476, %477 : vector<64x16xf32>
    %cst_146 = arith.constant 0.000000e+00 : f32
    %479 = vector.broadcast %cst_146 : f32 to vector<64x16xf32>
    %480 = arith.subf %479, %478 : vector<64x16xf32>
    %481 = math.exp %480 : vector<64x16xf32>
    %cst_147 = arith.constant 1.000000e+00 : f32
    %482 = vector.broadcast %cst_147 : f32 to vector<64x16xf32>
    %483 = arith.addf %482, %481 : vector<64x16xf32>
    %484 = tpu.reciprocal %483 {approx = true} : vector<64x16xf32> -> vector<64x16xf32>
    %485 = arith.mulf %478, %484 : vector<64x16xf32>
    %486 = arith.addf %335, %485 : vector<64x16xf32>
    %487 = tpu.transpose %486, [1, 0] : vector<64x16xf32> -> vector<16x64xf32>
    %c0_148 = arith.constant 0 : index
    %c0_149 = arith.constant 0 : index
    %c0_150 = arith.constant 0 : index
    %488 = vector.load %arg14[%c0_148, %c0_149, %c0_150] : memref<1x16x64xf32, #tpu.memory_space<vmem>>, vector<1x16x64xf32>
    %489 = vector.shape_cast %488 : vector<1x16x64xf32> to vector<16x64xf32>
    %490 = vector.shape_cast %487 : vector<16x64xf32> to vector<1x16x64xf32>
    tpu.vector_store %arg14[%c0_148, %c0_149, %c0_150], %490 {strides = array<i32>} : memref<1x16x64xf32, #tpu.memory_space<vmem>>, vector<1x16x64xf32>,
    return
  }
  func.func @transform_0(%arg0: i32) -> (i32, i32, i32) {
    %c0_i32 = arith.constant 0 : i32
    %c0_i32_0 = arith.constant 0 : i32
    %c0_i32_1 = arith.constant 0 : i32
    return %arg0, %c0_i32, %c0_i32_0 : i32, i32, i32
  }
  func.func @transform_1(%arg0: i32) -> (i32, i32, i32) {
    %c0_i32 = arith.constant 0 : i32
    %c0_i32_0 = arith.constant 0 : i32
    %c0_i32_1 = arith.constant 0 : i32
    return %arg0, %c0_i32, %c0_i32_0 : i32, i32, i32
  }
  func.func @transform_2(%arg0: i32) -> (i32, i32, i32) {
    %c0_i32 = arith.constant 0 : i32
    %c0_i32_0 = arith.constant 0 : i32
    %c0_i32_1 = arith.constant 0 : i32
    %c0_i32_2 = arith.constant 0 : i32
    return %c0_i32, %c0_i32_0, %c0_i32_1 : i32, i32, i32
  }
  func.func @transform_3(%arg0: i32) -> (i32, i32) {
    %c0_i32 = arith.constant 0 : i32
    %c0_i32_0 = arith.constant 0 : i32
    %c0_i32_1 = arith.constant 0 : i32
    return %c0_i32, %c0_i32_0 : i32, i32
  }
  func.func @transform_4(%arg0: i32) -> (i32, i32) {
    %c0_i32 = arith.constant 0 : i32
    %c0_i32_0 = arith.constant 0 : i32
    %c0_i32_1 = arith.constant 0 : i32
    return %c0_i32, %c0_i32_0 : i32, i32
  }
  func.func @transform_5(%arg0: i32) -> (i32, i32) {
    %c0_i32 = arith.constant 0 : i32
    %c0_i32_0 = arith.constant 0 : i32
    %c0_i32_1 = arith.constant 0 : i32
    return %c0_i32, %c0_i32_0 : i32, i32
  }
  func.func @transform_6(%arg0: i32) -> (i32, i32) {
    %c0_i32 = arith.constant 0 : i32
    %c0_i32_0 = arith.constant 0 : i32
    %c0_i32_1 = arith.constant 0 : i32
    return %c0_i32, %c0_i32_0 : i32, i32
  }
  func.func @transform_7(%arg0: i32) -> (i32, i32) {
    %c0_i32 = arith.constant 0 : i32
    %c0_i32_0 = arith.constant 0 : i32
    %c0_i32_1 = arith.constant 0 : i32
    return %c0_i32, %c0_i32_0 : i32, i32
  }
  func.func @transform_8(%arg0: i32) -> (i32, i32) {
    %c0_i32 = arith.constant 0 : i32
    %c0_i32_0 = arith.constant 0 : i32
    %c0_i32_1 = arith.constant 0 : i32
    return %c0_i32, %c0_i32_0 : i32, i32
  }
  func.func @transform_9(%arg0: i32) -> (i32, i32, i32) {
    %c0_i32 = arith.constant 0 : i32
    %c0_i32_0 = arith.constant 0 : i32
    %c0_i32_1 = arith.constant 0 : i32
    %c0_i32_2 = arith.constant 0 : i32
    return %c0_i32, %c0_i32_0, %c0_i32_1 : i32, i32, i32
  }
  func.func @transform_10(%arg0: i32) -> (i32, i32) {
    %c0_i32 = arith.constant 0 : i32
    %c0_i32_0 = arith.constant 0 : i32
    %c0_i32_1 = arith.constant 0 : i32
    return %c0_i32, %c0_i32_0 : i32, i32
  }
  func.func @transform_11(%arg0: i32) -> (i32, i32) {
    %c0_i32 = arith.constant 0 : i32
    %c0_i32_0 = arith.constant 0 : i32
    %c0_i32_1 = arith.constant 0 : i32
    return %c0_i32, %c0_i32_0 : i32, i32
  }
  func.func @transform_12(%arg0: i32) -> (i32, i32) {
    %c0_i32 = arith.constant 0 : i32
    %c0_i32_0 = arith.constant 0 : i32
    %c0_i32_1 = arith.constant 0 : i32
    return %c0_i32, %c0_i32_0 : i32, i32
  }
  func.func @transform_13(%arg0: i32) -> (i32, i32, i32) {
    %c0_i32 = arith.constant 0 : i32
    %c0_i32_0 = arith.constant 0 : i32
    %c0_i32_1 = arith.constant 0 : i32
    return %arg0, %c0_i32, %c0_i32_0 : i32, i32, i32
  }
}

</mosaic_0001>

<llo_original>
// kernel: midblock_forward.1
$region0: #{midblock_forward.1}
  #allocation0 [shape = 'u32[]', space=smem, size = 0x4, offset = 0x4, fixed_abs, tag = 'smem constant byte address 0x4 - core index']
  #allocation1 [shape = 'u32[144,128]{1,0:T(1,128)}', space=vmem, size = 0x12000, scoped, tag = 'internal scratch']
  %s0 = inlined_call_operand.vmem [shape: f32[2,16,64], index: 0, kind: input, shape index: {}]
  %s1 = inlined_call_operand.vmem [shape: f32[2,1,32], index: 1, kind: input, shape index: {}]
  %s2 = inlined_call_operand.vmem [shape: bf16[4,144,16], index: 2, kind: input, shape index: {}]
  %s3 = inlined_call_operand.vmem [shape: f32[4,16], index: 3, kind: input, shape index: {}]
  %s4 = inlined_call_operand.vmem [shape: f32[5,16], index: 4, kind: input, shape index: {}]
  %s5 = inlined_call_operand.vmem [shape: f32[5,16], index: 5, kind: input, shape index: {}]
  %s6 = inlined_call_operand.vmem [shape: f32[16,16], index: 6, kind: input, shape index: {}]
  %s7 = inlined_call_operand.vmem [shape: bf16[32,32], index: 7, kind: input, shape index: {}]
  %s8 = inlined_call_operand.vmem [shape: f32[1,32], index: 8, kind: input, shape index: {}]
  %s9 = inlined_call_operand.vmem [shape: bf16[3,16,16], index: 9, kind: input, shape index: {}]
  %s10 = inlined_call_operand.vmem [shape: f32[3,16], index: 10, kind: input, shape index: {}]
  %s11 = inlined_call_operand.vmem [shape: bf16[16,16], index: 11, kind: input, shape index: {}]
  %s12 = inlined_call_operand.vmem [shape: f32[1,16], index: 12, kind: input, shape index: {}]
  %s13 = inlined_call_operand.vmem [shape: f32[2,16,64], index: 13, kind: output, shape index: {}]
  %s14 = sld [smem:[#allocation0]]
  $region85: #{midblock_forward.1} parent=0
    _
  %s16 = ssub.s32 1, %s14
  %s17 = scalar_select 0, %s16, %s14
  loop: start=0, step=1, limit=4
  $region2: #{midblock_forward.1} parent=0 // loop_pre_header
    _
  $region3: #{midblock_forward.1} parent=0 // loop_header
    %s19 = sphi 0, %s23
    %p20 = scmp.ge.s32.totalorder %s19, 4
    %s29 = sphi 0, %s31
    %s32 = sphi 0, %s29
    %s33 = sphi 0, %s32
    %s49 = sphi 0, %s33
    %s55 = sphi 0, %s57
    %s58 = sphi 0, %s55
    %s59 = sphi 0, %s58
    %s75 = sphi 0, %s59
    %s79 = sphi 0, %s79
    %s81 = sphi 0, %s79
    %s82 = sphi 0, %s81
    %s96 = sphi 0, %s82
    %s100 = sphi 0, %s100
    %s102 = sphi 0, %s100
    %s103 = sphi 0, %s102
    %s117 = sphi 0, %s103
    %s121 = sphi 0, %s121
    %s123 = sphi 0, %s121
    %s124 = sphi 0, %s123
    %s138 = sphi 0, %s124
    %s142 = sphi 0, %s142
    %s144 = sphi 0, %s142
    %s145 = sphi 0, %s144
    %s159 = sphi 0, %s145
    %s163 = sphi 0, %s163
    %s165 = sphi 0, %s163
    %s166 = sphi 0, %s165
    %s180 = sphi 0, %s166
    %s184 = sphi 0, %s184
    %s186 = sphi 0, %s184
    %s187 = sphi 0, %s186
    %s201 = sphi 0, %s187
    %s205 = sphi 0, %s205
    %s207 = sphi 0, %s205
    %s208 = sphi 0, %s207
    %s222 = sphi 0, %s208
    %s226 = sphi 0, %s226
    %s228 = sphi 0, %s226
    %s229 = sphi 0, %s228
    %s243 = sphi 0, %s229
    %s247 = sphi 0, %s247
    %s249 = sphi 0, %s247
    %s250 = sphi 0, %s249
    %s264 = sphi 0, %s250
    %s268 = sphi 0, %s268
    %s270 = sphi 0, %s268
    %s271 = sphi 0, %s270
    %s285 = sphi 0, %s271
    %s289 = sphi 0, %s289
    %s291 = sphi 0, %s289
    %s292 = sphi 0, %s291
    %s306 = sphi 0, %s292
    %s312 = sphi 0, %s314
    %s315 = sphi 0, %s312
    %s316 = sphi 0, %s315
    %s332 = sphi 0, %s316
  $region4: #{midblock_forward.1} parent=0 // loop_header_branch
    %22 = sbr.rel (%p20) target = $region8
  $region5: #{midblock_forward.1} parent=0 // loop_body
    %s24 = ssub.s32 %s19, 1
    %s25 = ssub.s32 %s19, 2
    %s26 = sadd.s32 %s19, 1
    %s27 = ssub.s32 %s19, %s26
    %p28 = scmp.eq.s32.totalorder %s27, 0
    %s30 = sadd.s32 %s29, 1
    %s31 = scalar_select %p28, %s29, %s30
    %p34 = pneg %p28
    %p35 = scmp.eq.s32.totalorder %s19, 1
    %p36 = por %p34, %p35
    %p37 = scmp.ne.s32.totalorder %s29, %s32
    %p38 = scmp.eq.s32.totalorder %s19, 0
    %p39 = por %p37, %p38
    %p40 = scmp.ne.s32.totalorder %s29, %s32
    %p41 = scmp.eq.s32.totalorder %s24, 1
    %p42 = por %p40, %p41
    %p43 = scmp.ne.s32.totalorder %s32, %s33
    %p44 = scmp.eq.s32.totalorder %s24, 0
    %p45 = por %p43, %p44
    %p46 = scmp.ne.s32.totalorder %s32, %s33
    %p47 = scmp.eq.s32.totalorder %s25, 1
    %p48 = por %p46, %p47
    %p50 = scmp.ne.s32.totalorder %s33, %s49
    %p51 = scmp.eq.s32.totalorder %s25, 0
    %p52 = por %p50, %p51
    %s53 = ssub.s32 %s19, %s26
    %p54 = scmp.eq.s32.totalorder %s53, 0
    %s56 = sadd.s32 %s55, 1
    %s57 = scalar_select %p54, %s55, %s56
    %p60 = pneg %p54
    %p61 = scmp.eq.s32.totalorder %s19, 1
    %p62 = por %p60, %p61
    %p63 = scmp.ne.s32.totalorder %s55, %s58
    %p64 = scmp.eq.s32.totalorder %s19, 0
    %p65 = por %p63, %p64
    %p66 = scmp.ne.s32.totalorder %s55, %s58
    %p67 = scmp.eq.s32.totalorder %s24, 1
    %p68 = por %p66, %p67
    %p69 = scmp.ne.s32.totalorder %s58, %s59
    %p70 = scmp.eq.s32.totalorder %s24, 0
    %p71 = por %p69, %p70
    %p72 = scmp.ne.s32.totalorder %s58, %s59
    %p73 = scmp.eq.s32.totalorder %s25, 1
    %p74 = por %p72, %p73
    %p76 = scmp.ne.s32.totalorder %s59, %s75
    %p77 = scmp.eq.s32.totalorder %s25, 0
    %p78 = por %p76, %p77
    %s80 = sadd.s32 %s79, 1
    %p83 = scmp.eq.s32.totalorder %s19, 1
    %p84 = scmp.ne.s32.totalorder %s79, %s81
    %p85 = scmp.eq.s32.totalorder %s19, 0
    %p86 = por %p84, %p85
    %p87 = scmp.ne.s32.totalorder %s79, %s81
    %p88 = scmp.eq.s32.totalorder %s24, 1
    %p89 = por %p87, %p88
    %p90 = scmp.ne.s32.totalorder %s81, %s82
    %p91 = scmp.eq.s32.totalorder %s24, 0
    %p92 = por %p90, %p91
    %p93 = scmp.ne.s32.totalorder %s81, %s82
    %p94 = scmp.eq.s32.totalorder %s25, 1
    %p95 = por %p93, %p94
    %p97 = scmp.ne.s32.totalorder %s82, %s96
    %p98 = scmp.eq.s32.totalorder %s25, 0
    %p99 = por %p97, %p98
    %s101 = sadd.s32 %s100, 1
    %p104 = scmp.eq.s32.totalorder %s19, 1
    %p105 = scmp.ne.s32.totalorder %s100, %s102
    %p106 = scmp.eq.s32.totalorder %s19, 0
    %p107 = por %p105, %p106
    %p108 = scmp.ne.s32.totalorder %s100, %s102
    %p109 = scmp.eq.s32.totalorder %s24, 1
    %p110 = por %p108, %p109
    %p111 = scmp.ne.s32.totalorder %s102, %s103
    %p112 = scmp.eq.s32.totalorder %s24, 0
    %p113 = por %p111, %p112
    %p114 = scmp.ne.s32.totalorder %s102, %s103
    %p115 = scmp.eq.s32.totalorder %s25, 1
    %p116 = por %p114, %p115
    %p118 = scmp.ne.s32.totalorder %s103, %s117
    %p119 = scmp.eq.s32.totalorder %s25, 0
    %p120 = por %p118, %p119
    %s122 = sadd.s32 %s121, 1
    %p125 = scmp.eq.s32.totalorder %s19, 1
    %p126 = scmp.ne.s32.totalorder %s121, %s123
    %p127 = scmp.eq.s32.totalorder %s19, 0
    %p128 = por %p126, %p127
    %p129 = scmp.ne.s32.totalorder %s121, %s123
    %p130 = scmp.eq.s32.totalorder %s24, 1
    %p131 = por %p129, %p130
    %p132 = scmp.ne.s32.totalorder %s123, %s124
    %p133 = scmp.eq.s32.totalorder %s24, 0
    %p134 = por %p132, %p133
    %p135 = scmp.ne.s32.totalorder %s123, %s124
    %p136 = scmp.eq.s32.totalorder %s25, 1
    %p137 = por %p135, %p136
    %p139 = scmp.ne.s32.totalorder %s124, %s138
    %p140 = scmp.eq.s32.totalorder %s25, 0
    %p141 = por %p139, %p140
    %s143 = sadd.s32 %s142, 1
    %p146 = scmp.eq.s32.totalorder %s19, 1
    %p147 = scmp.ne.s32.totalorder %s142, %s144
    %p148 = scmp.eq.s32.totalorder %s19, 0
    %p149 = por %p147, %p148
    %p150 = scmp.ne.s32.totalorder %s142, %s144
    %p151 = scmp.eq.s32.totalorder %s24, 1
    %p152 = por %p150, %p151
    %p153 = scmp.ne.s32.totalorder %s144, %s145
    %p154 = scmp.eq.s32.totalorder %s24, 0
    %p155 = por %p153, %p154
    %p156 = scmp.ne.s32.totalorder %s144, %s145
    %p157 = scmp.eq.s32.totalorder %s25, 1
    %p158 = por %p156, %p157
    %p160 = scmp.ne.s32.totalorder %s145, %s159
    %p161 = scmp.eq.s32.totalorder %s25, 0
    %p162 = por %p160, %p161
    %s164 = sadd.s32 %s163, 1
    %p167 = scmp.eq.s32.totalorder %s19, 1
    %p168 = scmp.ne.s32.totalorder %s163, %s165
    %p169 = scmp.eq.s32.totalorder %s19, 0
    %p170 = por %p168, %p169
    %p171 = scmp.ne.s32.totalorder %s163, %s165
    %p172 = scmp.eq.s32.totalorder %s24, 1
    %p173 = por %p171, %p172
    %p174 = scmp.ne.s32.totalorder %s165, %s166
    %p175 = scmp.eq.s32.totalorder %s24, 0
    %p176 = por %p174, %p175
    %p177 = scmp.ne.s32.totalorder %s165, %s166
    %p178 = scmp.eq.s32.totalorder %s25, 1
    %p179 = por %p177, %p178
    %p181 = scmp.ne.s32.totalorder %s166, %s180
    %p182 = scmp.eq.s32.totalorder %s25, 0
    %p183 = por %p181, %p182
    %s185 = sadd.s32 %s184, 1
    %p188 = scmp.eq.s32.totalorder %s19, 1
    %p189 = scmp.ne.s32.totalorder %s184, %s186
    %p190 = scmp.eq.s32.totalorder %s19, 0
    %p191 = por %p189, %p190
    %p192 = scmp.ne.s32.totalorder %s184, %s186
    %p193 = scmp.eq.s32.totalorder %s24, 1
    %p194 = por %p192, %p193
    %p195 = scmp.ne.s32.totalorder %s186, %s187
    %p196 = scmp.eq.s32.totalorder %s24, 0
    %p197 = por %p195, %p196
    %p198 = scmp.ne.s32.totalorder %s186, %s187
    %p199 = scmp.eq.s32.totalorder %s25, 1
    %p200 = por %p198, %p199
    %p202 = scmp.ne.s32.totalorder %s187, %s201
    %p203 = scmp.eq.s32.totalorder %s25, 0
    %p204 = por %p202, %p203
    %s206 = sadd.s32 %s205, 1
    %p209 = scmp.eq.s32.totalorder %s19, 1
    %p210 = scmp.ne.s32.totalorder %s205, %s207
    %p211 = scmp.eq.s32.totalorder %s19, 0
    %p212 = por %p210, %p211
    %p213 = scmp.ne.s32.totalorder %s205, %s207
    %p214 = scmp.eq.s32.totalorder %s24, 1
    %p215 = por %p213, %p214
    %p216 = scmp.ne.s32.totalorder %s207, %s208
    %p217 = scmp.eq.s32.totalorder %s24, 0
    %p218 = por %p216, %p217
    %p219 = scmp.ne.s32.totalorder %s207, %s208
    %p220 = scmp.eq.s32.totalorder %s25, 1
    %p221 = por %p219, %p220
    %p223 = scmp.ne.s32.totalorder %s208, %s222
    %p224 = scmp.eq.s32.totalorder %s25, 0
    %p225 = por %p223, %p224
    %s227 = sadd.s32 %s226, 1
    %p230 = scmp.eq.s32.totalorder %s19, 1
    %p231 = scmp.ne.s32.totalorder %s226, %s228
    %p232 = scmp.eq.s32.totalorder %s19, 0
    %p233 = por %p231, %p232
    %p234 = scmp.ne.s32.totalorder %s226, %s228
    %p235 = scmp.eq.s32.totalorder %s24, 1
    %p236 = por %p234, %p235
    %p237 = scmp.ne.s32.totalorder %s228, %s229
    %p238 = scmp.eq.s32.totalorder %s24, 0
    %p239 = por %p237, %p238
    %p240 = scmp.ne.s32.totalorder %s228, %s229
    %p241 = scmp.eq.s32.totalorder %s25, 1
    %p242 = por %p240, %p241
    %p244 = scmp.ne.s32.totalorder %s229, %s243
    %p245 = scmp.eq.s32.totalorder %s25, 0
    %p246 = por %p244, %p245
    %s248 = sadd.s32 %s247, 1
    %p251 = scmp.eq.s32.totalorder %s19, 1
    %p252 = scmp.ne.s32.totalorder %s247, %s249
    %p253 = scmp.eq.s32.totalorder %s19, 0
    %p254 = por %p252, %p253
    %p255 = scmp.ne.s32.totalorder %s247, %s249
    %p256 = scmp.eq.s32.totalorder %s24, 1
    %p257 = por %p255, %p256
    %p258 = scmp.ne.s32.totalorder %s249, %s250
    %p259 = scmp.eq.s32.totalorder %s24, 0
    %p260 = por %p258, %p259
    %p261 = scmp.ne.s32.totalorder %s249, %s250
    %p262 = scmp.eq.s32.totalorder %s25, 1
    %p263 = por %p261, %p262
    %p265 = scmp.ne.s32.totalorder %s250, %s264
    %p266 = scmp.eq.s32.totalorder %s25, 0
    %p267 = por %p265, %p266
    %s269 = sadd.s32 %s268, 1
    %p272 = scmp.eq.s32.totalorder %s19, 1
    %p273 = scmp.ne.s32.totalorder %s268, %s270
    %p274 = scmp.eq.s32.totalorder %s19, 0
    %p275 = por %p273, %p274
    %p276 = scmp.ne.s32.totalorder %s268, %s270
    %p277 = scmp.eq.s32.totalorder %s24, 1
    %p278 = por %p276, %p277
    %p279 = scmp.ne.s32.totalorder %s270, %s271
    %p280 = scmp.eq.s32.totalorder %s24, 0
    %p281 = por %p279, %p280
    %p282 = scmp.ne.s32.totalorder %s270, %s271
    %p283 = scmp.eq.s32.totalorder %s25, 1
    %p284 = por %p282, %p283
    %p286 = scmp.ne.s32.totalorder %s271, %s285
    %p287 = scmp.eq.s32.totalorder %s25, 0
    %p288 = por %p286, %p287
    %s290 = sadd.s32 %s289, 1
    %p293 = scmp.eq.s32.totalorder %s19, 1
    %p294 = scmp.ne.s32.totalorder %s289, %s291
    %p295 = scmp.eq.s32.totalorder %s19, 0
    %p296 = por %p294, %p295
    %p297 = scmp.ne.s32.totalorder %s289, %s291
    %p298 = scmp.eq.s32.totalorder %s24, 1
    %p299 = por %p297, %p298
    %p300 = scmp.ne.s32.totalorder %s291, %s292
    %p301 = scmp.eq.s32.totalorder %s24, 0
    %p302 = por %p300, %p301
    %p303 = scmp.ne.s32.totalorder %s291, %s292
    %p304 = scmp.eq.s32.totalorder %s25, 1
    %p305 = por %p303, %p304
    %p307 = scmp.ne.s32.totalorder %s292, %s306
    %p308 = scmp.eq.s32.totalorder %s25, 0
    %p309 = por %p307, %p308
    %s310 = ssub.s32 %s19, %s26
    %p311 = scmp.eq.s32.totalorder %s310, 0
    %s313 = sadd.s32 %s312, 1
    %s314 = scalar_select %p311, %s312, %s313
    %p317 = pneg %p311
    %p318 = scmp.eq.s32.totalorder %s19, 1
    %p319 = por %p317, %p318
    %p320 = scmp.ne.s32.totalorder %s312, %s315
    %p321 = scmp.eq.s32.totalorder %s19, 0
    %p322 = por %p320, %p321
    %p323 = scmp.ne.s32.totalorder %s312, %s315
    %p324 = scmp.eq.s32.totalorder %s24, 1
    %p325 = por %p323, %p324
    %p326 = scmp.ne.s32.totalorder %s315, %s316
    %p327 = scmp.eq.s32.totalorder %s24, 0
    %p328 = por %p326, %p327
    %p329 = scmp.ne.s32.totalorder %s315, %s316
    %p330 = scmp.eq.s32.totalorder %s25, 1
    %p331 = por %p329, %p330
    %p333 = scmp.ne.s32.totalorder %s316, %s332
    %p334 = scmp.eq.s32.totalorder %s25, 0
    %p335 = por %p333, %p334
    %p336 = scmp.le.s32.totalorder 1, %s19
    %p337 = scmp.lt.s32.totalorder %s19, 3
    %p338 = pnand %p336, %p337
    %p339 = pneg %p338
    // Predicated region
    $region9: #{midblock_forward.1} parent=5 // pred_check
      _
    $region10: #{midblock_forward.1} parent=5 // pred_check_branch
      %341 = sbr.rel (%p338) target = $region12
    $region11: #{midblock_forward.1} parent=5 // pred_region
      %s342 = ssub.s32 %s19, 1
      // Predicated region
      $region13: #{midblock_forward.1} parent=11 // pred_check
        %p343 = pneg %p92
      $region14: #{midblock_forward.1} parent=11 // pred_check_branch
        %345 = sbr.rel (%p343) target = $region16
      $region15: #{midblock_forward.1} parent=11 // pred_region
        _
      $region16: #{midblock_forward.1} parent=11 // pred_fallthru
        _
      // Predicated region
      $region17: #{midblock_forward.1} parent=11 // pred_check
        %p346 = pneg %p113
      $region18: #{midblock_forward.1} parent=11 // pred_check_branch
        %348 = sbr.rel (%p346) target = $region20
      $region19: #{midblock_forward.1} parent=11 // pred_region
        _
      $region20: #{midblock_forward.1} parent=11 // pred_fallthru
        _
      // Predicated region
      $region21: #{midblock_forward.1} parent=11 // pred_check
        %p349 = pneg %p134
      $region22: #{midblock_forward.1} parent=11 // pred_check_branch
        %351 = sbr.rel (%p349) target = $region24
      $region23: #{midblock_forward.1} parent=11 // pred_region
        _
      $region24: #{midblock_forward.1} parent=11 // pred_fallthru
        _
      // Predicated region
      $region25: #{midblock_forward.1} parent=11 // pred_check
        %p352 = pneg %p155
      $region26: #{midblock_forward.1} parent=11 // pred_check_branch
        %354 = sbr.rel (%p352) target = $region28
      $region27: #{midblock_forward.1} parent=11 // pred_region
        _
      $region28: #{midblock_forward.1} parent=11 // pred_fallthru
        _
      // Predicated region
      $region29: #{midblock_forward.1} parent=11 // pred_check
        %p355 = pneg %p176
      $region30: #{midblock_forward.1} parent=11 // pred_check_branch
        %357 = sbr.rel (%p355) target = $region32
      $region31: #{midblock_forward.1} parent=11 // pred_region
        _
      $region32: #{midblock_forward.1} parent=11 // pred_fallthru
        _
      // Predicated region
      $region33: #{midblock_forward.1} parent=11 // pred_check
        %p358 = pneg %p197
      $region34: #{midblock_forward.1} parent=11 // pred_check_branch
        %360 = sbr.rel (%p358) target = $region36
      $region35: #{midblock_forward.1} parent=11 // pred_region
        _
      $region36: #{midblock_forward.1} parent=11 // pred_fallthru
        _
      // Predicated region
      $region37: #{midblock_forward.1} parent=11 // pred_check
        %p361 = pneg %p218
      $region38: #{midblock_forward.1} parent=11 // pred_check_branch
        %363 = sbr.rel (%p361) target = $region40
      $region39: #{midblock_forward.1} parent=11 // pred_region
        _
      $region40: #{midblock_forward.1} parent=11 // pred_fallthru
        _
      // Predicated region
      $region41: #{midblock_forward.1} parent=11 // pred_check
        %p364 = pneg %p239
      $region42: #{midblock_forward.1} parent=11 // pred_check_branch
        %366 = sbr.rel (%p364) target = $region44
      $region43: #{midblock_forward.1} parent=11 // pred_region
        _
      $region44: #{midblock_forward.1} parent=11 // pred_fallthru
        _
      // Predicated region
      $region45: #{midblock_forward.1} parent=11 // pred_check
        %p367 = pneg %p260
      $region46: #{midblock_forward.1} parent=11 // pred_check_branch
        %369 = sbr.rel (%p367) target = $region48
      $region47: #{midblock_forward.1} parent=11 // pred_region
        _
      $region48: #{midblock_forward.1} parent=11 // pred_fallthru
        _
      // Predicated region
      $region49: #{midblock_forward.1} parent=11 // pred_check
        %p370 = pneg %p281
      $region50: #{midblock_forward.1} parent=11 // pred_check_branch
        %372 = sbr.rel (%p370) target = $region52
      $region51: #{midblock_forward.1} parent=11 // pred_region
        _
      $region52: #{midblock_forward.1} parent=11 // pred_fallthru
        _
      // Predicated region
      $region53: #{midblock_forward.1} parent=11 // pred_check
        %p373 = pneg %p302
      $region54: #{midblock_forward.1} parent=11 // pred_check_branch
        %375 = sbr.rel (%p373) target = $region56
      $region55: #{midblock_forward.1} parent=11 // pred_region
        _
      $region56: #{midblock_forward.1} parent=11 // pred_fallthru
        _
    $region12: #{midblock_forward.1} parent=5 // pred_fallthru
      _
    %p376 = scmp.lt.s32.totalorder %s19, 2
    // Predicated region
    $region57: #{midblock_forward.1} parent=5 // pred_check
      %p377 = pneg %p376
    $region58: #{midblock_forward.1} parent=5 // pred_check_branch
      %379 = sbr.rel (%p377) target = $region60
    $region59: #{midblock_forward.1} parent=5 // pred_region
      // Predicated region
      $region61: #{midblock_forward.1} parent=59 // pred_check
        %p380 = pneg %p39
      $region62: #{midblock_forward.1} parent=59 // pred_check_branch
        %382 = sbr.rel (%p380) target = $region64
      $region63: #{midblock_forward.1} parent=59 // pred_region
        %p383 = scmp.lt.s32.totalorder %s19, 1
        %s384 = scalar_select %p383, %s19, 1
        %s385 = smul.addr %s384, 2
        %s386 = smul.addr %s385, 8
        %s387 = scalar_lea.vmem %s0, %s386
      $region64: #{midblock_forward.1} parent=59 // pred_fallthru
        _
      // Predicated region
      $region65: #{midblock_forward.1} parent=59 // pred_check
        %p388 = pneg %p65
      $region66: #{midblock_forward.1} parent=59 // pred_check_branch
        %390 = sbr.rel (%p388) target = $region68
      $region67: #{midblock_forward.1} parent=59 // pred_region
        %p391 = scmp.lt.s32.totalorder %s19, 1
        %s392 = scalar_select %p391, %s19, 1
        %s393 = scalar_lea.vmem %s1, %s392
      $region68: #{midblock_forward.1} parent=59 // pred_fallthru
        _
    $region60: #{midblock_forward.1} parent=5 // pred_fallthru
      _
    %p394 = scmp.le.s32.totalorder 1, %s19
    %p395 = scmp.lt.s32.totalorder %s19, 3
    %p396 = pnand %p394, %p395
    %p397 = pneg %p396
    // Predicated region
    $region69: #{midblock_forward.1} parent=5 // pred_check
      _
    $region70: #{midblock_forward.1} parent=5 // pred_check_branch
      %399 = sbr.rel (%p396) target = $region72
    $region71: #{midblock_forward.1} parent=5 // pred_region
      %s400 = ssub.s32 %s19, 1
      %p401 = scmp.lt.s32.totalorder %s24, 1
      %s402 = scalar_select %p401, %s24, 1
      %s403 = smul.addr %s402, 2
      %s404 = smul.addr %s403, 8
      %s405 = scalar_lea.vmem %s0, %s404
      %p406 = pneg %p45
      %p407 = pneg %p42
      %p408 = scmp.lt.s32.totalorder %s24, 1
      %s409 = scalar_select %p408, %s24, 1
      %s410 = scalar_lea.vmem %s1, %s409
      %p411 = pneg %p71
      %p412 = pneg %p68
      %p413 = pneg %p92
      %p414 = pneg %p89
      %p415 = pneg %p113
      %p416 = pneg %p110
      %p417 = pneg %p134
      %p418 = pneg %p131
      %p419 = pneg %p155
      %p420 = pneg %p152
      %p421 = pneg %p176
      %p422 = pneg %p173
      %p423 = pneg %p197
      %p424 = pneg %p194
      %p425 = pneg %p218
      %p426 = pneg %p215
      %p427 = pneg %p239
      %p428 = pneg %p236
      %p429 = pneg %p260
      %p430 = pneg %p257
      %p431 = pneg %p281
      %p432 = pneg %p278
      %p433 = pneg %p302
      %p434 = pneg %p299
      %p435 = pneg %p328
      %p436 = pneg %p325
      %p437 = scmp.lt.s32.totalorder %s24, 1
      %s438 = scalar_select %p437, %s24, 1
      %s439 = smul.addr %s438, 2
      %s440 = smul.addr %s439, 8
      %s441 = scalar_lea.vmem %s13, %s440
      %p442 = scmp.lt.s32.totalorder %s24, 1
      %s443 = scalar_select %p442, %s24, 1
      %s444 = smul.addr %s443, 2
      %s445 = smul.addr %s444, 8
      %s446 = scalar_lea.vmem %s0, %s445
      %p447 = scmp.lt.s32.totalorder %s24, 1
      %s448 = scalar_select %p447, %s24, 1
      %s449 = scalar_lea.vmem %s1, %s448
      %p450 = scmp.lt.s32.totalorder %s24, 1
      %s451 = scalar_select %p450, %s24, 1
      %s452 = smul.addr %s451, 2
      %s453 = smul.addr %s452, 8
      %s454 = scalar_lea.vmem %s13, %s453
      %v456 = vld [vmem:[%s6] sm:$0xff]
      %v457 = vld [vmem:[%s6 + $0x8] sm:$0xff]
      %v458 = vld [vmem:[%s4] sm:$0x1f]
      %v459 = vld [vmem:[%s5] sm:$0x1f]
      %v460 = vld [vmem:[%s3] sm:$0xf]
      %v461 = vld [vmem:[%s11] sm:$0xf]
      %v462 = vld [vmem:[%s11 + $0x4] sm:$0xf]
      %v463 = vld [vmem:[%s12] sm:$0x1]
      %v464 = vlaneseq
      %v465 = vshrl.u32 %v464, 7
      %v466 = vadd.s32 %v465, 8
      %v467 = vadd.s32 %v465, 16
      %v468 = vadd.s32 %v465, 24
      %v469 = vadd.s32 %v465, 32
      %v470 = vadd.s32 %v465, 40
      %v471 = vadd.s32 %v465, 48
      %v472 = vadd.s32 %v465, 56
      %vm473 = vcmp.lt.s32.totalorder %v465, 0
      %v474 = vsub.s32 0, %v465
      %v475 = vsel %vm473, %v474, %v465
      %v476 = vshrl.u32 %v475, 3
      %v477 = vand.u32 %v475, 7
      %v478 = vsub.s32 0, %v477
      %v479 = vsel %vm473, %v478, %v477
      %vm480 = vcmp.lt.s32.totalorder %v466, 0
      %v481 = vsub.s32 0, %v466
      %v482 = vsel %vm480, %v481, %v466
      %v483 = vshrl.u32 %v482, 3
      %v484 = vand.u32 %v482, 7
      %v485 = vsub.s32 0, %v484
      %v486 = vsel %vm480, %v485, %v484
      %vm487 = vcmp.lt.s32.totalorder %v467, 0
      %v488 = vsub.s32 0, %v467
      %v489 = vsel %vm487, %v488, %v467
      %v490 = vshrl.u32 %v489, 3
      %v491 = vand.u32 %v489, 7
      %v492 = vsub.s32 0, %v491
      %v493 = vsel %vm487, %v492, %v491
      %vm494 = vcmp.lt.s32.totalorder %v468, 0
      %v495 = vsub.s32 0, %v468
      %v496 = vsel %vm494, %v495, %v468
      %v497 = vshrl.u32 %v496, 3
      %v498 = vand.u32 %v496, 7
      %v499 = vsub.s32 0, %v498
      %v500 = vsel %vm494, %v499, %v498
      %vm501 = vcmp.lt.s32.totalorder %v469, 0
      %v502 = vsub.s32 0, %v469
      %v503 = vsel %vm501, %v502, %v469
      %v504 = vshrl.u32 %v503, 3
      %v505 = vand.u32 %v503, 7
      %v506 = vsub.s32 0, %v505
      %v507 = vsel %vm501, %v506, %v505
      %vm508 = vcmp.lt.s32.totalorder %v470, 0
      %v509 = vsub.s32 0, %v470
      %v510 = vsel %vm508, %v509, %v470
      %v511 = vshrl.u32 %v510, 3
      %v512 = vand.u32 %v510, 7
      %v513 = vsub.s32 0, %v512
      %v514 = vsel %vm508, %v513, %v512
      %vm515 = vcmp.lt.s32.totalorder %v471, 0
      %v516 = vsub.s32 0, %v471
      %v517 = vsel %vm515, %v516, %v471
      %v518 = vshrl.u32 %v517, 3
      %v519 = vand.u32 %v517, 7
      %v520 = vsub.s32 0, %v519
      %v521 = vsel %vm515, %v520, %v519
      %vm522 = vcmp.lt.s32.totalorder %v472, 0
      %v523 = vsub.s32 0, %v472
      %v524 = vsel %vm522, %v523, %v472
      %v525 = vshrl.u32 %v524, 3
      %v526 = vand.u32 %v524, 7
      %v527 = vsub.s32 0, %v526
      %v528 = vsel %vm522, %v527, %v526
      %vm529 = vcmp.ne.s32.totalorder %v479, 0
      %vm530 = vcmp.ne.s32.totalorder %v486, 0
      %vm531 = vcmp.ne.s32.totalorder %v493, 0
      %vm532 = vcmp.ne.s32.totalorder %v500, 0
      %vm533 = vcmp.ne.s32.totalorder %v507, 0
      %vm534 = vcmp.ne.s32.totalorder %v514, 0
      %vm535 = vcmp.ne.s32.totalorder %v521, 0
      %vm536 = vcmp.ne.s32.totalorder %v528, 0
      %vm537 = vcmp.lt.s32.totalorder %v479, 0
      %vm538 = vcmp.lt.s32.totalorder %v486, 0
      %vm539 = vcmp.lt.s32.totalorder %v493, 0
      %vm540 = vcmp.lt.s32.totalorder %v500, 0
      %vm541 = vcmp.lt.s32.totalorder %v507, 0
      %vm542 = vcmp.lt.s32.totalorder %v514, 0
      %vm543 = vcmp.lt.s32.totalorder %v521, 0
      %vm544 = vcmp.lt.s32.totalorder %v528, 0
      %vm545 = vmand %vm537, %vm529
      %vm546 = vmand %vm538, %vm530
      %vm547 = vmand %vm539, %vm531
      %vm548 = vmand %vm540, %vm532
      %vm549 = vmand %vm541, %vm533
      %vm550 = vmand %vm542, %vm534
      %vm551 = vmand %vm543, %vm535
      %vm552 = vmand %vm544, %vm536
      %v553 = vadd.s32 %v479, 8
      %v554 = vadd.s32 %v486, 8
      %v555 = vadd.s32 %v493, 8
      %v556 = vadd.s32 %v500, 8
      %v557 = vadd.s32 %v507, 8
      %v558 = vadd.s32 %v514, 8
      %v559 = vadd.s32 %v521, 8
      %v560 = vadd.s32 %v528, 8
      %v561 = vsel %vm545, %v553, %v479
      %v562 = vsel %vm546, %v554, %v486
      %v563 = vsel %vm547, %v555, %v493
      %v564 = vsel %vm548, %v556, %v500
      %v565 = vsel %vm549, %v557, %v507
      %v566 = vsel %vm550, %v558, %v514
      %v567 = vsel %vm551, %v559, %v521
      %v568 = vsel %vm552, %v560, %v528
      %vm569 = vcmp.ge.s32.totalorder %v561, 1
      %vm570 = vcmp.ge.s32.totalorder %v562, 1
      %vm571 = vcmp.ge.s32.totalorder %v563, 1
      %vm572 = vcmp.ge.s32.totalorder %v564, 1
      %vm573 = vcmp.ge.s32.totalorder %v565, 1
      %vm574 = vcmp.ge.s32.totalorder %v566, 1
      %vm575 = vcmp.ge.s32.totalorder %v567, 1
      %vm576 = vcmp.ge.s32.totalorder %v568, 1
      %vm577 = vcmp.le.s32.totalorder %v561, 6
      %vm578 = vcmp.le.s32.totalorder %v562, 6
      %vm579 = vcmp.le.s32.totalorder %v563, 6
      %vm580 = vcmp.le.s32.totalorder %v564, 6
      %vm581 = vcmp.le.s32.totalorder %v565, 6
      %vm582 = vcmp.le.s32.totalorder %v566, 6
      %vm583 = vcmp.le.s32.totalorder %v567, 6
      %vm584 = vcmp.le.s32.totalorder %v568, 6
      %v585 = vld [vmem:[%s449] sm:$0x1]
      %v586 = vsub.f32 0.0, %v585
      %v587 = vmul.f32 %v586, 1.442695
      %v588 = vpow.pop %v587
      %v589 = vadd.f32 %v588, 1.0
      %v590 = vrcp.pop %v589
      %v591 = vmul.f32 %v585, %v590
      %v592 = vpack.c.bf16 %v591, %v591
      %v593 = vld [vmem:[%s7] sm:$0xf]
      %v594 = vld [vmem:[%s7 + $0x4] sm:$0xf]
      %v595 = vld [vmem:[%s7 + $0x8] sm:$0xf]
      %v596 = vld [vmem:[%s7 + $0xc] sm:$0xf]
      %v597 = vld [vmem:[%s8] sm:$0x1]
      %v602 = vunpack.c.l.b16 %v593
      %v603 = vunpack.c.l.b16 %v594
      %v604 = vunpack.c.l.b16 %v595
      %v605 = vunpack.c.l.b16 %v596
      %v606 = vpack.c.b16 %v603, %v602
      %v607 = vpack.c.b16 %v605, %v604
      %vm610 = vcmask 261120
      %v612 = vsel %vm610, %v592, 0
      %614 = vmatprep.subr.bf16.mxu0 0
      %615 = vmatpush1.bf16.msra.mxu0 %v606
      %616 = vmatprep.subr.bf16.mxu0 0
      %617 = vmatpush1.bf16.msra.mxu0 %v607
      %618 = vmatprep.subr.bf16.mxu0 0
      %619 = vmatpush1.bf16.msra.mxu0 0
      %620 = vmatprep.subr.bf16.mxu0 0
      %621 = vmatpush1.bf16.msra.mxu0 0
      %622 = vmatprep.subr.bf16.mxu0 0
      %623 = vmatpush1.bf16.msra.mxu0 0
      %624 = vmatprep.subr.bf16.mxu0 0
      %625 = vmatpush1.bf16.msra.mxu0 0
      %626 = vmatprep.subr.bf16.mxu0 0
      %627 = vmatpush1.bf16.msra.mxu0 0
      %628 = vmatprep.subr.bf16.mxu0 0
      %629 = vmatpush1.bf16.msra.mxu0 0
      %630 = vmatprep.subr.bf16.mxu0 0
      %631 = vmatpush1.bf16.msra.mxu0 0
      %632 = vmatprep.subr.bf16.mxu0 0
      %633 = vmatpush1.bf16.msra.mxu0 0
      %634 = vmatprep.subr.bf16.mxu0 0
      %635 = vmatpush1.bf16.msra.mxu0 0
      %636 = vmatprep.subr.bf16.mxu0 0
      %637 = vmatpush1.bf16.msra.mxu0 0
      %638 = vmatprep.subr.bf16.mxu0 0
      %639 = vmatpush1.bf16.msra.mxu0 0
      %640 = vmatprep.subr.bf16.mxu0 0
      %641 = vmatpush1.bf16.msra.mxu0 0
      %642 = vmatprep.subr.bf16.mxu0 0
      %643 = vmatpush1.bf16.msra.mxu0 0
      %644 = vmatprep.subr.bf16.mxu0 0
      %645 = vmatpush1.bf16.msra.mxu0 0
      %646 = vmatprep.mubr.bf16.mxu0 0
      %647 = vmatmul.mubr.bf16.gmra.mrb[0].mxu0 %v612
      %v648 = vpop.f32.mrb[0].mxu0
      %v649 = vadd.f32 %v597, %v648
      %v650 = vpop.f32.mrb[0].mxu0
      %v651 = vpop.f32.mrb[0].mxu0
      %v652 = vpop.f32.mrb[0].mxu0
      %653 = vdwg.mxu0
      %v654 = vld [vmem:[%s446] sm:$0xff]
      %v655 = vld [vmem:[%s446 + $0x8] sm:$0xff]
      %656 = vxpose.xlu0.b32.start [1/16] %v654, 128
      %657 = vxpose.xlu0.b32.cont [2/16] %v655, 128
      %658 = vxpose.xlu0.b32.cont [3/16] 0.0, 128
      %659 = vxpose.xlu0.b32.cont [4/16] 0.0, 128
      %660 = vxpose.xlu0.b32.cont [5/16] 0.0, 128
      %661 = vxpose.xlu0.b32.cont [6/16] 0.0, 128
      %662 = vxpose.xlu0.b32.cont [7/16] 0.0, 128
      %663 = vxpose.xlu0.b32.cont [8/16] 0.0, 128
      %664 = vxpose.xlu0.b32.cont [9/16] 0.0, 128
      %665 = vxpose.xlu0.b32.cont [10/16] 0.0, 128
      %666 = vxpose.xlu0.b32.cont [11/16] 0.0, 128
      %667 = vxpose.xlu0.b32.cont [12/16] 0.0, 128
      %668 = vxpose.xlu0.b32.cont [13/16] 0.0, 128
      %669 = vxpose.xlu0.b32.cont [14/16] 0.0, 128
      %670 = vxpose.xlu0.b32.cont [15/16] 0.0, 128
      %671 = vxpose.xlu0.b32.end [16/16] 0.0, 128
      %v672 = vpop.trf.xlu0
      %v673 = vpop.trf.xlu0
      %v674 = vpop.trf.xlu0
      %v675 = vpop.trf.xlu0
      %v676 = vpop.trf.xlu0
      %v677 = vpop.trf.xlu0
      %v678 = vpop.trf.xlu0
      %v679 = vpop.trf.xlu0
      %v680 = vpop.trf.xlu0
      %v681 = vpop.trf.xlu0
      %v682 = vpop.trf.xlu0
      %v683 = vpop.trf.xlu0
      %v684 = vpop.trf.xlu0
      %v685 = vpop.trf.xlu0
      %v686 = vpop.trf.xlu0
      %v687 = vpop.trf.xlu0
      %v688 = vld [vmem:[%s2] sm:$0xf]
      %v689 = vld [vmem:[%s2 + $0x4] sm:$0xf]
      %v690 = vld [vmem:[%s2 + $0x8] sm:$0xf]
      %v691 = vld [vmem:[%s2 + $0xc] sm:$0xf]
      %v692 = vld [vmem:[%s2 + $0x10] sm:$0xf]
      %v693 = vld [vmem:[%s2 + $0x14] sm:$0xf]
      %v694 = vld [vmem:[%s2 + $0x18] sm:$0xf]
      %v695 = vld [vmem:[%s2 + $0x1c] sm:$0xf]
      %v696 = vld [vmem:[%s2 + $0x20] sm:$0xf]
      %v697 = vld [vmem:[%s2 + $0x24] sm:$0xf]
      %v698 = vld [vmem:[%s2 + $0x28] sm:$0xf]
      %v699 = vld [vmem:[%s2 + $0x2c] sm:$0xf]
      %v700 = vld [vmem:[%s2 + $0x30] sm:$0xf]
      %v701 = vld [vmem:[%s2 + $0x34] sm:$0xf]
      %v702 = vld [vmem:[%s2 + $0x38] sm:$0xf]
      %v703 = vld [vmem:[%s2 + $0x3c] sm:$0xf]
      %v704 = vld [vmem:[%s2 + $0x40] sm:$0xf]
      %v705 = vld [vmem:[%s2 + $0x44] sm:$0xf]
      %v706 = vsel %vm569, 1, 0
      %v707 = vsel %vm570, 1, 0
      %v708 = vsel %vm571, 1, 0
      %v709 = vsel %vm572, 1, 0
      %v710 = vsel %vm573, 1, 0
      %v711 = vsel %vm574, 1, 0
      %v712 = vsel %vm575, 1, 0
      %v713 = vsel %vm576, 1, 0
      %vm714 = vcmp.eq.s32.totalorder %v706, 1
      %vm715 = vcmp.eq.s32.totalorder %v707, 1
      %vm716 = vcmp.eq.s32.totalorder %v708, 1
      %vm717 = vcmp.eq.s32.totalorder %v709, 1
      %vm718 = vcmp.eq.s32.totalorder %v710, 1
      %vm719 = vcmp.eq.s32.totalorder %v711, 1
      %vm720 = vcmp.eq.s32.totalorder %v712, 1
      %vm721 = vcmp.eq.s32.totalorder %v713, 1
      %vm730 = vcmask 1040384
      %v731 = vrot.slane 0.0, 7
      %v732 = vsel %vm730, %v731, %v731
      %v733 = vrot.slane %v672, 7
      %v734 = vsel %vm730, %v731, %v733
      %v735 = vrot.slane %v673, 7
      %v736 = vsel %vm730, %v733, %v735
      %v737 = vrot.slane %v674, 7
      %v738 = vsel %vm730, %v735, %v737
      %v739 = vrot.slane %v675, 7
      %v740 = vsel %vm730, %v737, %v739
      %v741 = vrot.slane %v676, 7
      %v742 = vsel %vm730, %v739, %v741
      %v743 = vrot.slane %v677, 7
      %v744 = vsel %vm730, %v741, %v743
      %v745 = vrot.slane %v678, 7
      %v746 = vsel %vm730, %v743, %v745
      %v755 = vsel %vm714, %v732, 0.0
      %v756 = vsel %vm715, %v734, 0.0
      %v757 = vsel %vm716, %v736, 0.0
      %v758 = vsel %vm717, %v738, 0.0
      %v759 = vsel %vm718, %v740, 0.0
      %v760 = vsel %vm719, %v742, 0.0
      %v761 = vsel %vm720, %v744, 0.0
      %v762 = vsel %vm721, %v746, 0.0
      %v763 = vsel %vm577, 1, 0
      %v764 = vsel %vm578, 1, 0
      %v765 = vsel %vm579, 1, 0
      %v766 = vsel %vm580, 1, 0
      %v767 = vsel %vm581, 1, 0
      %v768 = vsel %vm582, 1, 0
      %v769 = vsel %vm583, 1, 0
      %v770 = vsel %vm584, 1, 0
      %vm771 = vcmp.eq.s32.totalorder %v763, 1
      %vm772 = vcmp.eq.s32.totalorder %v764, 1
      %vm773 = vcmp.eq.s32.totalorder %v765, 1
      %vm774 = vcmp.eq.s32.totalorder %v766, 1
      %vm775 = vcmp.eq.s32.totalorder %v767, 1
      %vm776 = vcmp.eq.s32.totalorder %v768, 1
      %vm777 = vcmp.eq.s32.totalorder %v769, 1
      %vm778 = vcmp.eq.s32.totalorder %v770, 1
      %vm780 = vcmask 1046528
      %v781 = vrot.slane 0.0, 1
      %v782 = vrot.slane %v672, 1
      %v783 = vsel %vm780, %v781, %v782
      %v784 = vrot.slane %v673, 1
      %v785 = vsel %vm780, %v782, %v784
      %v786 = vrot.slane %v674, 1
      %v787 = vsel %vm780, %v784, %v786
      %v788 = vrot.slane %v675, 1
      %v789 = vsel %vm780, %v786, %v788
      %v790 = vrot.slane %v676, 1
      %v791 = vsel %vm780, %v788, %v790
      %v792 = vrot.slane %v677, 1
      %v793 = vsel %vm780, %v790, %v792
      %v794 = vrot.slane %v678, 1
      %v795 = vsel %vm780, %v792, %v794
      %v796 = vrot.slane %v679, 1
      %v797 = vsel %vm780, %v794, %v796
      %v806 = vsel %vm771, %v783, 0.0
      %v807 = vsel %vm772, %v785, 0.0
      %v808 = vsel %vm773, %v787, 0.0
      %v809 = vsel %vm774, %v789, 0.0
      %v810 = vsel %vm775, %v791, 0.0
      %v811 = vsel %vm776, %v793, 0.0
      %v812 = vsel %vm777, %v795, 0.0
      %v813 = vsel %vm778, %v797, 0.0
      %v814 = vrot.slane %v679, 7
      %v815 = vsel %vm730, %v745, %v814
      %v817 = vsel %vm714, %v734, 0.0
      %v818 = vsel %vm715, %v736, 0.0
      %v819 = vsel %vm716, %v738, 0.0
      %v820 = vsel %vm717, %v740, 0.0
      %v821 = vsel %vm718, %v742, 0.0
      %v822 = vsel %vm719, %v744, 0.0
      %v823 = vsel %vm720, %v746, 0.0
      %v824 = vsel %vm721, %v815, 0.0
      %v825 = vsel %vm780, %v796, %v781
      %v827 = vsel %vm771, %v785, 0.0
      %v828 = vsel %vm772, %v787, 0.0
      %v829 = vsel %vm773, %v789, 0.0
      %v830 = vsel %vm774, %v791, 0.0
      %v831 = vsel %vm775, %v793, 0.0
      %v832 = vsel %vm776, %v795, 0.0
      %v833 = vsel %vm777, %v797, 0.0
      %v834 = vsel %vm778, %v825, 0.0
      %v835 = vsel %vm730, %v814, %v731
      %v837 = vsel %vm714, %v736, 0.0
      %v838 = vsel %vm715, %v738, 0.0
      %v839 = vsel %vm716, %v740, 0.0
      %v840 = vsel %vm717, %v742, 0.0
      %v841 = vsel %vm718, %v744, 0.0
      %v842 = vsel %vm719, %v746, 0.0
      %v843 = vsel %vm720, %v815, 0.0
      %v844 = vsel %vm721, %v835, 0.0
      %v845 = vsel %vm780, %v781, %v781
      %v847 = vsel %vm771, %v787, 0.0
      %v848 = vsel %vm772, %v789, 0.0
      %v849 = vsel %vm773, %v791, 0.0
      %v850 = vsel %vm774, %v793, 0.0
      %v851 = vsel %vm775, %v795, 0.0
      %v852 = vsel %vm776, %v797, 0.0
      %v853 = vsel %vm777, %v825, 0.0
      %v854 = vsel %vm778, %v845, 0.0
      %855 = vrot.lane.b32.xlu0 0.0, 16
      %v856 = vpop.permute.xlu0 %855
      %857 = vrot.lane.b32.xlu0 %v672, 16
      %v858 = vpop.permute.xlu0 %857
      %859 = vrot.lane.b32.xlu0 %v673, 16
      %v860 = vpop.permute.xlu0 %859
      %861 = vrot.lane.b32.xlu0 %v674, 16
      %v862 = vpop.permute.xlu0 %861
      %863 = vrot.lane.b32.xlu0 %v675, 16
      %v864 = vpop.permute.xlu0 %863
      %865 = vrot.lane.b32.xlu0 %v676, 16
      %v866 = vpop.permute.xlu0 %865
      %867 = vrot.lane.b32.xlu0 %v677, 16
      %v868 = vpop.permute.xlu0 %867
      %869 = vrot.lane.b32.xlu0 %v678, 16
      %v870 = vpop.permute.xlu0 %869
      %887 = vrot.lane.b32.xlu0 %v806, 32
      %v888 = vpop.permute.xlu0 %887
      %889 = vrot.lane.b32.xlu0 %v807, 32
      %v890 = vpop.permute.xlu0 %889
      %891 = vrot.lane.b32.xlu0 %v808, 32
      %v892 = vpop.permute.xlu0 %891
      %893 = vrot.lane.b32.xlu0 %v809, 32
      %v894 = vpop.permute.xlu0 %893
      %895 = vrot.lane.b32.xlu0 %v810, 32
      %v896 = vpop.permute.xlu0 %895
      %897 = vrot.lane.b32.xlu0 %v811, 32
      %v898 = vpop.permute.xlu0 %897
      %899 = vrot.lane.b32.xlu0 %v812, 32
      %v900 = vpop.permute.xlu0 %899
      %901 = vrot.lane.b32.xlu0 %v813, 32
      %v902 = vpop.permute.xlu0 %901
      %919 = vrot.lane.b32.xlu0 %v817, 48
      %v920 = vpop.permute.xlu0 %919
      %921 = vrot.lane.b32.xlu0 %v818, 48
      %v922 = vpop.permute.xlu0 %921
      %923 = vrot.lane.b32.xlu0 %v819, 48
      %v924 = vpop.permute.xlu0 %923
      %925 = vrot.lane.b32.xlu0 %v820, 48
      %v926 = vpop.permute.xlu0 %925
      %927 = vrot.lane.b32.xlu0 %v821, 48
      %v928 = vpop.permute.xlu0 %927
      %929 = vrot.lane.b32.xlu0 %v822, 48
      %v930 = vpop.permute.xlu0 %929
      %931 = vrot.lane.b32.xlu0 %v823, 48
      %v932 = vpop.permute.xlu0 %931
      %933 = vrot.lane.b32.xlu0 %v824, 48
      %v934 = vpop.permute.xlu0 %933
      %943 = vrot.lane.b32.xlu0 %v672, 64
      %v944 = vpop.permute.xlu0 %943
      %945 = vrot.lane.b32.xlu0 %v673, 64
      %v946 = vpop.permute.xlu0 %945
      %947 = vrot.lane.b32.xlu0 %v674, 64
      %v948 = vpop.permute.xlu0 %947
      %949 = vrot.lane.b32.xlu0 %v675, 64
      %v950 = vpop.permute.xlu0 %949
      %951 = vrot.lane.b32.xlu0 %v676, 64
      %v952 = vpop.permute.xlu0 %951
      %953 = vrot.lane.b32.xlu0 %v677, 64
      %v954 = vpop.permute.xlu0 %953
      %955 = vrot.lane.b32.xlu0 %v678, 64
      %v956 = vpop.permute.xlu0 %955
      %957 = vrot.lane.b32.xlu0 %v679, 64
      %v958 = vpop.permute.xlu0 %957
      %975 = vrot.lane.b32.xlu0 %v827, 80
      %v976 = vpop.permute.xlu0 %975
      %977 = vrot.lane.b32.xlu0 %v828, 80
      %v978 = vpop.permute.xlu0 %977
      %979 = vrot.lane.b32.xlu0 %v829, 80
      %v980 = vpop.permute.xlu0 %979
      %981 = vrot.lane.b32.xlu0 %v830, 80
      %v982 = vpop.permute.xlu0 %981
      %983 = vrot.lane.b32.xlu0 %v831, 80
      %v984 = vpop.permute.xlu0 %983
      %985 = vrot.lane.b32.xlu0 %v832, 80
      %v986 = vpop.permute.xlu0 %985
      %987 = vrot.lane.b32.xlu0 %v833, 80
      %v988 = vpop.permute.xlu0 %987
      %989 = vrot.lane.b32.xlu0 %v834, 80
      %v990 = vpop.permute.xlu0 %989
      %1007 = vrot.lane.b32.xlu0 %v837, 96
      %v1008 = vpop.permute.xlu0 %1007
      %1009 = vrot.lane.b32.xlu0 %v838, 96
      %v1010 = vpop.permute.xlu0 %1009
      %1011 = vrot.lane.b32.xlu0 %v839, 96
      %v1012 = vpop.permute.xlu0 %1011
      %1013 = vrot.lane.b32.xlu0 %v840, 96
      %v1014 = vpop.permute.xlu0 %1013
      %1015 = vrot.lane.b32.xlu0 %v841, 96
      %v1016 = vpop.permute.xlu0 %1015
      %1017 = vrot.lane.b32.xlu0 %v842, 96
      %v1018 = vpop.permute.xlu0 %1017
      %1019 = vrot.lane.b32.xlu0 %v843, 96
      %v1020 = vpop.permute.xlu0 %1019
      %1021 = vrot.lane.b32.xlu0 %v844, 96
      %v1022 = vpop.permute.xlu0 %1021
      %1031 = vrot.lane.b32.xlu0 %v673, 112
      %v1032 = vpop.permute.xlu0 %1031
      %1033 = vrot.lane.b32.xlu0 %v674, 112
      %v1034 = vpop.permute.xlu0 %1033
      %1035 = vrot.lane.b32.xlu0 %v675, 112
      %v1036 = vpop.permute.xlu0 %1035
      %1037 = vrot.lane.b32.xlu0 %v676, 112
      %v1038 = vpop.permute.xlu0 %1037
      %1039 = vrot.lane.b32.xlu0 %v677, 112
      %v1040 = vpop.permute.xlu0 %1039
      %1041 = vrot.lane.b32.xlu0 %v678, 112
      %v1042 = vpop.permute.xlu0 %1041
      %1043 = vrot.lane.b32.xlu0 %v679, 112
      %v1044 = vpop.permute.xlu0 %1043
      %1045 = vrot.lane.b32.xlu0 0.0, 112
      %v1046 = vpop.permute.xlu0 %1045
      %vm1055 = vcmask 130048
      %v1056 = vsel %vm1055, %v755, %v856
      %v1057 = vsel %vm1055, %v756, %v858
      %v1058 = vsel %vm1055, %v757, %v860
      %v1059 = vsel %vm1055, %v758, %v862
      %v1060 = vsel %vm1055, %v759, %v864
      %v1061 = vsel %vm1055, %v760, %v866
      %v1062 = vsel %vm1055, %v761, %v868
      %v1063 = vsel %vm1055, %v762, %v870
      %v1064 = vsel %vm610, %v1056, %v888
      %v1065 = vsel %vm610, %v1057, %v890
      %v1066 = vsel %vm610, %v1058, %v892
      %v1067 = vsel %vm610, %v1059, %v894
      %v1068 = vsel %vm610, %v1060, %v896
      %v1069 = vsel %vm610, %v1061, %v898
      %v1070 = vsel %vm610, %v1062, %v900
      %v1071 = vsel %vm610, %v1063, %v902
      %vm1072 = vcmask 392192
      %v1073 = vsel %vm1072, %v1064, %v920
      %v1074 = vsel %vm1072, %v1065, %v922
      %v1075 = vsel %vm1072, %v1066, %v924
      %v1076 = vsel %vm1072, %v1067, %v926
      %v1077 = vsel %vm1072, %v1068, %v928
      %v1078 = vsel %vm1072, %v1069, %v930
      %v1079 = vsel %vm1072, %v1070, %v932
      %v1080 = vsel %vm1072, %v1071, %v934
      %vm1081 = vcmask 523264
      %v1082 = vsel %vm1081, %v1073, %v944
      %v1083 = vsel %vm1081, %v1074, %v946
      %v1084 = vsel %vm1081, %v1075, %v948
      %v1085 = vsel %vm1081, %v1076, %v950
      %v1086 = vsel %vm1081, %v1077, %v952
      %v1087 = vsel %vm1081, %v1078, %v954
      %v1088 = vsel %vm1081, %v1079, %v956
      %v1089 = vsel %vm1081, %v1080, %v958
      %vm1090 = vcmask 654336
      %v1091 = vsel %vm1090, %v1082, %v976
      %v1092 = vsel %vm1090, %v1083, %v978
      %v1093 = vsel %vm1090, %v1084, %v980
      %v1094 = vsel %vm1090, %v1085, %v982
      %v1095 = vsel %vm1090, %v1086, %v984
      %v1096 = vsel %vm1090, %v1087, %v986
      %v1097 = vsel %vm1090, %v1088, %v988
      %v1098 = vsel %vm1090, %v1089, %v990
      %vm1099 = vcmask 785408
      %v1100 = vsel %vm1099, %v1091, %v1008
      %v1101 = vsel %vm1099, %v1092, %v1010
      %v1102 = vsel %vm1099, %v1093, %v1012
      %v1103 = vsel %vm1099, %v1094, %v1014
      %v1104 = vsel %vm1099, %v1095, %v1016
      %v1105 = vsel %vm1099, %v1096, %v1018
      %v1106 = vsel %vm1099, %v1097, %v1020
      %v1107 = vsel %vm1099, %v1098, %v1022
      %vm1108 = vcmask 916480
      %v1109 = vsel %vm1108, %v1100, %v1032
      %v1110 = vsel %vm1108, %v1101, %v1034
      %v1111 = vsel %vm1108, %v1102, %v1036
      %v1112 = vsel %vm1108, %v1103, %v1038
      %v1113 = vsel %vm1108, %v1104, %v1040
      %v1114 = vsel %vm1108, %v1105, %v1042
      %v1115 = vsel %vm1108, %v1106, %v1044
      %v1116 = vsel %vm1108, %v1107, %v1046
      %v1117 = vpack.c.bf16 %v1110, %v1109
      %v1118 = vpack.c.bf16 %v848, %v847
      %v1119 = vpack.c.bf16 %v1112, %v1111
      %v1120 = vpack.c.bf16 %v850, %v849
      %v1121 = vpack.c.bf16 %v1114, %v1113
      %v1122 = vpack.c.bf16 %v852, %v851
      %v1123 = vpack.c.bf16 %v1116, %v1115
      %v1124 = vpack.c.bf16 %v854, %v853
      %v1125 = vlaneseq
      %v1126 = vshrl.u32 %v1125, 7
      %v1127 = vsub.s32 0, %v1126
      %v1128 = vrot.slane %v460, %v1127
      %v1147 = vunpack.c.l.b16 %v688
      %v1148 = vunpack.c.l.b16 %v689
      %v1149 = vunpack.c.l.b16 %v690
      %v1150 = vunpack.c.l.b16 %v691
      %v1151 = vunpack.c.l.b16 %v692
      %v1152 = vunpack.c.l.b16 %v693
      %v1153 = vunpack.c.l.b16 %v694
      %v1154 = vunpack.c.l.b16 %v695
      %v1155 = vunpack.c.l.b16 %v696
      %v1156 = vunpack.c.l.b16 %v697
      %v1157 = vunpack.c.l.b16 %v698
      %v1158 = vunpack.c.l.b16 %v699
      %v1159 = vunpack.c.l.b16 %v700
      %v1160 = vunpack.c.l.b16 %v701
      %v1161 = vunpack.c.l.b16 %v702
      %v1162 = vunpack.c.l.b16 %v703
      %v1163 = vunpack.c.l.b16 %v704
      %v1164 = vunpack.c.l.b16 %v705
      %v1165 = vpack.c.b16 %v1148, %v1147
      %v1166 = vpack.c.b16 %v1150, %v1149
      %v1167 = vpack.c.b16 %v1152, %v1151
      %v1168 = vpack.c.b16 %v1154, %v1153
      %v1169 = vpack.c.b16 %v1156, %v1155
      %v1170 = vpack.c.b16 %v1158, %v1157
      %v1171 = vpack.c.b16 %v1160, %v1159
      %v1172 = vpack.c.b16 %v1162, %v1161
      %v1173 = vpack.c.b16 %v1164, %v1163
      %v1184 = vsel %vm1055, %v1118, 0
      %v1187 = vsel %vm1055, %v1120, 0
      %v1190 = vsel %vm1055, %v1122, 0
      %v1193 = vsel %vm1055, %v1124, 0
      %1195 = vmatprep.subr.bf16.mxu0 0
      %1196 = vmatpush1.bf16.msra.mxu0 %v1165
      %1197 = vmatprep.subr.bf16.mxu0 0
      %1198 = vmatpush1.bf16.msra.mxu0 %v1166
      %1199 = vmatprep.subr.bf16.mxu0 0
      %1200 = vmatpush1.bf16.msra.mxu0 %v1167
      %1201 = vmatprep.subr.bf16.mxu0 0
      %1202 = vmatpush1.bf16.msra.mxu0 %v1168
      %1203 = vmatprep.subr.bf16.mxu0 0
      %1204 = vmatpush1.bf16.msra.mxu0 %v1169
      %1205 = vmatprep.subr.bf16.mxu0 0
      %1206 = vmatpush1.bf16.msra.mxu0 %v1170
      %1207 = vmatprep.subr.bf16.mxu0 0
      %1208 = vmatpush1.bf16.msra.mxu0 %v1171
      %1209 = vmatprep.subr.bf16.mxu0 0
      %1210 = vmatpush1.bf16.msra.mxu0 %v1172
      %1211 = vmatprep.subr.bf16.mxu0 0
      %1212 = vmatpush1.bf16.msra.mxu0 %v1173
      %1213 = vmatprep.subr.bf16.mxu0 0
      %1214 = vmatpush1.bf16.msra.mxu0 0
      %1215 = vmatprep.subr.bf16.mxu0 0
      %1216 = vmatpush1.bf16.msra.mxu0 0
      %1217 = vmatprep.subr.bf16.mxu0 0
      %1218 = vmatpush1.bf16.msra.mxu0 0
      %1219 = vmatprep.subr.bf16.mxu0 0
      %1220 = vmatpush1.bf16.msra.mxu0 0
      %1221 = vmatprep.subr.bf16.mxu0 0
      %1222 = vmatpush1.bf16.msra.mxu0 0
      %1223 = vmatprep.subr.bf16.mxu0 0
      %1224 = vmatpush1.bf16.msra.mxu0 0
      %1225 = vmatprep.subr.bf16.mxu0 0
      %1226 = vmatpush1.bf16.msra.mxu0 0
      %1227 = vmatprep.mubr.bf16.mxu0 %v1184
      %1228 = vmatmul.mubr.bf16.gmra.mrb[0].mxu0 %v1117
      %v1229 = vpop.f32.mrb[0].mxu0
      %v1230 = vadd.f32 %v1128, %v1229
      %v1231 = vpop.f32.mrb[0].mxu0
      %v1232 = vpop.f32.mrb[0].mxu0
      %v1233 = vadd.f32 %v1128, %v1232
      %v1234 = vpop.f32.mrb[0].mxu0
      %1235 = vmatprep.mubr.bf16.mxu0 %v1187
      %1236 = vmatmul.mubr.bf16.gmra.mrb[0].mxu0 %v1119
      %v1237 = vpop.f32.mrb[0].mxu0
      %v1238 = vadd.f32 %v1128, %v1237
      %v1239 = vpop.f32.mrb[0].mxu0
      %v1240 = vpop.f32.mrb[0].mxu0
      %v1241 = vadd.f32 %v1128, %v1240
      %v1242 = vpop.f32.mrb[0].mxu0
      %1243 = vmatprep.mubr.bf16.mxu0 %v1190
      %1244 = vmatmul.mubr.bf16.gmra.mrb[0].mxu0 %v1121
      %v1245 = vpop.f32.mrb[0].mxu0
      %v1246 = vadd.f32 %v1128, %v1245
      %v1247 = vpop.f32.mrb[0].mxu0
      %v1248 = vpop.f32.mrb[0].mxu0
      %v1249 = vadd.f32 %v1128, %v1248
      %v1250 = vpop.f32.mrb[0].mxu0
      %1251 = vmatprep.mubr.bf16.mxu0 %v1193
      %1252 = vmatmul.mubr.bf16.gmra.mrb[0].mxu0 %v1123
      %v1253 = vpop.f32.mrb[0].mxu0
      %v1254 = vadd.f32 %v1128, %v1253
      %v1255 = vpop.f32.mrb[0].mxu0
      %v1256 = vpop.f32.mrb[0].mxu0
      %v1257 = vadd.f32 %v1128, %v1256
      %v1258 = vpop.f32.mrb[0].mxu0
      %1259 = vdwg.mxu0
      %v1260 = vsel %vm1055, %v1230, 0.0
      %v1261 = vsel %vm1055, %v1233, 0.0
      %v1262 = vadd.f32 %v1260, %v1261
      %v1263 = vsel %vm1055, %v1238, 0.0
      %v1264 = vadd.f32 %v1262, %v1263
      %v1265 = vsel %vm1055, %v1241, 0.0
      %v1266 = vadd.f32 %v1264, %v1265
      %v1267 = vsel %vm1055, %v1246, 0.0
      %v1268 = vadd.f32 %v1266, %v1267
      %v1269 = vsel %vm1055, %v1249, 0.0
      %v1270 = vadd.f32 %v1268, %v1269
      %v1271 = vsel %vm1055, %v1254, 0.0
      %v1272 = vadd.f32 %v1270, %v1271
      %v1273 = vsel %vm1055, %v1257, 0.0
      %v1274 = vadd.f32 %v1272, %v1273
      %v1275 = vrot.slane %v1274, 4
      %v1276 = vadd.f32 %v1274, %v1275
      %v1277 = vrot.slane %v1276, 2
      %v1278 = vadd.f32 %v1276, %v1277
      %v1279 = vrot.slane %v1278, 1
      %v1280 = vadd.f32 %v1278, %v1279
      %v1281 = vmul.f32 %v1280, 0.015625
      %v1282 = vmul.f32 %v1230, %v1230
      %v1283 = vmul.f32 %v1233, %v1233
      %v1284 = vmul.f32 %v1238, %v1238
      %v1285 = vmul.f32 %v1241, %v1241
      %v1286 = vmul.f32 %v1246, %v1246
      %v1287 = vmul.f32 %v1249, %v1249
      %v1288 = vmul.f32 %v1254, %v1254
      %v1289 = vmul.f32 %v1257, %v1257
      %v1290 = vsel %vm1055, %v1282, 0.0
      %v1291 = vsel %vm1055, %v1283, 0.0
      %v1292 = vadd.f32 %v1290, %v1291
      %v1293 = vsel %vm1055, %v1284, 0.0
      %v1294 = vadd.f32 %v1292, %v1293
      %v1295 = vsel %vm1055, %v1285, 0.0
      %v1296 = vadd.f32 %v1294, %v1295
      %v1297 = vsel %vm1055, %v1286, 0.0
      %v1298 = vadd.f32 %v1296, %v1297
      %v1299 = vsel %vm1055, %v1287, 0.0
      %v1300 = vadd.f32 %v1298, %v1299
      %v1301 = vsel %vm1055, %v1288, 0.0
      %v1302 = vadd.f32 %v1300, %v1301
      %v1303 = vsel %vm1055, %v1289, 0.0
      %v1304 = vadd.f32 %v1302, %v1303
      %v1305 = vrot.slane %v1304, 4
      %v1306 = vadd.f32 %v1304, %v1305
      %v1307 = vrot.slane %v1306, 2
      %v1308 = vadd.f32 %v1306, %v1307
      %v1309 = vrot.slane %v1308, 1
      %v1310 = vadd.f32 %v1308, %v1309
      %v1311 = vmul.f32 %v1310, 0.015625
      %v1313 = vsel %vm1055, %v1281, 0
      %1315 = vmatprep.subr.mxu0 0.0
      %v1316 = vand.u32 %v456, 4294901760
      %1317 = vmatpush1.msra.mxu0 %v1316
      %1318 = vmatprep.subr.mxu0 0.0
      %v1319 = vand.u32 %v457, 4294901760
      %1320 = vmatpush1.msra.mxu0 %v1319
      %1321 = vmatprep.subr.mxu0 0.0
      %1322 = vmatpush1.msra.mxu0 0.0
      %1323 = vmatprep.subr.mxu0 0.0
      %1324 = vmatpush1.msra.mxu0 0.0
      %1325 = vmatprep.subr.mxu0 0.0
      %1326 = vmatpush1.msra.mxu0 0.0
      %1327 = vmatprep.subr.mxu0 0.0
      %1328 = vmatpush1.msra.mxu0 0.0
      %1329 = vmatprep.subr.mxu0 0.0
      %1330 = vmatpush1.msra.mxu0 0.0
      %1331 = vmatprep.subr.mxu0 0.0
      %1332 = vmatpush1.msra.mxu0 0.0
      %1333 = vmatprep.subr.mxu0 0.0
      %1334 = vmatpush1.msra.mxu0 0.0
      %1335 = vmatprep.subr.mxu0 0.0
      %1336 = vmatpush1.msra.mxu0 0.0
      %1337 = vmatprep.subr.mxu0 0.0
      %1338 = vmatpush1.msra.mxu0 0.0
      %1339 = vmatprep.subr.mxu0 0.0
      %1340 = vmatpush1.msra.mxu0 0.0
      %1341 = vmatprep.subr.mxu0 0.0
      %1342 = vmatpush1.msra.mxu0 0.0
      %1343 = vmatprep.subr.mxu0 0.0
      %1344 = vmatpush1.msra.mxu0 0.0
      %1345 = vmatprep.subr.mxu0 0.0
      %1346 = vmatpush1.msra.mxu0 0.0
      %1347 = vmatprep.subr.mxu0 0.0
      %1348 = vmatpush1.msra.mxu0 0.0
      %1349 = vmatprep.subr.mxu0 0.0
      %1350 = vmatpush1.msra.mxu0 0.0
      %1351 = vmatprep.subr.mxu0 0.0
      %1352 = vmatpush1.msra.mxu0 0.0
      %1353 = vmatprep.subr.mxu0 0.0
      %1354 = vmatpush1.msra.mxu0 0.0
      %1355 = vmatprep.subr.mxu0 0.0
      %1356 = vmatpush1.msra.mxu0 0.0
      %1357 = vmatprep.subr.mxu0 0.0
      %1358 = vmatpush1.msra.mxu0 0.0
      %1359 = vmatprep.subr.mxu0 0.0
      %1360 = vmatpush1.msra.mxu0 0.0
      %1361 = vmatprep.subr.mxu0 0.0
      %1362 = vmatpush1.msra.mxu0 0.0
      %1363 = vmatprep.subr.mxu0 0.0
      %1364 = vmatpush1.msra.mxu0 0.0
      %1365 = vmatprep.subr.mxu0 0.0
      %1366 = vmatpush1.msra.mxu0 0.0
      %1367 = vmatprep.subr.mxu0 0.0
      %1368 = vmatpush1.msra.mxu0 0.0
      %1369 = vmatprep.subr.mxu0 0.0
      %1370 = vmatpush1.msra.mxu0 0.0
      %1371 = vmatprep.subr.mxu0 0.0
      %1372 = vmatpush1.msra.mxu0 0.0
      %1373 = vmatprep.subr.mxu0 0.0
      %1374 = vmatpush1.msra.mxu0 0.0
      %1375 = vmatprep.subr.mxu0 0.0
      %1376 = vmatpush1.msra.mxu0 0.0
      %1377 = vmatprep.subr.mxu0 0.0
      %1378 = vmatpush1.msra.mxu0 0.0
      %1379 = vmatprep.subr.mxu0 0.0
      %1380 = vmatpush1.msra.mxu0 0.0
      %1381 = vmatprep.mubr.f32.mxu0 0.0
      %v1382 = vand.u32 %v1313, 4294901760
      %v1383 = vsub.f32 %v1313, %v1382
      %v1384 = vand.u32 %v1383, 4294901760
      %v1385 = vsub.f32 %v1383, %v1384
      %v1386 = vand.u32 %v1385, 4294901760
      %1387 = vmatmul.mubr.f32.gmra.mrb[0].mxu0 %v1386
      %v1388 = vpop.f32.mrb[0].mxu0
      %v1389 = vadd.f32 0.0, %v1388
      %v1390 = vpop.f32.mrb[0].mxu0
      %1391 = vdwg.mxu0
      %1392 = vmatprep.subr.mxu0 0.0
      %v1393 = vand.u32 %v456, 4294901760
      %v1394 = vsub.f32 %v456, %v1393
      %v1395 = vand.u32 %v1394, 4294901760
      %v1396 = vsub.f32 %v1394, %v1395
      %v1397 = vand.u32 %v1396, 4294901760
      %1398 = vmatpush1.msra.mxu0 %v1397
      %1399 = vmatprep.subr.mxu0 0.0
      %v1400 = vand.u32 %v457, 4294901760
      %v1401 = vsub.f32 %v457, %v1400
      %v1402 = vand.u32 %v1401, 4294901760
      %v1403 = vsub.f32 %v1401, %v1402
      %v1404 = vand.u32 %v1403, 4294901760
      %1405 = vmatpush1.msra.mxu0 %v1404
      %1406 = vmatprep.subr.mxu0 0.0
      %1407 = vmatpush1.msra.mxu0 0.0
      %1408 = vmatprep.subr.mxu0 0.0
      %1409 = vmatpush1.msra.mxu0 0.0
      %1410 = vmatprep.subr.mxu0 0.0
      %1411 = vmatpush1.msra.mxu0 0.0
      %1412 = vmatprep.subr.mxu0 0.0
      %1413 = vmatpush1.msra.mxu0 0.0
      %1414 = vmatprep.subr.mxu0 0.0
      %1415 = vmatpush1.msra.mxu0 0.0
      %1416 = vmatprep.subr.mxu0 0.0
      %1417 = vmatpush1.msra.mxu0 0.0
      %1418 = vmatprep.subr.mxu0 0.0
      %1419 = vmatpush1.msra.mxu0 0.0
      %1420 = vmatprep.subr.mxu0 0.0
      %1421 = vmatpush1.msra.mxu0 0.0
      %1422 = vmatprep.subr.mxu0 0.0
      %1423 = vmatpush1.msra.mxu0 0.0
      %1424 = vmatprep.subr.mxu0 0.0
      %1425 = vmatpush1.msra.mxu0 0.0
      %1426 = vmatprep.subr.mxu0 0.0
      %1427 = vmatpush1.msra.mxu0 0.0
      %1428 = vmatprep.subr.mxu0 0.0
      %1429 = vmatpush1.msra.mxu0 0.0
      %1430 = vmatprep.subr.mxu0 0.0
      %1431 = vmatpush1.msra.mxu0 0.0
      %1432 = vmatprep.subr.mxu0 0.0
      %1433 = vmatpush1.msra.mxu0 0.0
      %1434 = vmatprep.subr.mxu0 0.0
      %1435 = vmatpush1.msra.mxu0 0.0
      %1436 = vmatprep.subr.mxu0 0.0
      %1437 = vmatpush1.msra.mxu0 0.0
      %1438 = vmatprep.subr.mxu0 0.0
      %1439 = vmatpush1.msra.mxu0 0.0
      %1440 = vmatprep.subr.mxu0 0.0
      %1441 = vmatpush1.msra.mxu0 0.0
      %1442 = vmatprep.subr.mxu0 0.0
      %1443 = vmatpush1.msra.mxu0 0.0
      %1444 = vmatprep.subr.mxu0 0.0
      %1445 = vmatpush1.msra.mxu0 0.0
      %1446 = vmatprep.subr.mxu0 0.0
      %1447 = vmatpush1.msra.mxu0 0.0
      %1448 = vmatprep.subr.mxu0 0.0
      %1449 = vmatpush1.msra.mxu0 0.0
      %1450 = vmatprep.subr.mxu0 0.0
      %1451 = vmatpush1.msra.mxu0 0.0
      %1452 = vmatprep.subr.mxu0 0.0
      %1453 = vmatpush1.msra.mxu0 0.0
      %1454 = vmatprep.subr.mxu0 0.0
      %1455 = vmatpush1.msra.mxu0 0.0
      %1456 = vmatprep.subr.mxu0 0.0
      %1457 = vmatpush1.msra.mxu0 0.0
      %1458 = vmatprep.subr.mxu0 0.0
      %1459 = vmatpush1.msra.mxu0 0.0
      %1460 = vmatprep.subr.mxu0 0.0
      %1461 = vmatpush1.msra.mxu0 0.0
      %1462 = vmatprep.subr.mxu0 0.0
      %1463 = vmatpush1.msra.mxu0 0.0
      %1464 = vmatprep.subr.mxu0 0.0
      %1465 = vmatpush1.msra.mxu0 0.0
      %1466 = vmatprep.mubr.f32.mxu0 0.0
      %v1467 = vand.u32 %v1313, 4294901760
      %1468 = vmatmul.mubr.f32.gmra.mrb[0].mxu0 %v1467
      %v1469 = vpop.f32.mrb[0].mxu0
      %v1470 = vadd.f32 %v1389, %v1469
      %v1471 = vpop.f32.mrb[0].mxu0
      %1472 = vdwg.mxu0
      %1473 = vmatprep.subr.mxu0 0.0
      %v1474 = vand.u32 %v456, 4294901760
      %v1475 = vsub.f32 %v456, %v1474
      %1476 = vmatpush1.msra.mxu0 %v1475
      %1477 = vmatprep.subr.mxu0 0.0
      %v1478 = vand.u32 %v457, 4294901760
      %v1479 = vsub.f32 %v457, %v1478
      %1480 = vmatpush1.msra.mxu0 %v1479
      %1481 = vmatprep.subr.mxu0 0.0
      %1482 = vmatpush1.msra.mxu0 0.0
      %1483 = vmatprep.subr.mxu0 0.0
      %1484 = vmatpush1.msra.mxu0 0.0
      %1485 = vmatprep.subr.mxu0 0.0
      %1486 = vmatpush1.msra.mxu0 0.0
      %1487 = vmatprep.subr.mxu0 0.0
      %1488 = vmatpush1.msra.mxu0 0.0
      %1489 = vmatprep.subr.mxu0 0.0
      %1490 = vmatpush1.msra.mxu0 0.0
      %1491 = vmatprep.subr.mxu0 0.0
      %1492 = vmatpush1.msra.mxu0 0.0
      %1493 = vmatprep.subr.mxu0 0.0
      %1494 = vmatpush1.msra.mxu0 0.0
      %1495 = vmatprep.subr.mxu0 0.0
      %1496 = vmatpush1.msra.mxu0 0.0
      %1497 = vmatprep.subr.mxu0 0.0
      %1498 = vmatpush1.msra.mxu0 0.0
      %1499 = vmatprep.subr.mxu0 0.0
      %1500 = vmatpush1.msra.mxu0 0.0
      %1501 = vmatprep.subr.mxu0 0.0
      %1502 = vmatpush1.msra.mxu0 0.0
      %1503 = vmatprep.subr.mxu0 0.0
      %1504 = vmatpush1.msra.mxu0 0.0
      %1505 = vmatprep.subr.mxu0 0.0
      %1506 = vmatpush1.msra.mxu0 0.0
      %1507 = vmatprep.subr.mxu0 0.0
      %1508 = vmatpush1.msra.mxu0 0.0
      %1509 = vmatprep.subr.mxu0 0.0
      %1510 = vmatpush1.msra.mxu0 0.0
      %1511 = vmatprep.subr.mxu0 0.0
      %1512 = vmatpush1.msra.mxu0 0.0
      %1513 = vmatprep.subr.mxu0 0.0
      %1514 = vmatpush1.msra.mxu0 0.0
      %1515 = vmatprep.subr.mxu0 0.0
      %1516 = vmatpush1.msra.mxu0 0.0
      %1517 = vmatprep.subr.mxu0 0.0
      %1518 = vmatpush1.msra.mxu0 0.0
      %1519 = vmatprep.subr.mxu0 0.0
      %1520 = vmatpush1.msra.mxu0 0.0
      %1521 = vmatprep.subr.mxu0 0.0
      %1522 = vmatpush1.msra.mxu0 0.0
      %1523 = vmatprep.subr.mxu0 0.0
      %1524 = vmatpush1.msra.mxu0 0.0
      %1525 = vmatprep.subr.mxu0 0.0
      %1526 = vmatpush1.msra.mxu0 0.0
      %1527 = vmatprep.subr.mxu0 0.0
      %1528 = vmatpush1.msra.mxu0 0.0
      %1529 = vmatprep.subr.mxu0 0.0
      %1530 = vmatpush1.msra.mxu0 0.0
      %1531 = vmatprep.subr.mxu0 0.0
      %1532 = vmatpush1.msra.mxu0 0.0
      %1533 = vmatprep.subr.mxu0 0.0
      %1534 = vmatpush1.msra.mxu0 0.0
      %1535 = vmatprep.subr.mxu0 0.0
      %1536 = vmatpush1.msra.mxu0 0.0
      %1537 = vmatprep.subr.mxu0 0.0
      %1538 = vmatpush1.msra.mxu0 0.0
      %1539 = vmatprep.subr.mxu0 0.0
      %1540 = vmatpush1.msra.mxu0 0.0
      %1541 = vmatprep.mubr.f32.mxu0 0.0
      %v1542 = vand.u32 %v1313, 4294901760
      %v1543 = vsub.f32 %v1313, %v1542
      %1544 = vmatmul.mubr.f32.gmra.mrb[0].mxu0 %v1543
      %v1545 = vpop.f32.mrb[0].mxu0
      %v1546 = vadd.f32 %v1470, %v1545
      %v1547 = vpop.f32.mrb[0].mxu0
      %1548 = vdwg.mxu0
      %1549 = vmatprep.subr.mxu0 0.0
      %v1550 = vand.u32 %v456, 4294901760
      %1551 = vmatpush1.msra.mxu0 %v1550
      %1552 = vmatprep.subr.mxu0 0.0
      %v1553 = vand.u32 %v457, 4294901760
      %1554 = vmatpush1.msra.mxu0 %v1553
      %1555 = vmatprep.subr.mxu0 0.0
      %1556 = vmatpush1.msra.mxu0 0.0
      %1557 = vmatprep.subr.mxu0 0.0
      %1558 = vmatpush1.msra.mxu0 0.0
      %1559 = vmatprep.subr.mxu0 0.0
      %1560 = vmatpush1.msra.mxu0 0.0
      %1561 = vmatprep.subr.mxu0 0.0
      %1562 = vmatpush1.msra.mxu0 0.0
      %1563 = vmatprep.subr.mxu0 0.0
      %1564 = vmatpush1.msra.mxu0 0.0
      %1565 = vmatprep.subr.mxu0 0.0
      %1566 = vmatpush1.msra.mxu0 0.0
      %1567 = vmatprep.subr.mxu0 0.0
      %1568 = vmatpush1.msra.mxu0 0.0
      %1569 = vmatprep.subr.mxu0 0.0
      %1570 = vmatpush1.msra.mxu0 0.0
      %1571 = vmatprep.subr.mxu0 0.0
      %1572 = vmatpush1.msra.mxu0 0.0
      %1573 = vmatprep.subr.mxu0 0.0
      %1574 = vmatpush1.msra.mxu0 0.0
      %1575 = vmatprep.subr.mxu0 0.0
      %1576 = vmatpush1.msra.mxu0 0.0
      %1577 = vmatprep.subr.mxu0 0.0
      %1578 = vmatpush1.msra.mxu0 0.0
      %1579 = vmatprep.subr.mxu0 0.0
      %1580 = vmatpush1.msra.mxu0 0.0
      %1581 = vmatprep.subr.mxu0 0.0
      %1582 = vmatpush1.msra.mxu0 0.0
      %1583 = vmatprep.subr.mxu0 0.0
      %1584 = vmatpush1.msra.mxu0 0.0
      %1585 = vmatprep.subr.mxu0 0.0
      %1586 = vmatpush1.msra.mxu0 0.0
      %1587 = vmatprep.subr.mxu0 0.0
      %1588 = vmatpush1.msra.mxu0 0.0
      %1589 = vmatprep.subr.mxu0 0.0
      %1590 = vmatpush1.msra.mxu0 0.0
      %1591 = vmatprep.subr.mxu0 0.0
      %1592 = vmatpush1.msra.mxu0 0.0
      %1593 = vmatprep.subr.mxu0 0.0
      %1594 = vmatpush1.msra.mxu0 0.0
      %1595 = vmatprep.subr.mxu0 0.0
      %1596 = vmatpush1.msra.mxu0 0.0
      %1597 = vmatprep.subr.mxu0 0.0
      %1598 = vmatpush1.msra.mxu0 0.0
      %1599 = vmatprep.subr.mxu0 0.0
      %1600 = vmatpush1.msra.mxu0 0.0
      %1601 = vmatprep.subr.mxu0 0.0
      %1602 = vmatpush1.msra.mxu0 0.0
      %1603 = vmatprep.subr.mxu0 0.0
      %1604 = vmatpush1.msra.mxu0 0.0
      %1605 = vmatprep.subr.mxu0 0.0
      %1606 = vmatpush1.msra.mxu0 0.0
      %1607 = vmatprep.subr.mxu0 0.0
      %1608 = vmatpush1.msra.mxu0 0.0
      %1609 = vmatprep.subr.mxu0 0.0
      %1610 = vmatpush1.msra.mxu0 0.0
      %1611 = vmatprep.subr.mxu0 0.0
      %1612 = vmatpush1.msra.mxu0 0.0
      %1613 = vmatprep.subr.mxu0 0.0
      %1614 = vmatpush1.msra.mxu0 0.0
      %1615 = vmatprep.mubr.f32.mxu0 0.0
      %v1616 = vand.u32 %v1313, 4294901760
      %v1617 = vsub.f32 %v1313, %v1616
      %v1618 = vand.u32 %v1617, 4294901760
      %1619 = vmatmul.mubr.f32.gmra.mrb[0].mxu0 %v1618
      %v1620 = vpop.f32.mrb[0].mxu0
      %v1621 = vadd.f32 %v1546, %v1620
      %v1622 = vpop.f32.mrb[0].mxu0
      %1623 = vdwg.mxu0
      %1624 = vmatprep.subr.mxu0 0.0
      %v1625 = vand.u32 %v456, 4294901760
      %v1626 = vsub.f32 %v456, %v1625
      %v1627 = vand.u32 %v1626, 4294901760
      %1628 = vmatpush1.msra.mxu0 %v1627
      %1629 = vmatprep.subr.mxu0 0.0
      %v1630 = vand.u32 %v457, 4294901760
      %v1631 = vsub.f32 %v457, %v1630
      %v1632 = vand.u32 %v1631, 4294901760
      %1633 = vmatpush1.msra.mxu0 %v1632
      %1634 = vmatprep.subr.mxu0 0.0
      %1635 = vmatpush1.msra.mxu0 0.0
      %1636 = vmatprep.subr.mxu0 0.0
      %1637 = vmatpush1.msra.mxu0 0.0
      %1638 = vmatprep.subr.mxu0 0.0
      %1639 = vmatpush1.msra.mxu0 0.0
      %1640 = vmatprep.subr.mxu0 0.0
      %1641 = vmatpush1.msra.mxu0 0.0
      %1642 = vmatprep.subr.mxu0 0.0
      %1643 = vmatpush1.msra.mxu0 0.0
      %1644 = vmatprep.subr.mxu0 0.0
      %1645 = vmatpush1.msra.mxu0 0.0
      %1646 = vmatprep.subr.mxu0 0.0
      %1647 = vmatpush1.msra.mxu0 0.0
      %1648 = vmatprep.subr.mxu0 0.0
      %1649 = vmatpush1.msra.mxu0 0.0
      %1650 = vmatprep.subr.mxu0 0.0
      %1651 = vmatpush1.msra.mxu0 0.0
      %1652 = vmatprep.subr.mxu0 0.0
      %1653 = vmatpush1.msra.mxu0 0.0
      %1654 = vmatprep.subr.mxu0 0.0
      %1655 = vmatpush1.msra.mxu0 0.0
      %1656 = vmatprep.subr.mxu0 0.0
      %1657 = vmatpush1.msra.mxu0 0.0
      %1658 = vmatprep.subr.mxu0 0.0
      %1659 = vmatpush1.msra.mxu0 0.0
      %1660 = vmatprep.subr.mxu0 0.0
      %1661 = vmatpush1.msra.mxu0 0.0
      %1662 = vmatprep.subr.mxu0 0.0
      %1663 = vmatpush1.msra.mxu0 0.0
      %1664 = vmatprep.subr.mxu0 0.0
      %1665 = vmatpush1.msra.mxu0 0.0
      %1666 = vmatprep.subr.mxu0 0.0
      %1667 = vmatpush1.msra.mxu0 0.0
      %1668 = vmatprep.subr.mxu0 0.0
      %1669 = vmatpush1.msra.mxu0 0.0
      %1670 = vmatprep.subr.mxu0 0.0
      %1671 = vmatpush1.msra.mxu0 0.0
      %1672 = vmatprep.subr.mxu0 0.0
      %1673 = vmatpush1.msra.mxu0 0.0
      %1674 = vmatprep.subr.mxu0 0.0
      %1675 = vmatpush1.msra.mxu0 0.0
      %1676 = vmatprep.subr.mxu0 0.0
      %1677 = vmatpush1.msra.mxu0 0.0
      %1678 = vmatprep.subr.mxu0 0.0
      %1679 = vmatpush1.msra.mxu0 0.0
      %1680 = vmatprep.subr.mxu0 0.0
      %1681 = vmatpush1.msra.mxu0 0.0
      %1682 = vmatprep.subr.mxu0 0.0
      %1683 = vmatpush1.msra.mxu0 0.0
      %1684 = vmatprep.subr.mxu0 0.0
      %1685 = vmatpush1.msra.mxu0 0.0
      %1686 = vmatprep.subr.mxu0 0.0
      %1687 = vmatpush1.msra.mxu0 0.0
      %1688 = vmatprep.subr.mxu0 0.0
      %1689 = vmatpush1.msra.mxu0 0.0
      %1690 = vmatprep.subr.mxu0 0.0
      %1691 = vmatpush1.msra.mxu0 0.0
      %1692 = vmatprep.subr.mxu0 0.0
      %1693 = vmatpush1.msra.mxu0 0.0
      %1694 = vmatprep.mubr.f32.mxu0 0.0
      %v1695 = vand.u32 %v1313, 4294901760
      %1696 = vmatmul.mubr.f32.gmra.mrb[0].mxu0 %v1695
      %v1697 = vpop.f32.mrb[0].mxu0
      %v1698 = vadd.f32 %v1621, %v1697
      %v1699 = vpop.f32.mrb[0].mxu0
      %1700 = vdwg.mxu0
      %1701 = vmatprep.subr.mxu0 0.0
      %v1702 = vand.u32 %v456, 4294901760
      %1703 = vmatpush1.msra.mxu0 %v1702
      %1704 = vmatprep.subr.mxu0 0.0
      %v1705 = vand.u32 %v457, 4294901760
      %1706 = vmatpush1.msra.mxu0 %v1705
      %1707 = vmatprep.subr.mxu0 0.0
      %1708 = vmatpush1.msra.mxu0 0.0
      %1709 = vmatprep.subr.mxu0 0.0
      %1710 = vmatpush1.msra.mxu0 0.0
      %1711 = vmatprep.subr.mxu0 0.0
      %1712 = vmatpush1.msra.mxu0 0.0
      %1713 = vmatprep.subr.mxu0 0.0
      %1714 = vmatpush1.msra.mxu0 0.0
      %1715 = vmatprep.subr.mxu0 0.0
      %1716 = vmatpush1.msra.mxu0 0.0
      %1717 = vmatprep.subr.mxu0 0.0
      %1718 = vmatpush1.msra.mxu0 0.0
      %1719 = vmatprep.subr.mxu0 0.0
      %1720 = vmatpush1.msra.mxu0 0.0
      %1721 = vmatprep.subr.mxu0 0.0
      %1722 = vmatpush1.msra.mxu0 0.0
      %1723 = vmatprep.subr.mxu0 0.0
      %1724 = vmatpush1.msra.mxu0 0.0
      %1725 = vmatprep.subr.mxu0 0.0
      %1726 = vmatpush1.msra.mxu0 0.0
      %1727 = vmatprep.subr.mxu0 0.0
      %1728 = vmatpush1.msra.mxu0 0.0
      %1729 = vmatprep.subr.mxu0 0.0
      %1730 = vmatpush1.msra.mxu0 0.0
      %1731 = vmatprep.subr.mxu0 0.0
      %1732 = vmatpush1.msra.mxu0 0.0
      %1733 = vmatprep.subr.mxu0 0.0
      %1734 = vmatpush1.msra.mxu0 0.0
      %1735 = vmatprep.subr.mxu0 0.0
      %1736 = vmatpush1.msra.mxu0 0.0
      %1737 = vmatprep.subr.mxu0 0.0
      %1738 = vmatpush1.msra.mxu0 0.0
      %1739 = vmatprep.subr.mxu0 0.0
      %1740 = vmatpush1.msra.mxu0 0.0
      %1741 = vmatprep.subr.mxu0 0.0
      %1742 = vmatpush1.msra.mxu0 0.0
      %1743 = vmatprep.subr.mxu0 0.0
      %1744 = vmatpush1.msra.mxu0 0.0
      %1745 = vmatprep.subr.mxu0 0.0
      %1746 = vmatpush1.msra.mxu0 0.0
      %1747 = vmatprep.subr.mxu0 0.0
      %1748 = vmatpush1.msra.mxu0 0.0
      %1749 = vmatprep.subr.mxu0 0.0
      %1750 = vmatpush1.msra.mxu0 0.0
      %1751 = vmatprep.subr.mxu0 0.0
      %1752 = vmatpush1.msra.mxu0 0.0
      %1753 = vmatprep.subr.mxu0 0.0
      %1754 = vmatpush1.msra.mxu0 0.0
      %1755 = vmatprep.subr.mxu0 0.0
      %1756 = vmatpush1.msra.mxu0 0.0
      %1757 = vmatprep.subr.mxu0 0.0
      %1758 = vmatpush1.msra.mxu0 0.0
      %1759 = vmatprep.subr.mxu0 0.0
      %1760 = vmatpush1.msra.mxu0 0.0
      %1761 = vmatprep.subr.mxu0 0.0
      %1762 = vmatpush1.msra.mxu0 0.0
      %1763 = vmatprep.subr.mxu0 0.0
      %1764 = vmatpush1.msra.mxu0 0.0
      %1765 = vmatprep.subr.mxu0 0.0
      %1766 = vmatpush1.msra.mxu0 0.0
      %1767 = vmatprep.mubr.f32.mxu0 0.0
      %v1768 = vand.u32 %v1313, 4294901760
      %1769 = vmatmul.mubr.f32.gmra.mrb[0].mxu0 %v1768
      %v1770 = vpop.f32.mrb[0].mxu0
      %v1771 = vadd.f32 %v1698, %v1770
      %v1772 = vpop.f32.mrb[0].mxu0
      %1773 = vdwg.mxu0
      %v1775 = vsel %vm1055, %v1311, 0
      %1777 = vmatprep.subr.mxu0 0.0
      %v1778 = vand.u32 %v456, 4294901760
      %1779 = vmatpush1.msra.mxu0 %v1778
      %1780 = vmatprep.subr.mxu0 0.0
      %v1781 = vand.u32 %v457, 4294901760
      %1782 = vmatpush1.msra.mxu0 %v1781
      %1783 = vmatprep.subr.mxu0 0.0
      %1784 = vmatpush1.msra.mxu0 0.0
      %1785 = vmatprep.subr.mxu0 0.0
      %1786 = vmatpush1.msra.mxu0 0.0
      %1787 = vmatprep.subr.mxu0 0.0
      %1788 = vmatpush1.msra.mxu0 0.0
      %1789 = vmatprep.subr.mxu0 0.0
      %1790 = vmatpush1.msra.mxu0 0.0
      %1791 = vmatprep.subr.mxu0 0.0
      %1792 = vmatpush1.msra.mxu0 0.0
      %1793 = vmatprep.subr.mxu0 0.0
      %1794 = vmatpush1.msra.mxu0 0.0
      %1795 = vmatprep.subr.mxu0 0.0
      %1796 = vmatpush1.msra.mxu0 0.0
      %1797 = vmatprep.subr.mxu0 0.0
      %1798 = vmatpush1.msra.mxu0 0.0
      %1799 = vmatprep.subr.mxu0 0.0
      %1800 = vmatpush1.msra.mxu0 0.0
      %1801 = vmatprep.subr.mxu0 0.0
      %1802 = vmatpush1.msra.mxu0 0.0
      %1803 = vmatprep.subr.mxu0 0.0
      %1804 = vmatpush1.msra.mxu0 0.0
      %1805 = vmatprep.subr.mxu0 0.0
      %1806 = vmatpush1.msra.mxu0 0.0
      %1807 = vmatprep.subr.mxu0 0.0
      %1808 = vmatpush1.msra.mxu0 0.0
      %1809 = vmatprep.subr.mxu0 0.0
      %1810 = vmatpush1.msra.mxu0 0.0
      %1811 = vmatprep.subr.mxu0 0.0
      %1812 = vmatpush1.msra.mxu0 0.0
      %1813 = vmatprep.subr.mxu0 0.0
      %1814 = vmatpush1.msra.mxu0 0.0
      %1815 = vmatprep.subr.mxu0 0.0
      %1816 = vmatpush1.msra.mxu0 0.0
      %1817 = vmatprep.subr.mxu0 0.0
      %1818 = vmatpush1.msra.mxu0 0.0
      %1819 = vmatprep.subr.mxu0 0.0
      %1820 = vmatpush1.msra.mxu0 0.0
      %1821 = vmatprep.subr.mxu0 0.0
      %1822 = vmatpush1.msra.mxu0 0.0
      %1823 = vmatprep.subr.mxu0 0.0
      %1824 = vmatpush1.msra.mxu0 0.0
      %1825 = vmatprep.subr.mxu0 0.0
      %1826 = vmatpush1.msra.mxu0 0.0
      %1827 = vmatprep.subr.mxu0 0.0
      %1828 = vmatpush1.msra.mxu0 0.0
      %1829 = vmatprep.subr.mxu0 0.0
      %1830 = vmatpush1.msra.mxu0 0.0
      %1831 = vmatprep.subr.mxu0 0.0
      %1832 = vmatpush1.msra.mxu0 0.0
      %1833 = vmatprep.subr.mxu0 0.0
      %1834 = vmatpush1.msra.mxu0 0.0
      %1835 = vmatprep.subr.mxu0 0.0
      %1836 = vmatpush1.msra.mxu0 0.0
      %1837 = vmatprep.subr.mxu0 0.0
      %1838 = vmatpush1.msra.mxu0 0.0
      %1839 = vmatprep.subr.mxu0 0.0
      %1840 = vmatpush1.msra.mxu0 0.0
      %1841 = vmatprep.subr.mxu0 0.0
      %1842 = vmatpush1.msra.mxu0 0.0
      %1843 = vmatprep.mubr.f32.mxu0 0.0
      %v1844 = vand.u32 %v1775, 4294901760
      %v1845 = vsub.f32 %v1775, %v1844
      %v1846 = vand.u32 %v1845, 4294901760
      %v1847 = vsub.f32 %v1845, %v1846
      %v1848 = vand.u32 %v1847, 4294901760
      %1849 = vmatmul.mubr.f32.gmra.mrb[0].mxu0 %v1848
      %v1850 = vpop.f32.mrb[0].mxu0
      %v1851 = vadd.f32 0.0, %v1850
      %v1852 = vpop.f32.mrb[0].mxu0
      %1853 = vdwg.mxu0
      %1854 = vmatprep.subr.mxu0 0.0
      %v1855 = vand.u32 %v456, 4294901760
      %v1856 = vsub.f32 %v456, %v1855
      %v1857 = vand.u32 %v1856, 4294901760
      %v1858 = vsub.f32 %v1856, %v1857
      %v1859 = vand.u32 %v1858, 4294901760
      %1860 = vmatpush1.msra.mxu0 %v1859
      %1861 = vmatprep.subr.mxu0 0.0
      %v1862 = vand.u32 %v457, 4294901760
      %v1863 = vsub.f32 %v457, %v1862
      %v1864 = vand.u32 %v1863, 4294901760
      %v1865 = vsub.f32 %v1863, %v1864
      %v1866 = vand.u32 %v1865, 4294901760
      %1867 = vmatpush1.msra.mxu0 %v1866
      %1868 = vmatprep.subr.mxu0 0.0
      %1869 = vmatpush1.msra.mxu0 0.0
      %1870 = vmatprep.subr.mxu0 0.0
      %1871 = vmatpush1.msra.mxu0 0.0
      %1872 = vmatprep.subr.mxu0 0.0
      %1873 = vmatpush1.msra.mxu0 0.0
      %1874 = vmatprep.subr.mxu0 0.0
      %1875 = vmatpush1.msra.mxu0 0.0
      %1876 = vmatprep.subr.mxu0 0.0
      %1877 = vmatpush1.msra.mxu0 0.0
      %1878 = vmatprep.subr.mxu0 0.0
      %1879 = vmatpush1.msra.mxu0 0.0
      %1880 = vmatprep.subr.mxu0 0.0
      %1881 = vmatpush1.msra.mxu0 0.0
      %1882 = vmatprep.subr.mxu0 0.0
      %1883 = vmatpush1.msra.mxu0 0.0
      %1884 = vmatprep.subr.mxu0 0.0
      %1885 = vmatpush1.msra.mxu0 0.0
      %1886 = vmatprep.subr.mxu0 0.0
      %1887 = vmatpush1.msra.mxu0 0.0
      %1888 = vmatprep.subr.mxu0 0.0
      %1889 = vmatpush1.msra.mxu0 0.0
      %1890 = vmatprep.subr.mxu0 0.0
      %1891 = vmatpush1.msra.mxu0 0.0
      %1892 = vmatprep.subr.mxu0 0.0
      %1893 = vmatpush1.msra.mxu0 0.0
      %1894 = vmatprep.subr.mxu0 0.0
      %1895 = vmatpush1.msra.mxu0 0.0
      %1896 = vmatprep.subr.mxu0 0.0
      %1897 = vmatpush1.msra.mxu0 0.0
      %1898 = vmatprep.subr.mxu0 0.0
      %1899 = vmatpush1.msra.mxu0 0.0
      %1900 = vmatprep.subr.mxu0 0.0
      %1901 = vmatpush1.msra.mxu0 0.0
      %1902 = vmatprep.subr.mxu0 0.0
      %1903 = vmatpush1.msra.mxu0 0.0
      %1904 = vmatprep.subr.mxu0 0.0
      %1905 = vmatpush1.msra.mxu0 0.0
      %1906 = vmatprep.subr.mxu0 0.0
      %1907 = vmatpush1.msra.mxu0 0.0
      %1908 = vmatprep.subr.mxu0 0.0
      %1909 = vmatpush1.msra.mxu0 0.0
      %1910 = vmatprep.subr.mxu0 0.0
      %1911 = vmatpush1.msra.mxu0 0.0
      %1912 = vmatprep.subr.mxu0 0.0
      %1913 = vmatpush1.msra.mxu0 0.0
      %1914 = vmatprep.subr.mxu0 0.0
      %1915 = vmatpush1.msra.mxu0 0.0
      %1916 = vmatprep.subr.mxu0 0.0
      %1917 = vmatpush1.msra.mxu0 0.0
      %1918 = vmatprep.subr.mxu0 0.0
      %1919 = vmatpush1.msra.mxu0 0.0
      %1920 = vmatprep.subr.mxu0 0.0
      %1921 = vmatpush1.msra.mxu0 0.0
      %1922 = vmatprep.subr.mxu0 0.0
      %1923 = vmatpush1.msra.mxu0 0.0
      %1924 = vmatprep.subr.mxu0 0.0
      %1925 = vmatpush1.msra.mxu0 0.0
      %1926 = vmatprep.subr.mxu0 0.0
      %1927 = vmatpush1.msra.mxu0 0.0
      %1928 = vmatprep.mubr.f32.mxu0 0.0
      %v1929 = vand.u32 %v1775, 4294901760
      %1930 = vmatmul.mubr.f32.gmra.mrb[0].mxu0 %v1929
      %v1931 = vpop.f32.mrb[0].mxu0
      %v1932 = vadd.f32 %v1851, %v1931
      %v1933 = vpop.f32.mrb[0].mxu0
      %1934 = vdwg.mxu0
      %1935 = vmatprep.subr.mxu0 0.0
      %v1936 = vand.u32 %v456, 4294901760
      %v1937 = vsub.f32 %v456, %v1936
      %1938 = vmatpush1.msra.mxu0 %v1937
      %1939 = vmatprep.subr.mxu0 0.0
      %v1940 = vand.u32 %v457, 4294901760
      %v1941 = vsub.f32 %v457, %v1940
      %1942 = vmatpush1.msra.mxu0 %v1941
      %1943 = vmatprep.subr.mxu0 0.0
      %1944 = vmatpush1.msra.mxu0 0.0
      %1945 = vmatprep.subr.mxu0 0.0
      %1946 = vmatpush1.msra.mxu0 0.0
      %1947 = vmatprep.subr.mxu0 0.0
      %1948 = vmatpush1.msra.mxu0 0.0
      %1949 = vmatprep.subr.mxu0 0.0
      %1950 = vmatpush1.msra.mxu0 0.0
      %1951 = vmatprep.subr.mxu0 0.0
      %1952 = vmatpush1.msra.mxu0 0.0
      %1953 = vmatprep.subr.mxu0 0.0
      %1954 = vmatpush1.msra.mxu0 0.0
      %1955 = vmatprep.subr.mxu0 0.0
      %1956 = vmatpush1.msra.mxu0 0.0
      %1957 = vmatprep.subr.mxu0 0.0
      %1958 = vmatpush1.msra.mxu0 0.0
      %1959 = vmatprep.subr.mxu0 0.0
      %1960 = vmatpush1.msra.mxu0 0.0
      %1961 = vmatprep.subr.mxu0 0.0
      %1962 = vmatpush1.msra.mxu0 0.0
      %1963 = vmatprep.subr.mxu0 0.0
      %1964 = vmatpush1.msra.mxu0 0.0
      %1965 = vmatprep.subr.mxu0 0.0
      %1966 = vmatpush1.msra.mxu0 0.0
      %1967 = vmatprep.subr.mxu0 0.0
      %1968 = vmatpush1.msra.mxu0 0.0
      %1969 = vmatprep.subr.mxu0 0.0
      %1970 = vmatpush1.msra.mxu0 0.0
      %1971 = vmatprep.subr.mxu0 0.0
      %1972 = vmatpush1.msra.mxu0 0.0
      %1973 = vmatprep.subr.mxu0 0.0
      %1974 = vmatpush1.msra.mxu0 0.0
      %1975 = vmatprep.subr.mxu0 0.0
      %1976 = vmatpush1.msra.mxu0 0.0
      %1977 = vmatprep.subr.mxu0 0.0
      %1978 = vmatpush1.msra.mxu0 0.0
      %1979 = vmatprep.subr.mxu0 0.0
      %1980 = vmatpush1.msra.mxu0 0.0
      %1981 = vmatprep.subr.mxu0 0.0
      %1982 = vmatpush1.msra.mxu0 0.0
      %1983 = vmatprep.subr.mxu0 0.0
      %1984 = vmatpush1.msra.mxu0 0.0
      %1985 = vmatprep.subr.mxu0 0.0
      %1986 = vmatpush1.msra.mxu0 0.0
      %1987 = vmatprep.subr.mxu0 0.0
      %1988 = vmatpush1.msra.mxu0 0.0
      %1989 = vmatprep.subr.mxu0 0.0
      %1990 = vmatpush1.msra.mxu0 0.0
      %1991 = vmatprep.subr.mxu0 0.0
      %1992 = vmatpush1.msra.mxu0 0.0
      %1993 = vmatprep.subr.mxu0 0.0
      %1994 = vmatpush1.msra.mxu0 0.0
      %1995 = vmatprep.subr.mxu0 0.0
      %1996 = vmatpush1.msra.mxu0 0.0
      %1997 = vmatprep.subr.mxu0 0.0
      %1998 = vmatpush1.msra.mxu0 0.0
      %1999 = vmatprep.subr.mxu0 0.0
      %2000 = vmatpush1.msra.mxu0 0.0
      %2001 = vmatprep.subr.mxu0 0.0
      %2002 = vmatpush1.msra.mxu0 0.0
      %2003 = vmatprep.mubr.f32.mxu0 0.0
      %v2004 = vand.u32 %v1775, 4294901760
      %v2005 = vsub.f32 %v1775, %v2004
      %2006 = vmatmul.mubr.f32.gmra.mrb[0].mxu0 %v2005
      %v2007 = vpop.f32.mrb[0].mxu0
      %v2008 = vadd.f32 %v1932, %v2007
      %v2009 = vpop.f32.mrb[0].mxu0
      %2010 = vdwg.mxu0
      %2011 = vmatprep.subr.mxu0 0.0
      %v2012 = vand.u32 %v456, 4294901760
      %2013 = vmatpush1.msra.mxu0 %v2012
      %2014 = vmatprep.subr.mxu0 0.0
      %v2015 = vand.u32 %v457, 4294901760
      %2016 = vmatpush1.msra.mxu0 %v2015
      %2017 = vmatprep.subr.mxu0 0.0
      %2018 = vmatpush1.msra.mxu0 0.0
      %2019 = vmatprep.subr.mxu0 0.0
      %2020 = vmatpush1.msra.mxu0 0.0
      %2021 = vmatprep.subr.mxu0 0.0
      %2022 = vmatpush1.msra.mxu0 0.0
      %2023 = vmatprep.subr.mxu0 0.0
      %2024 = vmatpush1.msra.mxu0 0.0
      %2025 = vmatprep.subr.mxu0 0.0
      %2026 = vmatpush1.msra.mxu0 0.0
      %2027 = vmatprep.subr.mxu0 0.0
      %2028 = vmatpush1.msra.mxu0 0.0
      %2029 = vmatprep.subr.mxu0 0.0
      %2030 = vmatpush1.msra.mxu0 0.0
      %2031 = vmatprep.subr.mxu0 0.0
      %2032 = vmatpush1.msra.mxu0 0.0
      %2033 = vmatprep.subr.mxu0 0.0
      %2034 = vmatpush1.msra.mxu0 0.0
      %2035 = vmatprep.subr.mxu0 0.0
      %2036 = vmatpush1.msra.mxu0 0.0
      %2037 = vmatprep.subr.mxu0 0.0
      %2038 = vmatpush1.msra.mxu0 0.0
      %2039 = vmatprep.subr.mxu0 0.0
      %2040 = vmatpush1.msra.mxu0 0.0
      %2041 = vmatprep.subr.mxu0 0.0
      %2042 = vmatpush1.msra.mxu0 0.0
      %2043 = vmatprep.subr.mxu0 0.0
      %2044 = vmatpush1.msra.mxu0 0.0
      %2045 = vmatprep.subr.mxu0 0.0
      %2046 = vmatpush1.msra.mxu0 0.0
      %2047 = vmatprep.subr.mxu0 0.0
      %2048 = vmatpush1.msra.mxu0 0.0
      %2049 = vmatprep.subr.mxu0 0.0
      %2050 = vmatpush1.msra.mxu0 0.0
      %2051 = vmatprep.subr.mxu0 0.0
      %2052 = vmatpush1.msra.mxu0 0.0
      %2053 = vmatprep.subr.mxu0 0.0
      %2054 = vmatpush1.msra.mxu0 0.0
      %2055 = vmatprep.subr.mxu0 0.0
      %2056 = vmatpush1.msra.mxu0 0.0
      %2057 = vmatprep.subr.mxu0 0.0
      %2058 = vmatpush1.msra.mxu0 0.0
      %2059 = vmatprep.subr.mxu0 0.0
      %2060 = vmatpush1.msra.mxu0 0.0
      %2061 = vmatprep.subr.mxu0 0.0
      %2062 = vmatpush1.msra.mxu0 0.0
      %2063 = vmatprep.subr.mxu0 0.0
      %2064 = vmatpush1.msra.mxu0 0.0
      %2065 = vmatprep.subr.mxu0 0.0
      %2066 = vmatpush1.msra.mxu0 0.0
      %2067 = vmatprep.subr.mxu0 0.0
      %2068 = vmatpush1.msra.mxu0 0.0
      %2069 = vmatprep.subr.mxu0 0.0
      %2070 = vmatpush1.msra.mxu0 0.0
      %2071 = vmatprep.subr.mxu0 0.0
      %2072 = vmatpush1.msra.mxu0 0.0
      %2073 = vmatprep.subr.mxu0 0.0
      %2074 = vmatpush1.msra.mxu0 0.0
      %2075 = vmatprep.subr.mxu0 0.0
      %2076 = vmatpush1.msra.mxu0 0.0
      %2077 = vmatprep.mubr.f32.mxu0 0.0
      %v2078 = vand.u32 %v1775, 4294901760
      %v2079 = vsub.f32 %v1775, %v2078
      %v2080 = vand.u32 %v2079, 4294901760
      %2081 = vmatmul.mubr.f32.gmra.mrb[0].mxu0 %v2080
      %v2082 = vpop.f32.mrb[0].mxu0
      %v2083 = vadd.f32 %v2008, %v2082
      %v2084 = vpop.f32.mrb[0].mxu0
      %2085 = vdwg.mxu0
      %2086 = vmatprep.subr.mxu0 0.0
      %v2087 = vand.u32 %v456, 4294901760
      %v2088 = vsub.f32 %v456, %v2087
      %v2089 = vand.u32 %v2088, 4294901760
      %2090 = vmatpush1.msra.mxu0 %v2089
      %2091 = vmatprep.subr.mxu0 0.0
      %v2092 = vand.u32 %v457, 4294901760
      %v2093 = vsub.f32 %v457, %v2092
      %v2094 = vand.u32 %v2093, 4294901760
      %2095 = vmatpush1.msra.mxu0 %v2094
      %2096 = vmatprep.subr.mxu0 0.0
      %2097 = vmatpush1.msra.mxu0 0.0
      %2098 = vmatprep.subr.mxu0 0.0
      %2099 = vmatpush1.msra.mxu0 0.0
      %2100 = vmatprep.subr.mxu0 0.0
      %2101 = vmatpush1.msra.mxu0 0.0
      %2102 = vmatprep.subr.mxu0 0.0
      %2103 = vmatpush1.msra.mxu0 0.0
      %2104 = vmatprep.subr.mxu0 0.0
      %2105 = vmatpush1.msra.mxu0 0.0
      %2106 = vmatprep.subr.mxu0 0.0
      %2107 = vmatpush1.msra.mxu0 0.0
      %2108 = vmatprep.subr.mxu0 0.0
      %2109 = vmatpush1.msra.mxu0 0.0
      %2110 = vmatprep.subr.mxu0 0.0
      %2111 = vmatpush1.msra.mxu0 0.0
      %2112 = vmatprep.subr.mxu0 0.0
      %2113 = vmatpush1.msra.mxu0 0.0
      %2114 = vmatprep.subr.mxu0 0.0
      %2115 = vmatpush1.msra.mxu0 0.0
      %2116 = vmatprep.subr.mxu0 0.0
      %2117 = vmatpush1.msra.mxu0 0.0
      %2118 = vmatprep.subr.mxu0 0.0
      %2119 = vmatpush1.msra.mxu0 0.0
      %2120 = vmatprep.subr.mxu0 0.0
      %2121 = vmatpush1.msra.mxu0 0.0
      %2122 = vmatprep.subr.mxu0 0.0
      %2123 = vmatpush1.msra.mxu0 0.0
      %2124 = vmatprep.subr.mxu0 0.0
      %2125 = vmatpush1.msra.mxu0 0.0
      %2126 = vmatprep.subr.mxu0 0.0
      %2127 = vmatpush1.msra.mxu0 0.0
      %2128 = vmatprep.subr.mxu0 0.0
      %2129 = vmatpush1.msra.mxu0 0.0
      %2130 = vmatprep.subr.mxu0 0.0
      %2131 = vmatpush1.msra.mxu0 0.0
      %2132 = vmatprep.subr.mxu0 0.0
      %2133 = vmatpush1.msra.mxu0 0.0
      %2134 = vmatprep.subr.mxu0 0.0
      %2135 = vmatpush1.msra.mxu0 0.0
      %2136 = vmatprep.subr.mxu0 0.0
      %2137 = vmatpush1.msra.mxu0 0.0
      %2138 = vmatprep.subr.mxu0 0.0
      %2139 = vmatpush1.msra.mxu0 0.0
      %2140 = vmatprep.subr.mxu0 0.0
      %2141 = vmatpush1.msra.mxu0 0.0
      %2142 = vmatprep.subr.mxu0 0.0
      %2143 = vmatpush1.msra.mxu0 0.0
      %2144 = vmatprep.subr.mxu0 0.0
      %2145 = vmatpush1.msra.mxu0 0.0
      %2146 = vmatprep.subr.mxu0 0.0
      %2147 = vmatpush1.msra.mxu0 0.0
      %2148 = vmatprep.subr.mxu0 0.0
      %2149 = vmatpush1.msra.mxu0 0.0
      %2150 = vmatprep.subr.mxu0 0.0
      %2151 = vmatpush1.msra.mxu0 0.0
      %2152 = vmatprep.subr.mxu0 0.0
      %2153 = vmatpush1.msra.mxu0 0.0
      %2154 = vmatprep.subr.mxu0 0.0
      %2155 = vmatpush1.msra.mxu0 0.0
      %2156 = vmatprep.mubr.f32.mxu0 0.0
      %v2157 = vand.u32 %v1775, 4294901760
      %2158 = vmatmul.mubr.f32.gmra.mrb[0].mxu0 %v2157
      %v2159 = vpop.f32.mrb[0].mxu0
      %v2160 = vadd.f32 %v2083, %v2159
      %v2161 = vpop.f32.mrb[0].mxu0
      %2162 = vdwg.mxu0
      %2163 = vmatprep.subr.mxu0 0.0
      %v2164 = vand.u32 %v456, 4294901760
      %2165 = vmatpush1.msra.mxu0 %v2164
      %2166 = vmatprep.subr.mxu0 0.0
      %v2167 = vand.u32 %v457, 4294901760
      %2168 = vmatpush1.msra.mxu0 %v2167
      %2169 = vmatprep.subr.mxu0 0.0
      %2170 = vmatpush1.msra.mxu0 0.0
      %2171 = vmatprep.subr.mxu0 0.0
      %2172 = vmatpush1.msra.mxu0 0.0
      %2173 = vmatprep.subr.mxu0 0.0
      %2174 = vmatpush1.msra.mxu0 0.0
      %2175 = vmatprep.subr.mxu0 0.0
      %2176 = vmatpush1.msra.mxu0 0.0
      %2177 = vmatprep.subr.mxu0 0.0
      %2178 = vmatpush1.msra.mxu0 0.0
      %2179 = vmatprep.subr.mxu0 0.0
      %2180 = vmatpush1.msra.mxu0 0.0
      %2181 = vmatprep.subr.mxu0 0.0
      %2182 = vmatpush1.msra.mxu0 0.0
      %2183 = vmatprep.subr.mxu0 0.0
      %2184 = vmatpush1.msra.mxu0 0.0
      %2185 = vmatprep.subr.mxu0 0.0
      %2186 = vmatpush1.msra.mxu0 0.0
      %2187 = vmatprep.subr.mxu0 0.0
      %2188 = vmatpush1.msra.mxu0 0.0
      %2189 = vmatprep.subr.mxu0 0.0
      %2190 = vmatpush1.msra.mxu0 0.0
      %2191 = vmatprep.subr.mxu0 0.0
      %2192 = vmatpush1.msra.mxu0 0.0
      %2193 = vmatprep.subr.mxu0 0.0
      %2194 = vmatpush1.msra.mxu0 0.0
      %2195 = vmatprep.subr.mxu0 0.0
      %2196 = vmatpush1.msra.mxu0 0.0
      %2197 = vmatprep.subr.mxu0 0.0
      %2198 = vmatpush1.msra.mxu0 0.0
      %2199 = vmatprep.subr.mxu0 0.0
      %2200 = vmatpush1.msra.mxu0 0.0
      %2201 = vmatprep.subr.mxu0 0.0
      %2202 = vmatpush1.msra.mxu0 0.0
      %2203 = vmatprep.subr.mxu0 0.0
      %2204 = vmatpush1.msra.mxu0 0.0
      %2205 = vmatprep.subr.mxu0 0.0
      %2206 = vmatpush1.msra.mxu0 0.0
      %2207 = vmatprep.subr.mxu0 0.0
      %2208 = vmatpush1.msra.mxu0 0.0
      %2209 = vmatprep.subr.mxu0 0.0
      %2210 = vmatpush1.msra.mxu0 0.0
      %2211 = vmatprep.subr.mxu0 0.0
      %2212 = vmatpush1.msra.mxu0 0.0
      %2213 = vmatprep.subr.mxu0 0.0
      %2214 = vmatpush1.msra.mxu0 0.0
      %2215 = vmatprep.subr.mxu0 0.0
      %2216 = vmatpush1.msra.mxu0 0.0
      %2217 = vmatprep.subr.mxu0 0.0
      %2218 = vmatpush1.msra.mxu0 0.0
      %2219 = vmatprep.subr.mxu0 0.0
      %2220 = vmatpush1.msra.mxu0 0.0
      %2221 = vmatprep.subr.mxu0 0.0
      %2222 = vmatpush1.msra.mxu0 0.0
      %2223 = vmatprep.subr.mxu0 0.0
      %2224 = vmatpush1.msra.mxu0 0.0
      %2225 = vmatprep.subr.mxu0 0.0
      %2226 = vmatpush1.msra.mxu0 0.0
      %2227 = vmatprep.subr.mxu0 0.0
      %2228 = vmatpush1.msra.mxu0 0.0
      %2229 = vmatprep.mubr.f32.mxu0 0.0
      %v2230 = vand.u32 %v1775, 4294901760
      %2231 = vmatmul.mubr.f32.gmra.mrb[0].mxu0 %v2230
      %v2232 = vpop.f32.mrb[0].mxu0
      %v2233 = vadd.f32 %v2160, %v2232
      %v2234 = vpop.f32.mrb[0].mxu0
      %2235 = vdwg.mxu0
      %v2236 = vmul.f32 %v1771, %v1771
      %v2237 = vsub.f32 %v2233, %v2236
      %v2238 = vadd.f32 %v2237, 1e-05
      %v2239 = vrsqrt.pop %v2238
      %v2240 = vmul.f32 %v458, %v2239
      %v2241 = vmul.f32 %v1771, %v2240
      %v2242 = vsub.f32 %v459, %v2241
      %v2243 = vlaneseq
      %v2244 = vshrl.u32 %v2243, 7
      %v2245 = vsub.s32 0, %v2244
      %v2246 = vrot.slane %v2240, %v2245
      %v2247 = vmul.f32 %v1230, %v2246
      %v2248 = vmul.f32 %v1233, %v2246
      %v2249 = vmul.f32 %v1238, %v2246
      %v2250 = vmul.f32 %v1241, %v2246
      %v2251 = vmul.f32 %v1246, %v2246
      %v2252 = vmul.f32 %v1249, %v2246
      %v2253 = vmul.f32 %v1254, %v2246
      %v2254 = vmul.f32 %v1257, %v2246
      %v2255 = vlaneseq
      %v2256 = vshrl.u32 %v2255, 7
      %v2257 = vsub.s32 0, %v2256
      %v2258 = vrot.slane %v2242, %v2257
      %v2259 = vadd.f32 %v2247, %v2258
      %v2260 = vadd.f32 %v2248, %v2258
      %v2261 = vadd.f32 %v2249, %v2258
      %v2262 = vadd.f32 %v2250, %v2258
      %v2263 = vadd.f32 %v2251, %v2258
      %v2264 = vadd.f32 %v2252, %v2258
      %v2265 = vadd.f32 %v2253, %v2258
      %v2266 = vadd.f32 %v2254, %v2258
      %v2267 = vsub.f32 0.0, %v2259
      %v2268 = vsub.f32 0.0, %v2260
      %v2269 = vsub.f32 0.0, %v2261
      %v2270 = vsub.f32 0.0, %v2262
      %v2271 = vsub.f32 0.0, %v2263
      %v2272 = vsub.f32 0.0, %v2264
      %v2273 = vsub.f32 0.0, %v2265
      %v2274 = vsub.f32 0.0, %v2266
      %v2275 = vmul.f32 %v2267, 1.442695
      %v2276 = vpow.pop %v2275
      %v2277 = vmul.f32 %v2268, 1.442695
      %v2278 = vpow.pop %v2277
      %v2279 = vmul.f32 %v2269, 1.442695
      %v2280 = vpow.pop %v2279
      %v2281 = vmul.f32 %v2270, 1.442695
      %v2282 = vpow.pop %v2281
      %v2283 = vmul.f32 %v2271, 1.442695
      %v2284 = vpow.pop %v2283
      %v2285 = vmul.f32 %v2272, 1.442695
      %v2286 = vpow.pop %v2285
      %v2287 = vmul.f32 %v2273, 1.442695
      %v2288 = vpow.pop %v2287
      %v2289 = vmul.f32 %v2274, 1.442695
      %v2290 = vpow.pop %v2289
      %v2291 = vadd.f32 %v2276, 1.0
      %v2292 = vadd.f32 %v2278, 1.0
      %v2293 = vadd.f32 %v2280, 1.0
      %v2294 = vadd.f32 %v2282, 1.0
      %v2295 = vadd.f32 %v2284, 1.0
      %v2296 = vadd.f32 %v2286, 1.0
      %v2297 = vadd.f32 %v2288, 1.0
      %v2298 = vadd.f32 %v2290, 1.0
      %v2299 = vrcp.pop %v2291
      %v2300 = vrcp.pop %v2292
      %v2301 = vrcp.pop %v2293
      %v2302 = vrcp.pop %v2294
      %v2303 = vrcp.pop %v2295
      %v2304 = vrcp.pop %v2296
      %v2305 = vrcp.pop %v2297
      %v2306 = vrcp.pop %v2298
      %v2307 = vmul.f32 %v2259, %v2299
      %v2308 = vmul.f32 %v2260, %v2300
      %v2309 = vmul.f32 %v2261, %v2301
      %v2310 = vmul.f32 %v2262, %v2302
      %v2311 = vmul.f32 %v2263, %v2303
      %v2312 = vmul.f32 %v2264, %v2304
      %v2313 = vmul.f32 %v2265, %v2305
      %v2314 = vmul.f32 %v2266, %v2306
      %v2315 = vlaneseq
      %v2316 = vshrl.u32 %v2315, 7
      %v2317 = vsub.s32 0, %v2316
      %v2318 = vrot.slane %v649, %v2317
      %v2319 = vadd.f32 %v2307, %v2318
      %v2320 = vadd.f32 %v2308, %v2318
      %v2321 = vadd.f32 %v2309, %v2318
      %v2322 = vadd.f32 %v2310, %v2318
      %v2323 = vadd.f32 %v2311, %v2318
      %v2324 = vadd.f32 %v2312, %v2318
      %v2325 = vadd.f32 %v2313, %v2318
      %v2326 = vadd.f32 %v2314, %v2318
      %s2327 = scalar_lea.vmem %s2, 72
      %v2328 = vld [vmem:[%s2327] sm:$0xf]
      %v2329 = vld [vmem:[%s2327 + $0x4] sm:$0xf]
      %v2330 = vld [vmem:[%s2327 + $0x8] sm:$0xf]
      %v2331 = vld [vmem:[%s2327 + $0xc] sm:$0xf]
      %v2332 = vld [vmem:[%s2327 + $0x10] sm:$0xf]
      %v2333 = vld [vmem:[%s2327 + $0x14] sm:$0xf]
      %v2334 = vld [vmem:[%s2327 + $0x18] sm:$0xf]
      %v2335 = vld [vmem:[%s2327 + $0x1c] sm:$0xf]
      %v2336 = vld [vmem:[%s2327 + $0x20] sm:$0xf]
      %v2337 = vld [vmem:[%s2327 + $0x24] sm:$0xf]
      %v2338 = vld [vmem:[%s2327 + $0x28] sm:$0xf]
      %v2339 = vld [vmem:[%s2327 + $0x2c] sm:$0xf]
      %v2340 = vld [vmem:[%s2327 + $0x30] sm:$0xf]
      %v2341 = vld [vmem:[%s2327 + $0x34] sm:$0xf]
      %v2342 = vld [vmem:[%s2327 + $0x38] sm:$0xf]
      %v2343 = vld [vmem:[%s2327 + $0x3c] sm:$0xf]
      %v2344 = vld [vmem:[%s2327 + $0x40] sm:$0xf]
      %v2345 = vld [vmem:[%s2327 + $0x44] sm:$0xf]
      %v2353 = vrot.slane %v2319, 7
      %v2354 = vsel %vm730, %v731, %v2353
      %v2355 = vrot.slane %v2320, 7
      %v2356 = vsel %vm730, %v2353, %v2355
      %v2357 = vrot.slane %v2321, 7
      %v2358 = vsel %vm730, %v2355, %v2357
      %v2359 = vrot.slane %v2322, 7
      %v2360 = vsel %vm730, %v2357, %v2359
      %v2361 = vrot.slane %v2323, 7
      %v2362 = vsel %vm730, %v2359, %v2361
      %v2363 = vrot.slane %v2324, 7
      %v2364 = vsel %vm730, %v2361, %v2363
      %v2365 = vrot.slane %v2325, 7
      %v2366 = vsel %vm730, %v2363, %v2365
      %v2374 = vsel %vm715, %v2354, 0.0
      %v2375 = vsel %vm716, %v2356, 0.0
      %v2376 = vsel %vm717, %v2358, 0.0
      %v2377 = vsel %vm718, %v2360, 0.0
      %v2378 = vsel %vm719, %v2362, 0.0
      %v2379 = vsel %vm720, %v2364, 0.0
      %v2380 = vsel %vm721, %v2366, 0.0
      %v2382 = vrot.slane %v2319, 1
      %v2383 = vsel %vm780, %v781, %v2382
      %v2384 = vrot.slane %v2320, 1
      %v2385 = vsel %vm780, %v2382, %v2384
      %v2386 = vrot.slane %v2321, 1
      %v2387 = vsel %vm780, %v2384, %v2386
      %v2388 = vrot.slane %v2322, 1
      %v2389 = vsel %vm780, %v2386, %v2388
      %v2390 = vrot.slane %v2323, 1
      %v2391 = vsel %vm780, %v2388, %v2390
      %v2392 = vrot.slane %v2324, 1
      %v2393 = vsel %vm780, %v2390, %v2392
      %v2394 = vrot.slane %v2325, 1
      %v2395 = vsel %vm780, %v2392, %v2394
      %v2396 = vrot.slane %v2326, 1
      %v2397 = vsel %vm780, %v2394, %v2396
      %v2406 = vsel %vm771, %v2383, 0.0
      %v2407 = vsel %vm772, %v2385, 0.0
      %v2408 = vsel %vm773, %v2387, 0.0
      %v2409 = vsel %vm774, %v2389, 0.0
      %v2410 = vsel %vm775, %v2391, 0.0
      %v2411 = vsel %vm776, %v2393, 0.0
      %v2412 = vsel %vm777, %v2395, 0.0
      %v2413 = vsel %vm778, %v2397, 0.0
      %v2414 = vrot.slane %v2326, 7
      %v2415 = vsel %vm730, %v2365, %v2414
      %v2417 = vsel %vm714, %v2354, 0.0
      %v2418 = vsel %vm715, %v2356, 0.0
      %v2419 = vsel %vm716, %v2358, 0.0
      %v2420 = vsel %vm717, %v2360, 0.0
      %v2421 = vsel %vm718, %v2362, 0.0
      %v2422 = vsel %vm719, %v2364, 0.0
      %v2423 = vsel %vm720, %v2366, 0.0
      %v2424 = vsel %vm721, %v2415, 0.0
      %v2425 = vsel %vm780, %v2396, %v781
      %v2427 = vsel %vm771, %v2385, 0.0
      %v2428 = vsel %vm772, %v2387, 0.0
      %v2429 = vsel %vm773, %v2389, 0.0
      %v2430 = vsel %vm774, %v2391, 0.0
      %v2431 = vsel %vm775, %v2393, 0.0
      %v2432 = vsel %vm776, %v2395, 0.0
      %v2433 = vsel %vm777, %v2397, 0.0
      %v2434 = vsel %vm778, %v2425, 0.0
      %v2435 = vsel %vm730, %v2414, %v731
      %v2437 = vsel %vm714, %v2356, 0.0
      %v2438 = vsel %vm715, %v2358, 0.0
      %v2439 = vsel %vm716, %v2360, 0.0
      %v2440 = vsel %vm717, %v2362, 0.0
      %v2441 = vsel %vm718, %v2364, 0.0
      %v2442 = vsel %vm719, %v2366, 0.0
      %v2443 = vsel %vm720, %v2415, 0.0
      %v2444 = vsel %vm721, %v2435, 0.0
      %v2445 = vsel %vm771, %v2387, 0.0
      %v2446 = vsel %vm772, %v2389, 0.0
      %v2447 = vsel %vm773, %v2391, 0.0
      %v2448 = vsel %vm774, %v2393, 0.0
      %v2449 = vsel %vm775, %v2395, 0.0
      %v2450 = vsel %vm776, %v2397, 0.0
      %v2451 = vsel %vm777, %v2425, 0.0
      %2452 = vrot.lane.b32.xlu0 %v2319, 16
      %v2453 = vpop.permute.xlu0 %2452
      %2454 = vrot.lane.b32.xlu0 %v2320, 16
      %v2455 = vpop.permute.xlu0 %2454
      %2456 = vrot.lane.b32.xlu0 %v2321, 16
      %v2457 = vpop.permute.xlu0 %2456
      %2458 = vrot.lane.b32.xlu0 %v2322, 16
      %v2459 = vpop.permute.xlu0 %2458
      %2460 = vrot.lane.b32.xlu0 %v2323, 16
      %v2461 = vpop.permute.xlu0 %2460
      %2462 = vrot.lane.b32.xlu0 %v2324, 16
      %v2463 = vpop.permute.xlu0 %2462
      %2464 = vrot.lane.b32.xlu0 %v2325, 16
      %v2465 = vpop.permute.xlu0 %2464
      %2481 = vrot.lane.b32.xlu0 %v2406, 32
      %v2482 = vpop.permute.xlu0 %2481
      %2483 = vrot.lane.b32.xlu0 %v2407, 32
      %v2484 = vpop.permute.xlu0 %2483
      %2485 = vrot.lane.b32.xlu0 %v2408, 32
      %v2486 = vpop.permute.xlu0 %2485
      %2487 = vrot.lane.b32.xlu0 %v2409, 32
      %v2488 = vpop.permute.xlu0 %2487
      %2489 = vrot.lane.b32.xlu0 %v2410, 32
      %v2490 = vpop.permute.xlu0 %2489
      %2491 = vrot.lane.b32.xlu0 %v2411, 32
      %v2492 = vpop.permute.xlu0 %2491
      %2493 = vrot.lane.b32.xlu0 %v2412, 32
      %v2494 = vpop.permute.xlu0 %2493
      %2495 = vrot.lane.b32.xlu0 %v2413, 32
      %v2496 = vpop.permute.xlu0 %2495
      %2513 = vrot.lane.b32.xlu0 %v2417, 48
      %v2514 = vpop.permute.xlu0 %2513
      %2515 = vrot.lane.b32.xlu0 %v2418, 48
      %v2516 = vpop.permute.xlu0 %2515
      %2517 = vrot.lane.b32.xlu0 %v2419, 48
      %v2518 = vpop.permute.xlu0 %2517
      %2519 = vrot.lane.b32.xlu0 %v2420, 48
      %v2520 = vpop.permute.xlu0 %2519
      %2521 = vrot.lane.b32.xlu0 %v2421, 48
      %v2522 = vpop.permute.xlu0 %2521
      %2523 = vrot.lane.b32.xlu0 %v2422, 48
      %v2524 = vpop.permute.xlu0 %2523
      %2525 = vrot.lane.b32.xlu0 %v2423, 48
      %v2526 = vpop.permute.xlu0 %2525
      %2527 = vrot.lane.b32.xlu0 %v2424, 48
      %v2528 = vpop.permute.xlu0 %2527
      %2537 = vrot.lane.b32.xlu0 %v2319, 64
      %v2538 = vpop.permute.xlu0 %2537
      %2539 = vrot.lane.b32.xlu0 %v2320, 64
      %v2540 = vpop.permute.xlu0 %2539
      %2541 = vrot.lane.b32.xlu0 %v2321, 64
      %v2542 = vpop.permute.xlu0 %2541
      %2543 = vrot.lane.b32.xlu0 %v2322, 64
      %v2544 = vpop.permute.xlu0 %2543
      %2545 = vrot.lane.b32.xlu0 %v2323, 64
      %v2546 = vpop.permute.xlu0 %2545
      %2547 = vrot.lane.b32.xlu0 %v2324, 64
      %v2548 = vpop.permute.xlu0 %2547
      %2549 = vrot.lane.b32.xlu0 %v2325, 64
      %v2550 = vpop.permute.xlu0 %2549
      %2551 = vrot.lane.b32.xlu0 %v2326, 64
      %v2552 = vpop.permute.xlu0 %2551
      %2569 = vrot.lane.b32.xlu0 %v2427, 80
      %v2570 = vpop.permute.xlu0 %2569
      %2571 = vrot.lane.b32.xlu0 %v2428, 80
      %v2572 = vpop.permute.xlu0 %2571
      %2573 = vrot.lane.b32.xlu0 %v2429, 80
      %v2574 = vpop.permute.xlu0 %2573
      %2575 = vrot.lane.b32.xlu0 %v2430, 80
      %v2576 = vpop.permute.xlu0 %2575
      %2577 = vrot.lane.b32.xlu0 %v2431, 80
      %v2578 = vpop.permute.xlu0 %2577
      %2579 = vrot.lane.b32.xlu0 %v2432, 80
      %v2580 = vpop.permute.xlu0 %2579
      %2581 = vrot.lane.b32.xlu0 %v2433, 80
      %v2582 = vpop.permute.xlu0 %2581
      %2583 = vrot.lane.b32.xlu0 %v2434, 80
      %v2584 = vpop.permute.xlu0 %2583
      %2601 = vrot.lane.b32.xlu0 %v2437, 96
      %v2602 = vpop.permute.xlu0 %2601
      %2603 = vrot.lane.b32.xlu0 %v2438, 96
      %v2604 = vpop.permute.xlu0 %2603
      %2605 = vrot.lane.b32.xlu0 %v2439, 96
      %v2606 = vpop.permute.xlu0 %2605
      %2607 = vrot.lane.b32.xlu0 %v2440, 96
      %v2608 = vpop.permute.xlu0 %2607
      %2609 = vrot.lane.b32.xlu0 %v2441, 96
      %v2610 = vpop.permute.xlu0 %2609
      %2611 = vrot.lane.b32.xlu0 %v2442, 96
      %v2612 = vpop.permute.xlu0 %2611
      %2613 = vrot.lane.b32.xlu0 %v2443, 96
      %v2614 = vpop.permute.xlu0 %2613
      %2615 = vrot.lane.b32.xlu0 %v2444, 96
      %v2616 = vpop.permute.xlu0 %2615
      %2625 = vrot.lane.b32.xlu0 %v2320, 112
      %v2626 = vpop.permute.xlu0 %2625
      %2627 = vrot.lane.b32.xlu0 %v2321, 112
      %v2628 = vpop.permute.xlu0 %2627
      %2629 = vrot.lane.b32.xlu0 %v2322, 112
      %v2630 = vpop.permute.xlu0 %2629
      %2631 = vrot.lane.b32.xlu0 %v2323, 112
      %v2632 = vpop.permute.xlu0 %2631
      %2633 = vrot.lane.b32.xlu0 %v2324, 112
      %v2634 = vpop.permute.xlu0 %2633
      %2635 = vrot.lane.b32.xlu0 %v2325, 112
      %v2636 = vpop.permute.xlu0 %2635
      %2637 = vrot.lane.b32.xlu0 %v2326, 112
      %v2638 = vpop.permute.xlu0 %2637
      %v2646 = vsel %vm1055, %v2374, %v2453
      %v2647 = vsel %vm1055, %v2375, %v2455
      %v2648 = vsel %vm1055, %v2376, %v2457
      %v2649 = vsel %vm1055, %v2377, %v2459
      %v2650 = vsel %vm1055, %v2378, %v2461
      %v2651 = vsel %vm1055, %v2379, %v2463
      %v2652 = vsel %vm1055, %v2380, %v2465
      %v2653 = vsel %vm610, %v1056, %v2482
      %v2654 = vsel %vm610, %v2646, %v2484
      %v2655 = vsel %vm610, %v2647, %v2486
      %v2656 = vsel %vm610, %v2648, %v2488
      %v2657 = vsel %vm610, %v2649, %v2490
      %v2658 = vsel %vm610, %v2650, %v2492
      %v2659 = vsel %vm610, %v2651, %v2494
      %v2660 = vsel %vm610, %v2652, %v2496
      %v2661 = vsel %vm1072, %v2653, %v2514
      %v2662 = vsel %vm1072, %v2654, %v2516
      %v2663 = vsel %vm1072, %v2655, %v2518
      %v2664 = vsel %vm1072, %v2656, %v2520
      %v2665 = vsel %vm1072, %v2657, %v2522
      %v2666 = vsel %vm1072, %v2658, %v2524
      %v2667 = vsel %vm1072, %v2659, %v2526
      %v2668 = vsel %vm1072, %v2660, %v2528
      %v2669 = vsel %vm1081, %v2661, %v2538
      %v2670 = vsel %vm1081, %v2662, %v2540
      %v2671 = vsel %vm1081, %v2663, %v2542
      %v2672 = vsel %vm1081, %v2664, %v2544
      %v2673 = vsel %vm1081, %v2665, %v2546
      %v2674 = vsel %vm1081, %v2666, %v2548
      %v2675 = vsel %vm1081, %v2667, %v2550
      %v2676 = vsel %vm1081, %v2668, %v2552
      %v2677 = vsel %vm1090, %v2669, %v2570
      %v2678 = vsel %vm1090, %v2670, %v2572
      %v2679 = vsel %vm1090, %v2671, %v2574
      %v2680 = vsel %vm1090, %v2672, %v2576
      %v2681 = vsel %vm1090, %v2673, %v2578
      %v2682 = vsel %vm1090, %v2674, %v2580
      %v2683 = vsel %vm1090, %v2675, %v2582
      %v2684 = vsel %vm1090, %v2676, %v2584
      %v2685 = vsel %vm1099, %v2677, %v2602
      %v2686 = vsel %vm1099, %v2678, %v2604
      %v2687 = vsel %vm1099, %v2679, %v2606
      %v2688 = vsel %vm1099, %v2680, %v2608
      %v2689 = vsel %vm1099, %v2681, %v2610
      %v2690 = vsel %vm1099, %v2682, %v2612
      %v2691 = vsel %vm1099, %v2683, %v2614
      %v2692 = vsel %vm1099, %v2684, %v2616
      %v2693 = vsel %vm1108, %v2685, %v2626
      %v2694 = vsel %vm1108, %v2686, %v2628
      %v2695 = vsel %vm1108, %v2687, %v2630
      %v2696 = vsel %vm1108, %v2688, %v2632
      %v2697 = vsel %vm1108, %v2689, %v2634
      %v2698 = vsel %vm1108, %v2690, %v2636
      %v2699 = vsel %vm1108, %v2691, %v2638
      %v2700 = vsel %vm1108, %v2692, %v1046
      %v2701 = vpack.c.bf16 %v2694, %v2693
      %v2702 = vpack.c.bf16 %v2446, %v2445
      %v2703 = vpack.c.bf16 %v2696, %v2695
      %v2704 = vpack.c.bf16 %v2448, %v2447
      %v2705 = vpack.c.bf16 %v2698, %v2697
      %v2706 = vpack.c.bf16 %v2450, %v2449
      %v2707 = vpack.c.bf16 %v2700, %v2699
      %v2708 = vpack.c.bf16 %v854, %v2451
      %v2709 = vlaneseq
      %v2710 = vshrl.u32 %v2709, 7
      %v2711 = vsub.s32 1, %v2710
      %v2712 = vrot.slane %v460, %v2711
      %v2731 = vunpack.c.l.b16 %v2328
      %v2732 = vunpack.c.l.b16 %v2329
      %v2733 = vunpack.c.l.b16 %v2330
      %v2734 = vunpack.c.l.b16 %v2331
      %v2735 = vunpack.c.l.b16 %v2332
      %v2736 = vunpack.c.l.b16 %v2333
      %v2737 = vunpack.c.l.b16 %v2334
      %v2738 = vunpack.c.l.b16 %v2335
      %v2739 = vunpack.c.l.b16 %v2336
      %v2740 = vunpack.c.l.b16 %v2337
      %v2741 = vunpack.c.l.b16 %v2338
      %v2742 = vunpack.c.l.b16 %v2339
      %v2743 = vunpack.c.l.b16 %v2340
      %v2744 = vunpack.c.l.b16 %v2341
      %v2745 = vunpack.c.l.b16 %v2342
      %v2746 = vunpack.c.l.b16 %v2343
      %v2747 = vunpack.c.l.b16 %v2344
      %v2748 = vunpack.c.l.b16 %v2345
      %v2749 = vpack.c.b16 %v2732, %v2731
      %v2750 = vpack.c.b16 %v2734, %v2733
      %v2751 = vpack.c.b16 %v2736, %v2735
      %v2752 = vpack.c.b16 %v2738, %v2737
      %v2753 = vpack.c.b16 %v2740, %v2739
      %v2754 = vpack.c.b16 %v2742, %v2741
      %v2755 = vpack.c.b16 %v2744, %v2743
      %v2756 = vpack.c.b16 %v2746, %v2745
      %v2757 = vpack.c.b16 %v2748, %v2747
      %v2768 = vsel %vm1055, %v2702, 0
      %v2771 = vsel %vm1055, %v2704, 0
      %v2774 = vsel %vm1055, %v2706, 0
      %v2777 = vsel %vm1055, %v2708, 0
      %2779 = vmatprep.subr.bf16.mxu0 0
      %2780 = vmatpush1.bf16.msra.mxu0 %v2749
      %2781 = vmatprep.subr.bf16.mxu0 0
      %2782 = vmatpush1.bf16.msra.mxu0 %v2750
      %2783 = vmatprep.subr.bf16.mxu0 0
      %2784 = vmatpush1.bf16.msra.mxu0 %v2751
      %2785 = vmatprep.subr.bf16.mxu0 0
      %2786 = vmatpush1.bf16.msra.mxu0 %v2752
      %2787 = vmatprep.subr.bf16.mxu0 0
      %2788 = vmatpush1.bf16.msra.mxu0 %v2753
      %2789 = vmatprep.subr.bf16.mxu0 0
      %2790 = vmatpush1.bf16.msra.mxu0 %v2754
      %2791 = vmatprep.subr.bf16.mxu0 0
      %2792 = vmatpush1.bf16.msra.mxu0 %v2755
      %2793 = vmatprep.subr.bf16.mxu0 0
      %2794 = vmatpush1.bf16.msra.mxu0 %v2756
      %2795 = vmatprep.subr.bf16.mxu0 0
      %2796 = vmatpush1.bf16.msra.mxu0 %v2757
      %2797 = vmatprep.subr.bf16.mxu0 0
      %2798 = vmatpush1.bf16.msra.mxu0 0
      %2799 = vmatprep.subr.bf16.mxu0 0
      %2800 = vmatpush1.bf16.msra.mxu0 0
      %2801 = vmatprep.subr.bf16.mxu0 0
      %2802 = vmatpush1.bf16.msra.mxu0 0
      %2803 = vmatprep.subr.bf16.mxu0 0
      %2804 = vmatpush1.bf16.msra.mxu0 0
      %2805 = vmatprep.subr.bf16.mxu0 0
      %2806 = vmatpush1.bf16.msra.mxu0 0
      %2807 = vmatprep.subr.bf16.mxu0 0
      %2808 = vmatpush1.bf16.msra.mxu0 0
      %2809 = vmatprep.subr.bf16.mxu0 0
      %2810 = vmatpush1.bf16.msra.mxu0 0
      %2811 = vmatprep.mubr.bf16.mxu0 %v2768
      %2812 = vmatmul.mubr.bf16.gmra.mrb[0].mxu0 %v2701
      %v2813 = vpop.f32.mrb[0].mxu0
      %v2814 = vadd.f32 %v2712, %v2813
      %v2815 = vpop.f32.mrb[0].mxu0
      %v2816 = vpop.f32.mrb[0].mxu0
      %v2817 = vadd.f32 %v2712, %v2816
      %v2818 = vpop.f32.mrb[0].mxu0
      %2819 = vmatprep.mubr.bf16.mxu0 %v2771
      %2820 = vmatmul.mubr.bf16.gmra.mrb[0].mxu0 %v2703
      %v2821 = vpop.f32.mrb[0].mxu0
      %v2822 = vadd.f32 %v2712, %v2821
      %v2823 = vpop.f32.mrb[0].mxu0
      %v2824 = vpop.f32.mrb[0].mxu0
      %v2825 = vadd.f32 %v2712, %v2824
      %v2826 = vpop.f32.mrb[0].mxu0
      %2827 = vmatprep.mubr.bf16.mxu0 %v2774
      %2828 = vmatmul.mubr.bf16.gmra.mrb[0].mxu0 %v2705
      %v2829 = vpop.f32.mrb[0].mxu0
      %v2830 = vadd.f32 %v2712, %v2829
      %v2831 = vpop.f32.mrb[0].mxu0
      %v2832 = vpop.f32.mrb[0].mxu0
      %v2833 = vadd.f32 %v2712, %v2832
      %v2834 = vpop.f32.mrb[0].mxu0
      %2835 = vmatprep.mubr.bf16.mxu0 %v2777
      %2836 = vmatmul.mubr.bf16.gmra.mrb[0].mxu0 %v2707
      %v2837 = vpop.f32.mrb[0].mxu0
      %v2838 = vadd.f32 %v2712, %v2837
      %v2839 = vpop.f32.mrb[0].mxu0
      %v2840 = vpop.f32.mrb[0].mxu0
      %v2841 = vadd.f32 %v2712, %v2840
      %v2842 = vpop.f32.mrb[0].mxu0
      %2843 = vdwg.mxu0
      %v2844 = vsel %vm1055, %v2814, 0.0
      %v2845 = vsel %vm1055, %v2817, 0.0
      %v2846 = vadd.f32 %v2844, %v2845
      %v2847 = vsel %vm1055, %v2822, 0.0
      %v2848 = vadd.f32 %v2846, %v2847
      %v2849 = vsel %vm1055, %v2825, 0.0
      %v2850 = vadd.f32 %v2848, %v2849
      %v2851 = vsel %vm1055, %v2830, 0.0
      %v2852 = vadd.f32 %v2850, %v2851
      %v2853 = vsel %vm1055, %v2833, 0.0
      %v2854 = vadd.f32 %v2852, %v2853
      %v2855 = vsel %vm1055, %v2838, 0.0
      %v2856 = vadd.f32 %v2854, %v2855
      %v2857 = vsel %vm1055, %v2841, 0.0
      %v2858 = vadd.f32 %v2856, %v2857
      %v2859 = vrot.slane %v2858, 4
      %v2860 = vadd.f32 %v2858, %v2859
      %v2861 = vrot.slane %v2860, 2
      %v2862 = vadd.f32 %v2860, %v2861
      %v2863 = vrot.slane %v2862, 1
      %v2864 = vadd.f32 %v2862, %v2863
      %v2865 = vmul.f32 %v2864, 0.015625
      %v2866 = vmul.f32 %v2814, %v2814
      %v2867 = vmul.f32 %v2817, %v2817
      %v2868 = vmul.f32 %v2822, %v2822
      %v2869 = vmul.f32 %v2825, %v2825
      %v2870 = vmul.f32 %v2830, %v2830
      %v2871 = vmul.f32 %v2833, %v2833
      %v2872 = vmul.f32 %v2838, %v2838
      %v2873 = vmul.f32 %v2841, %v2841
      %v2874 = vsel %vm1055, %v2866, 0.0
      %v2875 = vsel %vm1055, %v2867, 0.0
      %v2876 = vadd.f32 %v2874, %v2875
      %v2877 = vsel %vm1055, %v2868, 0.0
      %v2878 = vadd.f32 %v2876, %v2877
      %v2879 = vsel %vm1055, %v2869, 0.0
      %v2880 = vadd.f32 %v2878, %v2879
      %v2881 = vsel %vm1055, %v2870, 0.0
      %v2882 = vadd.f32 %v2880, %v2881
      %v2883 = vsel %vm1055, %v2871, 0.0
      %v2884 = vadd.f32 %v2882, %v2883
      %v2885 = vsel %vm1055, %v2872, 0.0
      %v2886 = vadd.f32 %v2884, %v2885
      %v2887 = vsel %vm1055, %v2873, 0.0
      %v2888 = vadd.f32 %v2886, %v2887
      %v2889 = vrot.slane %v2888, 4
      %v2890 = vadd.f32 %v2888, %v2889
      %v2891 = vrot.slane %v2890, 2
      %v2892 = vadd.f32 %v2890, %v2891
      %v2893 = vrot.slane %v2892, 1
      %v2894 = vadd.f32 %v2892, %v2893
      %v2895 = vmul.f32 %v2894, 0.015625
      %v2897 = vsel %vm1055, %v2865, 0
      %2899 = vmatprep.subr.mxu0 0.0
      %v2900 = vand.u32 %v456, 4294901760
      %2901 = vmatpush1.msra.mxu0 %v2900
      %2902 = vmatprep.subr.mxu0 0.0
      %v2903 = vand.u32 %v457, 4294901760
      %2904 = vmatpush1.msra.mxu0 %v2903
      %2905 = vmatprep.subr.mxu0 0.0
      %2906 = vmatpush1.msra.mxu0 0.0
      %2907 = vmatprep.subr.mxu0 0.0
      %2908 = vmatpush1.msra.mxu0 0.0
      %2909 = vmatprep.subr.mxu0 0.0
      %2910 = vmatpush1.msra.mxu0 0.0
      %2911 = vmatprep.subr.mxu0 0.0
      %2912 = vmatpush1.msra.mxu0 0.0
      %2913 = vmatprep.subr.mxu0 0.0
      %2914 = vmatpush1.msra.mxu0 0.0
      %2915 = vmatprep.subr.mxu0 0.0
      %2916 = vmatpush1.msra.mxu0 0.0
      %2917 = vmatprep.subr.mxu0 0.0
      %2918 = vmatpush1.msra.mxu0 0.0
      %2919 = vmatprep.subr.mxu0 0.0
      %2920 = vmatpush1.msra.mxu0 0.0
      %2921 = vmatprep.subr.mxu0 0.0
      %2922 = vmatpush1.msra.mxu0 0.0
      %2923 = vmatprep.subr.mxu0 0.0
      %2924 = vmatpush1.msra.mxu0 0.0
      %2925 = vmatprep.subr.mxu0 0.0
      %2926 = vmatpush1.msra.mxu0 0.0
      %2927 = vmatprep.subr.mxu0 0.0
      %2928 = vmatpush1.msra.mxu0 0.0
      %2929 = vmatprep.subr.mxu0 0.0
      %2930 = vmatpush1.msra.mxu0 0.0
      %2931 = vmatprep.subr.mxu0 0.0
      %2932 = vmatpush1.msra.mxu0 0.0
      %2933 = vmatprep.subr.mxu0 0.0
      %2934 = vmatpush1.msra.mxu0 0.0
      %2935 = vmatprep.subr.mxu0 0.0
      %2936 = vmatpush1.msra.mxu0 0.0
      %2937 = vmatprep.subr.mxu0 0.0
      %2938 = vmatpush1.msra.mxu0 0.0
      %2939 = vmatprep.subr.mxu0 0.0
      %2940 = vmatpush1.msra.mxu0 0.0
      %2941 = vmatprep.subr.mxu0 0.0
      %2942 = vmatpush1.msra.mxu0 0.0
      %2943 = vmatprep.subr.mxu0 0.0
      %2944 = vmatpush1.msra.mxu0 0.0
      %2945 = vmatprep.subr.mxu0 0.0
      %2946 = vmatpush1.msra.mxu0 0.0
      %2947 = vmatprep.subr.mxu0 0.0
      %2948 = vmatpush1.msra.mxu0 0.0
      %2949 = vmatprep.subr.mxu0 0.0
      %2950 = vmatpush1.msra.mxu0 0.0
      %2951 = vmatprep.subr.mxu0 0.0
      %2952 = vmatpush1.msra.mxu0 0.0
      %2953 = vmatprep.subr.mxu0 0.0
      %2954 = vmatpush1.msra.mxu0 0.0
      %2955 = vmatprep.subr.mxu0 0.0
      %2956 = vmatpush1.msra.mxu0 0.0
      %2957 = vmatprep.subr.mxu0 0.0
      %2958 = vmatpush1.msra.mxu0 0.0
      %2959 = vmatprep.subr.mxu0 0.0
      %2960 = vmatpush1.msra.mxu0 0.0
      %2961 = vmatprep.subr.mxu0 0.0
      %2962 = vmatpush1.msra.mxu0 0.0
      %2963 = vmatprep.subr.mxu0 0.0
      %2964 = vmatpush1.msra.mxu0 0.0
      %2965 = vmatprep.mubr.f32.mxu0 0.0
      %v2966 = vand.u32 %v2897, 4294901760
      %v2967 = vsub.f32 %v2897, %v2966
      %v2968 = vand.u32 %v2967, 4294901760
      %v2969 = vsub.f32 %v2967, %v2968
      %v2970 = vand.u32 %v2969, 4294901760
      %2971 = vmatmul.mubr.f32.gmra.mrb[0].mxu0 %v2970
      %v2972 = vpop.f32.mrb[0].mxu0
      %v2973 = vadd.f32 0.0, %v2972
      %v2974 = vpop.f32.mrb[0].mxu0
      %2975 = vdwg.mxu0
      %2976 = vmatprep.subr.mxu0 0.0
      %v2977 = vand.u32 %v456, 4294901760
      %v2978 = vsub.f32 %v456, %v2977
      %v2979 = vand.u32 %v2978, 4294901760
      %v2980 = vsub.f32 %v2978, %v2979
      %v2981 = vand.u32 %v2980, 4294901760
      %2982 = vmatpush1.msra.mxu0 %v2981
      %2983 = vmatprep.subr.mxu0 0.0
      %v2984 = vand.u32 %v457, 4294901760
      %v2985 = vsub.f32 %v457, %v2984
      %v2986 = vand.u32 %v2985, 4294901760
      %v2987 = vsub.f32 %v2985, %v2986
      %v2988 = vand.u32 %v2987, 4294901760
      %2989 = vmatpush1.msra.mxu0 %v2988
      %2990 = vmatprep.subr.mxu0 0.0
      %2991 = vmatpush1.msra.mxu0 0.0
      %2992 = vmatprep.subr.mxu0 0.0
      %2993 = vmatpush1.msra.mxu0 0.0
      %2994 = vmatprep.subr.mxu0 0.0
      %2995 = vmatpush1.msra.mxu0 0.0
      %2996 = vmatprep.subr.mxu0 0.0
      %2997 = vmatpush1.msra.mxu0 0.0
      %2998 = vmatprep.subr.mxu0 0.0
      %2999 = vmatpush1.msra.mxu0 0.0
      %3000 = vmatprep.subr.mxu0 0.0
      %3001 = vmatpush1.msra.mxu0 0.0
      %3002 = vmatprep.subr.mxu0 0.0
      %3003 = vmatpush1.msra.mxu0 0.0
      %3004 = vmatprep.subr.mxu0 0.0
      %3005 = vmatpush1.msra.mxu0 0.0
      %3006 = vmatprep.subr.mxu0 0.0
      %3007 = vmatpush1.msra.mxu0 0.0
      %3008 = vmatprep.subr.mxu0 0.0
      %3009 = vmatpush1.msra.mxu0 0.0
      %3010 = vmatprep.subr.mxu0 0.0
      %3011 = vmatpush1.msra.mxu0 0.0
      %3012 = vmatprep.subr.mxu0 0.0
      %3013 = vmatpush1.msra.mxu0 0.0
      %3014 = vmatprep.subr.mxu0 0.0
      %3015 = vmatpush1.msra.mxu0 0.0
      %3016 = vmatprep.subr.mxu0 0.0
      %3017 = vmatpush1.msra.mxu0 0.0
      %3018 = vmatprep.subr.mxu0 0.0
      %3019 = vmatpush1.msra.mxu0 0.0
      %3020 = vmatprep.subr.mxu0 0.0
      %3021 = vmatpush1.msra.mxu0 0.0
      %3022 = vmatprep.subr.mxu0 0.0
      %3023 = vmatpush1.msra.mxu0 0.0
      %3024 = vmatprep.subr.mxu0 0.0
      %3025 = vmatpush1.msra.mxu0 0.0
      %3026 = vmatprep.subr.mxu0 0.0
      %3027 = vmatpush1.msra.mxu0 0.0
      %3028 = vmatprep.subr.mxu0 0.0
      %3029 = vmatpush1.msra.mxu0 0.0
      %3030 = vmatprep.subr.mxu0 0.0
      %3031 = vmatpush1.msra.mxu0 0.0
      %3032 = vmatprep.subr.mxu0 0.0
      %3033 = vmatpush1.msra.mxu0 0.0
      %3034 = vmatprep.subr.mxu0 0.0
      %3035 = vmatpush1.msra.mxu0 0.0
      %3036 = vmatprep.subr.mxu0 0.0
      %3037 = vmatpush1.msra.mxu0 0.0
      %3038 = vmatprep.subr.mxu0 0.0
      %3039 = vmatpush1.msra.mxu0 0.0
      %3040 = vmatprep.subr.mxu0 0.0
      %3041 = vmatpush1.msra.mxu0 0.0
      %3042 = vmatprep.subr.mxu0 0.0
      %3043 = vmatpush1.msra.mxu0 0.0
      %3044 = vmatprep.subr.mxu0 0.0
      %3045 = vmatpush1.msra.mxu0 0.0
      %3046 = vmatprep.subr.mxu0 0.0
      %3047 = vmatpush1.msra.mxu0 0.0
      %3048 = vmatprep.subr.mxu0 0.0
      %3049 = vmatpush1.msra.mxu0 0.0
      %3050 = vmatprep.mubr.f32.mxu0 0.0
      %v3051 = vand.u32 %v2897, 4294901760
      %3052 = vmatmul.mubr.f32.gmra.mrb[0].mxu0 %v3051
      %v3053 = vpop.f32.mrb[0].mxu0
      %v3054 = vadd.f32 %v2973, %v3053
      %v3055 = vpop.f32.mrb[0].mxu0
      %3056 = vdwg.mxu0
      %3057 = vmatprep.subr.mxu0 0.0
      %v3058 = vand.u32 %v456, 4294901760
      %v3059 = vsub.f32 %v456, %v3058
      %3060 = vmatpush1.msra.mxu0 %v3059
      %3061 = vmatprep.subr.mxu0 0.0
      %v3062 = vand.u32 %v457, 4294901760
      %v3063 = vsub.f32 %v457, %v3062
      %3064 = vmatpush1.msra.mxu0 %v3063
      %3065 = vmatprep.subr.mxu0 0.0
      %3066 = vmatpush1.msra.mxu0 0.0
      %3067 = vmatprep.subr.mxu0 0.0
      %3068 = vmatpush1.msra.mxu0 0.0
      %3069 = vmatprep.subr.mxu0 0.0
      %3070 = vmatpush1.msra.mxu0 0.0
      %3071 = vmatprep.subr.mxu0 0.0
      %3072 = vmatpush1.msra.mxu0 0.0
      %3073 = vmatprep.subr.mxu0 0.0
      %3074 = vmatpush1.msra.mxu0 0.0
      %3075 = vmatprep.subr.mxu0 0.0
      %3076 = vmatpush1.msra.mxu0 0.0
      %3077 = vmatprep.subr.mxu0 0.0
      %3078 = vmatpush1.msra.mxu0 0.0
      %3079 = vmatprep.subr.mxu0 0.0
      %3080 = vmatpush1.msra.mxu0 0.0
      %3081 = vmatprep.subr.mxu0 0.0
      %3082 = vmatpush1.msra.mxu0 0.0
      %3083 = vmatprep.subr.mxu0 0.0
      %3084 = vmatpush1.msra.mxu0 0.0
      %3085 = vmatprep.subr.mxu0 0.0
      %3086 = vmatpush1.msra.mxu0 0.0
      %3087 = vmatprep.subr.mxu0 0.0
      %3088 = vmatpush1.msra.mxu0 0.0
      %3089 = vmatprep.subr.mxu0 0.0
      %3090 = vmatpush1.msra.mxu0 0.0
      %3091 = vmatprep.subr.mxu0 0.0
      %3092 = vmatpush1.msra.mxu0 0.0
      %3093 = vmatprep.subr.mxu0 0.0
      %3094 = vmatpush1.msra.mxu0 0.0
      %3095 = vmatprep.subr.mxu0 0.0
      %3096 = vmatpush1.msra.mxu0 0.0
      %3097 = vmatprep.subr.mxu0 0.0
      %3098 = vmatpush1.msra.mxu0 0.0
      %3099 = vmatprep.subr.mxu0 0.0
      %3100 = vmatpush1.msra.mxu0 0.0
      %3101 = vmatprep.subr.mxu0 0.0
      %3102 = vmatpush1.msra.mxu0 0.0
      %3103 = vmatprep.subr.mxu0 0.0
      %3104 = vmatpush1.msra.mxu0 0.0
      %3105 = vmatprep.subr.mxu0 0.0
      %3106 = vmatpush1.msra.mxu0 0.0
      %3107 = vmatprep.subr.mxu0 0.0
      %3108 = vmatpush1.msra.mxu0 0.0
      %3109 = vmatprep.subr.mxu0 0.0
      %3110 = vmatpush1.msra.mxu0 0.0
      %3111 = vmatprep.subr.mxu0 0.0
      %3112 = vmatpush1.msra.mxu0 0.0
      %3113 = vmatprep.subr.mxu0 0.0
      %3114 = vmatpush1.msra.mxu0 0.0
      %3115 = vmatprep.subr.mxu0 0.0
      %3116 = vmatpush1.msra.mxu0 0.0
      %3117 = vmatprep.subr.mxu0 0.0
      %3118 = vmatpush1.msra.mxu0 0.0
      %3119 = vmatprep.subr.mxu0 0.0
      %3120 = vmatpush1.msra.mxu0 0.0
      %3121 = vmatprep.subr.mxu0 0.0
      %3122 = vmatpush1.msra.mxu0 0.0
      %3123 = vmatprep.subr.mxu0 0.0
      %3124 = vmatpush1.msra.mxu0 0.0
      %3125 = vmatprep.mubr.f32.mxu0 0.0
      %v3126 = vand.u32 %v2897, 4294901760
      %v3127 = vsub.f32 %v2897, %v3126
      %3128 = vmatmul.mubr.f32.gmra.mrb[0].mxu0 %v3127
      %v3129 = vpop.f32.mrb[0].mxu0
      %v3130 = vadd.f32 %v3054, %v3129
      %v3131 = vpop.f32.mrb[0].mxu0
      %3132 = vdwg.mxu0
      %3133 = vmatprep.subr.mxu0 0.0
      %v3134 = vand.u32 %v456, 4294901760
      %3135 = vmatpush1.msra.mxu0 %v3134
      %3136 = vmatprep.subr.mxu0 0.0
      %v3137 = vand.u32 %v457, 4294901760
      %3138 = vmatpush1.msra.mxu0 %v3137
      %3139 = vmatprep.subr.mxu0 0.0
      %3140 = vmatpush1.msra.mxu0 0.0
      %3141 = vmatprep.subr.mxu0 0.0
      %3142 = vmatpush1.msra.mxu0 0.0
      %3143 = vmatprep.subr.mxu0 0.0
      %3144 = vmatpush1.msra.mxu0 0.0
      %3145 = vmatprep.subr.mxu0 0.0
      %3146 = vmatpush1.msra.mxu0 0.0
      %3147 = vmatprep.subr.mxu0 0.0
      %3148 = vmatpush1.msra.mxu0 0.0
      %3149 = vmatprep.subr.mxu0 0.0
      %3150 = vmatpush1.msra.mxu0 0.0
      %3151 = vmatprep.subr.mxu0 0.0
      %3152 = vmatpush1.msra.mxu0 0.0
      %3153 = vmatprep.subr.mxu0 0.0
      %3154 = vmatpush1.msra.mxu0 0.0
      %3155 = vmatprep.subr.mxu0 0.0
      %3156 = vmatpush1.msra.mxu0 0.0
      %3157 = vmatprep.subr.mxu0 0.0
      %3158 = vmatpush1.msra.mxu0 0.0
      %3159 = vmatprep.subr.mxu0 0.0
      %3160 = vmatpush1.msra.mxu0 0.0
      %3161 = vmatprep.subr.mxu0 0.0
      %3162 = vmatpush1.msra.mxu0 0.0
      %3163 = vmatprep.subr.mxu0 0.0
      %3164 = vmatpush1.msra.mxu0 0.0
      %3165 = vmatprep.subr.mxu0 0.0
      %3166 = vmatpush1.msra.mxu0 0.0
      %3167 = vmatprep.subr.mxu0 0.0
      %3168 = vmatpush1.msra.mxu0 0.0
      %3169 = vmatprep.subr.mxu0 0.0
      %3170 = vmatpush1.msra.mxu0 0.0
      %3171 = vmatprep.subr.mxu0 0.0
      %3172 = vmatpush1.msra.mxu0 0.0
      %3173 = vmatprep.subr.mxu0 0.0
      %3174 = vmatpush1.msra.mxu0 0.0
      %3175 = vmatprep.subr.mxu0 0.0
      %3176 = vmatpush1.msra.mxu0 0.0
      %3177 = vmatprep.subr.mxu0 0.0
      %3178 = vmatpush1.msra.mxu0 0.0
      %3179 = vmatprep.subr.mxu0 0.0
      %3180 = vmatpush1.msra.mxu0 0.0
      %3181 = vmatprep.subr.mxu0 0.0
      %3182 = vmatpush1.msra.mxu0 0.0
      %3183 = vmatprep.subr.mxu0 0.0
      %3184 = vmatpush1.msra.mxu0 0.0
      %3185 = vmatprep.subr.mxu0 0.0
      %3186 = vmatpush1.msra.mxu0 0.0
      %3187 = vmatprep.subr.mxu0 0.0
      %3188 = vmatpush1.msra.mxu0 0.0
      %3189 = vmatprep.subr.mxu0 0.0
      %3190 = vmatpush1.msra.mxu0 0.0
      %3191 = vmatprep.subr.mxu0 0.0
      %3192 = vmatpush1.msra.mxu0 0.0
      %3193 = vmatprep.subr.mxu0 0.0
      %3194 = vmatpush1.msra.mxu0 0.0
      %3195 = vmatprep.subr.mxu0 0.0
      %3196 = vmatpush1.msra.mxu0 0.0
      %3197 = vmatprep.subr.mxu0 0.0
      %3198 = vmatpush1.msra.mxu0 0.0
      %3199 = vmatprep.mubr.f32.mxu0 0.0
      %v3200 = vand.u32 %v2897, 4294901760
      %v3201 = vsub.f32 %v2897, %v3200
      %v3202 = vand.u32 %v3201, 4294901760
      %3203 = vmatmul.mubr.f32.gmra.mrb[0].mxu0 %v3202
      %v3204 = vpop.f32.mrb[0].mxu0
      %v3205 = vadd.f32 %v3130, %v3204
      %v3206 = vpop.f32.mrb[0].mxu0
      %3207 = vdwg.mxu0
      %3208 = vmatprep.subr.mxu0 0.0
      %v3209 = vand.u32 %v456, 4294901760
      %v3210 = vsub.f32 %v456, %v3209
      %v3211 = vand.u32 %v3210, 4294901760
      %3212 = vmatpush1.msra.mxu0 %v3211
      %3213 = vmatprep.subr.mxu0 0.0
      %v3214 = vand.u32 %v457, 4294901760
      %v3215 = vsub.f32 %v457, %v3214
      %v3216 = vand.u32 %v3215, 4294901760
      %3217 = vmatpush1.msra.mxu0 %v3216
      %3218 = vmatprep.subr.mxu0 0.0
      %3219 = vmatpush1.msra.mxu0 0.0
      %3220 = vmatprep.subr.mxu0 0.0
      %3221 = vmatpush1.msra.mxu0 0.0
      %3222 = vmatprep.subr.mxu0 0.0
      %3223 = vmatpush1.msra.mxu0 0.0
      %3224 = vmatprep.subr.mxu0 0.0
      %3225 = vmatpush1.msra.mxu0 0.0
      %3226 = vmatprep.subr.mxu0 0.0
      %3227 = vmatpush1.msra.mxu0 0.0
      %3228 = vmatprep.subr.mxu0 0.0
      %3229 = vmatpush1.msra.mxu0 0.0
      %3230 = vmatprep.subr.mxu0 0.0
      %3231 = vmatpush1.msra.mxu0 0.0
      %3232 = vmatprep.subr.mxu0 0.0
      %3233 = vmatpush1.msra.mxu0 0.0
      %3234 = vmatprep.subr.mxu0 0.0
      %3235 = vmatpush1.msra.mxu0 0.0
      %3236 = vmatprep.subr.mxu0 0.0
      %3237 = vmatpush1.msra.mxu0 0.0
      %3238 = vmatprep.subr.mxu0 0.0
      %3239 = vmatpush1.msra.mxu0 0.0
      %3240 = vmatprep.subr.mxu0 0.0
      %3241 = vmatpush1.msra.mxu0 0.0
      %3242 = vmatprep.subr.mxu0 0.0
      %3243 = vmatpush1.msra.mxu0 0.0
      %3244 = vmatprep.subr.mxu0 0.0
      %3245 = vmatpush1.msra.mxu0 0.0
      %3246 = vmatprep.subr.mxu0 0.0
      %3247 = vmatpush1.msra.mxu0 0.0
      %3248 = vmatprep.subr.mxu0 0.0
      %3249 = vmatpush1.msra.mxu0 0.0
      %3250 = vmatprep.subr.mxu0 0.0
      %3251 = vmatpush1.msra.mxu0 0.0
      %3252 = vmatprep.subr.mxu0 0.0
      %3253 = vmatpush1.msra.mxu0 0.0
      %3254 = vmatprep.subr.mxu0 0.0
      %3255 = vmatpush1.msra.mxu0 0.0
      %3256 = vmatprep.subr.mxu0 0.0
      %3257 = vmatpush1.msra.mxu0 0.0
      %3258 = vmatprep.subr.mxu0 0.0
      %3259 = vmatpush1.msra.mxu0 0.0
      %3260 = vmatprep.subr.mxu0 0.0
      %3261 = vmatpush1.msra.mxu0 0.0
      %3262 = vmatprep.subr.mxu0 0.0
      %3263 = vmatpush1.msra.mxu0 0.0
      %3264 = vmatprep.subr.mxu0 0.0
      %3265 = vmatpush1.msra.mxu0 0.0
      %3266 = vmatprep.subr.mxu0 0.0
      %3267 = vmatpush1.msra.mxu0 0.0
      %3268 = vmatprep.subr.mxu0 0.0
      %3269 = vmatpush1.msra.mxu0 0.0
      %3270 = vmatprep.subr.mxu0 0.0
      %3271 = vmatpush1.msra.mxu0 0.0
      %3272 = vmatprep.subr.mxu0 0.0
      %3273 = vmatpush1.msra.mxu0 0.0
      %3274 = vmatprep.subr.mxu0 0.0
      %3275 = vmatpush1.msra.mxu0 0.0
      %3276 = vmatprep.subr.mxu0 0.0
      %3277 = vmatpush1.msra.mxu0 0.0
      %3278 = vmatprep.mubr.f32.mxu0 0.0
      %v3279 = vand.u32 %v2897, 4294901760
      %3280 = vmatmul.mubr.f32.gmra.mrb[0].mxu0 %v3279
      %v3281 = vpop.f32.mrb[0].mxu0
      %v3282 = vadd.f32 %v3205, %v3281
      %v3283 = vpop.f32.mrb[0].mxu0
      %3284 = vdwg.mxu0
      %3285 = vmatprep.subr.mxu0 0.0
      %v3286 = vand.u32 %v456, 4294901760
      %3287 = vmatpush1.msra.mxu0 %v3286
      %3288 = vmatprep.subr.mxu0 0.0
      %v3289 = vand.u32 %v457, 4294901760
      %3290 = vmatpush1.msra.mxu0 %v3289
      %3291 = vmatprep.subr.mxu0 0.0
      %3292 = vmatpush1.msra.mxu0 0.0
      %3293 = vmatprep.subr.mxu0 0.0
      %3294 = vmatpush1.msra.mxu0 0.0
      %3295 = vmatprep.subr.mxu0 0.0
      %3296 = vmatpush1.msra.mxu0 0.0
      %3297 = vmatprep.subr.mxu0 0.0
      %3298 = vmatpush1.msra.mxu0 0.0
      %3299 = vmatprep.subr.mxu0 0.0
      %3300 = vmatpush1.msra.mxu0 0.0
      %3301 = vmatprep.subr.mxu0 0.0
      %3302 = vmatpush1.msra.mxu0 0.0
      %3303 = vmatprep.subr.mxu0 0.0
      %3304 = vmatpush1.msra.mxu0 0.0
      %3305 = vmatprep.subr.mxu0 0.0
      %3306 = vmatpush1.msra.mxu0 0.0
      %3307 = vmatprep.subr.mxu0 0.0
      %3308 = vmatpush1.msra.mxu0 0.0
      %3309 = vmatprep.subr.mxu0 0.0
      %3310 = vmatpush1.msra.mxu0 0.0
      %3311 = vmatprep.subr.mxu0 0.0
      %3312 = vmatpush1.msra.mxu0 0.0
      %3313 = vmatprep.subr.mxu0 0.0
      %3314 = vmatpush1.msra.mxu0 0.0
      %3315 = vmatprep.subr.mxu0 0.0
      %3316 = vmatpush1.msra.mxu0 0.0
      %3317 = vmatprep.subr.mxu0 0.0
      %3318 = vmatpush1.msra.mxu0 0.0
      %3319 = vmatprep.subr.mxu0 0.0
      %3320 = vmatpush1.msra.mxu0 0.0
      %3321 = vmatprep.subr.mxu0 0.0
      %3322 = vmatpush1.msra.mxu0 0.0
      %3323 = vmatprep.subr.mxu0 0.0
      %3324 = vmatpush1.msra.mxu0 0.0
      %3325 = vmatprep.subr.mxu0 0.0
      %3326 = vmatpush1.msra.mxu0 0.0
      %3327 = vmatprep.subr.mxu0 0.0
      %3328 = vmatpush1.msra.mxu0 0.0
      %3329 = vmatprep.subr.mxu0 0.0
      %3330 = vmatpush1.msra.mxu0 0.0
      %3331 = vmatprep.subr.mxu0 0.0
      %3332 = vmatpush1.msra.mxu0 0.0
      %3333 = vmatprep.subr.mxu0 0.0
      %3334 = vmatpush1.msra.mxu0 0.0
      %3335 = vmatprep.subr.mxu0 0.0
      %3336 = vmatpush1.msra.mxu0 0.0
      %3337 = vmatprep.subr.mxu0 0.0
      %3338 = vmatpush1.msra.mxu0 0.0
      %3339 = vmatprep.subr.mxu0 0.0
      %3340 = vmatpush1.msra.mxu0 0.0
      %3341 = vmatprep.subr.mxu0 0.0
      %3342 = vmatpush1.msra.mxu0 0.0
      %3343 = vmatprep.subr.mxu0 0.0
      %3344 = vmatpush1.msra.mxu0 0.0
      %3345 = vmatprep.subr.mxu0 0.0
      %3346 = vmatpush1.msra.mxu0 0.0
      %3347 = vmatprep.subr.mxu0 0.0
      %3348 = vmatpush1.msra.mxu0 0.0
      %3349 = vmatprep.subr.mxu0 0.0
      %3350 = vmatpush1.msra.mxu0 0.0
      %3351 = vmatprep.mubr.f32.mxu0 0.0
      %v3352 = vand.u32 %v2897, 4294901760
      %3353 = vmatmul.mubr.f32.gmra.mrb[0].mxu0 %v3352
      %v3354 = vpop.f32.mrb[0].mxu0
      %v3355 = vadd.f32 %v3282, %v3354
      %v3356 = vpop.f32.mrb[0].mxu0
      %3357 = vdwg.mxu0
      %v3359 = vsel %vm1055, %v2895, 0
      %3361 = vmatprep.subr.mxu0 0.0
      %v3362 = vand.u32 %v456, 4294901760
      %3363 = vmatpush1.msra.mxu0 %v3362
      %3364 = vmatprep.subr.mxu0 0.0
      %v3365 = vand.u32 %v457, 4294901760
      %3366 = vmatpush1.msra.mxu0 %v3365
      %3367 = vmatprep.subr.mxu0 0.0
      %3368 = vmatpush1.msra.mxu0 0.0
      %3369 = vmatprep.subr.mxu0 0.0
      %3370 = vmatpush1.msra.mxu0 0.0
      %3371 = vmatprep.subr.mxu0 0.0
      %3372 = vmatpush1.msra.mxu0 0.0
      %3373 = vmatprep.subr.mxu0 0.0
      %3374 = vmatpush1.msra.mxu0 0.0
      %3375 = vmatprep.subr.mxu0 0.0
      %3376 = vmatpush1.msra.mxu0 0.0
      %3377 = vmatprep.subr.mxu0 0.0
      %3378 = vmatpush1.msra.mxu0 0.0
      %3379 = vmatprep.subr.mxu0 0.0
      %3380 = vmatpush1.msra.mxu0 0.0
      %3381 = vmatprep.subr.mxu0 0.0
      %3382 = vmatpush1.msra.mxu0 0.0
      %3383 = vmatprep.subr.mxu0 0.0
      %3384 = vmatpush1.msra.mxu0 0.0
      %3385 = vmatprep.subr.mxu0 0.0
      %3386 = vmatpush1.msra.mxu0 0.0
      %3387 = vmatprep.subr.mxu0 0.0
      %3388 = vmatpush1.msra.mxu0 0.0
      %3389 = vmatprep.subr.mxu0 0.0
      %3390 = vmatpush1.msra.mxu0 0.0
      %3391 = vmatprep.subr.mxu0 0.0
      %3392 = vmatpush1.msra.mxu0 0.0
      %3393 = vmatprep.subr.mxu0 0.0
      %3394 = vmatpush1.msra.mxu0 0.0
      %3395 = vmatprep.subr.mxu0 0.0
      %3396 = vmatpush1.msra.mxu0 0.0
      %3397 = vmatprep.subr.mxu0 0.0
      %3398 = vmatpush1.msra.mxu0 0.0
      %3399 = vmatprep.subr.mxu0 0.0
      %3400 = vmatpush1.msra.mxu0 0.0
      %3401 = vmatprep.subr.mxu0 0.0
      %3402 = vmatpush1.msra.mxu0 0.0
      %3403 = vmatprep.subr.mxu0 0.0
      %3404 = vmatpush1.msra.mxu0 0.0
      %3405 = vmatprep.subr.mxu0 0.0
      %3406 = vmatpush1.msra.mxu0 0.0
      %3407 = vmatprep.subr.mxu0 0.0
      %3408 = vmatpush1.msra.mxu0 0.0
      %3409 = vmatprep.subr.mxu0 0.0
      %3410 = vmatpush1.msra.mxu0 0.0
      %3411 = vmatprep.subr.mxu0 0.0
      %3412 = vmatpush1.msra.mxu0 0.0
      %3413 = vmatprep.subr.mxu0 0.0
      %3414 = vmatpush1.msra.mxu0 0.0
      %3415 = vmatprep.subr.mxu0 0.0
      %3416 = vmatpush1.msra.mxu0 0.0
      %3417 = vmatprep.subr.mxu0 0.0
      %3418 = vmatpush1.msra.mxu0 0.0
      %3419 = vmatprep.subr.mxu0 0.0
      %3420 = vmatpush1.msra.mxu0 0.0
      %3421 = vmatprep.subr.mxu0 0.0
      %3422 = vmatpush1.msra.mxu0 0.0
      %3423 = vmatprep.subr.mxu0 0.0
      %3424 = vmatpush1.msra.mxu0 0.0
      %3425 = vmatprep.subr.mxu0 0.0
      %3426 = vmatpush1.msra.mxu0 0.0
      %3427 = vmatprep.mubr.f32.mxu0 0.0
      %v3428 = vand.u32 %v3359, 4294901760
      %v3429 = vsub.f32 %v3359, %v3428
      %v3430 = vand.u32 %v3429, 4294901760
      %v3431 = vsub.f32 %v3429, %v3430
      %v3432 = vand.u32 %v3431, 4294901760
      %3433 = vmatmul.mubr.f32.gmra.mrb[0].mxu0 %v3432
      %v3434 = vpop.f32.mrb[0].mxu0
      %v3435 = vadd.f32 0.0, %v3434
      %v3436 = vpop.f32.mrb[0].mxu0
      %3437 = vdwg.mxu0
      %3438 = vmatprep.subr.mxu0 0.0
      %v3439 = vand.u32 %v456, 4294901760
      %v3440 = vsub.f32 %v456, %v3439
      %v3441 = vand.u32 %v3440, 4294901760
      %v3442 = vsub.f32 %v3440, %v3441
      %v3443 = vand.u32 %v3442, 4294901760
      %3444 = vmatpush1.msra.mxu0 %v3443
      %3445 = vmatprep.subr.mxu0 0.0
      %v3446 = vand.u32 %v457, 4294901760
      %v3447 = vsub.f32 %v457, %v3446
      %v3448 = vand.u32 %v3447, 4294901760
      %v3449 = vsub.f32 %v3447, %v3448
      %v3450 = vand.u32 %v3449, 4294901760
      %3451 = vmatpush1.msra.mxu0 %v3450
      %3452 = vmatprep.subr.mxu0 0.0
      %3453 = vmatpush1.msra.mxu0 0.0
      %3454 = vmatprep.subr.mxu0 0.0
      %3455 = vmatpush1.msra.mxu0 0.0
      %3456 = vmatprep.subr.mxu0 0.0
      %3457 = vmatpush1.msra.mxu0 0.0
      %3458 = vmatprep.subr.mxu0 0.0
      %3459 = vmatpush1.msra.mxu0 0.0
      %3460 = vmatprep.subr.mxu0 0.0
      %3461 = vmatpush1.msra.mxu0 0.0
      %3462 = vmatprep.subr.mxu0 0.0
      %3463 = vmatpush1.msra.mxu0 0.0
      %3464 = vmatprep.subr.mxu0 0.0
      %3465 = vmatpush1.msra.mxu0 0.0
      %3466 = vmatprep.subr.mxu0 0.0
      %3467 = vmatpush1.msra.mxu0 0.0
      %3468 = vmatprep.subr.mxu0 0.0
      %3469 = vmatpush1.msra.mxu0 0.0
      %3470 = vmatprep.subr.mxu0 0.0
      %3471 = vmatpush1.msra.mxu0 0.0
      %3472 = vmatprep.subr.mxu0 0.0
      %3473 = vmatpush1.msra.mxu0 0.0
      %3474 = vmatprep.subr.mxu0 0.0
      %3475 = vmatpush1.msra.mxu0 0.0
      %3476 = vmatprep.subr.mxu0 0.0
      %3477 = vmatpush1.msra.mxu0 0.0
      %3478 = vmatprep.subr.mxu0 0.0
      %3479 = vmatpush1.msra.mxu0 0.0
      %3480 = vmatprep.subr.mxu0 0.0
      %3481 = vmatpush1.msra.mxu0 0.0
      %3482 = vmatprep.subr.mxu0 0.0
      %3483 = vmatpush1.msra.mxu0 0.0
      %3484 = vmatprep.subr.mxu0 0.0
      %3485 = vmatpush1.msra.mxu0 0.0
      %3486 = vmatprep.subr.mxu0 0.0
      %3487 = vmatpush1.msra.mxu0 0.0
      %3488 = vmatprep.subr.mxu0 0.0
      %3489 = vmatpush1.msra.mxu0 0.0
      %3490 = vmatprep.subr.mxu0 0.0
      %3491 = vmatpush1.msra.mxu0 0.0
      %3492 = vmatprep.subr.mxu0 0.0
      %3493 = vmatpush1.msra.mxu0 0.0
      %3494 = vmatprep.subr.mxu0 0.0
      %3495 = vmatpush1.msra.mxu0 0.0
      %3496 = vmatprep.subr.mxu0 0.0
      %3497 = vmatpush1.msra.mxu0 0.0
      %3498 = vmatprep.subr.mxu0 0.0
      %3499 = vmatpush1.msra.mxu0 0.0
      %3500 = vmatprep.subr.mxu0 0.0
      %3501 = vmatpush1.msra.mxu0 0.0
      %3502 = vmatprep.subr.mxu0 0.0
      %3503 = vmatpush1.msra.mxu0 0.0
      %3504 = vmatprep.subr.mxu0 0.0
      %3505 = vmatpush1.msra.mxu0 0.0
      %3506 = vmatprep.subr.mxu0 0.0
      %3507 = vmatpush1.msra.mxu0 0.0
      %3508 = vmatprep.subr.mxu0 0.0
      %3509 = vmatpush1.msra.mxu0 0.0
      %3510 = vmatprep.subr.mxu0 0.0
      %3511 = vmatpush1.msra.mxu0 0.0
      %3512 = vmatprep.mubr.f32.mxu0 0.0
      %v3513 = vand.u32 %v3359, 4294901760
      %3514 = vmatmul.mubr.f32.gmra.mrb[0].mxu0 %v3513
      %v3515 = vpop.f32.mrb[0].mxu0
      %v3516 = vadd.f32 %v3435, %v3515
      %v3517 = vpop.f32.mrb[0].mxu0
      %3518 = vdwg.mxu0
      %3519 = vmatprep.subr.mxu0 0.0
      %v3520 = vand.u32 %v456, 4294901760
      %v3521 = vsub.f32 %v456, %v3520
      %3522 = vmatpush1.msra.mxu0 %v3521
      %3523 = vmatprep.subr.mxu0 0.0
      %v3524 = vand.u32 %v457, 4294901760
      %v3525 = vsub.f32 %v457, %v3524
      %3526 = vmatpush1.msra.mxu0 %v3525
      %3527 = vmatprep.subr.mxu0 0.0
      %3528 = vmatpush1.msra.mxu0 0.0
      %3529 = vmatprep.subr.mxu0 0.0
      %3530 = vmatpush1.msra.mxu0 0.0
      %3531 = vmatprep.subr.mxu0 0.0
      %3532 = vmatpush1.msra.mxu0 0.0
      %3533 = vmatprep.subr.mxu0 0.0
      %3534 = vmatpush1.msra.mxu0 0.0
      %3535 = vmatprep.subr.mxu0 0.0
      %3536 = vmatpush1.msra.mxu0 0.0
      %3537 = vmatprep.subr.mxu0 0.0
      %3538 = vmatpush1.msra.mxu0 0.0
      %3539 = vmatprep.subr.mxu0 0.0
      %3540 = vmatpush1.msra.mxu0 0.0
      %3541 = vmatprep.subr.mxu0 0.0
      %3542 = vmatpush1.msra.mxu0 0.0
      %3543 = vmatprep.subr.mxu0 0.0
      %3544 = vmatpush1.msra.mxu0 0.0
      %3545 = vmatprep.subr.mxu0 0.0
      %3546 = vmatpush1.msra.mxu0 0.0
      %3547 = vmatprep.subr.mxu0 0.0
      %3548 = vmatpush1.msra.mxu0 0.0
      %3549 = vmatprep.subr.mxu0 0.0
      %3550 = vmatpush1.msra.mxu0 0.0
      %3551 = vmatprep.subr.mxu0 0.0
      %3552 = vmatpush1.msra.mxu0 0.0
      %3553 = vmatprep.subr.mxu0 0.0
      %3554 = vmatpush1.msra.mxu0 0.0
      %3555 = vmatprep.subr.mxu0 0.0
      %3556 = vmatpush1.msra.mxu0 0.0
      %3557 = vmatprep.subr.mxu0 0.0
      %3558 = vmatpush1.msra.mxu0 0.0
      %3559 = vmatprep.subr.mxu0 0.0
      %3560 = vmatpush1.msra.mxu0 0.0
      %3561 = vmatprep.subr.mxu0 0.0
      %3562 = vmatpush1.msra.mxu0 0.0
      %3563 = vmatprep.subr.mxu0 0.0
      %3564 = vmatpush1.msra.mxu0 0.0
      %3565 = vmatprep.subr.mxu0 0.0
      %3566 = vmatpush1.msra.mxu0 0.0
      %3567 = vmatprep.subr.mxu0 0.0
      %3568 = vmatpush1.msra.mxu0 0.0
      %3569 = vmatprep.subr.mxu0 0.0
      %3570 = vmatpush1.msra.mxu0 0.0
      %3571 = vmatprep.subr.mxu0 0.0
      %3572 = vmatpush1.msra.mxu0 0.0
      %3573 = vmatprep.subr.mxu0 0.0
      %3574 = vmatpush1.msra.mxu0 0.0
      %3575 = vmatprep.subr.mxu0 0.0
      %3576 = vmatpush1.msra.mxu0 0.0
      %3577 = vmatprep.subr.mxu0 0.0
      %3578 = vmatpush1.msra.mxu0 0.0
      %3579 = vmatprep.subr.mxu0 0.0
      %3580 = vmatpush1.msra.mxu0 0.0
      %3581 = vmatprep.subr.mxu0 0.0
      %3582 = vmatpush1.msra.mxu0 0.0
      %3583 = vmatprep.subr.mxu0 0.0
      %3584 = vmatpush1.msra.mxu0 0.0
      %3585 = vmatprep.subr.mxu0 0.0
      %3586 = vmatpush1.msra.mxu0 0.0
      %3587 = vmatprep.mubr.f32.mxu0 0.0
      %v3588 = vand.u32 %v3359, 4294901760
      %v3589 = vsub.f32 %v3359, %v3588
      %3590 = vmatmul.mubr.f32.gmra.mrb[0].mxu0 %v3589
      %v3591 = vpop.f32.mrb[0].mxu0
      %v3592 = vadd.f32 %v3516, %v3591
      %v3593 = vpop.f32.mrb[0].mxu0
      %3594 = vdwg.mxu0
      %3595 = vmatprep.subr.mxu0 0.0
      %v3596 = vand.u32 %v456, 4294901760
      %3597 = vmatpush1.msra.mxu0 %v3596
      %3598 = vmatprep.subr.mxu0 0.0
      %v3599 = vand.u32 %v457, 4294901760
      %3600 = vmatpush1.msra.mxu0 %v3599
      %3601 = vmatprep.subr.mxu0 0.0
      %3602 = vmatpush1.msra.mxu0 0.0
      %3603 = vmatprep.subr.mxu0 0.0
      %3604 = vmatpush1.msra.mxu0 0.0
      %3605 = vmatprep.subr.mxu0 0.0
      %3606 = vmatpush1.msra.mxu0 0.0
      %3607 = vmatprep.subr.mxu0 0.0
      %3608 = vmatpush1.msra.mxu0 0.0
      %3609 = vmatprep.subr.mxu0 0.0
      %3610 = vmatpush1.msra.mxu0 0.0
      %3611 = vmatprep.subr.mxu0 0.0
      %3612 = vmatpush1.msra.mxu0 0.0
      %3613 = vmatprep.subr.mxu0 0.0
      %3614 = vmatpush1.msra.mxu0 0.0
      %3615 = vmatprep.subr.mxu0 0.0
      %3616 = vmatpush1.msra.mxu0 0.0
      %3617 = vmatprep.subr.mxu0 0.0
      %3618 = vmatpush1.msra.mxu0 0.0
      %3619 = vmatprep.subr.mxu0 0.0
      %3620 = vmatpush1.msra.mxu0 0.0
      %3621 = vmatprep.subr.mxu0 0.0
      %3622 = vmatpush1.msra.mxu0 0.0
      %3623 = vmatprep.subr.mxu0 0.0
      %3624 = vmatpush1.msra.mxu0 0.0
      %3625 = vmatprep.subr.mxu0 0.0
      %3626 = vmatpush1.msra.mxu0 0.0
      %3627 = vmatprep.subr.mxu0 0.0
      %3628 = vmatpush1.msra.mxu0 0.0
      %3629 = vmatprep.subr.mxu0 0.0
      %3630 = vmatpush1.msra.mxu0 0.0
      %3631 = vmatprep.subr.mxu0 0.0
      %3632 = vmatpush1.msra.mxu0 0.0
      %3633 = vmatprep.subr.mxu0 0.0
      %3634 = vmatpush1.msra.mxu0 0.0
      %3635 = vmatprep.subr.mxu0 0.0
      %3636 = vmatpush1.msra.mxu0 0.0
      %3637 = vmatprep.subr.mxu0 0.0
      %3638 = vmatpush1.msra.mxu0 0.0
      %3639 = vmatprep.subr.mxu0 0.0
      %3640 = vmatpush1.msra.mxu0 0.0
      %3641 = vmatprep.subr.mxu0 0.0
      %3642 = vmatpush1.msra.mxu0 0.0
      %3643 = vmatprep.subr.mxu0 0.0
      %3644 = vmatpush1.msra.mxu0 0.0
      %3645 = vmatprep.subr.mxu0 0.0
      %3646 = vmatpush1.msra.mxu0 0.0
      %3647 = vmatprep.subr.mxu0 0.0
      %3648 = vmatpush1.msra.mxu0 0.0
      %3649 = vmatprep.subr.mxu0 0.0
      %3650 = vmatpush1.msra.mxu0 0.0
      %3651 = vmatprep.subr.mxu0 0.0
      %3652 = vmatpush1.msra.mxu0 0.0
      %3653 = vmatprep.subr.mxu0 0.0
      %3654 = vmatpush1.msra.mxu0 0.0
      %3655 = vmatprep.subr.mxu0 0.0
      %3656 = vmatpush1.msra.mxu0 0.0
      %3657 = vmatprep.subr.mxu0 0.0
      %3658 = vmatpush1.msra.mxu0 0.0
      %3659 = vmatprep.subr.mxu0 0.0
      %3660 = vmatpush1.msra.mxu0 0.0
      %3661 = vmatprep.mubr.f32.mxu0 0.0
      %v3662 = vand.u32 %v3359, 4294901760
      %v3663 = vsub.f32 %v3359, %v3662
      %v3664 = vand.u32 %v3663, 4294901760
      %3665 = vmatmul.mubr.f32.gmra.mrb[0].mxu0 %v3664
      %v3666 = vpop.f32.mrb[0].mxu0
      %v3667 = vadd.f32 %v3592, %v3666
      %v3668 = vpop.f32.mrb[0].mxu0
      %3669 = vdwg.mxu0
      %3670 = vmatprep.subr.mxu0 0.0
      %v3671 = vand.u32 %v456, 4294901760
      %v3672 = vsub.f32 %v456, %v3671
      %v3673 = vand.u32 %v3672, 4294901760
      %3674 = vmatpush1.msra.mxu0 %v3673
      %3675 = vmatprep.subr.mxu0 0.0
      %v3676 = vand.u32 %v457, 4294901760
      %v3677 = vsub.f32 %v457, %v3676
      %v3678 = vand.u32 %v3677, 4294901760
      %3679 = vmatpush1.msra.mxu0 %v3678
      %3680 = vmatprep.subr.mxu0 0.0
      %3681 = vmatpush1.msra.mxu0 0.0
      %3682 = vmatprep.subr.mxu0 0.0
      %3683 = vmatpush1.msra.mxu0 0.0
      %3684 = vmatprep.subr.mxu0 0.0
      %3685 = vmatpush1.msra.mxu0 0.0
      %3686 = vmatprep.subr.mxu0 0.0
      %3687 = vmatpush1.msra.mxu0 0.0
      %3688 = vmatprep.subr.mxu0 0.0
      %3689 = vmatpush1.msra.mxu0 0.0
      %3690 = vmatprep.subr.mxu0 0.0
      %3691 = vmatpush1.msra.mxu0 0.0
      %3692 = vmatprep.subr.mxu0 0.0
      %3693 = vmatpush1.msra.mxu0 0.0
      %3694 = vmatprep.subr.mxu0 0.0
      %3695 = vmatpush1.msra.mxu0 0.0
      %3696 = vmatprep.subr.mxu0 0.0
      %3697 = vmatpush1.msra.mxu0 0.0
      %3698 = vmatprep.subr.mxu0 0.0
      %3699 = vmatpush1.msra.mxu0 0.0
      %3700 = vmatprep.subr.mxu0 0.0
      %3701 = vmatpush1.msra.mxu0 0.0
      %3702 = vmatprep.subr.mxu0 0.0
      %3703 = vmatpush1.msra.mxu0 0.0
      %3704 = vmatprep.subr.mxu0 0.0
      %3705 = vmatpush1.msra.mxu0 0.0
      %3706 = vmatprep.subr.mxu0 0.0
      %3707 = vmatpush1.msra.mxu0 0.0
      %3708 = vmatprep.subr.mxu0 0.0
      %3709 = vmatpush1.msra.mxu0 0.0
      %3710 = vmatprep.subr.mxu0 0.0
      %3711 = vmatpush1.msra.mxu0 0.0
      %3712 = vmatprep.subr.mxu0 0.0
      %3713 = vmatpush1.msra.mxu0 0.0
      %3714 = vmatprep.subr.mxu0 0.0
      %3715 = vmatpush1.msra.mxu0 0.0
      %3716 = vmatprep.subr.mxu0 0.0
      %3717 = vmatpush1.msra.mxu0 0.0
      %3718 = vmatprep.subr.mxu0 0.0
      %3719 = vmatpush1.msra.mxu0 0.0
      %3720 = vmatprep.subr.mxu0 0.0
      %3721 = vmatpush1.msra.mxu0 0.0
      %3722 = vmatprep.subr.mxu0 0.0
      %3723 = vmatpush1.msra.mxu0 0.0
      %3724 = vmatprep.subr.mxu0 0.0
      %3725 = vmatpush1.msra.mxu0 0.0
      %3726 = vmatprep.subr.mxu0 0.0
      %3727 = vmatpush1.msra.mxu0 0.0
      %3728 = vmatprep.subr.mxu0 0.0
      %3729 = vmatpush1.msra.mxu0 0.0
      %3730 = vmatprep.subr.mxu0 0.0
      %3731 = vmatpush1.msra.mxu0 0.0
      %3732 = vmatprep.subr.mxu0 0.0
      %3733 = vmatpush1.msra.mxu0 0.0
      %3734 = vmatprep.subr.mxu0 0.0
      %3735 = vmatpush1.msra.mxu0 0.0
      %3736 = vmatprep.subr.mxu0 0.0
      %3737 = vmatpush1.msra.mxu0 0.0
      %3738 = vmatprep.subr.mxu0 0.0
      %3739 = vmatpush1.msra.mxu0 0.0
      %3740 = vmatprep.mubr.f32.mxu0 0.0
      %v3741 = vand.u32 %v3359, 4294901760
      %3742 = vmatmul.mubr.f32.gmra.mrb[0].mxu0 %v3741
      %v3743 = vpop.f32.mrb[0].mxu0
      %v3744 = vadd.f32 %v3667, %v3743
      %v3745 = vpop.f32.mrb[0].mxu0
      %3746 = vdwg.mxu0
      %3747 = vmatprep.subr.mxu0 0.0
      %v3748 = vand.u32 %v456, 4294901760
      %3749 = vmatpush1.msra.mxu0 %v3748
      %3750 = vmatprep.subr.mxu0 0.0
      %v3751 = vand.u32 %v457, 4294901760
      %3752 = vmatpush1.msra.mxu0 %v3751
      %3753 = vmatprep.subr.mxu0 0.0
      %3754 = vmatpush1.msra.mxu0 0.0
      %3755 = vmatprep.subr.mxu0 0.0
      %3756 = vmatpush1.msra.mxu0 0.0
      %3757 = vmatprep.subr.mxu0 0.0
      %3758 = vmatpush1.msra.mxu0 0.0
      %3759 = vmatprep.subr.mxu0 0.0
      %3760 = vmatpush1.msra.mxu0 0.0
      %3761 = vmatprep.subr.mxu0 0.0
      %3762 = vmatpush1.msra.mxu0 0.0
      %3763 = vmatprep.subr.mxu0 0.0
      %3764 = vmatpush1.msra.mxu0 0.0
      %3765 = vmatprep.subr.mxu0 0.0
      %3766 = vmatpush1.msra.mxu0 0.0
      %3767 = vmatprep.subr.mxu0 0.0
      %3768 = vmatpush1.msra.mxu0 0.0
      %3769 = vmatprep.subr.mxu0 0.0
      %3770 = vmatpush1.msra.mxu0 0.0
      %3771 = vmatprep.subr.mxu0 0.0
      %3772 = vmatpush1.msra.mxu0 0.0
      %3773 = vmatprep.subr.mxu0 0.0
      %3774 = vmatpush1.msra.mxu0 0.0
      %3775 = vmatprep.subr.mxu0 0.0
      %3776 = vmatpush1.msra.mxu0 0.0
      %3777 = vmatprep.subr.mxu0 0.0
      %3778 = vmatpush1.msra.mxu0 0.0
      %3779 = vmatprep.subr.mxu0 0.0
      %3780 = vmatpush1.msra.mxu0 0.0
      %3781 = vmatprep.subr.mxu0 0.0
      %3782 = vmatpush1.msra.mxu0 0.0
      %3783 = vmatprep.subr.mxu0 0.0
      %3784 = vmatpush1.msra.mxu0 0.0
      %3785 = vmatprep.subr.mxu0 0.0
      %3786 = vmatpush1.msra.mxu0 0.0
      %3787 = vmatprep.subr.mxu0 0.0
      %3788 = vmatpush1.msra.mxu0 0.0
      %3789 = vmatprep.subr.mxu0 0.0
      %3790 = vmatpush1.msra.mxu0 0.0
      %3791 = vmatprep.subr.mxu0 0.0
      %3792 = vmatpush1.msra.mxu0 0.0
      %3793 = vmatprep.subr.mxu0 0.0
      %3794 = vmatpush1.msra.mxu0 0.0
      %3795 = vmatprep.subr.mxu0 0.0
      %3796 = vmatpush1.msra.mxu0 0.0
      %3797 = vmatprep.subr.mxu0 0.0
      %3798 = vmatpush1.msra.mxu0 0.0
      %3799 = vmatprep.subr.mxu0 0.0
      %3800 = vmatpush1.msra.mxu0 0.0
      %3801 = vmatprep.subr.mxu0 0.0
      %3802 = vmatpush1.msra.mxu0 0.0
      %3803 = vmatprep.subr.mxu0 0.0
      %3804 = vmatpush1.msra.mxu0 0.0
      %3805 = vmatprep.subr.mxu0 0.0
      %3806 = vmatpush1.msra.mxu0 0.0
      %3807 = vmatprep.subr.mxu0 0.0
      %3808 = vmatpush1.msra.mxu0 0.0
      %3809 = vmatprep.subr.mxu0 0.0
      %3810 = vmatpush1.msra.mxu0 0.0
      %3811 = vmatprep.subr.mxu0 0.0
      %3812 = vmatpush1.msra.mxu0 0.0
      %3813 = vmatprep.mubr.f32.mxu0 0.0
      %v3814 = vand.u32 %v3359, 4294901760
      %3815 = vmatmul.mubr.f32.gmra.mrb[0].mxu0 %v3814
      %v3816 = vpop.f32.mrb[0].mxu0
      %v3817 = vadd.f32 %v3744, %v3816
      %v3818 = vpop.f32.mrb[0].mxu0
      %3819 = vdwg.mxu0
      %v3820 = vmul.f32 %v3355, %v3355
      %v3821 = vsub.f32 %v3817, %v3820
      %v3822 = vadd.f32 %v3821, 1e-05
      %v3823 = vrsqrt.pop %v3822
      %v3825 = vrot.slane %v3823, 7
      %v3827 = vmul.f32 %v458, %v3825
      %v3829 = vrot.slane %v3827, 1
      %v3831 = vmul.f32 %v3355, %v3829
      %v3833 = vrot.slane %v3831, 7
      %v3835 = vsub.f32 %v459, %v3833
      %v3836 = vlaneseq
      %v3837 = vshrl.u32 %v3836, 7
      %v3838 = vsub.s32 1, %v3837
      %v3839 = vrot.slane %v3827, %v3838
      %v3840 = vmul.f32 %v2814, %v3839
      %v3841 = vmul.f32 %v2817, %v3839
      %v3842 = vmul.f32 %v2822, %v3839
      %v3843 = vmul.f32 %v2825, %v3839
      %v3844 = vmul.f32 %v2830, %v3839
      %v3845 = vmul.f32 %v2833, %v3839
      %v3846 = vmul.f32 %v2838, %v3839
      %v3847 = vmul.f32 %v2841, %v3839
      %v3848 = vlaneseq
      %v3849 = vshrl.u32 %v3848, 7
      %v3850 = vsub.s32 1, %v3849
      %v3851 = vrot.slane %v3835, %v3850
      %v3852 = vadd.f32 %v3840, %v3851
      %v3853 = vadd.f32 %v3841, %v3851
      %v3854 = vadd.f32 %v3842, %v3851
      %v3855 = vadd.f32 %v3843, %v3851
      %v3856 = vadd.f32 %v3844, %v3851
      %v3857 = vadd.f32 %v3845, %v3851
      %v3858 = vadd.f32 %v3846, %v3851
      %v3859 = vadd.f32 %v3847, %v3851
      %v3860 = vsub.f32 0.0, %v3852
      %v3861 = vsub.f32 0.0, %v3853
      %v3862 = vsub.f32 0.0, %v3854
      %v3863 = vsub.f32 0.0, %v3855
      %v3864 = vsub.f32 0.0, %v3856
      %v3865 = vsub.f32 0.0, %v3857
      %v3866 = vsub.f32 0.0, %v3858
      %v3867 = vsub.f32 0.0, %v3859
      %v3868 = vmul.f32 %v3860, 1.442695
      %v3869 = vpow.pop %v3868
      %v3870 = vmul.f32 %v3861, 1.442695
      %v3871 = vpow.pop %v3870
      %v3872 = vmul.f32 %v3862, 1.442695
      %v3873 = vpow.pop %v3872
      %v3874 = vmul.f32 %v3863, 1.442695
      %v3875 = vpow.pop %v3874
      %v3876 = vmul.f32 %v3864, 1.442695
      %v3877 = vpow.pop %v3876
      %v3878 = vmul.f32 %v3865, 1.442695
      %v3879 = vpow.pop %v3878
      %v3880 = vmul.f32 %v3866, 1.442695
      %v3881 = vpow.pop %v3880
      %v3882 = vmul.f32 %v3867, 1.442695
      %v3883 = vpow.pop %v3882
      %v3884 = vadd.f32 %v3869, 1.0
      %v3885 = vadd.f32 %v3871, 1.0
      %v3886 = vadd.f32 %v3873, 1.0
      %v3887 = vadd.f32 %v3875, 1.0
      %v3888 = vadd.f32 %v3877, 1.0
      %v3889 = vadd.f32 %v3879, 1.0
      %v3890 = vadd.f32 %v3881, 1.0
      %v3891 = vadd.f32 %v3883, 1.0
      %v3892 = vrcp.pop %v3884
      %v3893 = vrcp.pop %v3885
      %v3894 = vrcp.pop %v3886
      %v3895 = vrcp.pop %v3887
      %v3896 = vrcp.pop %v3888
      %v3897 = vrcp.pop %v3889
      %v3898 = vrcp.pop %v3890
      %v3899 = vrcp.pop %v3891
      %v3900 = vmul.f32 %v3852, %v3892
      %v3901 = vmul.f32 %v3853, %v3893
      %v3902 = vmul.f32 %v3854, %v3894
      %v3903 = vmul.f32 %v3855, %v3895
      %v3904 = vmul.f32 %v3856, %v3896
      %v3905 = vmul.f32 %v3857, %v3897
      %v3906 = vmul.f32 %v3858, %v3898
      %v3907 = vmul.f32 %v3859, %v3899
      %v3908 = vadd.f32 %v672, %v3900
      %v3909 = vadd.f32 %v673, %v3901
      %v3910 = vadd.f32 %v674, %v3902
      %v3911 = vadd.f32 %v675, %v3903
      %v3912 = vadd.f32 %v676, %v3904
      %v3913 = vadd.f32 %v677, %v3905
      %v3914 = vadd.f32 %v678, %v3906
      %v3915 = vadd.f32 %v679, %v3907
      %v3916 = vsel %vm1055, %v3908, 0.0
      %v3917 = vsel %vm1055, %v3909, 0.0
      %v3918 = vadd.f32 %v3916, %v3917
      %v3919 = vsel %vm1055, %v3910, 0.0
      %v3920 = vadd.f32 %v3918, %v3919
      %v3921 = vsel %vm1055, %v3911, 0.0
      %v3922 = vadd.f32 %v3920, %v3921
      %v3923 = vsel %vm1055, %v3912, 0.0
      %v3924 = vadd.f32 %v3922, %v3923
      %v3925 = vsel %vm1055, %v3913, 0.0
      %v3926 = vadd.f32 %v3924, %v3925
      %v3927 = vsel %vm1055, %v3914, 0.0
      %v3928 = vadd.f32 %v3926, %v3927
      %v3929 = vsel %vm1055, %v3915, 0.0
      %v3930 = vadd.f32 %v3928, %v3929
      %v3931 = vrot.slane %v3930, 4
      %v3932 = vadd.f32 %v3930, %v3931
      %v3933 = vrot.slane %v3932, 2
      %v3934 = vadd.f32 %v3932, %v3933
      %v3935 = vrot.slane %v3934, 1
      %v3936 = vadd.f32 %v3934, %v3935
      %v3937 = vmul.f32 %v3936, 0.015625
      %v3938 = vmul.f32 %v3908, %v3908
      %v3939 = vmul.f32 %v3909, %v3909
      %v3940 = vmul.f32 %v3910, %v3910
      %v3941 = vmul.f32 %v3911, %v3911
      %v3942 = vmul.f32 %v3912, %v3912
      %v3943 = vmul.f32 %v3913, %v3913
      %v3944 = vmul.f32 %v3914, %v3914
      %v3945 = vmul.f32 %v3915, %v3915
      %v3946 = vsel %vm1055, %v3938, 0.0
      %v3947 = vsel %vm1055, %v3939, 0.0
      %v3948 = vadd.f32 %v3946, %v3947
      %v3949 = vsel %vm1055, %v3940, 0.0
      %v3950 = vadd.f32 %v3948, %v3949
      %v3951 = vsel %vm1055, %v3941, 0.0
      %v3952 = vadd.f32 %v3950, %v3951
      %v3953 = vsel %vm1055, %v3942, 0.0
      %v3954 = vadd.f32 %v3952, %v3953
      %v3955 = vsel %vm1055, %v3943, 0.0
      %v3956 = vadd.f32 %v3954, %v3955
      %v3957 = vsel %vm1055, %v3944, 0.0
      %v3958 = vadd.f32 %v3956, %v3957
      %v3959 = vsel %vm1055, %v3945, 0.0
      %v3960 = vadd.f32 %v3958, %v3959
      %v3961 = vrot.slane %v3960, 4
      %v3962 = vadd.f32 %v3960, %v3961
      %v3963 = vrot.slane %v3962, 2
      %v3964 = vadd.f32 %v3962, %v3963
      %v3965 = vrot.slane %v3964, 1
      %v3966 = vadd.f32 %v3964, %v3965
      %v3967 = vmul.f32 %v3966, 0.015625
      %v3968 = vsel %vm1055, %v3937, 0.0
      %3969 = vadd.xlane.f32.xlu0 %v3968
      %v3970 = vpop.xlane.xlu0 %3969
      %v3971 = vrcp.pop 16.0
      %v3972 = vmul.f32 %v3970, %v3971
      %v3973 = vsel %vm1055, %v3967, 0.0
      %3974 = vadd.xlane.f32.xlu0 %v3973
      %v3975 = vpop.xlane.xlu0 %3974
      %v3976 = vmul.f32 %v3975, %v3971
      %v3977 = vmul.f32 %v3972, %v3972
      %v3978 = vsub.f32 %v3976, %v3977
      %v3979 = vadd.f32 %v3978, 1e-05
      %v3980 = vrsqrt.pop %v3979
      %v3981 = vmul.f32 %v458, %v3980
      %v3982 = vmul.f32 %v3972, %v3981
      %v3983 = vsub.f32 %v459, %v3982
      %v3984 = vlaneseq
      %v3985 = vshrl.u32 %v3984, 7
      %v3986 = vsub.s32 2, %v3985
      %v3987 = vrot.slane %v3981, %v3986
      %v3988 = vmul.f32 %v3908, %v3987
      %v3989 = vmul.f32 %v3909, %v3987
      %v3990 = vmul.f32 %v3910, %v3987
      %v3991 = vmul.f32 %v3911, %v3987
      %v3992 = vmul.f32 %v3912, %v3987
      %v3993 = vmul.f32 %v3913, %v3987
      %v3994 = vmul.f32 %v3914, %v3987
      %v3995 = vmul.f32 %v3915, %v3987
      %v3996 = vlaneseq
      %v3997 = vshrl.u32 %v3996, 7
      %v3998 = vsub.s32 2, %v3997
      %v3999 = vrot.slane %v3983, %v3998
      %v4000 = vadd.f32 %v3988, %v3999
      %v4001 = vadd.f32 %v3989, %v3999
      %v4002 = vadd.f32 %v3990, %v3999
      %v4003 = vadd.f32 %v3991, %v3999
      %v4004 = vadd.f32 %v3992, %v3999
      %v4005 = vadd.f32 %v3993, %v3999
      %v4006 = vadd.f32 %v3994, %v3999
      %v4007 = vadd.f32 %v3995, %v3999
      %v4008 = vpack.c.bf16 %v4001, %v4000
      %v4009 = vpack.c.bf16 %v4003, %v4002
      %v4010 = vpack.c.bf16 %v4005, %v4004
      %v4011 = vpack.c.bf16 %v4007, %v4006
      %v4012 = vld [vmem:[%s9] sm:$0xf]
      %v4013 = vld [vmem:[%s9 + $0x4] sm:$0xf]
      %v4014 = vld [vmem:[%s10] sm:$0x1]
      %v4015 = vlaneseq
      %v4016 = vshrl.u32 %v4015, 7
      %v4017 = vsub.s32 0, %v4016
      %v4018 = vrot.slane %v4014, %v4017
      %v4021 = vunpack.c.l.b16 %v4012
      %v4022 = vunpack.c.l.b16 %v4013
      %v4023 = vpack.c.b16 %v4022, %v4021
      %v4026 = vsel %vm1055, %v4008, 0
      %v4029 = vsel %vm1055, %v4009, 0
      %v4032 = vsel %vm1055, %v4010, 0
      %v4035 = vsel %vm1055, %v4011, 0
      %4037 = vmatprep.subr.bf16.mxu0 0
      %4038 = vmatpush1.bf16.msra.mxu0 %v4023
      %4039 = vmatprep.subr.bf16.mxu0 0
      %4040 = vmatpush1.bf16.msra.mxu0 0
      %4041 = vmatprep.subr.bf16.mxu0 0
      %4042 = vmatpush1.bf16.msra.mxu0 0
      %4043 = vmatprep.subr.bf16.mxu0 0
      %4044 = vmatpush1.bf16.msra.mxu0 0
      %4045 = vmatprep.subr.bf16.mxu0 0
      %4046 = vmatpush1.bf16.msra.mxu0 0
      %4047 = vmatprep.subr.bf16.mxu0 0
      %4048 = vmatpush1.bf16.msra.mxu0 0
      %4049 = vmatprep.subr.bf16.mxu0 0
      %4050 = vmatpush1.bf16.msra.mxu0 0
      %4051 = vmatprep.subr.bf16.mxu0 0
      %4052 = vmatpush1.bf16.msra.mxu0 0
      %4053 = vmatprep.subr.bf16.mxu0 0
      %4054 = vmatpush1.bf16.msra.mxu0 0
      %4055 = vmatprep.subr.bf16.mxu0 0
      %4056 = vmatpush1.bf16.msra.mxu0 0
      %4057 = vmatprep.subr.bf16.mxu0 0
      %4058 = vmatpush1.bf16.msra.mxu0 0
      %4059 = vmatprep.subr.bf16.mxu0 0
      %4060 = vmatpush1.bf16.msra.mxu0 0
      %4061 = vmatprep.subr.bf16.mxu0 0
      %4062 = vmatpush1.bf16.msra.mxu0 0
      %4063 = vmatprep.subr.bf16.mxu0 0
      %4064 = vmatpush1.bf16.msra.mxu0 0
      %4065 = vmatprep.subr.bf16.mxu0 0
      %4066 = vmatpush1.bf16.msra.mxu0 0
      %4067 = vmatprep.subr.bf16.mxu0 0
      %4068 = vmatpush1.bf16.msra.mxu0 0
      %4069 = vmatprep.mubr.bf16.mxu0 0
      %4070 = vmatmul.mubr.bf16.gmra.mrb[0].mxu0 %v4026
      %v4071 = vpop.f32.mrb[0].mxu0
      %v4072 = vadd.f32 %v4018, %v4071
      %v4073 = vpop.f32.mrb[0].mxu0
      %v4074 = vpop.f32.mrb[0].mxu0
      %v4075 = vadd.f32 %v4018, %v4074
      %v4076 = vpop.f32.mrb[0].mxu0
      %4077 = vmatprep.mubr.bf16.mxu0 0
      %4078 = vmatmul.mubr.bf16.gmra.mrb[0].mxu0 %v4029
      %v4079 = vpop.f32.mrb[0].mxu0
      %v4080 = vadd.f32 %v4018, %v4079
      %v4081 = vpop.f32.mrb[0].mxu0
      %v4082 = vpop.f32.mrb[0].mxu0
      %v4083 = vadd.f32 %v4018, %v4082
      %v4084 = vpop.f32.mrb[0].mxu0
      %4085 = vmatprep.mubr.bf16.mxu0 0
      %4086 = vmatmul.mubr.bf16.gmra.mrb[0].mxu0 %v4032
      %v4087 = vpop.f32.mrb[0].mxu0
      %v4088 = vadd.f32 %v4018, %v4087
      %v4089 = vpop.f32.mrb[0].mxu0
      %v4090 = vpop.f32.mrb[0].mxu0
      %v4091 = vadd.f32 %v4018, %v4090
      %v4092 = vpop.f32.mrb[0].mxu0
      %4093 = vmatprep.mubr.bf16.mxu0 0
      %4094 = vmatmul.mubr.bf16.gmra.mrb[0].mxu0 %v4035
      %v4095 = vpop.f32.mrb[0].mxu0
      %v4096 = vadd.f32 %v4018, %v4095
      %v4097 = vpop.f32.mrb[0].mxu0
      %v4098 = vpop.f32.mrb[0].mxu0
      %v4099 = vadd.f32 %v4018, %v4098
      %v4100 = vpop.f32.mrb[0].mxu0
      %4101 = vdwg.mxu0
      %s4102 = scalar_lea.vmem %s9, 8
      %v4103 = vld [vmem:[%s4102] sm:$0xf]
      %v4104 = vld [vmem:[%s4102 + $0x4] sm:$0xf]
      %v4105 = vld [vmem:[%s10 + $0x1] sm:$0x1]
      %v4106 = vlaneseq
      %v4107 = vshrl.u32 %v4106, 7
      %v4108 = vsub.s32 0, %v4107
      %v4109 = vrot.slane %v4105, %v4108
      %v4112 = vunpack.c.l.b16 %v4103
      %v4113 = vunpack.c.l.b16 %v4104
      %v4114 = vpack.c.b16 %v4113, %v4112
      %4116 = vmatprep.subr.bf16.mxu0 0
      %4117 = vmatpush1.bf16.msra.mxu0 %v4114
      %4118 = vmatprep.subr.bf16.mxu0 0
      %4119 = vmatpush1.bf16.msra.mxu0 0
      %4120 = vmatprep.subr.bf16.mxu0 0
      %4121 = vmatpush1.bf16.msra.mxu0 0
      %4122 = vmatprep.subr.bf16.mxu0 0
      %4123 = vmatpush1.bf16.msra.mxu0 0
      %4124 = vmatprep.subr.bf16.mxu0 0
      %4125 = vmatpush1.bf16.msra.mxu0 0
      %4126 = vmatprep.subr.bf16.mxu0 0
      %4127 = vmatpush1.bf16.msra.mxu0 0
      %4128 = vmatprep.subr.bf16.mxu0 0
      %4129 = vmatpush1.bf16.msra.mxu0 0
      %4130 = vmatprep.subr.bf16.mxu0 0
      %4131 = vmatpush1.bf16.msra.mxu0 0
      %4132 = vmatprep.subr.bf16.mxu0 0
      %4133 = vmatpush1.bf16.msra.mxu0 0
      %4134 = vmatprep.subr.bf16.mxu0 0
      %4135 = vmatpush1.bf16.msra.mxu0 0
      %4136 = vmatprep.subr.bf16.mxu0 0
      %4137 = vmatpush1.bf16.msra.mxu0 0
      %4138 = vmatprep.subr.bf16.mxu0 0
      %4139 = vmatpush1.bf16.msra.mxu0 0
      %4140 = vmatprep.subr.bf16.mxu0 0
      %4141 = vmatpush1.bf16.msra.mxu0 0
      %4142 = vmatprep.subr.bf16.mxu0 0
      %4143 = vmatpush1.bf16.msra.mxu0 0
      %4144 = vmatprep.subr.bf16.mxu0 0
      %4145 = vmatpush1.bf16.msra.mxu0 0
      %4146 = vmatprep.subr.bf16.mxu0 0
      %4147 = vmatpush1.bf16.msra.mxu0 0
      %4148 = vmatprep.mubr.bf16.mxu0 0
      %4149 = vmatmul.mubr.bf16.gmra.mrb[0].mxu0 %v4026
      %v4150 = vpop.f32.mrb[0].mxu0
      %v4151 = vadd.f32 %v4109, %v4150
      %v4152 = vpop.f32.mrb[0].mxu0
      %v4153 = vpop.f32.mrb[0].mxu0
      %v4154 = vadd.f32 %v4109, %v4153
      %v4155 = vpop.f32.mrb[0].mxu0
      %4156 = vmatprep.mubr.bf16.mxu0 0
      %4157 = vmatmul.mubr.bf16.gmra.mrb[0].mxu0 %v4029
      %v4158 = vpop.f32.mrb[0].mxu0
      %v4159 = vadd.f32 %v4109, %v4158
      %v4160 = vpop.f32.mrb[0].mxu0
      %v4161 = vpop.f32.mrb[0].mxu0
      %v4162 = vadd.f32 %v4109, %v4161
      %v4163 = vpop.f32.mrb[0].mxu0
      %4164 = vmatprep.mubr.bf16.mxu0 0
      %4165 = vmatmul.mubr.bf16.gmra.mrb[0].mxu0 %v4032
      %v4166 = vpop.f32.mrb[0].mxu0
      %v4167 = vadd.f32 %v4109, %v4166
      %v4168 = vpop.f32.mrb[0].mxu0
      %v4169 = vpop.f32.mrb[0].mxu0
      %v4170 = vadd.f32 %v4109, %v4169
      %v4171 = vpop.f32.mrb[0].mxu0
      %4172 = vmatprep.mubr.bf16.mxu0 0
      %4173 = vmatmul.mubr.bf16.gmra.mrb[0].mxu0 %v4035
      %v4174 = vpop.f32.mrb[0].mxu0
      %v4175 = vadd.f32 %v4109, %v4174
      %v4176 = vpop.f32.mrb[0].mxu0
      %v4177 = vpop.f32.mrb[0].mxu0
      %v4178 = vadd.f32 %v4109, %v4177
      %v4179 = vpop.f32.mrb[0].mxu0
      %4180 = vdwg.mxu0
      %s4181 = scalar_lea.vmem %s9, 16
      %v4182 = vld [vmem:[%s4181] sm:$0xf]
      %v4183 = vld [vmem:[%s4181 + $0x4] sm:$0xf]
      %v4184 = vld [vmem:[%s10 + $0x2] sm:$0x1]
      %v4185 = vlaneseq
      %v4186 = vshrl.u32 %v4185, 7
      %v4187 = vsub.s32 0, %v4186
      %v4188 = vrot.slane %v4184, %v4187
      %v4191 = vunpack.c.l.b16 %v4182
      %v4192 = vunpack.c.l.b16 %v4183
      %v4193 = vpack.c.b16 %v4192, %v4191
      %4195 = vmatprep.subr.bf16.mxu0 0
      %4196 = vmatpush1.bf16.msra.mxu0 %v4193
      %4197 = vmatprep.subr.bf16.mxu0 0
      %4198 = vmatpush1.bf16.msra.mxu0 0
      %4199 = vmatprep.subr.bf16.mxu0 0
      %4200 = vmatpush1.bf16.msra.mxu0 0
      %4201 = vmatprep.subr.bf16.mxu0 0
      %4202 = vmatpush1.bf16.msra.mxu0 0
      %4203 = vmatprep.subr.bf16.mxu0 0
      %4204 = vmatpush1.bf16.msra.mxu0 0
      %4205 = vmatprep.subr.bf16.mxu0 0
      %4206 = vmatpush1.bf16.msra.mxu0 0
      %4207 = vmatprep.subr.bf16.mxu0 0
      %4208 = vmatpush1.bf16.msra.mxu0 0
      %4209 = vmatprep.subr.bf16.mxu0 0
      %4210 = vmatpush1.bf16.msra.mxu0 0
      %4211 = vmatprep.subr.bf16.mxu0 0
      %4212 = vmatpush1.bf16.msra.mxu0 0
      %4213 = vmatprep.subr.bf16.mxu0 0
      %4214 = vmatpush1.bf16.msra.mxu0 0
      %4215 = vmatprep.subr.bf16.mxu0 0
      %4216 = vmatpush1.bf16.msra.mxu0 0
      %4217 = vmatprep.subr.bf16.mxu0 0
      %4218 = vmatpush1.bf16.msra.mxu0 0
      %4219 = vmatprep.subr.bf16.mxu0 0
      %4220 = vmatpush1.bf16.msra.mxu0 0
      %4221 = vmatprep.subr.bf16.mxu0 0
      %4222 = vmatpush1.bf16.msra.mxu0 0
      %4223 = vmatprep.subr.bf16.mxu0 0
      %4224 = vmatpush1.bf16.msra.mxu0 0
      %4225 = vmatprep.subr.bf16.mxu0 0
      %4226 = vmatpush1.bf16.msra.mxu0 0
      %4227 = vmatprep.mubr.bf16.mxu0 0
      %4228 = vmatmul.mubr.bf16.gmra.mrb[0].mxu0 %v4026
      %v4229 = vpop.f32.mrb[0].mxu0
      %v4230 = vadd.f32 %v4188, %v4229
      %v4231 = vpop.f32.mrb[0].mxu0
      %v4232 = vpop.f32.mrb[0].mxu0
      %v4233 = vadd.f32 %v4188, %v4232
      %v4234 = vpop.f32.mrb[0].mxu0
      %4235 = vmatprep.mubr.bf16.mxu0 0
      %4236 = vmatmul.mubr.bf16.gmra.mrb[0].mxu0 %v4029
      %v4237 = vpop.f32.mrb[0].mxu0
      %v4238 = vadd.f32 %v4188, %v4237
      %v4239 = vpop.f32.mrb[0].mxu0
      %v4240 = vpop.f32.mrb[0].mxu0
      %v4241 = vadd.f32 %v4188, %v4240
      %v4242 = vpop.f32.mrb[0].mxu0
      %4243 = vmatprep.mubr.bf16.mxu0 0
      %4244 = vmatmul.mubr.bf16.gmra.mrb[0].mxu0 %v4032
      %v4245 = vpop.f32.mrb[0].mxu0
      %v4246 = vadd.f32 %v4188, %v4245
      %v4247 = vpop.f32.mrb[0].mxu0
      %v4248 = vpop.f32.mrb[0].mxu0
      %v4249 = vadd.f32 %v4188, %v4248
      %v4250 = vpop.f32.mrb[0].mxu0
      %4251 = vmatprep.mubr.bf16.mxu0 0
      %4252 = vmatmul.mubr.bf16.gmra.mrb[0].mxu0 %v4035
      %v4253 = vpop.f32.mrb[0].mxu0
      %v4254 = vadd.f32 %v4188, %v4253
      %v4255 = vpop.f32.mrb[0].mxu0
      %v4256 = vpop.f32.mrb[0].mxu0
      %v4257 = vadd.f32 %v4188, %v4256
      %v4258 = vpop.f32.mrb[0].mxu0
      %4259 = vdwg.mxu0
      %v4260 = vpack.c.bf16 %v4075, %v4072
      %v4261 = vpack.c.bf16 %v4083, %v4080
      %v4262 = vpack.c.bf16 %v4091, %v4088
      %v4263 = vpack.c.bf16 %v4099, %v4096
      %4264 = vxpose.xlu0.b32.start [1/16] %v4151, 128
      %4265 = vxpose.xlu0.b32.cont [2/16] %v4154, 128
      %4266 = vxpose.xlu0.b32.cont [3/16] %v4159, 128
      %4267 = vxpose.xlu0.b32.cont [4/16] %v4162, 128
      %4268 = vxpose.xlu0.b32.cont [5/16] %v4167, 128
      %4269 = vxpose.xlu0.b32.cont [6/16] %v4170, 128
      %4270 = vxpose.xlu0.b32.cont [7/16] %v4175, 128
      %4271 = vxpose.xlu0.b32.cont [8/16] %v4178, 128
      %4272 = vxpose.xlu0.b32.cont [9/16] 0.0, 128
      %4273 = vxpose.xlu0.b32.cont [10/16] 0.0, 128
      %4274 = vxpose.xlu0.b32.cont [11/16] 0.0, 128
      %4275 = vxpose.xlu0.b32.cont [12/16] 0.0, 128
      %4276 = vxpose.xlu0.b32.cont [13/16] 0.0, 128
      %4277 = vxpose.xlu0.b32.cont [14/16] 0.0, 128
      %4278 = vxpose.xlu0.b32.cont [15/16] 0.0, 128
      %4279 = vxpose.xlu0.b32.end [16/16] 0.0, 128
      %v4280 = vpop.trf.xlu0
      %v4281 = vpop.trf.xlu0
      %v4282 = vpop.trf.xlu0
      %v4283 = vpop.trf.xlu0
      %v4284 = vpop.trf.xlu0
      %v4285 = vpop.trf.xlu0
      %v4286 = vpop.trf.xlu0
      %v4287 = vpop.trf.xlu0
      %v4288 = vpop.trf.xlu0
      %v4289 = vpop.trf.xlu0
      %v4290 = vpop.trf.xlu0
      %v4291 = vpop.trf.xlu0
      %v4292 = vpop.trf.xlu0
      %v4293 = vpop.trf.xlu0
      %v4294 = vpop.trf.xlu0
      %v4295 = vpop.trf.xlu0
      %v4296 = vpack.c.bf16 %v4281, %v4280
      %v4297 = vpack.c.bf16 %v4233, %v4230
      %v4298 = vpack.c.bf16 %v4241, %v4238
      %v4299 = vpack.c.bf16 %v4249, %v4246
      %v4300 = vpack.c.bf16 %v4257, %v4254
      %vm4301 = vcmask 31744
      %v4303 = vsel %vm4301, %v4260, 0
      %v4306 = vsel %vm4301, %v4261, 0
      %v4309 = vsel %vm4301, %v4262, 0
      %v4312 = vsel %vm4301, %v4263, 0
      %vm4314 = vcmask 1041408
      %v4316 = vsel %vm4314, %v4296, 0
      %4318 = vmatprep.subr.bf16.mxu0 0
      %4319 = vmatpush1.bf16.msra.mxu0 %v4316
      %4320 = vmatprep.subr.bf16.mxu0 0
      %4321 = vmatpush1.bf16.msra.mxu0 0
      %4322 = vmatprep.subr.bf16.mxu0 0
      %4323 = vmatpush1.bf16.msra.mxu0 0
      %4324 = vmatprep.subr.bf16.mxu0 0
      %4325 = vmatpush1.bf16.msra.mxu0 0
      %4326 = vmatprep.subr.bf16.mxu0 0
      %4327 = vmatpush1.bf16.msra.mxu0 0
      %4328 = vmatprep.subr.bf16.mxu0 0
      %4329 = vmatpush1.bf16.msra.mxu0 0
      %4330 = vmatprep.subr.bf16.mxu0 0
      %4331 = vmatpush1.bf16.msra.mxu0 0
      %4332 = vmatprep.subr.bf16.mxu0 0
      %4333 = vmatpush1.bf16.msra.mxu0 0
      %4334 = vmatprep.subr.bf16.mxu0 0
      %4335 = vmatpush1.bf16.msra.mxu0 0
      %4336 = vmatprep.subr.bf16.mxu0 0
      %4337 = vmatpush1.bf16.msra.mxu0 0
      %4338 = vmatprep.subr.bf16.mxu0 0
      %4339 = vmatpush1.bf16.msra.mxu0 0
      %4340 = vmatprep.subr.bf16.mxu0 0
      %4341 = vmatpush1.bf16.msra.mxu0 0
      %4342 = vmatprep.subr.bf16.mxu0 0
      %4343 = vmatpush1.bf16.msra.mxu0 0
      %4344 = vmatprep.subr.bf16.mxu0 0
      %4345 = vmatpush1.bf16.msra.mxu0 0
      %4346 = vmatprep.subr.bf16.mxu0 0
      %4347 = vmatpush1.bf16.msra.mxu0 0
      %4348 = vmatprep.subr.bf16.mxu0 0
      %4349 = vmatpush1.bf16.msra.mxu0 0
      %4350 = vmatprep.mubr.bf16.mxu0 0
      %4351 = vmatmul.mubr.bf16.gmra.mrb[0].mxu0 %v4303
      %v4352 = vpop.f32.mrb[0].mxu0
      %v4353 = vadd.f32 0.0, %v4352
      %v4354 = vpop.f32.mrb[0].mxu0
      %v4355 = vpop.f32.mrb[0].mxu0
      %v4356 = vadd.f32 0.0, %v4355
      %v4357 = vpop.f32.mrb[0].mxu0
      %4358 = vmatprep.mubr.bf16.mxu0 0
      %4359 = vmatmul.mubr.bf16.gmra.mrb[0].mxu0 %v4306
      %v4360 = vpop.f32.mrb[0].mxu0
      %v4361 = vadd.f32 0.0, %v4360
      %v4362 = vpop.f32.mrb[0].mxu0
      %v4363 = vpop.f32.mrb[0].mxu0
      %v4364 = vadd.f32 0.0, %v4363
      %v4365 = vpop.f32.mrb[0].mxu0
      %4366 = vmatprep.mubr.bf16.mxu0 0
      %4367 = vmatmul.mubr.bf16.gmra.mrb[0].mxu0 %v4309
      %v4368 = vpop.f32.mrb[0].mxu0
      %v4369 = vadd.f32 0.0, %v4368
      %v4370 = vpop.f32.mrb[0].mxu0
      %v4371 = vpop.f32.mrb[0].mxu0
      %v4372 = vadd.f32 0.0, %v4371
      %v4373 = vpop.f32.mrb[0].mxu0
      %4374 = vmatprep.mubr.bf16.mxu0 0
      %4375 = vmatmul.mubr.bf16.gmra.mrb[0].mxu0 %v4312
      %v4376 = vpop.f32.mrb[0].mxu0
      %v4377 = vadd.f32 0.0, %v4376
      %v4378 = vpop.f32.mrb[0].mxu0
      %v4379 = vpop.f32.mrb[0].mxu0
      %v4380 = vadd.f32 0.0, %v4379
      %v4381 = vpop.f32.mrb[0].mxu0
      %4382 = vdwg.mxu0
      %v4383 = vsel %vm1081, %v4353, -inf
      %4384 = vmax.xlane.f32.xlu0 %v4383
      %v4385 = vpop.xlane.xlu0 %4384
      %v4386 = vsel %vm1081, %v4356, -inf
      %4387 = vmax.xlane.f32.xlu0 %v4386
      %v4388 = vpop.xlane.xlu0 %4387
      %v4389 = vsel %vm1081, %v4361, -inf
      %4390 = vmax.xlane.f32.xlu0 %v4389
      %v4391 = vpop.xlane.xlu0 %4390
      %v4392 = vsel %vm1081, %v4364, -inf
      %4393 = vmax.xlane.f32.xlu0 %v4392
      %v4394 = vpop.xlane.xlu0 %4393
      %v4395 = vsel %vm1081, %v4369, -inf
      %4396 = vmax.xlane.f32.xlu0 %v4395
      %v4397 = vpop.xlane.xlu0 %4396
      %v4398 = vsel %vm1081, %v4372, -inf
      %4399 = vmax.xlane.f32.xlu0 %v4398
      %v4400 = vpop.xlane.xlu0 %4399
      %v4401 = vsel %vm1081, %v4377, -inf
      %4402 = vmax.xlane.f32.xlu0 %v4401
      %v4403 = vpop.xlane.xlu0 %4402
      %v4404 = vsel %vm1081, %v4380, -inf
      %4405 = vmax.xlane.f32.xlu0 %v4404
      %v4406 = vpop.xlane.xlu0 %4405
      %v4407 = vsub.f32 %v4353, %v4385
      %v4408 = vsub.f32 %v4356, %v4388
      %v4409 = vsub.f32 %v4361, %v4391
      %v4410 = vsub.f32 %v4364, %v4394
      %v4411 = vsub.f32 %v4369, %v4397
      %v4412 = vsub.f32 %v4372, %v4400
      %v4413 = vsub.f32 %v4377, %v4403
      %v4414 = vsub.f32 %v4380, %v4406
      %v4415 = vmul.f32 %v4407, 1.442695
      %v4416 = vpow.pop %v4415
      %v4417 = vmul.f32 %v4408, 1.442695
      %v4418 = vpow.pop %v4417
      %v4419 = vmul.f32 %v4409, 1.442695
      %v4420 = vpow.pop %v4419
      %v4421 = vmul.f32 %v4410, 1.442695
      %v4422 = vpow.pop %v4421
      %v4423 = vmul.f32 %v4411, 1.442695
      %v4424 = vpow.pop %v4423
      %v4425 = vmul.f32 %v4412, 1.442695
      %v4426 = vpow.pop %v4425
      %v4427 = vmul.f32 %v4413, 1.442695
      %v4428 = vpow.pop %v4427
      %v4429 = vmul.f32 %v4414, 1.442695
      %v4430 = vpow.pop %v4429
      %v4431 = vsel %vm1081, %v4416, 0.0
      %4432 = vadd.xlane.f32.xlu0 %v4431
      %v4433 = vpop.xlane.xlu0 %4432
      %v4434 = vsel %vm1081, %v4418, 0.0
      %4435 = vadd.xlane.f32.xlu0 %v4434
      %v4436 = vpop.xlane.xlu0 %4435
      %v4437 = vsel %vm1081, %v4420, 0.0
      %4438 = vadd.xlane.f32.xlu0 %v4437
      %v4439 = vpop.xlane.xlu0 %4438
      %v4440 = vsel %vm1081, %v4422, 0.0
      %4441 = vadd.xlane.f32.xlu0 %v4440
      %v4442 = vpop.xlane.xlu0 %4441
      %v4443 = vsel %vm1081, %v4424, 0.0
      %4444 = vadd.xlane.f32.xlu0 %v4443
      %v4445 = vpop.xlane.xlu0 %4444
      %v4446 = vsel %vm1081, %v4426, 0.0
      %4447 = vadd.xlane.f32.xlu0 %v4446
      %v4448 = vpop.xlane.xlu0 %4447
      %v4449 = vsel %vm1081, %v4428, 0.0
      %4450 = vadd.xlane.f32.xlu0 %v4449
      %v4451 = vpop.xlane.xlu0 %4450
      %v4452 = vsel %vm1081, %v4430, 0.0
      %4453 = vadd.xlane.f32.xlu0 %v4452
      %v4454 = vpop.xlane.xlu0 %4453
      %v4455 = vrcp.pop %v4433
      %v4456 = vrcp.pop %v4436
      %v4457 = vrcp.pop %v4439
      %v4458 = vrcp.pop %v4442
      %v4459 = vrcp.pop %v4445
      %v4460 = vrcp.pop %v4448
      %v4461 = vrcp.pop %v4451
      %v4462 = vrcp.pop %v4454
      %v4463 = vmul.f32 %v4416, %v4455
      %v4464 = vmul.f32 %v4418, %v4456
      %v4465 = vmul.f32 %v4420, %v4457
      %v4466 = vmul.f32 %v4422, %v4458
      %v4467 = vmul.f32 %v4424, %v4459
      %v4468 = vmul.f32 %v4426, %v4460
      %v4469 = vmul.f32 %v4428, %v4461
      %v4470 = vmul.f32 %v4430, %v4462
      %v4471 = vpack.c.bf16 %v4464, %v4463
      %v4472 = vpack.c.bf16 %v4466, %v4465
      %v4473 = vpack.c.bf16 %v4468, %v4467
      %v4474 = vpack.c.bf16 %v4470, %v4469
      %v4476 = vsel %vm1081, %v4471, 0
      %v4479 = vsel %vm1081, %v4472, 0
      %v4482 = vsel %vm1081, %v4473, 0
      %v4485 = vsel %vm1081, %v4474, 0
      %4487 = vmatprep.subr.bf16.mxu0 0
      %4488 = vmatpush1.bf16.msra.mxu0 %v4297
      %4489 = vmatprep.subr.bf16.mxu0 0
      %4490 = vmatpush1.bf16.msra.mxu0 %v4298
      %4491 = vmatprep.subr.bf16.mxu0 0
      %4492 = vmatpush1.bf16.msra.mxu0 %v4299
      %4493 = vmatprep.subr.bf16.mxu0 0
      %4494 = vmatpush1.bf16.msra.mxu0 %v4300
      %4495 = vmatprep.subr.bf16.mxu0 0
      %4496 = vmatpush1.bf16.msra.mxu0 0
      %4497 = vmatprep.subr.bf16.mxu0 0
      %4498 = vmatpush1.bf16.msra.mxu0 0
      %4499 = vmatprep.subr.bf16.mxu0 0
      %4500 = vmatpush1.bf16.msra.mxu0 0
      %4501 = vmatprep.subr.bf16.mxu0 0
      %4502 = vmatpush1.bf16.msra.mxu0 0
      %4503 = vmatprep.subr.bf16.mxu0 0
      %4504 = vmatpush1.bf16.msra.mxu0 0
      %4505 = vmatprep.subr.bf16.mxu0 0
      %4506 = vmatpush1.bf16.msra.mxu0 0
      %4507 = vmatprep.subr.bf16.mxu0 0
      %4508 = vmatpush1.bf16.msra.mxu0 0
      %4509 = vmatprep.subr.bf16.mxu0 0
      %4510 = vmatpush1.bf16.msra.mxu0 0
      %4511 = vmatprep.subr.bf16.mxu0 0
      %4512 = vmatpush1.bf16.msra.mxu0 0
      %4513 = vmatprep.subr.bf16.mxu0 0
      %4514 = vmatpush1.bf16.msra.mxu0 0
      %4515 = vmatprep.subr.bf16.mxu0 0
      %4516 = vmatpush1.bf16.msra.mxu0 0
      %4517 = vmatprep.subr.bf16.mxu0 0
      %4518 = vmatpush1.bf16.msra.mxu0 0
      %4519 = vmatprep.mubr.bf16.mxu0 0
      %4520 = vmatmul.mubr.bf16.gmra.mrb[0].mxu0 %v4476
      %v4521 = vpop.f32.mrb[0].mxu0
      %v4522 = vadd.f32 0.0, %v4521
      %v4523 = vpop.f32.mrb[0].mxu0
      %v4524 = vpop.f32.mrb[0].mxu0
      %v4525 = vadd.f32 0.0, %v4524
      %v4526 = vpop.f32.mrb[0].mxu0
      %4527 = vmatprep.mubr.bf16.mxu0 0
      %4528 = vmatmul.mubr.bf16.gmra.mrb[0].mxu0 %v4479
      %v4529 = vpop.f32.mrb[0].mxu0
      %v4530 = vadd.f32 0.0, %v4529
      %v4531 = vpop.f32.mrb[0].mxu0
      %v4532 = vpop.f32.mrb[0].mxu0
      %v4533 = vadd.f32 0.0, %v4532
      %v4534 = vpop.f32.mrb[0].mxu0
      %4535 = vmatprep.mubr.bf16.mxu0 0
      %4536 = vmatmul.mubr.bf16.gmra.mrb[0].mxu0 %v4482
      %v4537 = vpop.f32.mrb[0].mxu0
      %v4538 = vadd.f32 0.0, %v4537
      %v4539 = vpop.f32.mrb[0].mxu0
      %v4540 = vpop.f32.mrb[0].mxu0
      %v4541 = vadd.f32 0.0, %v4540
      %v4542 = vpop.f32.mrb[0].mxu0
      %4543 = vmatprep.mubr.bf16.mxu0 0
      %4544 = vmatmul.mubr.bf16.gmra.mrb[0].mxu0 %v4485
      %v4545 = vpop.f32.mrb[0].mxu0
      %v4546 = vadd.f32 0.0, %v4545
      %v4547 = vpop.f32.mrb[0].mxu0
      %v4548 = vpop.f32.mrb[0].mxu0
      %v4549 = vadd.f32 0.0, %v4548
      %v4550 = vpop.f32.mrb[0].mxu0
      %4551 = vdwg.mxu0
      %v4552 = vpack.c.bf16 %v4525, %v4522
      %v4553 = vpack.c.bf16 %v4533, %v4530
      %v4554 = vpack.c.bf16 %v4541, %v4538
      %v4555 = vpack.c.bf16 %v4549, %v4546
      %4560 = vrot.lane.b32.xlu0 %v4260, 124
      %v4561 = vpop.permute.xlu0 %4560
      %4562 = vrot.lane.b32.xlu0 %v4261, 124
      %v4563 = vpop.permute.xlu0 %4562
      %4564 = vrot.lane.b32.xlu0 %v4262, 124
      %v4565 = vpop.permute.xlu0 %4564
      %4566 = vrot.lane.b32.xlu0 %v4263, 124
      %v4567 = vpop.permute.xlu0 %4566
      %v4569 = vrot.slane %v4296, 2
      %v4571 = vsel %vm4301, %v4561, 0
      %v4574 = vsel %vm4301, %v4563, 0
      %v4577 = vsel %vm4301, %v4565, 0
      %v4580 = vsel %vm4301, %v4567, 0
      %v4583 = vsel %vm4314, %v4569, 0
      %4585 = vmatprep.subr.bf16.mxu0 0
      %4586 = vmatpush1.bf16.msra.mxu0 %v4583
      %4587 = vmatprep.subr.bf16.mxu0 0
      %4588 = vmatpush1.bf16.msra.mxu0 0
      %4589 = vmatprep.subr.bf16.mxu0 0
      %4590 = vmatpush1.bf16.msra.mxu0 0
      %4591 = vmatprep.subr.bf16.mxu0 0
      %4592 = vmatpush1.bf16.msra.mxu0 0
      %4593 = vmatprep.subr.bf16.mxu0 0
      %4594 = vmatpush1.bf16.msra.mxu0 0
      %4595 = vmatprep.subr.bf16.mxu0 0
      %4596 = vmatpush1.bf16.msra.mxu0 0
      %4597 = vmatprep.subr.bf16.mxu0 0
      %4598 = vmatpush1.bf16.msra.mxu0 0
      %4599 = vmatprep.subr.bf16.mxu0 0
      %4600 = vmatpush1.bf16.msra.mxu0 0
      %4601 = vmatprep.subr.bf16.mxu0 0
      %4602 = vmatpush1.bf16.msra.mxu0 0
      %4603 = vmatprep.subr.bf16.mxu0 0
      %4604 = vmatpush1.bf16.msra.mxu0 0
      %4605 = vmatprep.subr.bf16.mxu0 0
      %4606 = vmatpush1.bf16.msra.mxu0 0
      %4607 = vmatprep.subr.bf16.mxu0 0
      %4608 = vmatpush1.bf16.msra.mxu0 0
      %4609 = vmatprep.subr.bf16.mxu0 0
      %4610 = vmatpush1.bf16.msra.mxu0 0
      %4611 = vmatprep.subr.bf16.mxu0 0
      %4612 = vmatpush1.bf16.msra.mxu0 0
      %4613 = vmatprep.subr.bf16.mxu0 0
      %4614 = vmatpush1.bf16.msra.mxu0 0
      %4615 = vmatprep.subr.bf16.mxu0 0
      %4616 = vmatpush1.bf16.msra.mxu0 0
      %4617 = vmatprep.mubr.bf16.mxu0 0
      %4618 = vmatmul.mubr.bf16.gmra.mrb[0].mxu0 %v4571
      %v4619 = vpop.f32.mrb[0].mxu0
      %v4620 = vadd.f32 0.0, %v4619
      %v4621 = vpop.f32.mrb[0].mxu0
      %v4622 = vpop.f32.mrb[0].mxu0
      %v4623 = vadd.f32 0.0, %v4622
      %v4624 = vpop.f32.mrb[0].mxu0
      %4625 = vmatprep.mubr.bf16.mxu0 0
      %4626 = vmatmul.mubr.bf16.gmra.mrb[0].mxu0 %v4574
      %v4627 = vpop.f32.mrb[0].mxu0
      %v4628 = vadd.f32 0.0, %v4627
      %v4629 = vpop.f32.mrb[0].mxu0
      %v4630 = vpop.f32.mrb[0].mxu0
      %v4631 = vadd.f32 0.0, %v4630
      %v4632 = vpop.f32.mrb[0].mxu0
      %4633 = vmatprep.mubr.bf16.mxu0 0
      %4634 = vmatmul.mubr.bf16.gmra.mrb[0].mxu0 %v4577
      %v4635 = vpop.f32.mrb[0].mxu0
      %v4636 = vadd.f32 0.0, %v4635
      %v4637 = vpop.f32.mrb[0].mxu0
      %v4638 = vpop.f32.mrb[0].mxu0
      %v4639 = vadd.f32 0.0, %v4638
      %v4640 = vpop.f32.mrb[0].mxu0
      %4641 = vmatprep.mubr.bf16.mxu0 0
      %4642 = vmatmul.mubr.bf16.gmra.mrb[0].mxu0 %v4580
      %v4643 = vpop.f32.mrb[0].mxu0
      %v4644 = vadd.f32 0.0, %v4643
      %v4645 = vpop.f32.mrb[0].mxu0
      %v4646 = vpop.f32.mrb[0].mxu0
      %v4647 = vadd.f32 0.0, %v4646
      %v4648 = vpop.f32.mrb[0].mxu0
      %4649 = vdwg.mxu0
      %v4650 = vsel %vm1081, %v4620, -inf
      %4651 = vmax.xlane.f32.xlu0 %v4650
      %v4652 = vpop.xlane.xlu0 %4651
      %v4653 = vsel %vm1081, %v4623, -inf
      %4654 = vmax.xlane.f32.xlu0 %v4653
      %v4655 = vpop.xlane.xlu0 %4654
      %v4656 = vsel %vm1081, %v4628, -inf
      %4657 = vmax.xlane.f32.xlu0 %v4656
      %v4658 = vpop.xlane.xlu0 %4657
      %v4659 = vsel %vm1081, %v4631, -inf
      %4660 = vmax.xlane.f32.xlu0 %v4659
      %v4661 = vpop.xlane.xlu0 %4660
      %v4662 = vsel %vm1081, %v4636, -inf
      %4663 = vmax.xlane.f32.xlu0 %v4662
      %v4664 = vpop.xlane.xlu0 %4663
      %v4665 = vsel %vm1081, %v4639, -inf
      %4666 = vmax.xlane.f32.xlu0 %v4665
      %v4667 = vpop.xlane.xlu0 %4666
      %v4668 = vsel %vm1081, %v4644, -inf
      %4669 = vmax.xlane.f32.xlu0 %v4668
      %v4670 = vpop.xlane.xlu0 %4669
      %v4671 = vsel %vm1081, %v4647, -inf
      %4672 = vmax.xlane.f32.xlu0 %v4671
      %v4673 = vpop.xlane.xlu0 %4672
      %v4674 = vsub.f32 %v4620, %v4652
      %v4675 = vsub.f32 %v4623, %v4655
      %v4676 = vsub.f32 %v4628, %v4658
      %v4677 = vsub.f32 %v4631, %v4661
      %v4678 = vsub.f32 %v4636, %v4664
      %v4679 = vsub.f32 %v4639, %v4667
      %v4680 = vsub.f32 %v4644, %v4670
      %v4681 = vsub.f32 %v4647, %v4673
      %v4682 = vmul.f32 %v4674, 1.442695
      %v4683 = vpow.pop %v4682
      %v4684 = vmul.f32 %v4675, 1.442695
      %v4685 = vpow.pop %v4684
      %v4686 = vmul.f32 %v4676, 1.442695
      %v4687 = vpow.pop %v4686
      %v4688 = vmul.f32 %v4677, 1.442695
      %v4689 = vpow.pop %v4688
      %v4690 = vmul.f32 %v4678, 1.442695
      %v4691 = vpow.pop %v4690
      %v4692 = vmul.f32 %v4679, 1.442695
      %v4693 = vpow.pop %v4692
      %v4694 = vmul.f32 %v4680, 1.442695
      %v4695 = vpow.pop %v4694
      %v4696 = vmul.f32 %v4681, 1.442695
      %v4697 = vpow.pop %v4696
      %v4698 = vsel %vm1081, %v4683, 0.0
      %4699 = vadd.xlane.f32.xlu0 %v4698
      %v4700 = vpop.xlane.xlu0 %4699
      %v4701 = vsel %vm1081, %v4685, 0.0
      %4702 = vadd.xlane.f32.xlu0 %v4701
      %v4703 = vpop.xlane.xlu0 %4702
      %v4704 = vsel %vm1081, %v4687, 0.0
      %4705 = vadd.xlane.f32.xlu0 %v4704
      %v4706 = vpop.xlane.xlu0 %4705
      %v4707 = vsel %vm1081, %v4689, 0.0
      %4708 = vadd.xlane.f32.xlu0 %v4707
      %v4709 = vpop.xlane.xlu0 %4708
      %v4710 = vsel %vm1081, %v4691, 0.0
      %4711 = vadd.xlane.f32.xlu0 %v4710
      %v4712 = vpop.xlane.xlu0 %4711
      %v4713 = vsel %vm1081, %v4693, 0.0
      %4714 = vadd.xlane.f32.xlu0 %v4713
      %v4715 = vpop.xlane.xlu0 %4714
      %v4716 = vsel %vm1081, %v4695, 0.0
      %4717 = vadd.xlane.f32.xlu0 %v4716
      %v4718 = vpop.xlane.xlu0 %4717
      %v4719 = vsel %vm1081, %v4697, 0.0
      %4720 = vadd.xlane.f32.xlu0 %v4719
      %v4721 = vpop.xlane.xlu0 %4720
      %v4722 = vrcp.pop %v4700
      %v4723 = vrcp.pop %v4703
      %v4724 = vrcp.pop %v4706
      %v4725 = vrcp.pop %v4709
      %v4726 = vrcp.pop %v4712
      %v4727 = vrcp.pop %v4715
      %v4728 = vrcp.pop %v4718
      %v4729 = vrcp.pop %v4721
      %v4730 = vmul.f32 %v4683, %v4722
      %v4731 = vmul.f32 %v4685, %v4723
      %v4732 = vmul.f32 %v4687, %v4724
      %v4733 = vmul.f32 %v4689, %v4725
      %v4734 = vmul.f32 %v4691, %v4726
      %v4735 = vmul.f32 %v4693, %v4727
      %v4736 = vmul.f32 %v4695, %v4728
      %v4737 = vmul.f32 %v4697, %v4729
      %v4738 = vpack.c.bf16 %v4731, %v4730
      %v4739 = vpack.c.bf16 %v4733, %v4732
      %v4740 = vpack.c.bf16 %v4735, %v4734
      %v4741 = vpack.c.bf16 %v4737, %v4736
      %4746 = vrot.lane.b32.xlu0 %v4297, 124
      %v4747 = vpop.permute.xlu0 %4746
      %4748 = vrot.lane.b32.xlu0 %v4298, 124
      %v4749 = vpop.permute.xlu0 %4748
      %4750 = vrot.lane.b32.xlu0 %v4299, 124
      %v4751 = vpop.permute.xlu0 %4750
      %4752 = vrot.lane.b32.xlu0 %v4300, 124
      %v4753 = vpop.permute.xlu0 %4752
      %v4759 = vsel %vm1081, %v4738, 0
      %v4762 = vsel %vm1081, %v4739, 0
      %v4765 = vsel %vm1081, %v4740, 0
      %v4768 = vsel %vm1081, %v4741, 0
      %4770 = vmatprep.subr.bf16.mxu0 0
      %4771 = vmatpush1.bf16.msra.mxu0 %v4747
      %4772 = vmatprep.subr.bf16.mxu0 0
      %4773 = vmatpush1.bf16.msra.mxu0 %v4749
      %4774 = vmatprep.subr.bf16.mxu0 0
      %4775 = vmatpush1.bf16.msra.mxu0 %v4751
      %4776 = vmatprep.subr.bf16.mxu0 0
      %4777 = vmatpush1.bf16.msra.mxu0 %v4753
      %4778 = vmatprep.subr.bf16.mxu0 0
      %4779 = vmatpush1.bf16.msra.mxu0 0
      %4780 = vmatprep.subr.bf16.mxu0 0
      %4781 = vmatpush1.bf16.msra.mxu0 0
      %4782 = vmatprep.subr.bf16.mxu0 0
      %4783 = vmatpush1.bf16.msra.mxu0 0
      %4784 = vmatprep.subr.bf16.mxu0 0
      %4785 = vmatpush1.bf16.msra.mxu0 0
      %4786 = vmatprep.subr.bf16.mxu0 0
      %4787 = vmatpush1.bf16.msra.mxu0 0
      %4788 = vmatprep.subr.bf16.mxu0 0
      %4789 = vmatpush1.bf16.msra.mxu0 0
      %4790 = vmatprep.subr.bf16.mxu0 0
      %4791 = vmatpush1.bf16.msra.mxu0 0
      %4792 = vmatprep.subr.bf16.mxu0 0
      %4793 = vmatpush1.bf16.msra.mxu0 0
      %4794 = vmatprep.subr.bf16.mxu0 0
      %4795 = vmatpush1.bf16.msra.mxu0 0
      %4796 = vmatprep.subr.bf16.mxu0 0
      %4797 = vmatpush1.bf16.msra.mxu0 0
      %4798 = vmatprep.subr.bf16.mxu0 0
      %4799 = vmatpush1.bf16.msra.mxu0 0
      %4800 = vmatprep.subr.bf16.mxu0 0
      %4801 = vmatpush1.bf16.msra.mxu0 0
      %4802 = vmatprep.mubr.bf16.mxu0 0
      %4803 = vmatmul.mubr.bf16.gmra.mrb[0].mxu0 %v4759
      %v4804 = vpop.f32.mrb[0].mxu0
      %v4805 = vadd.f32 0.0, %v4804
      %v4806 = vpop.f32.mrb[0].mxu0
      %v4807 = vpop.f32.mrb[0].mxu0
      %v4808 = vadd.f32 0.0, %v4807
      %v4809 = vpop.f32.mrb[0].mxu0
      %4810 = vmatprep.mubr.bf16.mxu0 0
      %4811 = vmatmul.mubr.bf16.gmra.mrb[0].mxu0 %v4762
      %v4812 = vpop.f32.mrb[0].mxu0
      %v4813 = vadd.f32 0.0, %v4812
      %v4814 = vpop.f32.mrb[0].mxu0
      %v4815 = vpop.f32.mrb[0].mxu0
      %v4816 = vadd.f32 0.0, %v4815
      %v4817 = vpop.f32.mrb[0].mxu0
      %4818 = vmatprep.mubr.bf16.mxu0 0
      %4819 = vmatmul.mubr.bf16.gmra.mrb[0].mxu0 %v4765
      %v4820 = vpop.f32.mrb[0].mxu0
      %v4821 = vadd.f32 0.0, %v4820
      %v4822 = vpop.f32.mrb[0].mxu0
      %v4823 = vpop.f32.mrb[0].mxu0
      %v4824 = vadd.f32 0.0, %v4823
      %v4825 = vpop.f32.mrb[0].mxu0
      %4826 = vmatprep.mubr.bf16.mxu0 0
      %4827 = vmatmul.mubr.bf16.gmra.mrb[0].mxu0 %v4768
      %v4828 = vpop.f32.mrb[0].mxu0
      %v4829 = vadd.f32 0.0, %v4828
      %v4830 = vpop.f32.mrb[0].mxu0
      %v4831 = vpop.f32.mrb[0].mxu0
      %v4832 = vadd.f32 0.0, %v4831
      %v4833 = vpop.f32.mrb[0].mxu0
      %4834 = vdwg.mxu0
      %v4835 = vpack.c.bf16 %v4808, %v4805
      %v4836 = vpack.c.bf16 %v4816, %v4813
      %v4837 = vpack.c.bf16 %v4824, %v4821
      %v4838 = vpack.c.bf16 %v4832, %v4829
      %v4840 = vunpack.c.l.b16 %v461
      %v4841 = vpack.c.b16 %v4840, %v4840
      %v4842 = vrot.slane %v4841, 2
      %v4844 = vsel %vm4301, %v4835, 0
      %v4847 = vsel %vm4301, %v4836, 0
      %v4850 = vsel %vm4301, %v4837, 0
      %v4853 = vsel %vm4301, %v4838, 0
      %v4856 = vsel %vm4314, %v4842, 0
      %4858 = vmatprep.subr.bf16.mxu0 0
      %4859 = vmatpush1.bf16.msra.mxu0 %v4856
      %4860 = vmatprep.subr.bf16.mxu0 0
      %4861 = vmatpush1.bf16.msra.mxu0 0
      %4862 = vmatprep.subr.bf16.mxu0 0
      %4863 = vmatpush1.bf16.msra.mxu0 0
      %4864 = vmatprep.subr.bf16.mxu0 0
      %4865 = vmatpush1.bf16.msra.mxu0 0
      %4866 = vmatprep.subr.bf16.mxu0 0
      %4867 = vmatpush1.bf16.msra.mxu0 0
      %4868 = vmatprep.subr.bf16.mxu0 0
      %4869 = vmatpush1.bf16.msra.mxu0 0
      %4870 = vmatprep.subr.bf16.mxu0 0
      %4871 = vmatpush1.bf16.msra.mxu0 0
      %4872 = vmatprep.subr.bf16.mxu0 0
      %4873 = vmatpush1.bf16.msra.mxu0 0
      %4874 = vmatprep.subr.bf16.mxu0 0
      %4875 = vmatpush1.bf16.msra.mxu0 0
      %4876 = vmatprep.subr.bf16.mxu0 0
      %4877 = vmatpush1.bf16.msra.mxu0 0
      %4878 = vmatprep.subr.bf16.mxu0 0
      %4879 = vmatpush1.bf16.msra.mxu0 0
      %4880 = vmatprep.subr.bf16.mxu0 0
      %4881 = vmatpush1.bf16.msra.mxu0 0
      %4882 = vmatprep.subr.bf16.mxu0 0
      %4883 = vmatpush1.bf16.msra.mxu0 0
      %4884 = vmatprep.subr.bf16.mxu0 0
      %4885 = vmatpush1.bf16.msra.mxu0 0
      %4886 = vmatprep.subr.bf16.mxu0 0
      %4887 = vmatpush1.bf16.msra.mxu0 0
      %4888 = vmatprep.subr.bf16.mxu0 0
      %4889 = vmatpush1.bf16.msra.mxu0 0
      %4890 = vmatprep.mubr.bf16.mxu0 0
      %4891 = vmatmul.mubr.bf16.gmra.mrb[0].mxu0 %v4844
      %v4892 = vpop.f32.mrb[0].mxu0
      %v4893 = vadd.f32 0.0, %v4892
      %v4894 = vpop.f32.mrb[0].mxu0
      %v4895 = vpop.f32.mrb[0].mxu0
      %v4896 = vadd.f32 0.0, %v4895
      %v4897 = vpop.f32.mrb[0].mxu0
      %4898 = vmatprep.mubr.bf16.mxu0 0
      %4899 = vmatmul.mubr.bf16.gmra.mrb[0].mxu0 %v4847
      %v4900 = vpop.f32.mrb[0].mxu0
      %v4901 = vadd.f32 0.0, %v4900
      %v4902 = vpop.f32.mrb[0].mxu0
      %v4903 = vpop.f32.mrb[0].mxu0
      %v4904 = vadd.f32 0.0, %v4903
      %v4905 = vpop.f32.mrb[0].mxu0
      %4906 = vmatprep.mubr.bf16.mxu0 0
      %4907 = vmatmul.mubr.bf16.gmra.mrb[0].mxu0 %v4850
      %v4908 = vpop.f32.mrb[0].mxu0
      %v4909 = vadd.f32 0.0, %v4908
      %v4910 = vpop.f32.mrb[0].mxu0
      %v4911 = vpop.f32.mrb[0].mxu0
      %v4912 = vadd.f32 0.0, %v4911
      %v4913 = vpop.f32.mrb[0].mxu0
      %4914 = vmatprep.mubr.bf16.mxu0 0
      %4915 = vmatmul.mubr.bf16.gmra.mrb[0].mxu0 %v4853
      %v4916 = vpop.f32.mrb[0].mxu0
      %v4917 = vadd.f32 0.0, %v4916
      %v4918 = vpop.f32.mrb[0].mxu0
      %v4919 = vpop.f32.mrb[0].mxu0
      %v4920 = vadd.f32 0.0, %v4919
      %v4921 = vpop.f32.mrb[0].mxu0
      %4922 = vdwg.mxu0
      %v4924 = vsel %vm4301, %v4552, 0
      %v4927 = vsel %vm4301, %v4553, 0
      %v4930 = vsel %vm4301, %v4554, 0
      %v4933 = vsel %vm4301, %v4555, 0
      %v4936 = vsel %vm4314, %v461, 0
      %4938 = vmatprep.subr.bf16.mxu0 0
      %4939 = vmatpush1.bf16.msra.mxu0 %v4936
      %4940 = vmatprep.subr.bf16.mxu0 0
      %4941 = vmatpush1.bf16.msra.mxu0 0
      %4942 = vmatprep.subr.bf16.mxu0 0
      %4943 = vmatpush1.bf16.msra.mxu0 0
      %4944 = vmatprep.subr.bf16.mxu0 0
      %4945 = vmatpush1.bf16.msra.mxu0 0
      %4946 = vmatprep.subr.bf16.mxu0 0
      %4947 = vmatpush1.bf16.msra.mxu0 0
      %4948 = vmatprep.subr.bf16.mxu0 0
      %4949 = vmatpush1.bf16.msra.mxu0 0
      %4950 = vmatprep.subr.bf16.mxu0 0
      %4951 = vmatpush1.bf16.msra.mxu0 0
      %4952 = vmatprep.subr.bf16.mxu0 0
      %4953 = vmatpush1.bf16.msra.mxu0 0
      %4954 = vmatprep.subr.bf16.mxu0 0
      %4955 = vmatpush1.bf16.msra.mxu0 0
      %4956 = vmatprep.subr.bf16.mxu0 0
      %4957 = vmatpush1.bf16.msra.mxu0 0
      %4958 = vmatprep.subr.bf16.mxu0 0
      %4959 = vmatpush1.bf16.msra.mxu0 0
      %4960 = vmatprep.subr.bf16.mxu0 0
      %4961 = vmatpush1.bf16.msra.mxu0 0
      %4962 = vmatprep.subr.bf16.mxu0 0
      %4963 = vmatpush1.bf16.msra.mxu0 0
      %4964 = vmatprep.subr.bf16.mxu0 0
      %4965 = vmatpush1.bf16.msra.mxu0 0
      %4966 = vmatprep.subr.bf16.mxu0 0
      %4967 = vmatpush1.bf16.msra.mxu0 0
      %4968 = vmatprep.subr.bf16.mxu0 0
      %4969 = vmatpush1.bf16.msra.mxu0 0
      %4970 = vmatprep.mubr.bf16.mxu0 0
      %4971 = vmatmul.mubr.bf16.gmra.mrb[0].mxu0 %v4924
      %v4972 = vpop.f32.mrb[0].mxu0
      %v4973 = vadd.f32 %v4893, %v4972
      %v4974 = vpop.f32.mrb[0].mxu0
      %v4975 = vpop.f32.mrb[0].mxu0
      %v4976 = vadd.f32 %v4896, %v4975
      %v4977 = vpop.f32.mrb[0].mxu0
      %4978 = vmatprep.mubr.bf16.mxu0 0
      %4979 = vmatmul.mubr.bf16.gmra.mrb[0].mxu0 %v4927
      %v4980 = vpop.f32.mrb[0].mxu0
      %v4981 = vadd.f32 %v4901, %v4980
      %v4982 = vpop.f32.mrb[0].mxu0
      %v4983 = vpop.f32.mrb[0].mxu0
      %v4984 = vadd.f32 %v4904, %v4983
      %v4985 = vpop.f32.mrb[0].mxu0
      %4986 = vmatprep.mubr.bf16.mxu0 0
      %4987 = vmatmul.mubr.bf16.gmra.mrb[0].mxu0 %v4930
      %v4988 = vpop.f32.mrb[0].mxu0
      %v4989 = vadd.f32 %v4909, %v4988
      %v4990 = vpop.f32.mrb[0].mxu0
      %v4991 = vpop.f32.mrb[0].mxu0
      %v4992 = vadd.f32 %v4912, %v4991
      %v4993 = vpop.f32.mrb[0].mxu0
      %4994 = vmatprep.mubr.bf16.mxu0 0
      %4995 = vmatmul.mubr.bf16.gmra.mrb[0].mxu0 %v4933
      %v4996 = vpop.f32.mrb[0].mxu0
      %v4997 = vadd.f32 %v4917, %v4996
      %v4998 = vpop.f32.mrb[0].mxu0
      %v4999 = vpop.f32.mrb[0].mxu0
      %v5000 = vadd.f32 %v4920, %v4999
      %v5001 = vpop.f32.mrb[0].mxu0
      %5002 = vdwg.mxu0
      %5003 = vrot.lane.b32.xlu0 %v4260, 120
      %v5004 = vpop.permute.xlu0 %5003
      %5005 = vrot.lane.b32.xlu0 %v4261, 120
      %v5006 = vpop.permute.xlu0 %5005
      %5007 = vrot.lane.b32.xlu0 %v4262, 120
      %v5008 = vpop.permute.xlu0 %5007
      %5009 = vrot.lane.b32.xlu0 %v4263, 120
      %v5010 = vpop.permute.xlu0 %5009
      %v5011 = vrot.slane %v4296, 4
      %v5013 = vsel %vm4301, %v5004, 0
      %v5016 = vsel %vm4301, %v5006, 0
      %v5019 = vsel %vm4301, %v5008, 0
      %v5022 = vsel %vm4301, %v5010, 0
      %v5025 = vsel %vm4314, %v5011, 0
      %5027 = vmatprep.subr.bf16.mxu0 0
      %5028 = vmatpush1.bf16.msra.mxu0 %v5025
      %5029 = vmatprep.subr.bf16.mxu0 0
      %5030 = vmatpush1.bf16.msra.mxu0 0
      %5031 = vmatprep.subr.bf16.mxu0 0
      %5032 = vmatpush1.bf16.msra.mxu0 0
      %5033 = vmatprep.subr.bf16.mxu0 0
      %5034 = vmatpush1.bf16.msra.mxu0 0
      %5035 = vmatprep.subr.bf16.mxu0 0
      %5036 = vmatpush1.bf16.msra.mxu0 0
      %5037 = vmatprep.subr.bf16.mxu0 0
      %5038 = vmatpush1.bf16.msra.mxu0 0
      %5039 = vmatprep.subr.bf16.mxu0 0
      %5040 = vmatpush1.bf16.msra.mxu0 0
      %5041 = vmatprep.subr.bf16.mxu0 0
      %5042 = vmatpush1.bf16.msra.mxu0 0
      %5043 = vmatprep.subr.bf16.mxu0 0
      %5044 = vmatpush1.bf16.msra.mxu0 0
      %5045 = vmatprep.subr.bf16.mxu0 0
      %5046 = vmatpush1.bf16.msra.mxu0 0
      %5047 = vmatprep.subr.bf16.mxu0 0
      %5048 = vmatpush1.bf16.msra.mxu0 0
      %5049 = vmatprep.subr.bf16.mxu0 0
      %5050 = vmatpush1.bf16.msra.mxu0 0
      %5051 = vmatprep.subr.bf16.mxu0 0
      %5052 = vmatpush1.bf16.msra.mxu0 0
      %5053 = vmatprep.subr.bf16.mxu0 0
      %5054 = vmatpush1.bf16.msra.mxu0 0
      %5055 = vmatprep.subr.bf16.mxu0 0
      %5056 = vmatpush1.bf16.msra.mxu0 0
      %5057 = vmatprep.subr.bf16.mxu0 0
      %5058 = vmatpush1.bf16.msra.mxu0 0
      %5059 = vmatprep.mubr.bf16.mxu0 0
      %5060 = vmatmul.mubr.bf16.gmra.mrb[0].mxu0 %v5013
      %v5061 = vpop.f32.mrb[0].mxu0
      %v5062 = vadd.f32 0.0, %v5061
      %v5063 = vpop.f32.mrb[0].mxu0
      %v5064 = vpop.f32.mrb[0].mxu0
      %v5065 = vadd.f32 0.0, %v5064
      %v5066 = vpop.f32.mrb[0].mxu0
      %5067 = vmatprep.mubr.bf16.mxu0 0
      %5068 = vmatmul.mubr.bf16.gmra.mrb[0].mxu0 %v5016
      %v5069 = vpop.f32.mrb[0].mxu0
      %v5070 = vadd.f32 0.0, %v5069
      %v5071 = vpop.f32.mrb[0].mxu0
      %v5072 = vpop.f32.mrb[0].mxu0
      %v5073 = vadd.f32 0.0, %v5072
      %v5074 = vpop.f32.mrb[0].mxu0
      %5075 = vmatprep.mubr.bf16.mxu0 0
      %5076 = vmatmul.mubr.bf16.gmra.mrb[0].mxu0 %v5019
      %v5077 = vpop.f32.mrb[0].mxu0
      %v5078 = vadd.f32 0.0, %v5077
      %v5079 = vpop.f32.mrb[0].mxu0
      %v5080 = vpop.f32.mrb[0].mxu0
      %v5081 = vadd.f32 0.0, %v5080
      %v5082 = vpop.f32.mrb[0].mxu0
      %5083 = vmatprep.mubr.bf16.mxu0 0
      %5084 = vmatmul.mubr.bf16.gmra.mrb[0].mxu0 %v5022
      %v5085 = vpop.f32.mrb[0].mxu0
      %v5086 = vadd.f32 0.0, %v5085
      %v5087 = vpop.f32.mrb[0].mxu0
      %v5088 = vpop.f32.mrb[0].mxu0
      %v5089 = vadd.f32 0.0, %v5088
      %v5090 = vpop.f32.mrb[0].mxu0
      %5091 = vdwg.mxu0
      %v5092 = vsel %vm1081, %v5062, -inf
      %5093 = vmax.xlane.f32.xlu0 %v5092
      %v5094 = vpop.xlane.xlu0 %5093
      %v5095 = vsel %vm1081, %v5065, -inf
      %5096 = vmax.xlane.f32.xlu0 %v5095
      %v5097 = vpop.xlane.xlu0 %5096
      %v5098 = vsel %vm1081, %v5070, -inf
      %5099 = vmax.xlane.f32.xlu0 %v5098
      %v5100 = vpop.xlane.xlu0 %5099
      %v5101 = vsel %vm1081, %v5073, -inf
      %5102 = vmax.xlane.f32.xlu0 %v5101
      %v5103 = vpop.xlane.xlu0 %5102
      %v5104 = vsel %vm1081, %v5078, -inf
      %5105 = vmax.xlane.f32.xlu0 %v5104
      %v5106 = vpop.xlane.xlu0 %5105
      %v5107 = vsel %vm1081, %v5081, -inf
      %5108 = vmax.xlane.f32.xlu0 %v5107
      %v5109 = vpop.xlane.xlu0 %5108
      %v5110 = vsel %vm1081, %v5086, -inf
      %5111 = vmax.xlane.f32.xlu0 %v5110
      %v5112 = vpop.xlane.xlu0 %5111
      %v5113 = vsel %vm1081, %v5089, -inf
      %5114 = vmax.xlane.f32.xlu0 %v5113
      %v5115 = vpop.xlane.xlu0 %5114
      %v5116 = vsub.f32 %v5062, %v5094
      %v5117 = vsub.f32 %v5065, %v5097
      %v5118 = vsub.f32 %v5070, %v5100
      %v5119 = vsub.f32 %v5073, %v5103
      %v5120 = vsub.f32 %v5078, %v5106
      %v5121 = vsub.f32 %v5081, %v5109
      %v5122 = vsub.f32 %v5086, %v5112
      %v5123 = vsub.f32 %v5089, %v5115
      %v5124 = vmul.f32 %v5116, 1.442695
      %v5125 = vpow.pop %v5124
      %v5126 = vmul.f32 %v5117, 1.442695
      %v5127 = vpow.pop %v5126
      %v5128 = vmul.f32 %v5118, 1.442695
      %v5129 = vpow.pop %v5128
      %v5130 = vmul.f32 %v5119, 1.442695
      %v5131 = vpow.pop %v5130
      %v5132 = vmul.f32 %v5120, 1.442695
      %v5133 = vpow.pop %v5132
      %v5134 = vmul.f32 %v5121, 1.442695
      %v5135 = vpow.pop %v5134
      %v5136 = vmul.f32 %v5122, 1.442695
      %v5137 = vpow.pop %v5136
      %v5138 = vmul.f32 %v5123, 1.442695
      %v5139 = vpow.pop %v5138
      %v5140 = vsel %vm1081, %v5125, 0.0
      %5141 = vadd.xlane.f32.xlu0 %v5140
      %v5142 = vpop.xlane.xlu0 %5141
      %v5143 = vsel %vm1081, %v5127, 0.0
      %5144 = vadd.xlane.f32.xlu0 %v5143
      %v5145 = vpop.xlane.xlu0 %5144
      %v5146 = vsel %vm1081, %v5129, 0.0
      %5147 = vadd.xlane.f32.xlu0 %v5146
      %v5148 = vpop.xlane.xlu0 %5147
      %v5149 = vsel %vm1081, %v5131, 0.0
      %5150 = vadd.xlane.f32.xlu0 %v5149
      %v5151 = vpop.xlane.xlu0 %5150
      %v5152 = vsel %vm1081, %v5133, 0.0
      %5153 = vadd.xlane.f32.xlu0 %v5152
      %v5154 = vpop.xlane.xlu0 %5153
      %v5155 = vsel %vm1081, %v5135, 0.0
      %5156 = vadd.xlane.f32.xlu0 %v5155
      %v5157 = vpop.xlane.xlu0 %5156
      %v5158 = vsel %vm1081, %v5137, 0.0
      %5159 = vadd.xlane.f32.xlu0 %v5158
      %v5160 = vpop.xlane.xlu0 %5159
      %v5161 = vsel %vm1081, %v5139, 0.0
      %5162 = vadd.xlane.f32.xlu0 %v5161
      %v5163 = vpop.xlane.xlu0 %5162
      %v5164 = vrcp.pop %v5142
      %v5165 = vrcp.pop %v5145
      %v5166 = vrcp.pop %v5148
      %v5167 = vrcp.pop %v5151
      %v5168 = vrcp.pop %v5154
      %v5169 = vrcp.pop %v5157
      %v5170 = vrcp.pop %v5160
      %v5171 = vrcp.pop %v5163
      %v5172 = vmul.f32 %v5125, %v5164
      %v5173 = vmul.f32 %v5127, %v5165
      %v5174 = vmul.f32 %v5129, %v5166
      %v5175 = vmul.f32 %v5131, %v5167
      %v5176 = vmul.f32 %v5133, %v5168
      %v5177 = vmul.f32 %v5135, %v5169
      %v5178 = vmul.f32 %v5137, %v5170
      %v5179 = vmul.f32 %v5139, %v5171
      %v5180 = vpack.c.bf16 %v5173, %v5172
      %v5181 = vpack.c.bf16 %v5175, %v5174
      %v5182 = vpack.c.bf16 %v5177, %v5176
      %v5183 = vpack.c.bf16 %v5179, %v5178
      %5184 = vrot.lane.b32.xlu0 %v4297, 120
      %v5185 = vpop.permute.xlu0 %5184
      %5186 = vrot.lane.b32.xlu0 %v4298, 120
      %v5187 = vpop.permute.xlu0 %5186
      %5188 = vrot.lane.b32.xlu0 %v4299, 120
      %v5189 = vpop.permute.xlu0 %5188
      %5190 = vrot.lane.b32.xlu0 %v4300, 120
      %v5191 = vpop.permute.xlu0 %5190
      %v5197 = vsel %vm1081, %v5180, 0
      %v5200 = vsel %vm1081, %v5181, 0
      %v5203 = vsel %vm1081, %v5182, 0
      %v5206 = vsel %vm1081, %v5183, 0
      %5208 = vmatprep.subr.bf16.mxu0 0
      %5209 = vmatpush1.bf16.msra.mxu0 %v5185
      %5210 = vmatprep.subr.bf16.mxu0 0
      %5211 = vmatpush1.bf16.msra.mxu0 %v5187
      %5212 = vmatprep.subr.bf16.mxu0 0
      %5213 = vmatpush1.bf16.msra.mxu0 %v5189
      %5214 = vmatprep.subr.bf16.mxu0 0
      %5215 = vmatpush1.bf16.msra.mxu0 %v5191
      %5216 = vmatprep.subr.bf16.mxu0 0
      %5217 = vmatpush1.bf16.msra.mxu0 0
      %5218 = vmatprep.subr.bf16.mxu0 0
      %5219 = vmatpush1.bf16.msra.mxu0 0
      %5220 = vmatprep.subr.bf16.mxu0 0
      %5221 = vmatpush1.bf16.msra.mxu0 0
      %5222 = vmatprep.subr.bf16.mxu0 0
      %5223 = vmatpush1.bf16.msra.mxu0 0
      %5224 = vmatprep.subr.bf16.mxu0 0
      %5225 = vmatpush1.bf16.msra.mxu0 0
      %5226 = vmatprep.subr.bf16.mxu0 0
      %5227 = vmatpush1.bf16.msra.mxu0 0
      %5228 = vmatprep.subr.bf16.mxu0 0
      %5229 = vmatpush1.bf16.msra.mxu0 0
      %5230 = vmatprep.subr.bf16.mxu0 0
      %5231 = vmatpush1.bf16.msra.mxu0 0
      %5232 = vmatprep.subr.bf16.mxu0 0
      %5233 = vmatpush1.bf16.msra.mxu0 0
      %5234 = vmatprep.subr.bf16.mxu0 0
      %5235 = vmatpush1.bf16.msra.mxu0 0
      %5236 = vmatprep.subr.bf16.mxu0 0
      %5237 = vmatpush1.bf16.msra.mxu0 0
      %5238 = vmatprep.subr.bf16.mxu0 0
      %5239 = vmatpush1.bf16.msra.mxu0 0
      %5240 = vmatprep.mubr.bf16.mxu0 0
      %5241 = vmatmul.mubr.bf16.gmra.mrb[0].mxu0 %v5197
      %v5242 = vpop.f32.mrb[0].mxu0
      %v5243 = vadd.f32 0.0, %v5242
      %v5244 = vpop.f32.mrb[0].mxu0
      %v5245 = vpop.f32.mrb[0].mxu0
      %v5246 = vadd.f32 0.0, %v5245
      %v5247 = vpop.f32.mrb[0].mxu0
      %5248 = vmatprep.mubr.bf16.mxu0 0
      %5249 = vmatmul.mubr.bf16.gmra.mrb[0].mxu0 %v5200
      %v5250 = vpop.f32.mrb[0].mxu0
      %v5251 = vadd.f32 0.0, %v5250
      %v5252 = vpop.f32.mrb[0].mxu0
      %v5253 = vpop.f32.mrb[0].mxu0
      %v5254 = vadd.f32 0.0, %v5253
      %v5255 = vpop.f32.mrb[0].mxu0
      %5256 = vmatprep.mubr.bf16.mxu0 0
      %5257 = vmatmul.mubr.bf16.gmra.mrb[0].mxu0 %v5203
      %v5258 = vpop.f32.mrb[0].mxu0
      %v5259 = vadd.f32 0.0, %v5258
      %v5260 = vpop.f32.mrb[0].mxu0
      %v5261 = vpop.f32.mrb[0].mxu0
      %v5262 = vadd.f32 0.0, %v5261
      %v5263 = vpop.f32.mrb[0].mxu0
      %5264 = vmatprep.mubr.bf16.mxu0 0
      %5265 = vmatmul.mubr.bf16.gmra.mrb[0].mxu0 %v5206
      %v5266 = vpop.f32.mrb[0].mxu0
      %v5267 = vadd.f32 0.0, %v5266
      %v5268 = vpop.f32.mrb[0].mxu0
      %v5269 = vpop.f32.mrb[0].mxu0
      %v5270 = vadd.f32 0.0, %v5269
      %v5271 = vpop.f32.mrb[0].mxu0
      %5272 = vdwg.mxu0
      %v5273 = vpack.c.bf16 %v5246, %v5243
      %v5274 = vpack.c.bf16 %v5254, %v5251
      %v5275 = vpack.c.bf16 %v5262, %v5259
      %v5276 = vpack.c.bf16 %v5270, %v5267
      %v5278 = vsel %vm4301, %v5273, 0
      %v5281 = vsel %vm4301, %v5274, 0
      %v5284 = vsel %vm4301, %v5275, 0
      %v5287 = vsel %vm4301, %v5276, 0
      %v5290 = vsel %vm4314, %v462, 0
      %5292 = vmatprep.subr.bf16.mxu0 0
      %5293 = vmatpush1.bf16.msra.mxu0 %v5290
      %5294 = vmatprep.subr.bf16.mxu0 0
      %5295 = vmatpush1.bf16.msra.mxu0 0
      %5296 = vmatprep.subr.bf16.mxu0 0
      %5297 = vmatpush1.bf16.msra.mxu0 0
      %5298 = vmatprep.subr.bf16.mxu0 0
      %5299 = vmatpush1.bf16.msra.mxu0 0
      %5300 = vmatprep.subr.bf16.mxu0 0
      %5301 = vmatpush1.bf16.msra.mxu0 0
      %5302 = vmatprep.subr.bf16.mxu0 0
      %5303 = vmatpush1.bf16.msra.mxu0 0
      %5304 = vmatprep.subr.bf16.mxu0 0
      %5305 = vmatpush1.bf16.msra.mxu0 0
      %5306 = vmatprep.subr.bf16.mxu0 0
      %5307 = vmatpush1.bf16.msra.mxu0 0
      %5308 = vmatprep.subr.bf16.mxu0 0
      %5309 = vmatpush1.bf16.msra.mxu0 0
      %5310 = vmatprep.subr.bf16.mxu0 0
      %5311 = vmatpush1.bf16.msra.mxu0 0
      %5312 = vmatprep.subr.bf16.mxu0 0
      %5313 = vmatpush1.bf16.msra.mxu0 0
      %5314 = vmatprep.subr.bf16.mxu0 0
      %5315 = vmatpush1.bf16.msra.mxu0 0
      %5316 = vmatprep.subr.bf16.mxu0 0
      %5317 = vmatpush1.bf16.msra.mxu0 0
      %5318 = vmatprep.subr.bf16.mxu0 0
      %5319 = vmatpush1.bf16.msra.mxu0 0
      %5320 = vmatprep.subr.bf16.mxu0 0
      %5321 = vmatpush1.bf16.msra.mxu0 0
      %5322 = vmatprep.subr.bf16.mxu0 0
      %5323 = vmatpush1.bf16.msra.mxu0 0
      %5324 = vmatprep.mubr.bf16.mxu0 0
      %5325 = vmatmul.mubr.bf16.gmra.mrb[0].mxu0 %v5278
      %v5326 = vpop.f32.mrb[0].mxu0
      %v5327 = vadd.f32 0.0, %v5326
      %v5328 = vpop.f32.mrb[0].mxu0
      %v5329 = vpop.f32.mrb[0].mxu0
      %v5330 = vadd.f32 0.0, %v5329
      %v5331 = vpop.f32.mrb[0].mxu0
      %5332 = vmatprep.mubr.bf16.mxu0 0
      %5333 = vmatmul.mubr.bf16.gmra.mrb[0].mxu0 %v5281
      %v5334 = vpop.f32.mrb[0].mxu0
      %v5335 = vadd.f32 0.0, %v5334
      %v5336 = vpop.f32.mrb[0].mxu0
      %v5337 = vpop.f32.mrb[0].mxu0
      %v5338 = vadd.f32 0.0, %v5337
      %v5339 = vpop.f32.mrb[0].mxu0
      %5340 = vmatprep.mubr.bf16.mxu0 0
      %5341 = vmatmul.mubr.bf16.gmra.mrb[0].mxu0 %v5284
      %v5342 = vpop.f32.mrb[0].mxu0
      %v5343 = vadd.f32 0.0, %v5342
      %v5344 = vpop.f32.mrb[0].mxu0
      %v5345 = vpop.f32.mrb[0].mxu0
      %v5346 = vadd.f32 0.0, %v5345
      %v5347 = vpop.f32.mrb[0].mxu0
      %5348 = vmatprep.mubr.bf16.mxu0 0
      %5349 = vmatmul.mubr.bf16.gmra.mrb[0].mxu0 %v5287
      %v5350 = vpop.f32.mrb[0].mxu0
      %v5351 = vadd.f32 0.0, %v5350
      %v5352 = vpop.f32.mrb[0].mxu0
      %v5353 = vpop.f32.mrb[0].mxu0
      %v5354 = vadd.f32 0.0, %v5353
      %v5355 = vpop.f32.mrb[0].mxu0
      %5356 = vdwg.mxu0
      %v5357 = vadd.f32 %v4973, %v5327
      %v5358 = vadd.f32 %v4976, %v5330
      %v5359 = vadd.f32 %v4981, %v5335
      %v5360 = vadd.f32 %v4984, %v5338
      %v5361 = vadd.f32 %v4989, %v5343
      %v5362 = vadd.f32 %v4992, %v5346
      %v5363 = vadd.f32 %v4997, %v5351
      %v5364 = vadd.f32 %v5000, %v5354
      %5365 = vrot.lane.b32.xlu0 %v4260, 116
      %v5366 = vpop.permute.xlu0 %5365
      %5367 = vrot.lane.b32.xlu0 %v4261, 116
      %v5368 = vpop.permute.xlu0 %5367
      %5369 = vrot.lane.b32.xlu0 %v4262, 116
      %v5370 = vpop.permute.xlu0 %5369
      %5371 = vrot.lane.b32.xlu0 %v4263, 116
      %v5372 = vpop.permute.xlu0 %5371
      %v5373 = vrot.slane %v4296, 6
      %v5375 = vsel %vm4301, %v5366, 0
      %v5378 = vsel %vm4301, %v5368, 0
      %v5381 = vsel %vm4301, %v5370, 0
      %v5384 = vsel %vm4301, %v5372, 0
      %v5387 = vsel %vm4314, %v5373, 0
      %5389 = vmatprep.subr.bf16.mxu0 0
      %5390 = vmatpush1.bf16.msra.mxu0 %v5387
      %5391 = vmatprep.subr.bf16.mxu0 0
      %5392 = vmatpush1.bf16.msra.mxu0 0
      %5393 = vmatprep.subr.bf16.mxu0 0
      %5394 = vmatpush1.bf16.msra.mxu0 0
      %5395 = vmatprep.subr.bf16.mxu0 0
      %5396 = vmatpush1.bf16.msra.mxu0 0
      %5397 = vmatprep.subr.bf16.mxu0 0
      %5398 = vmatpush1.bf16.msra.mxu0 0
      %5399 = vmatprep.subr.bf16.mxu0 0
      %5400 = vmatpush1.bf16.msra.mxu0 0
      %5401 = vmatprep.subr.bf16.mxu0 0
      %5402 = vmatpush1.bf16.msra.mxu0 0
      %5403 = vmatprep.subr.bf16.mxu0 0
      %5404 = vmatpush1.bf16.msra.mxu0 0
      %5405 = vmatprep.subr.bf16.mxu0 0
      %5406 = vmatpush1.bf16.msra.mxu0 0
      %5407 = vmatprep.subr.bf16.mxu0 0
      %5408 = vmatpush1.bf16.msra.mxu0 0
      %5409 = vmatprep.subr.bf16.mxu0 0
      %5410 = vmatpush1.bf16.msra.mxu0 0
      %5411 = vmatprep.subr.bf16.mxu0 0
      %5412 = vmatpush1.bf16.msra.mxu0 0
      %5413 = vmatprep.subr.bf16.mxu0 0
      %5414 = vmatpush1.bf16.msra.mxu0 0
      %5415 = vmatprep.subr.bf16.mxu0 0
      %5416 = vmatpush1.bf16.msra.mxu0 0
      %5417 = vmatprep.subr.bf16.mxu0 0
      %5418 = vmatpush1.bf16.msra.mxu0 0
      %5419 = vmatprep.subr.bf16.mxu0 0
      %5420 = vmatpush1.bf16.msra.mxu0 0
      %5421 = vmatprep.mubr.bf16.mxu0 0
      %5422 = vmatmul.mubr.bf16.gmra.mrb[0].mxu0 %v5375
      %v5423 = vpop.f32.mrb[0].mxu0
      %v5424 = vadd.f32 0.0, %v5423
      %v5425 = vpop.f32.mrb[0].mxu0
      %v5426 = vpop.f32.mrb[0].mxu0
      %v5427 = vadd.f32 0.0, %v5426
      %v5428 = vpop.f32.mrb[0].mxu0
      %5429 = vmatprep.mubr.bf16.mxu0 0
      %5430 = vmatmul.mubr.bf16.gmra.mrb[0].mxu0 %v5378
      %v5431 = vpop.f32.mrb[0].mxu0
      %v5432 = vadd.f32 0.0, %v5431
      %v5433 = vpop.f32.mrb[0].mxu0
      %v5434 = vpop.f32.mrb[0].mxu0
      %v5435 = vadd.f32 0.0, %v5434
      %v5436 = vpop.f32.mrb[0].mxu0
      %5437 = vmatprep.mubr.bf16.mxu0 0
      %5438 = vmatmul.mubr.bf16.gmra.mrb[0].mxu0 %v5381
      %v5439 = vpop.f32.mrb[0].mxu0
      %v5440 = vadd.f32 0.0, %v5439
      %v5441 = vpop.f32.mrb[0].mxu0
      %v5442 = vpop.f32.mrb[0].mxu0
      %v5443 = vadd.f32 0.0, %v5442
      %v5444 = vpop.f32.mrb[0].mxu0
      %5445 = vmatprep.mubr.bf16.mxu0 0
      %5446 = vmatmul.mubr.bf16.gmra.mrb[0].mxu0 %v5384
      %v5447 = vpop.f32.mrb[0].mxu0
      %v5448 = vadd.f32 0.0, %v5447
      %v5449 = vpop.f32.mrb[0].mxu0
      %v5450 = vpop.f32.mrb[0].mxu0
      %v5451 = vadd.f32 0.0, %v5450
      %v5452 = vpop.f32.mrb[0].mxu0
      %5453 = vdwg.mxu0
      %v5454 = vsel %vm1081, %v5424, -inf
      %5455 = vmax.xlane.f32.xlu0 %v5454
      %v5456 = vpop.xlane.xlu0 %5455
      %v5457 = vsel %vm1081, %v5427, -inf
      %5458 = vmax.xlane.f32.xlu0 %v5457
      %v5459 = vpop.xlane.xlu0 %5458
      %v5460 = vsel %vm1081, %v5432, -inf
      %5461 = vmax.xlane.f32.xlu0 %v5460
      %v5462 = vpop.xlane.xlu0 %5461
      %v5463 = vsel %vm1081, %v5435, -inf
      %5464 = vmax.xlane.f32.xlu0 %v5463
      %v5465 = vpop.xlane.xlu0 %5464
      %v5466 = vsel %vm1081, %v5440, -inf
      %5467 = vmax.xlane.f32.xlu0 %v5466
      %v5468 = vpop.xlane.xlu0 %5467
      %v5469 = vsel %vm1081, %v5443, -inf
      %5470 = vmax.xlane.f32.xlu0 %v5469
      %v5471 = vpop.xlane.xlu0 %5470
      %v5472 = vsel %vm1081, %v5448, -inf
      %5473 = vmax.xlane.f32.xlu0 %v5472
      %v5474 = vpop.xlane.xlu0 %5473
      %v5475 = vsel %vm1081, %v5451, -inf
      %5476 = vmax.xlane.f32.xlu0 %v5475
      %v5477 = vpop.xlane.xlu0 %5476
      %v5478 = vsub.f32 %v5424, %v5456
      %v5479 = vsub.f32 %v5427, %v5459
      %v5480 = vsub.f32 %v5432, %v5462
      %v5481 = vsub.f32 %v5435, %v5465
      %v5482 = vsub.f32 %v5440, %v5468
      %v5483 = vsub.f32 %v5443, %v5471
      %v5484 = vsub.f32 %v5448, %v5474
      %v5485 = vsub.f32 %v5451, %v5477
      %v5486 = vmul.f32 %v5478, 1.442695
      %v5487 = vpow.pop %v5486
      %v5488 = vmul.f32 %v5479, 1.442695
      %v5489 = vpow.pop %v5488
      %v5490 = vmul.f32 %v5480, 1.442695
      %v5491 = vpow.pop %v5490
      %v5492 = vmul.f32 %v5481, 1.442695
      %v5493 = vpow.pop %v5492
      %v5494 = vmul.f32 %v5482, 1.442695
      %v5495 = vpow.pop %v5494
      %v5496 = vmul.f32 %v5483, 1.442695
      %v5497 = vpow.pop %v5496
      %v5498 = vmul.f32 %v5484, 1.442695
      %v5499 = vpow.pop %v5498
      %v5500 = vmul.f32 %v5485, 1.442695
      %v5501 = vpow.pop %v5500
      %v5502 = vsel %vm1081, %v5487, 0.0
      %5503 = vadd.xlane.f32.xlu0 %v5502
      %v5504 = vpop.xlane.xlu0 %5503
      %v5505 = vsel %vm1081, %v5489, 0.0
      %5506 = vadd.xlane.f32.xlu0 %v5505
      %v5507 = vpop.xlane.xlu0 %5506
      %v5508 = vsel %vm1081, %v5491, 0.0
      %5509 = vadd.xlane.f32.xlu0 %v5508
      %v5510 = vpop.xlane.xlu0 %5509
      %v5511 = vsel %vm1081, %v5493, 0.0
      %5512 = vadd.xlane.f32.xlu0 %v5511
      %v5513 = vpop.xlane.xlu0 %5512
      %v5514 = vsel %vm1081, %v5495, 0.0
      %5515 = vadd.xlane.f32.xlu0 %v5514
      %v5516 = vpop.xlane.xlu0 %5515
      %v5517 = vsel %vm1081, %v5497, 0.0
      %5518 = vadd.xlane.f32.xlu0 %v5517
      %v5519 = vpop.xlane.xlu0 %5518
      %v5520 = vsel %vm1081, %v5499, 0.0
      %5521 = vadd.xlane.f32.xlu0 %v5520
      %v5522 = vpop.xlane.xlu0 %5521
      %v5523 = vsel %vm1081, %v5501, 0.0
      %5524 = vadd.xlane.f32.xlu0 %v5523
      %v5525 = vpop.xlane.xlu0 %5524
      %v5526 = vrcp.pop %v5504
      %v5527 = vrcp.pop %v5507
      %v5528 = vrcp.pop %v5510
      %v5529 = vrcp.pop %v5513
      %v5530 = vrcp.pop %v5516
      %v5531 = vrcp.pop %v5519
      %v5532 = vrcp.pop %v5522
      %v5533 = vrcp.pop %v5525
      %v5534 = vmul.f32 %v5487, %v5526
      %v5535 = vmul.f32 %v5489, %v5527
      %v5536 = vmul.f32 %v5491, %v5528
      %v5537 = vmul.f32 %v5493, %v5529
      %v5538 = vmul.f32 %v5495, %v5530
      %v5539 = vmul.f32 %v5497, %v5531
      %v5540 = vmul.f32 %v5499, %v5532
      %v5541 = vmul.f32 %v5501, %v5533
      %v5542 = vpack.c.bf16 %v5535, %v5534
      %v5543 = vpack.c.bf16 %v5537, %v5536
      %v5544 = vpack.c.bf16 %v5539, %v5538
      %v5545 = vpack.c.bf16 %v5541, %v5540
      %5546 = vrot.lane.b32.xlu0 %v4297, 116
      %v5547 = vpop.permute.xlu0 %5546
      %5548 = vrot.lane.b32.xlu0 %v4298, 116
      %v5549 = vpop.permute.xlu0 %5548
      %5550 = vrot.lane.b32.xlu0 %v4299, 116
      %v5551 = vpop.permute.xlu0 %5550
      %5552 = vrot.lane.b32.xlu0 %v4300, 116
      %v5553 = vpop.permute.xlu0 %5552
      %v5559 = vsel %vm1081, %v5542, 0
      %v5562 = vsel %vm1081, %v5543, 0
      %v5565 = vsel %vm1081, %v5544, 0
      %v5568 = vsel %vm1081, %v5545, 0
      %5570 = vmatprep.subr.bf16.mxu0 0
      %5571 = vmatpush1.bf16.msra.mxu0 %v5547
      %5572 = vmatprep.subr.bf16.mxu0 0
      %5573 = vmatpush1.bf16.msra.mxu0 %v5549
      %5574 = vmatprep.subr.bf16.mxu0 0
      %5575 = vmatpush1.bf16.msra.mxu0 %v5551
      %5576 = vmatprep.subr.bf16.mxu0 0
      %5577 = vmatpush1.bf16.msra.mxu0 %v5553
      %5578 = vmatprep.subr.bf16.mxu0 0
      %5579 = vmatpush1.bf16.msra.mxu0 0
      %5580 = vmatprep.subr.bf16.mxu0 0
      %5581 = vmatpush1.bf16.msra.mxu0 0
      %5582 = vmatprep.subr.bf16.mxu0 0
      %5583 = vmatpush1.bf16.msra.mxu0 0
      %5584 = vmatprep.subr.bf16.mxu0 0
      %5585 = vmatpush1.bf16.msra.mxu0 0
      %5586 = vmatprep.subr.bf16.mxu0 0
      %5587 = vmatpush1.bf16.msra.mxu0 0
      %5588 = vmatprep.subr.bf16.mxu0 0
      %5589 = vmatpush1.bf16.msra.mxu0 0
      %5590 = vmatprep.subr.bf16.mxu0 0
      %5591 = vmatpush1.bf16.msra.mxu0 0
      %5592 = vmatprep.subr.bf16.mxu0 0
      %5593 = vmatpush1.bf16.msra.mxu0 0
      %5594 = vmatprep.subr.bf16.mxu0 0
      %5595 = vmatpush1.bf16.msra.mxu0 0
      %5596 = vmatprep.subr.bf16.mxu0 0
      %5597 = vmatpush1.bf16.msra.mxu0 0
      %5598 = vmatprep.subr.bf16.mxu0 0
      %5599 = vmatpush1.bf16.msra.mxu0 0
      %5600 = vmatprep.subr.bf16.mxu0 0
      %5601 = vmatpush1.bf16.msra.mxu0 0
      %5602 = vmatprep.mubr.bf16.mxu0 0
      %5603 = vmatmul.mubr.bf16.gmra.mrb[0].mxu0 %v5559
      %v5604 = vpop.f32.mrb[0].mxu0
      %v5605 = vadd.f32 0.0, %v5604
      %v5606 = vpop.f32.mrb[0].mxu0
      %v5607 = vpop.f32.mrb[0].mxu0
      %v5608 = vadd.f32 0.0, %v5607
      %v5609 = vpop.f32.mrb[0].mxu0
      %5610 = vmatprep.mubr.bf16.mxu0 0
      %5611 = vmatmul.mubr.bf16.gmra.mrb[0].mxu0 %v5562
      %v5612 = vpop.f32.mrb[0].mxu0
      %v5613 = vadd.f32 0.0, %v5612
      %v5614 = vpop.f32.mrb[0].mxu0
      %v5615 = vpop.f32.mrb[0].mxu0
      %v5616 = vadd.f32 0.0, %v5615
      %v5617 = vpop.f32.mrb[0].mxu0
      %5618 = vmatprep.mubr.bf16.mxu0 0
      %5619 = vmatmul.mubr.bf16.gmra.mrb[0].mxu0 %v5565
      %v5620 = vpop.f32.mrb[0].mxu0
      %v5621 = vadd.f32 0.0, %v5620
      %v5622 = vpop.f32.mrb[0].mxu0
      %v5623 = vpop.f32.mrb[0].mxu0
      %v5624 = vadd.f32 0.0, %v5623
      %v5625 = vpop.f32.mrb[0].mxu0
      %5626 = vmatprep.mubr.bf16.mxu0 0
      %5627 = vmatmul.mubr.bf16.gmra.mrb[0].mxu0 %v5568
      %v5628 = vpop.f32.mrb[0].mxu0
      %v5629 = vadd.f32 0.0, %v5628
      %v5630 = vpop.f32.mrb[0].mxu0
      %v5631 = vpop.f32.mrb[0].mxu0
      %v5632 = vadd.f32 0.0, %v5631
      %v5633 = vpop.f32.mrb[0].mxu0
      %5634 = vdwg.mxu0
      %v5635 = vpack.c.bf16 %v5608, %v5605
      %v5636 = vpack.c.bf16 %v5616, %v5613
      %v5637 = vpack.c.bf16 %v5624, %v5621
      %v5638 = vpack.c.bf16 %v5632, %v5629
      %v5640 = vunpack.c.l.b16 %v462
      %v5641 = vpack.c.b16 %v5640, %v5640
      %v5642 = vrot.slane %v5641, 2
      %v5644 = vsel %vm4301, %v5635, 0
      %v5647 = vsel %vm4301, %v5636, 0
      %v5650 = vsel %vm4301, %v5637, 0
      %v5653 = vsel %vm4301, %v5638, 0
      %v5656 = vsel %vm4314, %v5642, 0
      %5658 = vmatprep.subr.bf16.mxu0 0
      %5659 = vmatpush1.bf16.msra.mxu0 %v5656
      %5660 = vmatprep.subr.bf16.mxu0 0
      %5661 = vmatpush1.bf16.msra.mxu0 0
      %5662 = vmatprep.subr.bf16.mxu0 0
      %5663 = vmatpush1.bf16.msra.mxu0 0
      %5664 = vmatprep.subr.bf16.mxu0 0
      %5665 = vmatpush1.bf16.msra.mxu0 0
      %5666 = vmatprep.subr.bf16.mxu0 0
      %5667 = vmatpush1.bf16.msra.mxu0 0
      %5668 = vmatprep.subr.bf16.mxu0 0
      %5669 = vmatpush1.bf16.msra.mxu0 0
      %5670 = vmatprep.subr.bf16.mxu0 0
      %5671 = vmatpush1.bf16.msra.mxu0 0
      %5672 = vmatprep.subr.bf16.mxu0 0
      %5673 = vmatpush1.bf16.msra.mxu0 0
      %5674 = vmatprep.subr.bf16.mxu0 0
      %5675 = vmatpush1.bf16.msra.mxu0 0
      %5676 = vmatprep.subr.bf16.mxu0 0
      %5677 = vmatpush1.bf16.msra.mxu0 0
      %5678 = vmatprep.subr.bf16.mxu0 0
      %5679 = vmatpush1.bf16.msra.mxu0 0
      %5680 = vmatprep.subr.bf16.mxu0 0
      %5681 = vmatpush1.bf16.msra.mxu0 0
      %5682 = vmatprep.subr.bf16.mxu0 0
      %5683 = vmatpush1.bf16.msra.mxu0 0
      %5684 = vmatprep.subr.bf16.mxu0 0
      %5685 = vmatpush1.bf16.msra.mxu0 0
      %5686 = vmatprep.subr.bf16.mxu0 0
      %5687 = vmatpush1.bf16.msra.mxu0 0
      %5688 = vmatprep.subr.bf16.mxu0 0
      %5689 = vmatpush1.bf16.msra.mxu0 0
      %5690 = vmatprep.mubr.bf16.mxu0 0
      %5691 = vmatmul.mubr.bf16.gmra.mrb[0].mxu0 %v5644
      %v5692 = vpop.f32.mrb[0].mxu0
      %v5693 = vadd.f32 0.0, %v5692
      %v5694 = vpop.f32.mrb[0].mxu0
      %v5695 = vpop.f32.mrb[0].mxu0
      %v5696 = vadd.f32 0.0, %v5695
      %v5697 = vpop.f32.mrb[0].mxu0
      %5698 = vmatprep.mubr.bf16.mxu0 0
      %5699 = vmatmul.mubr.bf16.gmra.mrb[0].mxu0 %v5647
      %v5700 = vpop.f32.mrb[0].mxu0
      %v5701 = vadd.f32 0.0, %v5700
      %v5702 = vpop.f32.mrb[0].mxu0
      %v5703 = vpop.f32.mrb[0].mxu0
      %v5704 = vadd.f32 0.0, %v5703
      %v5705 = vpop.f32.mrb[0].mxu0
      %5706 = vmatprep.mubr.bf16.mxu0 0
      %5707 = vmatmul.mubr.bf16.gmra.mrb[0].mxu0 %v5650
      %v5708 = vpop.f32.mrb[0].mxu0
      %v5709 = vadd.f32 0.0, %v5708
      %v5710 = vpop.f32.mrb[0].mxu0
      %v5711 = vpop.f32.mrb[0].mxu0
      %v5712 = vadd.f32 0.0, %v5711
      %v5713 = vpop.f32.mrb[0].mxu0
      %5714 = vmatprep.mubr.bf16.mxu0 0
      %5715 = vmatmul.mubr.bf16.gmra.mrb[0].mxu0 %v5653
      %v5716 = vpop.f32.mrb[0].mxu0
      %v5717 = vadd.f32 0.0, %v5716
      %v5718 = vpop.f32.mrb[0].mxu0
      %v5719 = vpop.f32.mrb[0].mxu0
      %v5720 = vadd.f32 0.0, %v5719
      %v5721 = vpop.f32.mrb[0].mxu0
      %5722 = vdwg.mxu0
      %v5723 = vadd.f32 %v5357, %v5693
      %v5724 = vadd.f32 %v5358, %v5696
      %v5725 = vadd.f32 %v5359, %v5701
      %v5726 = vadd.f32 %v5360, %v5704
      %v5727 = vadd.f32 %v5361, %v5709
      %v5728 = vadd.f32 %v5362, %v5712
      %v5729 = vadd.f32 %v5363, %v5717
      %v5730 = vadd.f32 %v5364, %v5720
      %v5732 = vlaneseq
      %v5733 = vshrl.u32 %v5732, 7
      %v5734 = vsub.s32 0, %v5733
      %v5735 = vrot.slane %v463, %v5734
      %v5737 = vadd.f32 %v5723, %v5735
      %v5738 = vadd.f32 %v5724, %v5735
      %v5739 = vadd.f32 %v5725, %v5735
      %v5740 = vadd.f32 %v5726, %v5735
      %v5741 = vadd.f32 %v5727, %v5735
      %v5742 = vadd.f32 %v5728, %v5735
      %v5743 = vadd.f32 %v5729, %v5735
      %v5744 = vadd.f32 %v5730, %v5735
      %v5745 = vadd.f32 %v3908, %v5737
      %v5746 = vadd.f32 %v3909, %v5738
      %v5747 = vadd.f32 %v3910, %v5739
      %v5748 = vadd.f32 %v3911, %v5740
      %v5749 = vadd.f32 %v3912, %v5741
      %v5750 = vadd.f32 %v3913, %v5742
      %v5751 = vadd.f32 %v3914, %v5743
      %v5752 = vadd.f32 %v3915, %v5744
      %s5753 = scalar_lea.vmem %s2, 144
      %v5754 = vld [vmem:[%s5753] sm:$0xf]
      %v5755 = vld [vmem:[%s5753 + $0x4] sm:$0xf]
      %v5756 = vld [vmem:[%s5753 + $0x8] sm:$0xf]
      %v5757 = vld [vmem:[%s5753 + $0xc] sm:$0xf]
      %v5758 = vld [vmem:[%s5753 + $0x10] sm:$0xf]
      %v5759 = vld [vmem:[%s5753 + $0x14] sm:$0xf]
      %v5760 = vld [vmem:[%s5753 + $0x18] sm:$0xf]
      %v5761 = vld [vmem:[%s5753 + $0x1c] sm:$0xf]
      %v5762 = vld [vmem:[%s5753 + $0x20] sm:$0xf]
      %v5763 = vld [vmem:[%s5753 + $0x24] sm:$0xf]
      %v5764 = vld [vmem:[%s5753 + $0x28] sm:$0xf]
      %v5765 = vld [vmem:[%s5753 + $0x2c] sm:$0xf]
      %v5766 = vld [vmem:[%s5753 + $0x30] sm:$0xf]
      %v5767 = vld [vmem:[%s5753 + $0x34] sm:$0xf]
      %v5768 = vld [vmem:[%s5753 + $0x38] sm:$0xf]
      %v5769 = vld [vmem:[%s5753 + $0x3c] sm:$0xf]
      %v5770 = vld [vmem:[%s5753 + $0x40] sm:$0xf]
      %v5771 = vld [vmem:[%s5753 + $0x44] sm:$0xf]
      %v5779 = vrot.slane %v5745, 7
      %v5780 = vsel %vm730, %v731, %v5779
      %v5781 = vrot.slane %v5746, 7
      %v5782 = vsel %vm730, %v5779, %v5781
      %v5783 = vrot.slane %v5747, 7
      %v5784 = vsel %vm730, %v5781, %v5783
      %v5785 = vrot.slane %v5748, 7
      %v5786 = vsel %vm730, %v5783, %v5785
      %v5787 = vrot.slane %v5749, 7
      %v5788 = vsel %vm730, %v5785, %v5787
      %v5789 = vrot.slane %v5750, 7
      %v5790 = vsel %vm730, %v5787, %v5789
      %v5791 = vrot.slane %v5751, 7
      %v5792 = vsel %vm730, %v5789, %v5791
      %v5800 = vsel %vm715, %v5780, 0.0
      %v5801 = vsel %vm716, %v5782, 0.0
      %v5802 = vsel %vm717, %v5784, 0.0
      %v5803 = vsel %vm718, %v5786, 0.0
      %v5804 = vsel %vm719, %v5788, 0.0
      %v5805 = vsel %vm720, %v5790, 0.0
      %v5806 = vsel %vm721, %v5792, 0.0
      %v5808 = vrot.slane %v5745, 1
      %v5809 = vsel %vm780, %v781, %v5808
      %v5810 = vrot.slane %v5746, 1
      %v5811 = vsel %vm780, %v5808, %v5810
      %v5812 = vrot.slane %v5747, 1
      %v5813 = vsel %vm780, %v5810, %v5812
      %v5814 = vrot.slane %v5748, 1
      %v5815 = vsel %vm780, %v5812, %v5814
      %v5816 = vrot.slane %v5749, 1
      %v5817 = vsel %vm780, %v5814, %v5816
      %v5818 = vrot.slane %v5750, 1
      %v5819 = vsel %vm780, %v5816, %v5818
      %v5820 = vrot.slane %v5751, 1
      %v5821 = vsel %vm780, %v5818, %v5820
      %v5822 = vrot.slane %v5752, 1
      %v5823 = vsel %vm780, %v5820, %v5822
      %v5832 = vsel %vm771, %v5809, 0.0
      %v5833 = vsel %vm772, %v5811, 0.0
      %v5834 = vsel %vm773, %v5813, 0.0
      %v5835 = vsel %vm774, %v5815, 0.0
      %v5836 = vsel %vm775, %v5817, 0.0
      %v5837 = vsel %vm776, %v5819, 0.0
      %v5838 = vsel %vm777, %v5821, 0.0
      %v5839 = vsel %vm778, %v5823, 0.0
      %v5840 = vrot.slane %v5752, 7
      %v5841 = vsel %vm730, %v5791, %v5840
      %v5843 = vsel %vm714, %v5780, 0.0
      %v5844 = vsel %vm715, %v5782, 0.0
      %v5845 = vsel %vm716, %v5784, 0.0
      %v5846 = vsel %vm717, %v5786, 0.0
      %v5847 = vsel %vm718, %v5788, 0.0
      %v5848 = vsel %vm719, %v5790, 0.0
      %v5849 = vsel %vm720, %v5792, 0.0
      %v5850 = vsel %vm721, %v5841, 0.0
      %v5851 = vsel %vm780, %v5822, %v781
      %v5853 = vsel %vm771, %v5811, 0.0
      %v5854 = vsel %vm772, %v5813, 0.0
      %v5855 = vsel %vm773, %v5815, 0.0
      %v5856 = vsel %vm774, %v5817, 0.0
      %v5857 = vsel %vm775, %v5819, 0.0
      %v5858 = vsel %vm776, %v5821, 0.0
      %v5859 = vsel %vm777, %v5823, 0.0
      %v5860 = vsel %vm778, %v5851, 0.0
      %v5861 = vsel %vm730, %v5840, %v731
      %v5863 = vsel %vm714, %v5782, 0.0
      %v5864 = vsel %vm715, %v5784, 0.0
      %v5865 = vsel %vm716, %v5786, 0.0
      %v5866 = vsel %vm717, %v5788, 0.0
      %v5867 = vsel %vm718, %v5790, 0.0
      %v5868 = vsel %vm719, %v5792, 0.0
      %v5869 = vsel %vm720, %v5841, 0.0
      %v5870 = vsel %vm721, %v5861, 0.0
      %v5871 = vsel %vm771, %v5813, 0.0
      %v5872 = vsel %vm772, %v5815, 0.0
      %v5873 = vsel %vm773, %v5817, 0.0
      %v5874 = vsel %vm774, %v5819, 0.0
      %v5875 = vsel %vm775, %v5821, 0.0
      %v5876 = vsel %vm776, %v5823, 0.0
      %v5877 = vsel %vm777, %v5851, 0.0
      %5878 = vrot.lane.b32.xlu0 %v5745, 16
      %v5879 = vpop.permute.xlu0 %5878
      %5880 = vrot.lane.b32.xlu0 %v5746, 16
      %v5881 = vpop.permute.xlu0 %5880
      %5882 = vrot.lane.b32.xlu0 %v5747, 16
      %v5883 = vpop.permute.xlu0 %5882
      %5884 = vrot.lane.b32.xlu0 %v5748, 16
      %v5885 = vpop.permute.xlu0 %5884
      %5886 = vrot.lane.b32.xlu0 %v5749, 16
      %v5887 = vpop.permute.xlu0 %5886
      %5888 = vrot.lane.b32.xlu0 %v5750, 16
      %v5889 = vpop.permute.xlu0 %5888
      %5890 = vrot.lane.b32.xlu0 %v5751, 16
      %v5891 = vpop.permute.xlu0 %5890
      %5907 = vrot.lane.b32.xlu0 %v5832, 32
      %v5908 = vpop.permute.xlu0 %5907
      %5909 = vrot.lane.b32.xlu0 %v5833, 32
      %v5910 = vpop.permute.xlu0 %5909
      %5911 = vrot.lane.b32.xlu0 %v5834, 32
      %v5912 = vpop.permute.xlu0 %5911
      %5913 = vrot.lane.b32.xlu0 %v5835, 32
      %v5914 = vpop.permute.xlu0 %5913
      %5915 = vrot.lane.b32.xlu0 %v5836, 32
      %v5916 = vpop.permute.xlu0 %5915
      %5917 = vrot.lane.b32.xlu0 %v5837, 32
      %v5918 = vpop.permute.xlu0 %5917
      %5919 = vrot.lane.b32.xlu0 %v5838, 32
      %v5920 = vpop.permute.xlu0 %5919
      %5921 = vrot.lane.b32.xlu0 %v5839, 32
      %v5922 = vpop.permute.xlu0 %5921
      %5939 = vrot.lane.b32.xlu0 %v5843, 48
      %v5940 = vpop.permute.xlu0 %5939
      %5941 = vrot.lane.b32.xlu0 %v5844, 48
      %v5942 = vpop.permute.xlu0 %5941
      %5943 = vrot.lane.b32.xlu0 %v5845, 48
      %v5944 = vpop.permute.xlu0 %5943
      %5945 = vrot.lane.b32.xlu0 %v5846, 48
      %v5946 = vpop.permute.xlu0 %5945
      %5947 = vrot.lane.b32.xlu0 %v5847, 48
      %v5948 = vpop.permute.xlu0 %5947
      %5949 = vrot.lane.b32.xlu0 %v5848, 48
      %v5950 = vpop.permute.xlu0 %5949
      %5951 = vrot.lane.b32.xlu0 %v5849, 48
      %v5952 = vpop.permute.xlu0 %5951
      %5953 = vrot.lane.b32.xlu0 %v5850, 48
      %v5954 = vpop.permute.xlu0 %5953
      %5963 = vrot.lane.b32.xlu0 %v5745, 64
      %v5964 = vpop.permute.xlu0 %5963
      %5965 = vrot.lane.b32.xlu0 %v5746, 64
      %v5966 = vpop.permute.xlu0 %5965
      %5967 = vrot.lane.b32.xlu0 %v5747, 64
      %v5968 = vpop.permute.xlu0 %5967
      %5969 = vrot.lane.b32.xlu0 %v5748, 64
      %v5970 = vpop.permute.xlu0 %5969
      %5971 = vrot.lane.b32.xlu0 %v5749, 64
      %v5972 = vpop.permute.xlu0 %5971
      %5973 = vrot.lane.b32.xlu0 %v5750, 64
      %v5974 = vpop.permute.xlu0 %5973
      %5975 = vrot.lane.b32.xlu0 %v5751, 64
      %v5976 = vpop.permute.xlu0 %5975
      %5977 = vrot.lane.b32.xlu0 %v5752, 64
      %v5978 = vpop.permute.xlu0 %5977
      %5995 = vrot.lane.b32.xlu0 %v5853, 80
      %v5996 = vpop.permute.xlu0 %5995
      %5997 = vrot.lane.b32.xlu0 %v5854, 80
      %v5998 = vpop.permute.xlu0 %5997
      %5999 = vrot.lane.b32.xlu0 %v5855, 80
      %v6000 = vpop.permute.xlu0 %5999
      %6001 = vrot.lane.b32.xlu0 %v5856, 80
      %v6002 = vpop.permute.xlu0 %6001
      %6003 = vrot.lane.b32.xlu0 %v5857, 80
      %v6004 = vpop.permute.xlu0 %6003
      %6005 = vrot.lane.b32.xlu0 %v5858, 80
      %v6006 = vpop.permute.xlu0 %6005
      %6007 = vrot.lane.b32.xlu0 %v5859, 80
      %v6008 = vpop.permute.xlu0 %6007
      %6009 = vrot.lane.b32.xlu0 %v5860, 80
      %v6010 = vpop.permute.xlu0 %6009
      %6027 = vrot.lane.b32.xlu0 %v5863, 96
      %v6028 = vpop.permute.xlu0 %6027
      %6029 = vrot.lane.b32.xlu0 %v5864, 96
      %v6030 = vpop.permute.xlu0 %6029
      %6031 = vrot.lane.b32.xlu0 %v5865, 96
      %v6032 = vpop.permute.xlu0 %6031
      %6033 = vrot.lane.b32.xlu0 %v5866, 96
      %v6034 = vpop.permute.xlu0 %6033
      %6035 = vrot.lane.b32.xlu0 %v5867, 96
      %v6036 = vpop.permute.xlu0 %6035
      %6037 = vrot.lane.b32.xlu0 %v5868, 96
      %v6038 = vpop.permute.xlu0 %6037
      %6039 = vrot.lane.b32.xlu0 %v5869, 96
      %v6040 = vpop.permute.xlu0 %6039
      %6041 = vrot.lane.b32.xlu0 %v5870, 96
      %v6042 = vpop.permute.xlu0 %6041
      %6051 = vrot.lane.b32.xlu0 %v5746, 112
      %v6052 = vpop.permute.xlu0 %6051
      %6053 = vrot.lane.b32.xlu0 %v5747, 112
      %v6054 = vpop.permute.xlu0 %6053
      %6055 = vrot.lane.b32.xlu0 %v5748, 112
      %v6056 = vpop.permute.xlu0 %6055
      %6057 = vrot.lane.b32.xlu0 %v5749, 112
      %v6058 = vpop.permute.xlu0 %6057
      %6059 = vrot.lane.b32.xlu0 %v5750, 112
      %v6060 = vpop.permute.xlu0 %6059
      %6061 = vrot.lane.b32.xlu0 %v5751, 112
      %v6062 = vpop.permute.xlu0 %6061
      %6063 = vrot.lane.b32.xlu0 %v5752, 112
      %v6064 = vpop.permute.xlu0 %6063
      %v6072 = vsel %vm1055, %v5800, %v5879
      %v6073 = vsel %vm1055, %v5801, %v5881
      %v6074 = vsel %vm1055, %v5802, %v5883
      %v6075 = vsel %vm1055, %v5803, %v5885
      %v6076 = vsel %vm1055, %v5804, %v5887
      %v6077 = vsel %vm1055, %v5805, %v5889
      %v6078 = vsel %vm1055, %v5806, %v5891
      %v6079 = vsel %vm610, %v1056, %v5908
      %v6080 = vsel %vm610, %v6072, %v5910
      %v6081 = vsel %vm610, %v6073, %v5912
      %v6082 = vsel %vm610, %v6074, %v5914
      %v6083 = vsel %vm610, %v6075, %v5916
      %v6084 = vsel %vm610, %v6076, %v5918
      %v6085 = vsel %vm610, %v6077, %v5920
      %v6086 = vsel %vm610, %v6078, %v5922
      %v6087 = vsel %vm1072, %v6079, %v5940
      %v6088 = vsel %vm1072, %v6080, %v5942
      %v6089 = vsel %vm1072, %v6081, %v5944
      %v6090 = vsel %vm1072, %v6082, %v5946
      %v6091 = vsel %vm1072, %v6083, %v5948
      %v6092 = vsel %vm1072, %v6084, %v5950
      %v6093 = vsel %vm1072, %v6085, %v5952
      %v6094 = vsel %vm1072, %v6086, %v5954
      %v6095 = vsel %vm1081, %v6087, %v5964
      %v6096 = vsel %vm1081, %v6088, %v5966
      %v6097 = vsel %vm1081, %v6089, %v5968
      %v6098 = vsel %vm1081, %v6090, %v5970
      %v6099 = vsel %vm1081, %v6091, %v5972
      %v6100 = vsel %vm1081, %v6092, %v5974
      %v6101 = vsel %vm1081, %v6093, %v5976
      %v6102 = vsel %vm1081, %v6094, %v5978
      %v6103 = vsel %vm1090, %v6095, %v5996
      %v6104 = vsel %vm1090, %v6096, %v5998
      %v6105 = vsel %vm1090, %v6097, %v6000
      %v6106 = vsel %vm1090, %v6098, %v6002
      %v6107 = vsel %vm1090, %v6099, %v6004
      %v6108 = vsel %vm1090, %v6100, %v6006
      %v6109 = vsel %vm1090, %v6101, %v6008
      %v6110 = vsel %vm1090, %v6102, %v6010
      %v6111 = vsel %vm1099, %v6103, %v6028
      %v6112 = vsel %vm1099, %v6104, %v6030
      %v6113 = vsel %vm1099, %v6105, %v6032
      %v6114 = vsel %vm1099, %v6106, %v6034
      %v6115 = vsel %vm1099, %v6107, %v6036
      %v6116 = vsel %vm1099, %v6108, %v6038
      %v6117 = vsel %vm1099, %v6109, %v6040
      %v6118 = vsel %vm1099, %v6110, %v6042
      %v6119 = vsel %vm1108, %v6111, %v6052
      %v6120 = vsel %vm1108, %v6112, %v6054
      %v6121 = vsel %vm1108, %v6113, %v6056
      %v6122 = vsel %vm1108, %v6114, %v6058
      %v6123 = vsel %vm1108, %v6115, %v6060
      %v6124 = vsel %vm1108, %v6116, %v6062
      %v6125 = vsel %vm1108, %v6117, %v6064
      %v6126 = vsel %vm1108, %v6118, %v1046
      %v6127 = vpack.c.bf16 %v6120, %v6119
      %v6128 = vpack.c.bf16 %v5872, %v5871
      %v6129 = vpack.c.bf16 %v6122, %v6121
      %v6130 = vpack.c.bf16 %v5874, %v5873
      %v6131 = vpack.c.bf16 %v6124, %v6123
      %v6132 = vpack.c.bf16 %v5876, %v5875
      %v6133 = vpack.c.bf16 %v6126, %v6125
      %v6134 = vpack.c.bf16 %v854, %v5877
      %v6135 = vlaneseq
      %v6136 = vshrl.u32 %v6135, 7
      %v6137 = vsub.s32 2, %v6136
      %v6138 = vrot.slane %v460, %v6137
      %v6157 = vunpack.c.l.b16 %v5754
      %v6158 = vunpack.c.l.b16 %v5755
      %v6159 = vunpack.c.l.b16 %v5756
      %v6160 = vunpack.c.l.b16 %v5757
      %v6161 = vunpack.c.l.b16 %v5758
      %v6162 = vunpack.c.l.b16 %v5759
      %v6163 = vunpack.c.l.b16 %v5760
      %v6164 = vunpack.c.l.b16 %v5761
      %v6165 = vunpack.c.l.b16 %v5762
      %v6166 = vunpack.c.l.b16 %v5763
      %v6167 = vunpack.c.l.b16 %v5764
      %v6168 = vunpack.c.l.b16 %v5765
      %v6169 = vunpack.c.l.b16 %v5766
      %v6170 = vunpack.c.l.b16 %v5767
      %v6171 = vunpack.c.l.b16 %v5768
      %v6172 = vunpack.c.l.b16 %v5769
      %v6173 = vunpack.c.l.b16 %v5770
      %v6174 = vunpack.c.l.b16 %v5771
      %v6175 = vpack.c.b16 %v6158, %v6157
      %v6176 = vpack.c.b16 %v6160, %v6159
      %v6177 = vpack.c.b16 %v6162, %v6161
      %v6178 = vpack.c.b16 %v6164, %v6163
      %v6179 = vpack.c.b16 %v6166, %v6165
      %v6180 = vpack.c.b16 %v6168, %v6167
      %v6181 = vpack.c.b16 %v6170, %v6169
      %v6182 = vpack.c.b16 %v6172, %v6171
      %v6183 = vpack.c.b16 %v6174, %v6173
      %v6194 = vsel %vm1055, %v6128, 0
      %v6197 = vsel %vm1055, %v6130, 0
      %v6200 = vsel %vm1055, %v6132, 0
      %v6203 = vsel %vm1055, %v6134, 0
      %6205 = vmatprep.subr.bf16.mxu0 0
      %6206 = vmatpush1.bf16.msra.mxu0 %v6175
      %6207 = vmatprep.subr.bf16.mxu0 0
      %6208 = vmatpush1.bf16.msra.mxu0 %v6176
      %6209 = vmatprep.subr.bf16.mxu0 0
      %6210 = vmatpush1.bf16.msra.mxu0 %v6177
      %6211 = vmatprep.subr.bf16.mxu0 0
      %6212 = vmatpush1.bf16.msra.mxu0 %v6178
      %6213 = vmatprep.subr.bf16.mxu0 0
      %6214 = vmatpush1.bf16.msra.mxu0 %v6179
      %6215 = vmatprep.subr.bf16.mxu0 0
      %6216 = vmatpush1.bf16.msra.mxu0 %v6180
      %6217 = vmatprep.subr.bf16.mxu0 0
      %6218 = vmatpush1.bf16.msra.mxu0 %v6181
      %6219 = vmatprep.subr.bf16.mxu0 0
      %6220 = vmatpush1.bf16.msra.mxu0 %v6182
      %6221 = vmatprep.subr.bf16.mxu0 0
      %6222 = vmatpush1.bf16.msra.mxu0 %v6183
      %6223 = vmatprep.subr.bf16.mxu0 0
      %6224 = vmatpush1.bf16.msra.mxu0 0
      %6225 = vmatprep.subr.bf16.mxu0 0
      %6226 = vmatpush1.bf16.msra.mxu0 0
      %6227 = vmatprep.subr.bf16.mxu0 0
      %6228 = vmatpush1.bf16.msra.mxu0 0
      %6229 = vmatprep.subr.bf16.mxu0 0
      %6230 = vmatpush1.bf16.msra.mxu0 0
      %6231 = vmatprep.subr.bf16.mxu0 0
      %6232 = vmatpush1.bf16.msra.mxu0 0
      %6233 = vmatprep.subr.bf16.mxu0 0
      %6234 = vmatpush1.bf16.msra.mxu0 0
      %6235 = vmatprep.subr.bf16.mxu0 0
      %6236 = vmatpush1.bf16.msra.mxu0 0
      %6237 = vmatprep.mubr.bf16.mxu0 %v6194
      %6238 = vmatmul.mubr.bf16.gmra.mrb[0].mxu0 %v6127
      %v6239 = vpop.f32.mrb[0].mxu0
      %v6240 = vadd.f32 %v6138, %v6239
      %v6241 = vpop.f32.mrb[0].mxu0
      %v6242 = vpop.f32.mrb[0].mxu0
      %v6243 = vadd.f32 %v6138, %v6242
      %v6244 = vpop.f32.mrb[0].mxu0
      %6245 = vmatprep.mubr.bf16.mxu0 %v6197
      %6246 = vmatmul.mubr.bf16.gmra.mrb[0].mxu0 %v6129
      %v6247 = vpop.f32.mrb[0].mxu0
      %v6248 = vadd.f32 %v6138, %v6247
      %v6249 = vpop.f32.mrb[0].mxu0
      %v6250 = vpop.f32.mrb[0].mxu0
      %v6251 = vadd.f32 %v6138, %v6250
      %v6252 = vpop.f32.mrb[0].mxu0
      %6253 = vmatprep.mubr.bf16.mxu0 %v6200
      %6254 = vmatmul.mubr.bf16.gmra.mrb[0].mxu0 %v6131
      %v6255 = vpop.f32.mrb[0].mxu0
      %v6256 = vadd.f32 %v6138, %v6255
      %v6257 = vpop.f32.mrb[0].mxu0
      %v6258 = vpop.f32.mrb[0].mxu0
      %v6259 = vadd.f32 %v6138, %v6258
      %v6260 = vpop.f32.mrb[0].mxu0
      %6261 = vmatprep.mubr.bf16.mxu0 %v6203
      %6262 = vmatmul.mubr.bf16.gmra.mrb[0].mxu0 %v6133
      %v6263 = vpop.f32.mrb[0].mxu0
      %v6264 = vadd.f32 %v6138, %v6263
      %v6265 = vpop.f32.mrb[0].mxu0
      %v6266 = vpop.f32.mrb[0].mxu0
      %v6267 = vadd.f32 %v6138, %v6266
      %v6268 = vpop.f32.mrb[0].mxu0
      %6269 = vdwg.mxu0
      %v6270 = vsel %vm1055, %v6240, 0.0
      %v6271 = vsel %vm1055, %v6243, 0.0
      %v6272 = vadd.f32 %v6270, %v6271
      %v6273 = vsel %vm1055, %v6248, 0.0
      %v6274 = vadd.f32 %v6272, %v6273
      %v6275 = vsel %vm1055, %v6251, 0.0
      %v6276 = vadd.f32 %v6274, %v6275
      %v6277 = vsel %vm1055, %v6256, 0.0
      %v6278 = vadd.f32 %v6276, %v6277
      %v6279 = vsel %vm1055, %v6259, 0.0
      %v6280 = vadd.f32 %v6278, %v6279
      %v6281 = vsel %vm1055, %v6264, 0.0
      %v6282 = vadd.f32 %v6280, %v6281
      %v6283 = vsel %vm1055, %v6267, 0.0
      %v6284 = vadd.f32 %v6282, %v6283
      %v6285 = vrot.slane %v6284, 4
      %v6286 = vadd.f32 %v6284, %v6285
      %v6287 = vrot.slane %v6286, 2
      %v6288 = vadd.f32 %v6286, %v6287
      %v6289 = vrot.slane %v6288, 1
      %v6290 = vadd.f32 %v6288, %v6289
      %v6291 = vmul.f32 %v6290, 0.015625
      %v6292 = vmul.f32 %v6240, %v6240
      %v6293 = vmul.f32 %v6243, %v6243
      %v6294 = vmul.f32 %v6248, %v6248
      %v6295 = vmul.f32 %v6251, %v6251
      %v6296 = vmul.f32 %v6256, %v6256
      %v6297 = vmul.f32 %v6259, %v6259
      %v6298 = vmul.f32 %v6264, %v6264
      %v6299 = vmul.f32 %v6267, %v6267
      %v6300 = vsel %vm1055, %v6292, 0.0
      %v6301 = vsel %vm1055, %v6293, 0.0
      %v6302 = vadd.f32 %v6300, %v6301
      %v6303 = vsel %vm1055, %v6294, 0.0
      %v6304 = vadd.f32 %v6302, %v6303
      %v6305 = vsel %vm1055, %v6295, 0.0
      %v6306 = vadd.f32 %v6304, %v6305
      %v6307 = vsel %vm1055, %v6296, 0.0
      %v6308 = vadd.f32 %v6306, %v6307
      %v6309 = vsel %vm1055, %v6297, 0.0
      %v6310 = vadd.f32 %v6308, %v6309
      %v6311 = vsel %vm1055, %v6298, 0.0
      %v6312 = vadd.f32 %v6310, %v6311
      %v6313 = vsel %vm1055, %v6299, 0.0
      %v6314 = vadd.f32 %v6312, %v6313
      %v6315 = vrot.slane %v6314, 4
      %v6316 = vadd.f32 %v6314, %v6315
      %v6317 = vrot.slane %v6316, 2
      %v6318 = vadd.f32 %v6316, %v6317
      %v6319 = vrot.slane %v6318, 1
      %v6320 = vadd.f32 %v6318, %v6319
      %v6321 = vmul.f32 %v6320, 0.015625
      %v6323 = vsel %vm1055, %v6291, 0
      %6325 = vmatprep.subr.mxu0 0.0
      %v6326 = vand.u32 %v456, 4294901760
      %6327 = vmatpush1.msra.mxu0 %v6326
      %6328 = vmatprep.subr.mxu0 0.0
      %v6329 = vand.u32 %v457, 4294901760
      %6330 = vmatpush1.msra.mxu0 %v6329
      %6331 = vmatprep.subr.mxu0 0.0
      %6332 = vmatpush1.msra.mxu0 0.0
      %6333 = vmatprep.subr.mxu0 0.0
      %6334 = vmatpush1.msra.mxu0 0.0
      %6335 = vmatprep.subr.mxu0 0.0
      %6336 = vmatpush1.msra.mxu0 0.0
      %6337 = vmatprep.subr.mxu0 0.0
      %6338 = vmatpush1.msra.mxu0 0.0
      %6339 = vmatprep.subr.mxu0 0.0
      %6340 = vmatpush1.msra.mxu0 0.0
      %6341 = vmatprep.subr.mxu0 0.0
      %6342 = vmatpush1.msra.mxu0 0.0
      %6343 = vmatprep.subr.mxu0 0.0
      %6344 = vmatpush1.msra.mxu0 0.0
      %6345 = vmatprep.subr.mxu0 0.0
      %6346 = vmatpush1.msra.mxu0 0.0
      %6347 = vmatprep.subr.mxu0 0.0
      %6348 = vmatpush1.msra.mxu0 0.0
      %6349 = vmatprep.subr.mxu0 0.0
      %6350 = vmatpush1.msra.mxu0 0.0
      %6351 = vmatprep.subr.mxu0 0.0
      %6352 = vmatpush1.msra.mxu0 0.0
      %6353 = vmatprep.subr.mxu0 0.0
      %6354 = vmatpush1.msra.mxu0 0.0
      %6355 = vmatprep.subr.mxu0 0.0
      %6356 = vmatpush1.msra.mxu0 0.0
      %6357 = vmatprep.subr.mxu0 0.0
      %6358 = vmatpush1.msra.mxu0 0.0
      %6359 = vmatprep.subr.mxu0 0.0
      %6360 = vmatpush1.msra.mxu0 0.0
      %6361 = vmatprep.subr.mxu0 0.0
      %6362 = vmatpush1.msra.mxu0 0.0
      %6363 = vmatprep.subr.mxu0 0.0
      %6364 = vmatpush1.msra.mxu0 0.0
      %6365 = vmatprep.subr.mxu0 0.0
      %6366 = vmatpush1.msra.mxu0 0.0
      %6367 = vmatprep.subr.mxu0 0.0
      %6368 = vmatpush1.msra.mxu0 0.0
      %6369 = vmatprep.subr.mxu0 0.0
      %6370 = vmatpush1.msra.mxu0 0.0
      %6371 = vmatprep.subr.mxu0 0.0
      %6372 = vmatpush1.msra.mxu0 0.0
      %6373 = vmatprep.subr.mxu0 0.0
      %6374 = vmatpush1.msra.mxu0 0.0
      %6375 = vmatprep.subr.mxu0 0.0
      %6376 = vmatpush1.msra.mxu0 0.0
      %6377 = vmatprep.subr.mxu0 0.0
      %6378 = vmatpush1.msra.mxu0 0.0
      %6379 = vmatprep.subr.mxu0 0.0
      %6380 = vmatpush1.msra.mxu0 0.0
      %6381 = vmatprep.subr.mxu0 0.0
      %6382 = vmatpush1.msra.mxu0 0.0
      %6383 = vmatprep.subr.mxu0 0.0
      %6384 = vmatpush1.msra.mxu0 0.0
      %6385 = vmatprep.subr.mxu0 0.0
      %6386 = vmatpush1.msra.mxu0 0.0
      %6387 = vmatprep.subr.mxu0 0.0
      %6388 = vmatpush1.msra.mxu0 0.0
      %6389 = vmatprep.subr.mxu0 0.0
      %6390 = vmatpush1.msra.mxu0 0.0
      %6391 = vmatprep.mubr.f32.mxu0 0.0
      %v6392 = vand.u32 %v6323, 4294901760
      %v6393 = vsub.f32 %v6323, %v6392
      %v6394 = vand.u32 %v6393, 4294901760
      %v6395 = vsub.f32 %v6393, %v6394
      %v6396 = vand.u32 %v6395, 4294901760
      %6397 = vmatmul.mubr.f32.gmra.mrb[0].mxu0 %v6396
      %v6398 = vpop.f32.mrb[0].mxu0
      %v6399 = vadd.f32 0.0, %v6398
      %v6400 = vpop.f32.mrb[0].mxu0
      %6401 = vdwg.mxu0
      %6402 = vmatprep.subr.mxu0 0.0
      %v6403 = vand.u32 %v456, 4294901760
      %v6404 = vsub.f32 %v456, %v6403
      %v6405 = vand.u32 %v6404, 4294901760
      %v6406 = vsub.f32 %v6404, %v6405
      %v6407 = vand.u32 %v6406, 4294901760
      %6408 = vmatpush1.msra.mxu0 %v6407
      %6409 = vmatprep.subr.mxu0 0.0
      %v6410 = vand.u32 %v457, 4294901760
      %v6411 = vsub.f32 %v457, %v6410
      %v6412 = vand.u32 %v6411, 4294901760
      %v6413 = vsub.f32 %v6411, %v6412
      %v6414 = vand.u32 %v6413, 4294901760
      %6415 = vmatpush1.msra.mxu0 %v6414
      %6416 = vmatprep.subr.mxu0 0.0
      %6417 = vmatpush1.msra.mxu0 0.0
      %6418 = vmatprep.subr.mxu0 0.0
      %6419 = vmatpush1.msra.mxu0 0.0
      %6420 = vmatprep.subr.mxu0 0.0
      %6421 = vmatpush1.msra.mxu0 0.0
      %6422 = vmatprep.subr.mxu0 0.0
      %6423 = vmatpush1.msra.mxu0 0.0
      %6424 = vmatprep.subr.mxu0 0.0
      %6425 = vmatpush1.msra.mxu0 0.0
      %6426 = vmatprep.subr.mxu0 0.0
      %6427 = vmatpush1.msra.mxu0 0.0
      %6428 = vmatprep.subr.mxu0 0.0
      %6429 = vmatpush1.msra.mxu0 0.0
      %6430 = vmatprep.subr.mxu0 0.0
      %6431 = vmatpush1.msra.mxu0 0.0
      %6432 = vmatprep.subr.mxu0 0.0
      %6433 = vmatpush1.msra.mxu0 0.0
      %6434 = vmatprep.subr.mxu0 0.0
      %6435 = vmatpush1.msra.mxu0 0.0
      %6436 = vmatprep.subr.mxu0 0.0
      %6437 = vmatpush1.msra.mxu0 0.0
      %6438 = vmatprep.subr.mxu0 0.0
      %6439 = vmatpush1.msra.mxu0 0.0
      %6440 = vmatprep.subr.mxu0 0.0
      %6441 = vmatpush1.msra.mxu0 0.0
      %6442 = vmatprep.subr.mxu0 0.0
      %6443 = vmatpush1.msra.mxu0 0.0
      %6444 = vmatprep.subr.mxu0 0.0
      %6445 = vmatpush1.msra.mxu0 0.0
      %6446 = vmatprep.subr.mxu0 0.0
      %6447 = vmatpush1.msra.mxu0 0.0
      %6448 = vmatprep.subr.mxu0 0.0
      %6449 = vmatpush1.msra.mxu0 0.0
      %6450 = vmatprep.subr.mxu0 0.0
      %6451 = vmatpush1.msra.mxu0 0.0
      %6452 = vmatprep.subr.mxu0 0.0
      %6453 = vmatpush1.msra.mxu0 0.0
      %6454 = vmatprep.subr.mxu0 0.0
      %6455 = vmatpush1.msra.mxu0 0.0
      %6456 = vmatprep.subr.mxu0 0.0
      %6457 = vmatpush1.msra.mxu0 0.0
      %6458 = vmatprep.subr.mxu0 0.0
      %6459 = vmatpush1.msra.mxu0 0.0
      %6460 = vmatprep.subr.mxu0 0.0
      %6461 = vmatpush1.msra.mxu0 0.0
      %6462 = vmatprep.subr.mxu0 0.0
      %6463 = vmatpush1.msra.mxu0 0.0
      %6464 = vmatprep.subr.mxu0 0.0
      %6465 = vmatpush1.msra.mxu0 0.0
      %6466 = vmatprep.subr.mxu0 0.0
      %6467 = vmatpush1.msra.mxu0 0.0
      %6468 = vmatprep.subr.mxu0 0.0
      %6469 = vmatpush1.msra.mxu0 0.0
      %6470 = vmatprep.subr.mxu0 0.0
      %6471 = vmatpush1.msra.mxu0 0.0
      %6472 = vmatprep.subr.mxu0 0.0
      %6473 = vmatpush1.msra.mxu0 0.0
      %6474 = vmatprep.subr.mxu0 0.0
      %6475 = vmatpush1.msra.mxu0 0.0
      %6476 = vmatprep.mubr.f32.mxu0 0.0
      %v6477 = vand.u32 %v6323, 4294901760
      %6478 = vmatmul.mubr.f32.gmra.mrb[0].mxu0 %v6477
      %v6479 = vpop.f32.mrb[0].mxu0
      %v6480 = vadd.f32 %v6399, %v6479
      %v6481 = vpop.f32.mrb[0].mxu0
      %6482 = vdwg.mxu0
      %6483 = vmatprep.subr.mxu0 0.0
      %v6484 = vand.u32 %v456, 4294901760
      %v6485 = vsub.f32 %v456, %v6484
      %6486 = vmatpush1.msra.mxu0 %v6485
      %6487 = vmatprep.subr.mxu0 0.0
      %v6488 = vand.u32 %v457, 4294901760
      %v6489 = vsub.f32 %v457, %v6488
      %6490 = vmatpush1.msra.mxu0 %v6489
      %6491 = vmatprep.subr.mxu0 0.0
      %6492 = vmatpush1.msra.mxu0 0.0
      %6493 = vmatprep.subr.mxu0 0.0
      %6494 = vmatpush1.msra.mxu0 0.0
      %6495 = vmatprep.subr.mxu0 0.0
      %6496 = vmatpush1.msra.mxu0 0.0
      %6497 = vmatprep.subr.mxu0 0.0
      %6498 = vmatpush1.msra.mxu0 0.0
      %6499 = vmatprep.subr.mxu0 0.0
      %6500 = vmatpush1.msra.mxu0 0.0
      %6501 = vmatprep.subr.mxu0 0.0
      %6502 = vmatpush1.msra.mxu0 0.0
      %6503 = vmatprep.subr.mxu0 0.0
      %6504 = vmatpush1.msra.mxu0 0.0
      %6505 = vmatprep.subr.mxu0 0.0
      %6506 = vmatpush1.msra.mxu0 0.0
      %6507 = vmatprep.subr.mxu0 0.0
      %6508 = vmatpush1.msra.mxu0 0.0
      %6509 = vmatprep.subr.mxu0 0.0
      %6510 = vmatpush1.msra.mxu0 0.0
      %6511 = vmatprep.subr.mxu0 0.0
      %6512 = vmatpush1.msra.mxu0 0.0
      %6513 = vmatprep.subr.mxu0 0.0
      %6514 = vmatpush1.msra.mxu0 0.0
      %6515 = vmatprep.subr.mxu0 0.0
      %6516 = vmatpush1.msra.mxu0 0.0
      %6517 = vmatprep.subr.mxu0 0.0
      %6518 = vmatpush1.msra.mxu0 0.0
      %6519 = vmatprep.subr.mxu0 0.0
      %6520 = vmatpush1.msra.mxu0 0.0
      %6521 = vmatprep.subr.mxu0 0.0
      %6522 = vmatpush1.msra.mxu0 0.0
      %6523 = vmatprep.subr.mxu0 0.0
      %6524 = vmatpush1.msra.mxu0 0.0
      %6525 = vmatprep.subr.mxu0 0.0
      %6526 = vmatpush1.msra.mxu0 0.0
      %6527 = vmatprep.subr.mxu0 0.0
      %6528 = vmatpush1.msra.mxu0 0.0
      %6529 = vmatprep.subr.mxu0 0.0
      %6530 = vmatpush1.msra.mxu0 0.0
      %6531 = vmatprep.subr.mxu0 0.0
      %6532 = vmatpush1.msra.mxu0 0.0
      %6533 = vmatprep.subr.mxu0 0.0
      %6534 = vmatpush1.msra.mxu0 0.0
      %6535 = vmatprep.subr.mxu0 0.0
      %6536 = vmatpush1.msra.mxu0 0.0
      %6537 = vmatprep.subr.mxu0 0.0
      %6538 = vmatpush1.msra.mxu0 0.0
      %6539 = vmatprep.subr.mxu0 0.0
      %6540 = vmatpush1.msra.mxu0 0.0
      %6541 = vmatprep.subr.mxu0 0.0
      %6542 = vmatpush1.msra.mxu0 0.0
      %6543 = vmatprep.subr.mxu0 0.0
      %6544 = vmatpush1.msra.mxu0 0.0
      %6545 = vmatprep.subr.mxu0 0.0
      %6546 = vmatpush1.msra.mxu0 0.0
      %6547 = vmatprep.subr.mxu0 0.0
      %6548 = vmatpush1.msra.mxu0 0.0
      %6549 = vmatprep.subr.mxu0 0.0
      %6550 = vmatpush1.msra.mxu0 0.0
      %6551 = vmatprep.mubr.f32.mxu0 0.0
      %v6552 = vand.u32 %v6323, 4294901760
      %v6553 = vsub.f32 %v6323, %v6552
      %6554 = vmatmul.mubr.f32.gmra.mrb[0].mxu0 %v6553
      %v6555 = vpop.f32.mrb[0].mxu0
      %v6556 = vadd.f32 %v6480, %v6555
      %v6557 = vpop.f32.mrb[0].mxu0
      %6558 = vdwg.mxu0
      %6559 = vmatprep.subr.mxu0 0.0
      %v6560 = vand.u32 %v456, 4294901760
      %6561 = vmatpush1.msra.mxu0 %v6560
      %6562 = vmatprep.subr.mxu0 0.0
      %v6563 = vand.u32 %v457, 4294901760
      %6564 = vmatpush1.msra.mxu0 %v6563
      %6565 = vmatprep.subr.mxu0 0.0
      %6566 = vmatpush1.msra.mxu0 0.0
      %6567 = vmatprep.subr.mxu0 0.0
      %6568 = vmatpush1.msra.mxu0 0.0
      %6569 = vmatprep.subr.mxu0 0.0
      %6570 = vmatpush1.msra.mxu0 0.0
      %6571 = vmatprep.subr.mxu0 0.0
      %6572 = vmatpush1.msra.mxu0 0.0
      %6573 = vmatprep.subr.mxu0 0.0
      %6574 = vmatpush1.msra.mxu0 0.0
      %6575 = vmatprep.subr.mxu0 0.0
      %6576 = vmatpush1.msra.mxu0 0.0
      %6577 = vmatprep.subr.mxu0 0.0
      %6578 = vmatpush1.msra.mxu0 0.0
      %6579 = vmatprep.subr.mxu0 0.0
      %6580 = vmatpush1.msra.mxu0 0.0
      %6581 = vmatprep.subr.mxu0 0.0
      %6582 = vmatpush1.msra.mxu0 0.0
      %6583 = vmatprep.subr.mxu0 0.0
      %6584 = vmatpush1.msra.mxu0 0.0
      %6585 = vmatprep.subr.mxu0 0.0
      %6586 = vmatpush1.msra.mxu0 0.0
      %6587 = vmatprep.subr.mxu0 0.0
      %6588 = vmatpush1.msra.mxu0 0.0
      %6589 = vmatprep.subr.mxu0 0.0
      %6590 = vmatpush1.msra.mxu0 0.0
      %6591 = vmatprep.subr.mxu0 0.0
      %6592 = vmatpush1.msra.mxu0 0.0
      %6593 = vmatprep.subr.mxu0 0.0
      %6594 = vmatpush1.msra.mxu0 0.0
      %6595 = vmatprep.subr.mxu0 0.0
      %6596 = vmatpush1.msra.mxu0 0.0
      %6597 = vmatprep.subr.mxu0 0.0
      %6598 = vmatpush1.msra.mxu0 0.0
      %6599 = vmatprep.subr.mxu0 0.0
      %6600 = vmatpush1.msra.mxu0 0.0
      %6601 = vmatprep.subr.mxu0 0.0
      %6602 = vmatpush1.msra.mxu0 0.0
      %6603 = vmatprep.subr.mxu0 0.0
      %6604 = vmatpush1.msra.mxu0 0.0
      %6605 = vmatprep.subr.mxu0 0.0
      %6606 = vmatpush1.msra.mxu0 0.0
      %6607 = vmatprep.subr.mxu0 0.0
      %6608 = vmatpush1.msra.mxu0 0.0
      %6609 = vmatprep.subr.mxu0 0.0
      %6610 = vmatpush1.msra.mxu0 0.0
      %6611 = vmatprep.subr.mxu0 0.0
      %6612 = vmatpush1.msra.mxu0 0.0
      %6613 = vmatprep.subr.mxu0 0.0
      %6614 = vmatpush1.msra.mxu0 0.0
      %6615 = vmatprep.subr.mxu0 0.0
      %6616 = vmatpush1.msra.mxu0 0.0
      %6617 = vmatprep.subr.mxu0 0.0
      %6618 = vmatpush1.msra.mxu0 0.0
      %6619 = vmatprep.subr.mxu0 0.0
      %6620 = vmatpush1.msra.mxu0 0.0
      %6621 = vmatprep.subr.mxu0 0.0
      %6622 = vmatpush1.msra.mxu0 0.0
      %6623 = vmatprep.subr.mxu0 0.0
      %6624 = vmatpush1.msra.mxu0 0.0
      %6625 = vmatprep.mubr.f32.mxu0 0.0
      %v6626 = vand.u32 %v6323, 4294901760
      %v6627 = vsub.f32 %v6323, %v6626
      %v6628 = vand.u32 %v6627, 4294901760
      %6629 = vmatmul.mubr.f32.gmra.mrb[0].mxu0 %v6628
      %v6630 = vpop.f32.mrb[0].mxu0
      %v6631 = vadd.f32 %v6556, %v6630
      %v6632 = vpop.f32.mrb[0].mxu0
      %6633 = vdwg.mxu0
      %6634 = vmatprep.subr.mxu0 0.0
      %v6635 = vand.u32 %v456, 4294901760
      %v6636 = vsub.f32 %v456, %v6635
      %v6637 = vand.u32 %v6636, 4294901760
      %6638 = vmatpush1.msra.mxu0 %v6637
      %6639 = vmatprep.subr.mxu0 0.0
      %v6640 = vand.u32 %v457, 4294901760
      %v6641 = vsub.f32 %v457, %v6640
      %v6642 = vand.u32 %v6641, 4294901760
      %6643 = vmatpush1.msra.mxu0 %v6642
      %6644 = vmatprep.subr.mxu0 0.0
      %6645 = vmatpush1.msra.mxu0 0.0
      %6646 = vmatprep.subr.mxu0 0.0
      %6647 = vmatpush1.msra.mxu0 0.0
      %6648 = vmatprep.subr.mxu0 0.0
      %6649 = vmatpush1.msra.mxu0 0.0
      %6650 = vmatprep.subr.mxu0 0.0
      %6651 = vmatpush1.msra.mxu0 0.0
      %6652 = vmatprep.subr.mxu0 0.0
      %6653 = vmatpush1.msra.mxu0 0.0
      %6654 = vmatprep.subr.mxu0 0.0
      %6655 = vmatpush1.msra.mxu0 0.0
      %6656 = vmatprep.subr.mxu0 0.0
      %6657 = vmatpush1.msra.mxu0 0.0
      %6658 = vmatprep.subr.mxu0 0.0
      %6659 = vmatpush1.msra.mxu0 0.0
      %6660 = vmatprep.subr.mxu0 0.0
      %6661 = vmatpush1.msra.mxu0 0.0
      %6662 = vmatprep.subr.mxu0 0.0
      %6663 = vmatpush1.msra.mxu0 0.0
      %6664 = vmatprep.subr.mxu0 0.0
      %6665 = vmatpush1.msra.mxu0 0.0
      %6666 = vmatprep.subr.mxu0 0.0
      %6667 = vmatpush1.msra.mxu0 0.0
      %6668 = vmatprep.subr.mxu0 0.0
      %6669 = vmatpush1.msra.mxu0 0.0
      %6670 = vmatprep.subr.mxu0 0.0
      %6671 = vmatpush1.msra.mxu0 0.0
      %6672 = vmatprep.subr.mxu0 0.0
      %6673 = vmatpush1.msra.mxu0 0.0
      %6674 = vmatprep.subr.mxu0 0.0
      %6675 = vmatpush1.msra.mxu0 0.0
      %6676 = vmatprep.subr.mxu0 0.0
      %6677 = vmatpush1.msra.mxu0 0.0
      %6678 = vmatprep.subr.mxu0 0.0
      %6679 = vmatpush1.msra.mxu0 0.0
      %6680 = vmatprep.subr.mxu0 0.0
      %6681 = vmatpush1.msra.mxu0 0.0
      %6682 = vmatprep.subr.mxu0 0.0
      %6683 = vmatpush1.msra.mxu0 0.0
      %6684 = vmatprep.subr.mxu0 0.0
      %6685 = vmatpush1.msra.mxu0 0.0
      %6686 = vmatprep.subr.mxu0 0.0
      %6687 = vmatpush1.msra.mxu0 0.0
      %6688 = vmatprep.subr.mxu0 0.0
      %6689 = vmatpush1.msra.mxu0 0.0
      %6690 = vmatprep.subr.mxu0 0.0
      %6691 = vmatpush1.msra.mxu0 0.0
      %6692 = vmatprep.subr.mxu0 0.0
      %6693 = vmatpush1.msra.mxu0 0.0
      %6694 = vmatprep.subr.mxu0 0.0
      %6695 = vmatpush1.msra.mxu0 0.0
      %6696 = vmatprep.subr.mxu0 0.0
      %6697 = vmatpush1.msra.mxu0 0.0
      %6698 = vmatprep.subr.mxu0 0.0
      %6699 = vmatpush1.msra.mxu0 0.0
      %6700 = vmatprep.subr.mxu0 0.0
      %6701 = vmatpush1.msra.mxu0 0.0
      %6702 = vmatprep.subr.mxu0 0.0
      %6703 = vmatpush1.msra.mxu0 0.0
      %6704 = vmatprep.mubr.f32.mxu0 0.0
      %v6705 = vand.u32 %v6323, 4294901760
      %6706 = vmatmul.mubr.f32.gmra.mrb[0].mxu0 %v6705
      %v6707 = vpop.f32.mrb[0].mxu0
      %v6708 = vadd.f32 %v6631, %v6707
      %v6709 = vpop.f32.mrb[0].mxu0
      %6710 = vdwg.mxu0
      %6711 = vmatprep.subr.mxu0 0.0
      %v6712 = vand.u32 %v456, 4294901760
      %6713 = vmatpush1.msra.mxu0 %v6712
      %6714 = vmatprep.subr.mxu0 0.0
      %v6715 = vand.u32 %v457, 4294901760
      %6716 = vmatpush1.msra.mxu0 %v6715
      %6717 = vmatprep.subr.mxu0 0.0
      %6718 = vmatpush1.msra.mxu0 0.0
      %6719 = vmatprep.subr.mxu0 0.0
      %6720 = vmatpush1.msra.mxu0 0.0
      %6721 = vmatprep.subr.mxu0 0.0
      %6722 = vmatpush1.msra.mxu0 0.0
      %6723 = vmatprep.subr.mxu0 0.0
      %6724 = vmatpush1.msra.mxu0 0.0
      %6725 = vmatprep.subr.mxu0 0.0
      %6726 = vmatpush1.msra.mxu0 0.0
      %6727 = vmatprep.subr.mxu0 0.0
      %6728 = vmatpush1.msra.mxu0 0.0
      %6729 = vmatprep.subr.mxu0 0.0
      %6730 = vmatpush1.msra.mxu0 0.0
      %6731 = vmatprep.subr.mxu0 0.0
      %6732 = vmatpush1.msra.mxu0 0.0
      %6733 = vmatprep.subr.mxu0 0.0
      %6734 = vmatpush1.msra.mxu0 0.0
      %6735 = vmatprep.subr.mxu0 0.0
      %6736 = vmatpush1.msra.mxu0 0.0
      %6737 = vmatprep.subr.mxu0 0.0
      %6738 = vmatpush1.msra.mxu0 0.0
      %6739 = vmatprep.subr.mxu0 0.0
      %6740 = vmatpush1.msra.mxu0 0.0
      %6741 = vmatprep.subr.mxu0 0.0
      %6742 = vmatpush1.msra.mxu0 0.0
      %6743 = vmatprep.subr.mxu0 0.0
      %6744 = vmatpush1.msra.mxu0 0.0
      %6745 = vmatprep.subr.mxu0 0.0
      %6746 = vmatpush1.msra.mxu0 0.0
      %6747 = vmatprep.subr.mxu0 0.0
      %6748 = vmatpush1.msra.mxu0 0.0
      %6749 = vmatprep.subr.mxu0 0.0
      %6750 = vmatpush1.msra.mxu0 0.0
      %6751 = vmatprep.subr.mxu0 0.0
      %6752 = vmatpush1.msra.mxu0 0.0
      %6753 = vmatprep.subr.mxu0 0.0
      %6754 = vmatpush1.msra.mxu0 0.0
      %6755 = vmatprep.subr.mxu0 0.0
      %6756 = vmatpush1.msra.mxu0 0.0
      %6757 = vmatprep.subr.mxu0 0.0
      %6758 = vmatpush1.msra.mxu0 0.0
      %6759 = vmatprep.subr.mxu0 0.0
      %6760 = vmatpush1.msra.mxu0 0.0
      %6761 = vmatprep.subr.mxu0 0.0
      %6762 = vmatpush1.msra.mxu0 0.0
      %6763 = vmatprep.subr.mxu0 0.0
      %6764 = vmatpush1.msra.mxu0 0.0
      %6765 = vmatprep.subr.mxu0 0.0
      %6766 = vmatpush1.msra.mxu0 0.0
      %6767 = vmatprep.subr.mxu0 0.0
      %6768 = vmatpush1.msra.mxu0 0.0
      %6769 = vmatprep.subr.mxu0 0.0
      %6770 = vmatpush1.msra.mxu0 0.0
      %6771 = vmatprep.subr.mxu0 0.0
      %6772 = vmatpush1.msra.mxu0 0.0
      %6773 = vmatprep.subr.mxu0 0.0
      %6774 = vmatpush1.msra.mxu0 0.0
      %6775 = vmatprep.subr.mxu0 0.0
      %6776 = vmatpush1.msra.mxu0 0.0
      %6777 = vmatprep.mubr.f32.mxu0 0.0
      %v6778 = vand.u32 %v6323, 4294901760
      %6779 = vmatmul.mubr.f32.gmra.mrb[0].mxu0 %v6778
      %v6780 = vpop.f32.mrb[0].mxu0
      %v6781 = vadd.f32 %v6708, %v6780
      %v6782 = vpop.f32.mrb[0].mxu0
      %6783 = vdwg.mxu0
      %v6785 = vsel %vm1055, %v6321, 0
      %6787 = vmatprep.subr.mxu0 0.0
      %v6788 = vand.u32 %v456, 4294901760
      %6789 = vmatpush1.msra.mxu0 %v6788
      %6790 = vmatprep.subr.mxu0 0.0
      %v6791 = vand.u32 %v457, 4294901760
      %6792 = vmatpush1.msra.mxu0 %v6791
      %6793 = vmatprep.subr.mxu0 0.0
      %6794 = vmatpush1.msra.mxu0 0.0
      %6795 = vmatprep.subr.mxu0 0.0
      %6796 = vmatpush1.msra.mxu0 0.0
      %6797 = vmatprep.subr.mxu0 0.0
      %6798 = vmatpush1.msra.mxu0 0.0
      %6799 = vmatprep.subr.mxu0 0.0
      %6800 = vmatpush1.msra.mxu0 0.0
      %6801 = vmatprep.subr.mxu0 0.0
      %6802 = vmatpush1.msra.mxu0 0.0
      %6803 = vmatprep.subr.mxu0 0.0
      %6804 = vmatpush1.msra.mxu0 0.0
      %6805 = vmatprep.subr.mxu0 0.0
      %6806 = vmatpush1.msra.mxu0 0.0
      %6807 = vmatprep.subr.mxu0 0.0
      %6808 = vmatpush1.msra.mxu0 0.0
      %6809 = vmatprep.subr.mxu0 0.0
      %6810 = vmatpush1.msra.mxu0 0.0
      %6811 = vmatprep.subr.mxu0 0.0
      %6812 = vmatpush1.msra.mxu0 0.0
      %6813 = vmatprep.subr.mxu0 0.0
      %6814 = vmatpush1.msra.mxu0 0.0
      %6815 = vmatprep.subr.mxu0 0.0
      %6816 = vmatpush1.msra.mxu0 0.0
      %6817 = vmatprep.subr.mxu0 0.0
      %6818 = vmatpush1.msra.mxu0 0.0
      %6819 = vmatprep.subr.mxu0 0.0
      %6820 = vmatpush1.msra.mxu0 0.0
      %6821 = vmatprep.subr.mxu0 0.0
      %6822 = vmatpush1.msra.mxu0 0.0
      %6823 = vmatprep.subr.mxu0 0.0
      %6824 = vmatpush1.msra.mxu0 0.0
      %6825 = vmatprep.subr.mxu0 0.0
      %6826 = vmatpush1.msra.mxu0 0.0
      %6827 = vmatprep.subr.mxu0 0.0
      %6828 = vmatpush1.msra.mxu0 0.0
      %6829 = vmatprep.subr.mxu0 0.0
      %6830 = vmatpush1.msra.mxu0 0.0
      %6831 = vmatprep.subr.mxu0 0.0
      %6832 = vmatpush1.msra.mxu0 0.0
      %6833 = vmatprep.subr.mxu0 0.0
      %6834 = vmatpush1.msra.mxu0 0.0
      %6835 = vmatprep.subr.mxu0 0.0
      %6836 = vmatpush1.msra.mxu0 0.0
      %6837 = vmatprep.subr.mxu0 0.0
      %6838 = vmatpush1.msra.mxu0 0.0
      %6839 = vmatprep.subr.mxu0 0.0
      %6840 = vmatpush1.msra.mxu0 0.0
      %6841 = vmatprep.subr.mxu0 0.0
      %6842 = vmatpush1.msra.mxu0 0.0
      %6843 = vmatprep.subr.mxu0 0.0
      %6844 = vmatpush1.msra.mxu0 0.0
      %6845 = vmatprep.subr.mxu0 0.0
      %6846 = vmatpush1.msra.mxu0 0.0
      %6847 = vmatprep.subr.mxu0 0.0
      %6848 = vmatpush1.msra.mxu0 0.0
      %6849 = vmatprep.subr.mxu0 0.0
      %6850 = vmatpush1.msra.mxu0 0.0
      %6851 = vmatprep.subr.mxu0 0.0
      %6852 = vmatpush1.msra.mxu0 0.0
      %6853 = vmatprep.mubr.f32.mxu0 0.0
      %v6854 = vand.u32 %v6785, 4294901760
      %v6855 = vsub.f32 %v6785, %v6854
      %v6856 = vand.u32 %v6855, 4294901760
      %v6857 = vsub.f32 %v6855, %v6856
      %v6858 = vand.u32 %v6857, 4294901760
      %6859 = vmatmul.mubr.f32.gmra.mrb[0].mxu0 %v6858
      %v6860 = vpop.f32.mrb[0].mxu0
      %v6861 = vadd.f32 0.0, %v6860
      %v6862 = vpop.f32.mrb[0].mxu0
      %6863 = vdwg.mxu0
      %6864 = vmatprep.subr.mxu0 0.0
      %v6865 = vand.u32 %v456, 4294901760
      %v6866 = vsub.f32 %v456, %v6865
      %v6867 = vand.u32 %v6866, 4294901760
      %v6868 = vsub.f32 %v6866, %v6867
      %v6869 = vand.u32 %v6868, 4294901760
      %6870 = vmatpush1.msra.mxu0 %v6869
      %6871 = vmatprep.subr.mxu0 0.0
      %v6872 = vand.u32 %v457, 4294901760
      %v6873 = vsub.f32 %v457, %v6872
      %v6874 = vand.u32 %v6873, 4294901760
      %v6875 = vsub.f32 %v6873, %v6874
      %v6876 = vand.u32 %v6875, 4294901760
      %6877 = vmatpush1.msra.mxu0 %v6876
      %6878 = vmatprep.subr.mxu0 0.0
      %6879 = vmatpush1.msra.mxu0 0.0
      %6880 = vmatprep.subr.mxu0 0.0
      %6881 = vmatpush1.msra.mxu0 0.0
      %6882 = vmatprep.subr.mxu0 0.0
      %6883 = vmatpush1.msra.mxu0 0.0
      %6884 = vmatprep.subr.mxu0 0.0
      %6885 = vmatpush1.msra.mxu0 0.0
      %6886 = vmatprep.subr.mxu0 0.0
      %6887 = vmatpush1.msra.mxu0 0.0
      %6888 = vmatprep.subr.mxu0 0.0
      %6889 = vmatpush1.msra.mxu0 0.0
      %6890 = vmatprep.subr.mxu0 0.0
      %6891 = vmatpush1.msra.mxu0 0.0
      %6892 = vmatprep.subr.mxu0 0.0
      %6893 = vmatpush1.msra.mxu0 0.0
      %6894 = vmatprep.subr.mxu0 0.0
      %6895 = vmatpush1.msra.mxu0 0.0
      %6896 = vmatprep.subr.mxu0 0.0
      %6897 = vmatpush1.msra.mxu0 0.0
      %6898 = vmatprep.subr.mxu0 0.0
      %6899 = vmatpush1.msra.mxu0 0.0
      %6900 = vmatprep.subr.mxu0 0.0
      %6901 = vmatpush1.msra.mxu0 0.0
      %6902 = vmatprep.subr.mxu0 0.0
      %6903 = vmatpush1.msra.mxu0 0.0
      %6904 = vmatprep.subr.mxu0 0.0
      %6905 = vmatpush1.msra.mxu0 0.0
      %6906 = vmatprep.subr.mxu0 0.0
      %6907 = vmatpush1.msra.mxu0 0.0
      %6908 = vmatprep.subr.mxu0 0.0
      %6909 = vmatpush1.msra.mxu0 0.0
      %6910 = vmatprep.subr.mxu0 0.0
      %6911 = vmatpush1.msra.mxu0 0.0
      %6912 = vmatprep.subr.mxu0 0.0
      %6913 = vmatpush1.msra.mxu0 0.0
      %6914 = vmatprep.subr.mxu0 0.0
      %6915 = vmatpush1.msra.mxu0 0.0
      %6916 = vmatprep.subr.mxu0 0.0
      %6917 = vmatpush1.msra.mxu0 0.0
      %6918 = vmatprep.subr.mxu0 0.0
      %6919 = vmatpush1.msra.mxu0 0.0
      %6920 = vmatprep.subr.mxu0 0.0
      %6921 = vmatpush1.msra.mxu0 0.0
      %6922 = vmatprep.subr.mxu0 0.0
      %6923 = vmatpush1.msra.mxu0 0.0
      %6924 = vmatprep.subr.mxu0 0.0
      %6925 = vmatpush1.msra.mxu0 0.0
      %6926 = vmatprep.subr.mxu0 0.0
      %6927 = vmatpush1.msra.mxu0 0.0
      %6928 = vmatprep.subr.mxu0 0.0
      %6929 = vmatpush1.msra.mxu0 0.0
      %6930 = vmatprep.subr.mxu0 0.0
      %6931 = vmatpush1.msra.mxu0 0.0
      %6932 = vmatprep.subr.mxu0 0.0
      %6933 = vmatpush1.msra.mxu0 0.0
      %6934 = vmatprep.subr.mxu0 0.0
      %6935 = vmatpush1.msra.mxu0 0.0
      %6936 = vmatprep.subr.mxu0 0.0
      %6937 = vmatpush1.msra.mxu0 0.0
      %6938 = vmatprep.mubr.f32.mxu0 0.0
      %v6939 = vand.u32 %v6785, 4294901760
      %6940 = vmatmul.mubr.f32.gmra.mrb[0].mxu0 %v6939
      %v6941 = vpop.f32.mrb[0].mxu0
      %v6942 = vadd.f32 %v6861, %v6941
      %v6943 = vpop.f32.mrb[0].mxu0
      %6944 = vdwg.mxu0
      %6945 = vmatprep.subr.mxu0 0.0
      %v6946 = vand.u32 %v456, 4294901760
      %v6947 = vsub.f32 %v456, %v6946
      %6948 = vmatpush1.msra.mxu0 %v6947
      %6949 = vmatprep.subr.mxu0 0.0
      %v6950 = vand.u32 %v457, 4294901760
      %v6951 = vsub.f32 %v457, %v6950
      %6952 = vmatpush1.msra.mxu0 %v6951
      %6953 = vmatprep.subr.mxu0 0.0
      %6954 = vmatpush1.msra.mxu0 0.0
      %6955 = vmatprep.subr.mxu0 0.0
      %6956 = vmatpush1.msra.mxu0 0.0
      %6957 = vmatprep.subr.mxu0 0.0
      %6958 = vmatpush1.msra.mxu0 0.0
      %6959 = vmatprep.subr.mxu0 0.0
      %6960 = vmatpush1.msra.mxu0 0.0
      %6961 = vmatprep.subr.mxu0 0.0
      %6962 = vmatpush1.msra.mxu0 0.0
      %6963 = vmatprep.subr.mxu0 0.0
      %6964 = vmatpush1.msra.mxu0 0.0
      %6965 = vmatprep.subr.mxu0 0.0
      %6966 = vmatpush1.msra.mxu0 0.0
      %6967 = vmatprep.subr.mxu0 0.0
      %6968 = vmatpush1.msra.mxu0 0.0
      %6969 = vmatprep.subr.mxu0 0.0
      %6970 = vmatpush1.msra.mxu0 0.0
      %6971 = vmatprep.subr.mxu0 0.0
      %6972 = vmatpush1.msra.mxu0 0.0
      %6973 = vmatprep.subr.mxu0 0.0
      %6974 = vmatpush1.msra.mxu0 0.0
      %6975 = vmatprep.subr.mxu0 0.0
      %6976 = vmatpush1.msra.mxu0 0.0
      %6977 = vmatprep.subr.mxu0 0.0
      %6978 = vmatpush1.msra.mxu0 0.0
      %6979 = vmatprep.subr.mxu0 0.0
      %6980 = vmatpush1.msra.mxu0 0.0
      %6981 = vmatprep.subr.mxu0 0.0
      %6982 = vmatpush1.msra.mxu0 0.0
      %6983 = vmatprep.subr.mxu0 0.0
      %6984 = vmatpush1.msra.mxu0 0.0
      %6985 = vmatprep.subr.mxu0 0.0
      %6986 = vmatpush1.msra.mxu0 0.0
      %6987 = vmatprep.subr.mxu0 0.0
      %6988 = vmatpush1.msra.mxu0 0.0
      %6989 = vmatprep.subr.mxu0 0.0
      %6990 = vmatpush1.msra.mxu0 0.0
      %6991 = vmatprep.subr.mxu0 0.0
      %6992 = vmatpush1.msra.mxu0 0.0
      %6993 = vmatprep.subr.mxu0 0.0
      %6994 = vmatpush1.msra.mxu0 0.0
      %6995 = vmatprep.subr.mxu0 0.0
      %6996 = vmatpush1.msra.mxu0 0.0
      %6997 = vmatprep.subr.mxu0 0.0
      %6998 = vmatpush1.msra.mxu0 0.0
      %6999 = vmatprep.subr.mxu0 0.0
      %7000 = vmatpush1.msra.mxu0 0.0
      %7001 = vmatprep.subr.mxu0 0.0
      %7002 = vmatpush1.msra.mxu0 0.0
      %7003 = vmatprep.subr.mxu0 0.0
      %7004 = vmatpush1.msra.mxu0 0.0
      %7005 = vmatprep.subr.mxu0 0.0
      %7006 = vmatpush1.msra.mxu0 0.0
      %7007 = vmatprep.subr.mxu0 0.0
      %7008 = vmatpush1.msra.mxu0 0.0
      %7009 = vmatprep.subr.mxu0 0.0
      %7010 = vmatpush1.msra.mxu0 0.0
      %7011 = vmatprep.subr.mxu0 0.0
      %7012 = vmatpush1.msra.mxu0 0.0
      %7013 = vmatprep.mubr.f32.mxu0 0.0
      %v7014 = vand.u32 %v6785, 4294901760
      %v7015 = vsub.f32 %v6785, %v7014
      %7016 = vmatmul.mubr.f32.gmra.mrb[0].mxu0 %v7015
      %v7017 = vpop.f32.mrb[0].mxu0
      %v7018 = vadd.f32 %v6942, %v7017
      %v7019 = vpop.f32.mrb[0].mxu0
      %7020 = vdwg.mxu0
      %7021 = vmatprep.subr.mxu0 0.0
      %v7022 = vand.u32 %v456, 4294901760
      %7023 = vmatpush1.msra.mxu0 %v7022
      %7024 = vmatprep.subr.mxu0 0.0
      %v7025 = vand.u32 %v457, 4294901760
      %7026 = vmatpush1.msra.mxu0 %v7025
      %7027 = vmatprep.subr.mxu0 0.0
      %7028 = vmatpush1.msra.mxu0 0.0
      %7029 = vmatprep.subr.mxu0 0.0
      %7030 = vmatpush1.msra.mxu0 0.0
      %7031 = vmatprep.subr.mxu0 0.0
      %7032 = vmatpush1.msra.mxu0 0.0
      %7033 = vmatprep.subr.mxu0 0.0
      %7034 = vmatpush1.msra.mxu0 0.0
      %7035 = vmatprep.subr.mxu0 0.0
      %7036 = vmatpush1.msra.mxu0 0.0
      %7037 = vmatprep.subr.mxu0 0.0
      %7038 = vmatpush1.msra.mxu0 0.0
      %7039 = vmatprep.subr.mxu0 0.0
      %7040 = vmatpush1.msra.mxu0 0.0
      %7041 = vmatprep.subr.mxu0 0.0
      %7042 = vmatpush1.msra.mxu0 0.0
      %7043 = vmatprep.subr.mxu0 0.0
      %7044 = vmatpush1.msra.mxu0 0.0
      %7045 = vmatprep.subr.mxu0 0.0
      %7046 = vmatpush1.msra.mxu0 0.0
      %7047 = vmatprep.subr.mxu0 0.0
      %7048 = vmatpush1.msra.mxu0 0.0
      %7049 = vmatprep.subr.mxu0 0.0
      %7050 = vmatpush1.msra.mxu0 0.0
      %7051 = vmatprep.subr.mxu0 0.0
      %7052 = vmatpush1.msra.mxu0 0.0
      %7053 = vmatprep.subr.mxu0 0.0
      %7054 = vmatpush1.msra.mxu0 0.0
      %7055 = vmatprep.subr.mxu0 0.0
      %7056 = vmatpush1.msra.mxu0 0.0
      %7057 = vmatprep.subr.mxu0 0.0
      %7058 = vmatpush1.msra.mxu0 0.0
      %7059 = vmatprep.subr.mxu0 0.0
      %7060 = vmatpush1.msra.mxu0 0.0
      %7061 = vmatprep.subr.mxu0 0.0
      %7062 = vmatpush1.msra.mxu0 0.0
      %7063 = vmatprep.subr.mxu0 0.0
      %7064 = vmatpush1.msra.mxu0 0.0
      %7065 = vmatprep.subr.mxu0 0.0
      %7066 = vmatpush1.msra.mxu0 0.0
      %7067 = vmatprep.subr.mxu0 0.0
      %7068 = vmatpush1.msra.mxu0 0.0
      %7069 = vmatprep.subr.mxu0 0.0
      %7070 = vmatpush1.msra.mxu0 0.0
      %7071 = vmatprep.subr.mxu0 0.0
      %7072 = vmatpush1.msra.mxu0 0.0
      %7073 = vmatprep.subr.mxu0 0.0
      %7074 = vmatpush1.msra.mxu0 0.0
      %7075 = vmatprep.subr.mxu0 0.0
      %7076 = vmatpush1.msra.mxu0 0.0
      %7077 = vmatprep.subr.mxu0 0.0
      %7078 = vmatpush1.msra.mxu0 0.0
      %7079 = vmatprep.subr.mxu0 0.0
      %7080 = vmatpush1.msra.mxu0 0.0
      %7081 = vmatprep.subr.mxu0 0.0
      %7082 = vmatpush1.msra.mxu0 0.0
      %7083 = vmatprep.subr.mxu0 0.0
      %7084 = vmatpush1.msra.mxu0 0.0
      %7085 = vmatprep.subr.mxu0 0.0
      %7086 = vmatpush1.msra.mxu0 0.0
      %7087 = vmatprep.mubr.f32.mxu0 0.0
      %v7088 = vand.u32 %v6785, 4294901760
      %v7089 = vsub.f32 %v6785, %v7088
      %v7090 = vand.u32 %v7089, 4294901760
      %7091 = vmatmul.mubr.f32.gmra.mrb[0].mxu0 %v7090
      %v7092 = vpop.f32.mrb[0].mxu0
      %v7093 = vadd.f32 %v7018, %v7092
      %v7094 = vpop.f32.mrb[0].mxu0
      %7095 = vdwg.mxu0
      %7096 = vmatprep.subr.mxu0 0.0
      %v7097 = vand.u32 %v456, 4294901760
      %v7098 = vsub.f32 %v456, %v7097
      %v7099 = vand.u32 %v7098, 4294901760
      %7100 = vmatpush1.msra.mxu0 %v7099
      %7101 = vmatprep.subr.mxu0 0.0
      %v7102 = vand.u32 %v457, 4294901760
      %v7103 = vsub.f32 %v457, %v7102
      %v7104 = vand.u32 %v7103, 4294901760
      %7105 = vmatpush1.msra.mxu0 %v7104
      %7106 = vmatprep.subr.mxu0 0.0
      %7107 = vmatpush1.msra.mxu0 0.0
      %7108 = vmatprep.subr.mxu0 0.0
      %7109 = vmatpush1.msra.mxu0 0.0
      %7110 = vmatprep.subr.mxu0 0.0
      %7111 = vmatpush1.msra.mxu0 0.0
      %7112 = vmatprep.subr.mxu0 0.0
      %7113 = vmatpush1.msra.mxu0 0.0
      %7114 = vmatprep.subr.mxu0 0.0
      %7115 = vmatpush1.msra.mxu0 0.0
      %7116 = vmatprep.subr.mxu0 0.0
      %7117 = vmatpush1.msra.mxu0 0.0
      %7118 = vmatprep.subr.mxu0 0.0
      %7119 = vmatpush1.msra.mxu0 0.0
      %7120 = vmatprep.subr.mxu0 0.0
      %7121 = vmatpush1.msra.mxu0 0.0
      %7122 = vmatprep.subr.mxu0 0.0
      %7123 = vmatpush1.msra.mxu0 0.0
      %7124 = vmatprep.subr.mxu0 0.0
      %7125 = vmatpush1.msra.mxu0 0.0
      %7126 = vmatprep.subr.mxu0 0.0
      %7127 = vmatpush1.msra.mxu0 0.0
      %7128 = vmatprep.subr.mxu0 0.0
      %7129 = vmatpush1.msra.mxu0 0.0
      %7130 = vmatprep.subr.mxu0 0.0
      %7131 = vmatpush1.msra.mxu0 0.0
      %7132 = vmatprep.subr.mxu0 0.0
      %7133 = vmatpush1.msra.mxu0 0.0
      %7134 = vmatprep.subr.mxu0 0.0
      %7135 = vmatpush1.msra.mxu0 0.0
      %7136 = vmatprep.subr.mxu0 0.0
      %7137 = vmatpush1.msra.mxu0 0.0
      %7138 = vmatprep.subr.mxu0 0.0
      %7139 = vmatpush1.msra.mxu0 0.0
      %7140 = vmatprep.subr.mxu0 0.0
      %7141 = vmatpush1.msra.mxu0 0.0
      %7142 = vmatprep.subr.mxu0 0.0
      %7143 = vmatpush1.msra.mxu0 0.0
      %7144 = vmatprep.subr.mxu0 0.0
      %7145 = vmatpush1.msra.mxu0 0.0
      %7146 = vmatprep.subr.mxu0 0.0
      %7147 = vmatpush1.msra.mxu0 0.0
      %7148 = vmatprep.subr.mxu0 0.0
      %7149 = vmatpush1.msra.mxu0 0.0
      %7150 = vmatprep.subr.mxu0 0.0
      %7151 = vmatpush1.msra.mxu0 0.0
      %7152 = vmatprep.subr.mxu0 0.0
      %7153 = vmatpush1.msra.mxu0 0.0
      %7154 = vmatprep.subr.mxu0 0.0
      %7155 = vmatpush1.msra.mxu0 0.0
      %7156 = vmatprep.subr.mxu0 0.0
      %7157 = vmatpush1.msra.mxu0 0.0
      %7158 = vmatprep.subr.mxu0 0.0
      %7159 = vmatpush1.msra.mxu0 0.0
      %7160 = vmatprep.subr.mxu0 0.0
      %7161 = vmatpush1.msra.mxu0 0.0
      %7162 = vmatprep.subr.mxu0 0.0
      %7163 = vmatpush1.msra.mxu0 0.0
      %7164 = vmatprep.subr.mxu0 0.0
      %7165 = vmatpush1.msra.mxu0 0.0
      %7166 = vmatprep.mubr.f32.mxu0 0.0
      %v7167 = vand.u32 %v6785, 4294901760
      %7168 = vmatmul.mubr.f32.gmra.mrb[0].mxu0 %v7167
      %v7169 = vpop.f32.mrb[0].mxu0
      %v7170 = vadd.f32 %v7093, %v7169
      %v7171 = vpop.f32.mrb[0].mxu0
      %7172 = vdwg.mxu0
      %7173 = vmatprep.subr.mxu0 0.0
      %v7174 = vand.u32 %v456, 4294901760
      %7175 = vmatpush1.msra.mxu0 %v7174
      %7176 = vmatprep.subr.mxu0 0.0
      %v7177 = vand.u32 %v457, 4294901760
      %7178 = vmatpush1.msra.mxu0 %v7177
      %7179 = vmatprep.subr.mxu0 0.0
      %7180 = vmatpush1.msra.mxu0 0.0
      %7181 = vmatprep.subr.mxu0 0.0
      %7182 = vmatpush1.msra.mxu0 0.0
      %7183 = vmatprep.subr.mxu0 0.0
      %7184 = vmatpush1.msra.mxu0 0.0
      %7185 = vmatprep.subr.mxu0 0.0
      %7186 = vmatpush1.msra.mxu0 0.0
      %7187 = vmatprep.subr.mxu0 0.0
      %7188 = vmatpush1.msra.mxu0 0.0
      %7189 = vmatprep.subr.mxu0 0.0
      %7190 = vmatpush1.msra.mxu0 0.0
      %7191 = vmatprep.subr.mxu0 0.0
      %7192 = vmatpush1.msra.mxu0 0.0
      %7193 = vmatprep.subr.mxu0 0.0
      %7194 = vmatpush1.msra.mxu0 0.0
      %7195 = vmatprep.subr.mxu0 0.0
      %7196 = vmatpush1.msra.mxu0 0.0
      %7197 = vmatprep.subr.mxu0 0.0
      %7198 = vmatpush1.msra.mxu0 0.0
      %7199 = vmatprep.subr.mxu0 0.0
      %7200 = vmatpush1.msra.mxu0 0.0
      %7201 = vmatprep.subr.mxu0 0.0
      %7202 = vmatpush1.msra.mxu0 0.0
      %7203 = vmatprep.subr.mxu0 0.0
      %7204 = vmatpush1.msra.mxu0 0.0
      %7205 = vmatprep.subr.mxu0 0.0
      %7206 = vmatpush1.msra.mxu0 0.0
      %7207 = vmatprep.subr.mxu0 0.0
      %7208 = vmatpush1.msra.mxu0 0.0
      %7209 = vmatprep.subr.mxu0 0.0
      %7210 = vmatpush1.msra.mxu0 0.0
      %7211 = vmatprep.subr.mxu0 0.0
      %7212 = vmatpush1.msra.mxu0 0.0
      %7213 = vmatprep.subr.mxu0 0.0
      %7214 = vmatpush1.msra.mxu0 0.0
      %7215 = vmatprep.subr.mxu0 0.0
      %7216 = vmatpush1.msra.mxu0 0.0
      %7217 = vmatprep.subr.mxu0 0.0
      %7218 = vmatpush1.msra.mxu0 0.0
      %7219 = vmatprep.subr.mxu0 0.0
      %7220 = vmatpush1.msra.mxu0 0.0
      %7221 = vmatprep.subr.mxu0 0.0
      %7222 = vmatpush1.msra.mxu0 0.0
      %7223 = vmatprep.subr.mxu0 0.0
      %7224 = vmatpush1.msra.mxu0 0.0
      %7225 = vmatprep.subr.mxu0 0.0
      %7226 = vmatpush1.msra.mxu0 0.0
      %7227 = vmatprep.subr.mxu0 0.0
      %7228 = vmatpush1.msra.mxu0 0.0
      %7229 = vmatprep.subr.mxu0 0.0
      %7230 = vmatpush1.msra.mxu0 0.0
      %7231 = vmatprep.subr.mxu0 0.0
      %7232 = vmatpush1.msra.mxu0 0.0
      %7233 = vmatprep.subr.mxu0 0.0
      %7234 = vmatpush1.msra.mxu0 0.0
      %7235 = vmatprep.subr.mxu0 0.0
      %7236 = vmatpush1.msra.mxu0 0.0
      %7237 = vmatprep.subr.mxu0 0.0
      %7238 = vmatpush1.msra.mxu0 0.0
      %7239 = vmatprep.mubr.f32.mxu0 0.0
      %v7240 = vand.u32 %v6785, 4294901760
      %7241 = vmatmul.mubr.f32.gmra.mrb[0].mxu0 %v7240
      %v7242 = vpop.f32.mrb[0].mxu0
      %v7243 = vadd.f32 %v7170, %v7242
      %v7244 = vpop.f32.mrb[0].mxu0
      %7245 = vdwg.mxu0
      %v7246 = vmul.f32 %v6781, %v6781
      %v7247 = vsub.f32 %v7243, %v7246
      %v7248 = vadd.f32 %v7247, 1e-05
      %v7249 = vrsqrt.pop %v7248
      %v7251 = vrot.slane %v7249, 5
      %v7253 = vmul.f32 %v458, %v7251
      %v7255 = vrot.slane %v7253, 3
      %v7257 = vmul.f32 %v6781, %v7255
      %v7259 = vrot.slane %v7257, 5
      %v7261 = vsub.f32 %v459, %v7259
      %v7262 = vlaneseq
      %v7263 = vshrl.u32 %v7262, 7
      %v7264 = vsub.s32 3, %v7263
      %v7265 = vrot.slane %v7253, %v7264
      %v7266 = vmul.f32 %v6240, %v7265
      %v7267 = vmul.f32 %v6243, %v7265
      %v7268 = vmul.f32 %v6248, %v7265
      %v7269 = vmul.f32 %v6251, %v7265
      %v7270 = vmul.f32 %v6256, %v7265
      %v7271 = vmul.f32 %v6259, %v7265
      %v7272 = vmul.f32 %v6264, %v7265
      %v7273 = vmul.f32 %v6267, %v7265
      %v7274 = vlaneseq
      %v7275 = vshrl.u32 %v7274, 7
      %v7276 = vsub.s32 3, %v7275
      %v7277 = vrot.slane %v7261, %v7276
      %v7278 = vadd.f32 %v7266, %v7277
      %v7279 = vadd.f32 %v7267, %v7277
      %v7280 = vadd.f32 %v7268, %v7277
      %v7281 = vadd.f32 %v7269, %v7277
      %v7282 = vadd.f32 %v7270, %v7277
      %v7283 = vadd.f32 %v7271, %v7277
      %v7284 = vadd.f32 %v7272, %v7277
      %v7285 = vadd.f32 %v7273, %v7277
      %v7286 = vsub.f32 0.0, %v7278
      %v7287 = vsub.f32 0.0, %v7279
      %v7288 = vsub.f32 0.0, %v7280
      %v7289 = vsub.f32 0.0, %v7281
      %v7290 = vsub.f32 0.0, %v7282
      %v7291 = vsub.f32 0.0, %v7283
      %v7292 = vsub.f32 0.0, %v7284
      %v7293 = vsub.f32 0.0, %v7285
      %v7294 = vmul.f32 %v7286, 1.442695
      %v7295 = vpow.pop %v7294
      %v7296 = vmul.f32 %v7287, 1.442695
      %v7297 = vpow.pop %v7296
      %v7298 = vmul.f32 %v7288, 1.442695
      %v7299 = vpow.pop %v7298
      %v7300 = vmul.f32 %v7289, 1.442695
      %v7301 = vpow.pop %v7300
      %v7302 = vmul.f32 %v7290, 1.442695
      %v7303 = vpow.pop %v7302
      %v7304 = vmul.f32 %v7291, 1.442695
      %v7305 = vpow.pop %v7304
      %v7306 = vmul.f32 %v7292, 1.442695
      %v7307 = vpow.pop %v7306
      %v7308 = vmul.f32 %v7293, 1.442695
      %v7309 = vpow.pop %v7308
      %v7310 = vadd.f32 %v7295, 1.0
      %v7311 = vadd.f32 %v7297, 1.0
      %v7312 = vadd.f32 %v7299, 1.0
      %v7313 = vadd.f32 %v7301, 1.0
      %v7314 = vadd.f32 %v7303, 1.0
      %v7315 = vadd.f32 %v7305, 1.0
      %v7316 = vadd.f32 %v7307, 1.0
      %v7317 = vadd.f32 %v7309, 1.0
      %v7318 = vrcp.pop %v7310
      %v7319 = vrcp.pop %v7311
      %v7320 = vrcp.pop %v7312
      %v7321 = vrcp.pop %v7313
      %v7322 = vrcp.pop %v7314
      %v7323 = vrcp.pop %v7315
      %v7324 = vrcp.pop %v7316
      %v7325 = vrcp.pop %v7317
      %v7326 = vmul.f32 %v7278, %v7318
      %v7327 = vmul.f32 %v7279, %v7319
      %v7328 = vmul.f32 %v7280, %v7320
      %v7329 = vmul.f32 %v7281, %v7321
      %v7330 = vmul.f32 %v7282, %v7322
      %v7331 = vmul.f32 %v7283, %v7323
      %v7332 = vmul.f32 %v7284, %v7324
      %v7333 = vmul.f32 %v7285, %v7325
      %7335 = vrot.lane.b32.xlu0 %v2318, 112
      %v7336 = vpop.permute.xlu0 %7335
      %v7338 = vadd.f32 %v7326, %v7336
      %v7339 = vadd.f32 %v7327, %v7336
      %v7340 = vadd.f32 %v7328, %v7336
      %v7341 = vadd.f32 %v7329, %v7336
      %v7342 = vadd.f32 %v7330, %v7336
      %v7343 = vadd.f32 %v7331, %v7336
      %v7344 = vadd.f32 %v7332, %v7336
      %v7345 = vadd.f32 %v7333, %v7336
      %s7346 = scalar_lea.vmem %s2, 216
      %v7347 = vld [vmem:[%s7346] sm:$0xf]
      %v7348 = vld [vmem:[%s7346 + $0x4] sm:$0xf]
      %v7349 = vld [vmem:[%s7346 + $0x8] sm:$0xf]
      %v7350 = vld [vmem:[%s7346 + $0xc] sm:$0xf]
      %v7351 = vld [vmem:[%s7346 + $0x10] sm:$0xf]
      %v7352 = vld [vmem:[%s7346 + $0x14] sm:$0xf]
      %v7353 = vld [vmem:[%s7346 + $0x18] sm:$0xf]
      %v7354 = vld [vmem:[%s7346 + $0x1c] sm:$0xf]
      %v7355 = vld [vmem:[%s7346 + $0x20] sm:$0xf]
      %v7356 = vld [vmem:[%s7346 + $0x24] sm:$0xf]
      %v7357 = vld [vmem:[%s7346 + $0x28] sm:$0xf]
      %v7358 = vld [vmem:[%s7346 + $0x2c] sm:$0xf]
      %v7359 = vld [vmem:[%s7346 + $0x30] sm:$0xf]
      %v7360 = vld [vmem:[%s7346 + $0x34] sm:$0xf]
      %v7361 = vld [vmem:[%s7346 + $0x38] sm:$0xf]
      %v7362 = vld [vmem:[%s7346 + $0x3c] sm:$0xf]
      %v7363 = vld [vmem:[%s7346 + $0x40] sm:$0xf]
      %v7364 = vld [vmem:[%s7346 + $0x44] sm:$0xf]
      %v7372 = vrot.slane %v7338, 7
      %v7373 = vsel %vm730, %v731, %v7372
      %v7374 = vrot.slane %v7339, 7
      %v7375 = vsel %vm730, %v7372, %v7374
      %v7376 = vrot.slane %v7340, 7
      %v7377 = vsel %vm730, %v7374, %v7376
      %v7378 = vrot.slane %v7341, 7
      %v7379 = vsel %vm730, %v7376, %v7378
      %v7380 = vrot.slane %v7342, 7
      %v7381 = vsel %vm730, %v7378, %v7380
      %v7382 = vrot.slane %v7343, 7
      %v7383 = vsel %vm730, %v7380, %v7382
      %v7384 = vrot.slane %v7344, 7
      %v7385 = vsel %vm730, %v7382, %v7384
      %v7393 = vsel %vm715, %v7373, 0.0
      %v7394 = vsel %vm716, %v7375, 0.0
      %v7395 = vsel %vm717, %v7377, 0.0
      %v7396 = vsel %vm718, %v7379, 0.0
      %v7397 = vsel %vm719, %v7381, 0.0
      %v7398 = vsel %vm720, %v7383, 0.0
      %v7399 = vsel %vm721, %v7385, 0.0
      %v7401 = vrot.slane %v7338, 1
      %v7402 = vsel %vm780, %v781, %v7401
      %v7403 = vrot.slane %v7339, 1
      %v7404 = vsel %vm780, %v7401, %v7403
      %v7405 = vrot.slane %v7340, 1
      %v7406 = vsel %vm780, %v7403, %v7405
      %v7407 = vrot.slane %v7341, 1
      %v7408 = vsel %vm780, %v7405, %v7407
      %v7409 = vrot.slane %v7342, 1
      %v7410 = vsel %vm780, %v7407, %v7409
      %v7411 = vrot.slane %v7343, 1
      %v7412 = vsel %vm780, %v7409, %v7411
      %v7413 = vrot.slane %v7344, 1
      %v7414 = vsel %vm780, %v7411, %v7413
      %v7415 = vrot.slane %v7345, 1
      %v7416 = vsel %vm780, %v7413, %v7415
      %v7425 = vsel %vm771, %v7402, 0.0
      %v7426 = vsel %vm772, %v7404, 0.0
      %v7427 = vsel %vm773, %v7406, 0.0
      %v7428 = vsel %vm774, %v7408, 0.0
      %v7429 = vsel %vm775, %v7410, 0.0
      %v7430 = vsel %vm776, %v7412, 0.0
      %v7431 = vsel %vm777, %v7414, 0.0
      %v7432 = vsel %vm778, %v7416, 0.0
      %v7433 = vrot.slane %v7345, 7
      %v7434 = vsel %vm730, %v7384, %v7433
      %v7436 = vsel %vm714, %v7373, 0.0
      %v7437 = vsel %vm715, %v7375, 0.0
      %v7438 = vsel %vm716, %v7377, 0.0
      %v7439 = vsel %vm717, %v7379, 0.0
      %v7440 = vsel %vm718, %v7381, 0.0
      %v7441 = vsel %vm719, %v7383, 0.0
      %v7442 = vsel %vm720, %v7385, 0.0
      %v7443 = vsel %vm721, %v7434, 0.0
      %v7444 = vsel %vm780, %v7415, %v781
      %v7446 = vsel %vm771, %v7404, 0.0
      %v7447 = vsel %vm772, %v7406, 0.0
      %v7448 = vsel %vm773, %v7408, 0.0
      %v7449 = vsel %vm774, %v7410, 0.0
      %v7450 = vsel %vm775, %v7412, 0.0
      %v7451 = vsel %vm776, %v7414, 0.0
      %v7452 = vsel %vm777, %v7416, 0.0
      %v7453 = vsel %vm778, %v7444, 0.0
      %v7454 = vsel %vm730, %v7433, %v731
      %v7456 = vsel %vm714, %v7375, 0.0
      %v7457 = vsel %vm715, %v7377, 0.0
      %v7458 = vsel %vm716, %v7379, 0.0
      %v7459 = vsel %vm717, %v7381, 0.0
      %v7460 = vsel %vm718, %v7383, 0.0
      %v7461 = vsel %vm719, %v7385, 0.0
      %v7462 = vsel %vm720, %v7434, 0.0
      %v7463 = vsel %vm721, %v7454, 0.0
      %v7464 = vsel %vm771, %v7406, 0.0
      %v7465 = vsel %vm772, %v7408, 0.0
      %v7466 = vsel %vm773, %v7410, 0.0
      %v7467 = vsel %vm774, %v7412, 0.0
      %v7468 = vsel %vm775, %v7414, 0.0
      %v7469 = vsel %vm776, %v7416, 0.0
      %v7470 = vsel %vm777, %v7444, 0.0
      %7471 = vrot.lane.b32.xlu0 %v7338, 16
      %v7472 = vpop.permute.xlu0 %7471
      %7473 = vrot.lane.b32.xlu0 %v7339, 16
      %v7474 = vpop.permute.xlu0 %7473
      %7475 = vrot.lane.b32.xlu0 %v7340, 16
      %v7476 = vpop.permute.xlu0 %7475
      %7477 = vrot.lane.b32.xlu0 %v7341, 16
      %v7478 = vpop.permute.xlu0 %7477
      %7479 = vrot.lane.b32.xlu0 %v7342, 16
      %v7480 = vpop.permute.xlu0 %7479
      %7481 = vrot.lane.b32.xlu0 %v7343, 16
      %v7482 = vpop.permute.xlu0 %7481
      %7483 = vrot.lane.b32.xlu0 %v7344, 16
      %v7484 = vpop.permute.xlu0 %7483
      %7500 = vrot.lane.b32.xlu0 %v7425, 32
      %v7501 = vpop.permute.xlu0 %7500
      %7502 = vrot.lane.b32.xlu0 %v7426, 32
      %v7503 = vpop.permute.xlu0 %7502
      %7504 = vrot.lane.b32.xlu0 %v7427, 32
      %v7505 = vpop.permute.xlu0 %7504
      %7506 = vrot.lane.b32.xlu0 %v7428, 32
      %v7507 = vpop.permute.xlu0 %7506
      %7508 = vrot.lane.b32.xlu0 %v7429, 32
      %v7509 = vpop.permute.xlu0 %7508
      %7510 = vrot.lane.b32.xlu0 %v7430, 32
      %v7511 = vpop.permute.xlu0 %7510
      %7512 = vrot.lane.b32.xlu0 %v7431, 32
      %v7513 = vpop.permute.xlu0 %7512
      %7514 = vrot.lane.b32.xlu0 %v7432, 32
      %v7515 = vpop.permute.xlu0 %7514
      %7532 = vrot.lane.b32.xlu0 %v7436, 48
      %v7533 = vpop.permute.xlu0 %7532
      %7534 = vrot.lane.b32.xlu0 %v7437, 48
      %v7535 = vpop.permute.xlu0 %7534
      %7536 = vrot.lane.b32.xlu0 %v7438, 48
      %v7537 = vpop.permute.xlu0 %7536
      %7538 = vrot.lane.b32.xlu0 %v7439, 48
      %v7539 = vpop.permute.xlu0 %7538
      %7540 = vrot.lane.b32.xlu0 %v7440, 48
      %v7541 = vpop.permute.xlu0 %7540
      %7542 = vrot.lane.b32.xlu0 %v7441, 48
      %v7543 = vpop.permute.xlu0 %7542
      %7544 = vrot.lane.b32.xlu0 %v7442, 48
      %v7545 = vpop.permute.xlu0 %7544
      %7546 = vrot.lane.b32.xlu0 %v7443, 48
      %v7547 = vpop.permute.xlu0 %7546
      %7556 = vrot.lane.b32.xlu0 %v7338, 64
      %v7557 = vpop.permute.xlu0 %7556
      %7558 = vrot.lane.b32.xlu0 %v7339, 64
      %v7559 = vpop.permute.xlu0 %7558
      %7560 = vrot.lane.b32.xlu0 %v7340, 64
      %v7561 = vpop.permute.xlu0 %7560
      %7562 = vrot.lane.b32.xlu0 %v7341, 64
      %v7563 = vpop.permute.xlu0 %7562
      %7564 = vrot.lane.b32.xlu0 %v7342, 64
      %v7565 = vpop.permute.xlu0 %7564
      %7566 = vrot.lane.b32.xlu0 %v7343, 64
      %v7567 = vpop.permute.xlu0 %7566
      %7568 = vrot.lane.b32.xlu0 %v7344, 64
      %v7569 = vpop.permute.xlu0 %7568
      %7570 = vrot.lane.b32.xlu0 %v7345, 64
      %v7571 = vpop.permute.xlu0 %7570
      %7588 = vrot.lane.b32.xlu0 %v7446, 80
      %v7589 = vpop.permute.xlu0 %7588
      %7590 = vrot.lane.b32.xlu0 %v7447, 80
      %v7591 = vpop.permute.xlu0 %7590
      %7592 = vrot.lane.b32.xlu0 %v7448, 80
      %v7593 = vpop.permute.xlu0 %7592
      %7594 = vrot.lane.b32.xlu0 %v7449, 80
      %v7595 = vpop.permute.xlu0 %7594
      %7596 = vrot.lane.b32.xlu0 %v7450, 80
      %v7597 = vpop.permute.xlu0 %7596
      %7598 = vrot.lane.b32.xlu0 %v7451, 80
      %v7599 = vpop.permute.xlu0 %7598
      %7600 = vrot.lane.b32.xlu0 %v7452, 80
      %v7601 = vpop.permute.xlu0 %7600
      %7602 = vrot.lane.b32.xlu0 %v7453, 80
      %v7603 = vpop.permute.xlu0 %7602
      %7620 = vrot.lane.b32.xlu0 %v7456, 96
      %v7621 = vpop.permute.xlu0 %7620
      %7622 = vrot.lane.b32.xlu0 %v7457, 96
      %v7623 = vpop.permute.xlu0 %7622
      %7624 = vrot.lane.b32.xlu0 %v7458, 96
      %v7625 = vpop.permute.xlu0 %7624
      %7626 = vrot.lane.b32.xlu0 %v7459, 96
      %v7627 = vpop.permute.xlu0 %7626
      %7628 = vrot.lane.b32.xlu0 %v7460, 96
      %v7629 = vpop.permute.xlu0 %7628
      %7630 = vrot.lane.b32.xlu0 %v7461, 96
      %v7631 = vpop.permute.xlu0 %7630
      %7632 = vrot.lane.b32.xlu0 %v7462, 96
      %v7633 = vpop.permute.xlu0 %7632
      %7634 = vrot.lane.b32.xlu0 %v7463, 96
      %v7635 = vpop.permute.xlu0 %7634
      %7644 = vrot.lane.b32.xlu0 %v7339, 112
      %v7645 = vpop.permute.xlu0 %7644
      %7646 = vrot.lane.b32.xlu0 %v7340, 112
      %v7647 = vpop.permute.xlu0 %7646
      %7648 = vrot.lane.b32.xlu0 %v7341, 112
      %v7649 = vpop.permute.xlu0 %7648
      %7650 = vrot.lane.b32.xlu0 %v7342, 112
      %v7651 = vpop.permute.xlu0 %7650
      %7652 = vrot.lane.b32.xlu0 %v7343, 112
      %v7653 = vpop.permute.xlu0 %7652
      %7654 = vrot.lane.b32.xlu0 %v7344, 112
      %v7655 = vpop.permute.xlu0 %7654
      %7656 = vrot.lane.b32.xlu0 %v7345, 112
      %v7657 = vpop.permute.xlu0 %7656
      %v7665 = vsel %vm1055, %v7393, %v7472
      %v7666 = vsel %vm1055, %v7394, %v7474
      %v7667 = vsel %vm1055, %v7395, %v7476
      %v7668 = vsel %vm1055, %v7396, %v7478
      %v7669 = vsel %vm1055, %v7397, %v7480
      %v7670 = vsel %vm1055, %v7398, %v7482
      %v7671 = vsel %vm1055, %v7399, %v7484
      %v7672 = vsel %vm610, %v1056, %v7501
      %v7673 = vsel %vm610, %v7665, %v7503
      %v7674 = vsel %vm610, %v7666, %v7505
      %v7675 = vsel %vm610, %v7667, %v7507
      %v7676 = vsel %vm610, %v7668, %v7509
      %v7677 = vsel %vm610, %v7669, %v7511
      %v7678 = vsel %vm610, %v7670, %v7513
      %v7679 = vsel %vm610, %v7671, %v7515
      %v7680 = vsel %vm1072, %v7672, %v7533
      %v7681 = vsel %vm1072, %v7673, %v7535
      %v7682 = vsel %vm1072, %v7674, %v7537
      %v7683 = vsel %vm1072, %v7675, %v7539
      %v7684 = vsel %vm1072, %v7676, %v7541
      %v7685 = vsel %vm1072, %v7677, %v7543
      %v7686 = vsel %vm1072, %v7678, %v7545
      %v7687 = vsel %vm1072, %v7679, %v7547
      %v7688 = vsel %vm1081, %v7680, %v7557
      %v7689 = vsel %vm1081, %v7681, %v7559
      %v7690 = vsel %vm1081, %v7682, %v7561
      %v7691 = vsel %vm1081, %v7683, %v7563
      %v7692 = vsel %vm1081, %v7684, %v7565
      %v7693 = vsel %vm1081, %v7685, %v7567
      %v7694 = vsel %vm1081, %v7686, %v7569
      %v7695 = vsel %vm1081, %v7687, %v7571
      %v7696 = vsel %vm1090, %v7688, %v7589
      %v7697 = vsel %vm1090, %v7689, %v7591
      %v7698 = vsel %vm1090, %v7690, %v7593
      %v7699 = vsel %vm1090, %v7691, %v7595
      %v7700 = vsel %vm1090, %v7692, %v7597
      %v7701 = vsel %vm1090, %v7693, %v7599
      %v7702 = vsel %vm1090, %v7694, %v7601
      %v7703 = vsel %vm1090, %v7695, %v7603
      %v7704 = vsel %vm1099, %v7696, %v7621
      %v7705 = vsel %vm1099, %v7697, %v7623
      %v7706 = vsel %vm1099, %v7698, %v7625
      %v7707 = vsel %vm1099, %v7699, %v7627
      %v7708 = vsel %vm1099, %v7700, %v7629
      %v7709 = vsel %vm1099, %v7701, %v7631
      %v7710 = vsel %vm1099, %v7702, %v7633
      %v7711 = vsel %vm1099, %v7703, %v7635
      %v7712 = vsel %vm1108, %v7704, %v7645
      %v7713 = vsel %vm1108, %v7705, %v7647
      %v7714 = vsel %vm1108, %v7706, %v7649
      %v7715 = vsel %vm1108, %v7707, %v7651
      %v7716 = vsel %vm1108, %v7708, %v7653
      %v7717 = vsel %vm1108, %v7709, %v7655
      %v7718 = vsel %vm1108, %v7710, %v7657
      %v7719 = vsel %vm1108, %v7711, %v1046
      %v7720 = vpack.c.bf16 %v7713, %v7712
      %v7721 = vpack.c.bf16 %v7465, %v7464
      %v7722 = vpack.c.bf16 %v7715, %v7714
      %v7723 = vpack.c.bf16 %v7467, %v7466
      %v7724 = vpack.c.bf16 %v7717, %v7716
      %v7725 = vpack.c.bf16 %v7469, %v7468
      %v7726 = vpack.c.bf16 %v7719, %v7718
      %v7727 = vpack.c.bf16 %v854, %v7470
      %v7728 = vlaneseq
      %v7729 = vshrl.u32 %v7728, 7
      %v7730 = vsub.s32 3, %v7729
      %v7731 = vrot.slane %v460, %v7730
      %v7750 = vunpack.c.l.b16 %v7347
      %v7751 = vunpack.c.l.b16 %v7348
      %v7752 = vunpack.c.l.b16 %v7349
      %v7753 = vunpack.c.l.b16 %v7350
      %v7754 = vunpack.c.l.b16 %v7351
      %v7755 = vunpack.c.l.b16 %v7352
      %v7756 = vunpack.c.l.b16 %v7353
      %v7757 = vunpack.c.l.b16 %v7354
      %v7758 = vunpack.c.l.b16 %v7355
      %v7759 = vunpack.c.l.b16 %v7356
      %v7760 = vunpack.c.l.b16 %v7357
      %v7761 = vunpack.c.l.b16 %v7358
      %v7762 = vunpack.c.l.b16 %v7359
      %v7763 = vunpack.c.l.b16 %v7360
      %v7764 = vunpack.c.l.b16 %v7361
      %v7765 = vunpack.c.l.b16 %v7362
      %v7766 = vunpack.c.l.b16 %v7363
      %v7767 = vunpack.c.l.b16 %v7364
      %v7768 = vpack.c.b16 %v7751, %v7750
      %v7769 = vpack.c.b16 %v7753, %v7752
      %v7770 = vpack.c.b16 %v7755, %v7754
      %v7771 = vpack.c.b16 %v7757, %v7756
      %v7772 = vpack.c.b16 %v7759, %v7758
      %v7773 = vpack.c.b16 %v7761, %v7760
      %v7774 = vpack.c.b16 %v7763, %v7762
      %v7775 = vpack.c.b16 %v7765, %v7764
      %v7776 = vpack.c.b16 %v7767, %v7766
      %v7787 = vsel %vm1055, %v7721, 0
      %v7790 = vsel %vm1055, %v7723, 0
      %v7793 = vsel %vm1055, %v7725, 0
      %v7796 = vsel %vm1055, %v7727, 0
      %7798 = vmatprep.subr.bf16.mxu0 0
      %7799 = vmatpush1.bf16.msra.mxu0 %v7768
      %7800 = vmatprep.subr.bf16.mxu0 0
      %7801 = vmatpush1.bf16.msra.mxu0 %v7769
      %7802 = vmatprep.subr.bf16.mxu0 0
      %7803 = vmatpush1.bf16.msra.mxu0 %v7770
      %7804 = vmatprep.subr.bf16.mxu0 0
      %7805 = vmatpush1.bf16.msra.mxu0 %v7771
      %7806 = vmatprep.subr.bf16.mxu0 0
      %7807 = vmatpush1.bf16.msra.mxu0 %v7772
      %7808 = vmatprep.subr.bf16.mxu0 0
      %7809 = vmatpush1.bf16.msra.mxu0 %v7773
      %7810 = vmatprep.subr.bf16.mxu0 0
      %7811 = vmatpush1.bf16.msra.mxu0 %v7774
      %7812 = vmatprep.subr.bf16.mxu0 0
      %7813 = vmatpush1.bf16.msra.mxu0 %v7775
      %7814 = vmatprep.subr.bf16.mxu0 0
      %7815 = vmatpush1.bf16.msra.mxu0 %v7776
      %7816 = vmatprep.subr.bf16.mxu0 0
      %7817 = vmatpush1.bf16.msra.mxu0 0
      %7818 = vmatprep.subr.bf16.mxu0 0
      %7819 = vmatpush1.bf16.msra.mxu0 0
      %7820 = vmatprep.subr.bf16.mxu0 0
      %7821 = vmatpush1.bf16.msra.mxu0 0
      %7822 = vmatprep.subr.bf16.mxu0 0
      %7823 = vmatpush1.bf16.msra.mxu0 0
      %7824 = vmatprep.subr.bf16.mxu0 0
      %7825 = vmatpush1.bf16.msra.mxu0 0
      %7826 = vmatprep.subr.bf16.mxu0 0
      %7827 = vmatpush1.bf16.msra.mxu0 0
      %7828 = vmatprep.subr.bf16.mxu0 0
      %7829 = vmatpush1.bf16.msra.mxu0 0
      %7830 = vmatprep.mubr.bf16.mxu0 %v7787
      %7831 = vmatmul.mubr.bf16.gmra.mrb[0].mxu0 %v7720
      %v7832 = vpop.f32.mrb[0].mxu0
      %v7833 = vadd.f32 %v7731, %v7832
      %v7834 = vpop.f32.mrb[0].mxu0
      %v7835 = vpop.f32.mrb[0].mxu0
      %v7836 = vadd.f32 %v7731, %v7835
      %v7837 = vpop.f32.mrb[0].mxu0
      %7838 = vmatprep.mubr.bf16.mxu0 %v7790
      %7839 = vmatmul.mubr.bf16.gmra.mrb[0].mxu0 %v7722
      %v7840 = vpop.f32.mrb[0].mxu0
      %v7841 = vadd.f32 %v7731, %v7840
      %v7842 = vpop.f32.mrb[0].mxu0
      %v7843 = vpop.f32.mrb[0].mxu0
      %v7844 = vadd.f32 %v7731, %v7843
      %v7845 = vpop.f32.mrb[0].mxu0
      %7846 = vmatprep.mubr.bf16.mxu0 %v7793
      %7847 = vmatmul.mubr.bf16.gmra.mrb[0].mxu0 %v7724
      %v7848 = vpop.f32.mrb[0].mxu0
      %v7849 = vadd.f32 %v7731, %v7848
      %v7850 = vpop.f32.mrb[0].mxu0
      %v7851 = vpop.f32.mrb[0].mxu0
      %v7852 = vadd.f32 %v7731, %v7851
      %v7853 = vpop.f32.mrb[0].mxu0
      %7854 = vmatprep.mubr.bf16.mxu0 %v7796
      %7855 = vmatmul.mubr.bf16.gmra.mrb[0].mxu0 %v7726
      %v7856 = vpop.f32.mrb[0].mxu0
      %v7857 = vadd.f32 %v7731, %v7856
      %v7858 = vpop.f32.mrb[0].mxu0
      %v7859 = vpop.f32.mrb[0].mxu0
      %v7860 = vadd.f32 %v7731, %v7859
      %v7861 = vpop.f32.mrb[0].mxu0
      %7862 = vdwg.mxu0
      %v7863 = vsel %vm1055, %v7833, 0.0
      %v7864 = vsel %vm1055, %v7836, 0.0
      %v7865 = vadd.f32 %v7863, %v7864
      %v7866 = vsel %vm1055, %v7841, 0.0
      %v7867 = vadd.f32 %v7865, %v7866
      %v7868 = vsel %vm1055, %v7844, 0.0
      %v7869 = vadd.f32 %v7867, %v7868
      %v7870 = vsel %vm1055, %v7849, 0.0
      %v7871 = vadd.f32 %v7869, %v7870
      %v7872 = vsel %vm1055, %v7852, 0.0
      %v7873 = vadd.f32 %v7871, %v7872
      %v7874 = vsel %vm1055, %v7857, 0.0
      %v7875 = vadd.f32 %v7873, %v7874
      %v7876 = vsel %vm1055, %v7860, 0.0
      %v7877 = vadd.f32 %v7875, %v7876
      %v7878 = vrot.slane %v7877, 4
      %v7879 = vadd.f32 %v7877, %v7878
      %v7880 = vrot.slane %v7879, 2
      %v7881 = vadd.f32 %v7879, %v7880
      %v7882 = vrot.slane %v7881, 1
      %v7883 = vadd.f32 %v7881, %v7882
      %v7884 = vmul.f32 %v7883, 0.015625
      %v7885 = vmul.f32 %v7833, %v7833
      %v7886 = vmul.f32 %v7836, %v7836
      %v7887 = vmul.f32 %v7841, %v7841
      %v7888 = vmul.f32 %v7844, %v7844
      %v7889 = vmul.f32 %v7849, %v7849
      %v7890 = vmul.f32 %v7852, %v7852
      %v7891 = vmul.f32 %v7857, %v7857
      %v7892 = vmul.f32 %v7860, %v7860
      %v7893 = vsel %vm1055, %v7885, 0.0
      %v7894 = vsel %vm1055, %v7886, 0.0
      %v7895 = vadd.f32 %v7893, %v7894
      %v7896 = vsel %vm1055, %v7887, 0.0
      %v7897 = vadd.f32 %v7895, %v7896
      %v7898 = vsel %vm1055, %v7888, 0.0
      %v7899 = vadd.f32 %v7897, %v7898
      %v7900 = vsel %vm1055, %v7889, 0.0
      %v7901 = vadd.f32 %v7899, %v7900
      %v7902 = vsel %vm1055, %v7890, 0.0
      %v7903 = vadd.f32 %v7901, %v7902
      %v7904 = vsel %vm1055, %v7891, 0.0
      %v7905 = vadd.f32 %v7903, %v7904
      %v7906 = vsel %vm1055, %v7892, 0.0
      %v7907 = vadd.f32 %v7905, %v7906
      %v7908 = vrot.slane %v7907, 4
      %v7909 = vadd.f32 %v7907, %v7908
      %v7910 = vrot.slane %v7909, 2
      %v7911 = vadd.f32 %v7909, %v7910
      %v7912 = vrot.slane %v7911, 1
      %v7913 = vadd.f32 %v7911, %v7912
      %v7914 = vmul.f32 %v7913, 0.015625
      %v7916 = vsel %vm1055, %v7884, 0
      %7918 = vmatprep.subr.mxu0 0.0
      %v7919 = vand.u32 %v456, 4294901760
      %7920 = vmatpush1.msra.mxu0 %v7919
      %7921 = vmatprep.subr.mxu0 0.0
      %v7922 = vand.u32 %v457, 4294901760
      %7923 = vmatpush1.msra.mxu0 %v7922
      %7924 = vmatprep.subr.mxu0 0.0
      %7925 = vmatpush1.msra.mxu0 0.0
      %7926 = vmatprep.subr.mxu0 0.0
      %7927 = vmatpush1.msra.mxu0 0.0
      %7928 = vmatprep.subr.mxu0 0.0
      %7929 = vmatpush1.msra.mxu0 0.0
      %7930 = vmatprep.subr.mxu0 0.0
      %7931 = vmatpush1.msra.mxu0 0.0
      %7932 = vmatprep.subr.mxu0 0.0
      %7933 = vmatpush1.msra.mxu0 0.0
      %7934 = vmatprep.subr.mxu0 0.0
      %7935 = vmatpush1.msra.mxu0 0.0
      %7936 = vmatprep.subr.mxu0 0.0
      %7937 = vmatpush1.msra.mxu0 0.0
      %7938 = vmatprep.subr.mxu0 0.0
      %7939 = vmatpush1.msra.mxu0 0.0
      %7940 = vmatprep.subr.mxu0 0.0
      %7941 = vmatpush1.msra.mxu0 0.0
      %7942 = vmatprep.subr.mxu0 0.0
      %7943 = vmatpush1.msra.mxu0 0.0
      %7944 = vmatprep.subr.mxu0 0.0
      %7945 = vmatpush1.msra.mxu0 0.0
      %7946 = vmatprep.subr.mxu0 0.0
      %7947 = vmatpush1.msra.mxu0 0.0
      %7948 = vmatprep.subr.mxu0 0.0
      %7949 = vmatpush1.msra.mxu0 0.0
      %7950 = vmatprep.subr.mxu0 0.0
      %7951 = vmatpush1.msra.mxu0 0.0
      %7952 = vmatprep.subr.mxu0 0.0
      %7953 = vmatpush1.msra.mxu0 0.0
      %7954 = vmatprep.subr.mxu0 0.0
      %7955 = vmatpush1.msra.mxu0 0.0
      %7956 = vmatprep.subr.mxu0 0.0
      %7957 = vmatpush1.msra.mxu0 0.0
      %7958 = vmatprep.subr.mxu0 0.0
      %7959 = vmatpush1.msra.mxu0 0.0
      %7960 = vmatprep.subr.mxu0 0.0
      %7961 = vmatpush1.msra.mxu0 0.0
      %7962 = vmatprep.subr.mxu0 0.0
      %7963 = vmatpush1.msra.mxu0 0.0
      %7964 = vmatprep.subr.mxu0 0.0
      %7965 = vmatpush1.msra.mxu0 0.0
      %7966 = vmatprep.subr.mxu0 0.0
      %7967 = vmatpush1.msra.mxu0 0.0
      %7968 = vmatprep.subr.mxu0 0.0
      %7969 = vmatpush1.msra.mxu0 0.0
      %7970 = vmatprep.subr.mxu0 0.0
      %7971 = vmatpush1.msra.mxu0 0.0
      %7972 = vmatprep.subr.mxu0 0.0
      %7973 = vmatpush1.msra.mxu0 0.0
      %7974 = vmatprep.subr.mxu0 0.0
      %7975 = vmatpush1.msra.mxu0 0.0
      %7976 = vmatprep.subr.mxu0 0.0
      %7977 = vmatpush1.msra.mxu0 0.0
      %7978 = vmatprep.subr.mxu0 0.0
      %7979 = vmatpush1.msra.mxu0 0.0
      %7980 = vmatprep.subr.mxu0 0.0
      %7981 = vmatpush1.msra.mxu0 0.0
      %7982 = vmatprep.subr.mxu0 0.0
      %7983 = vmatpush1.msra.mxu0 0.0
      %7984 = vmatprep.mubr.f32.mxu0 0.0
      %v7985 = vand.u32 %v7916, 4294901760
      %v7986 = vsub.f32 %v7916, %v7985
      %v7987 = vand.u32 %v7986, 4294901760
      %v7988 = vsub.f32 %v7986, %v7987
      %v7989 = vand.u32 %v7988, 4294901760
      %7990 = vmatmul.mubr.f32.gmra.mrb[0].mxu0 %v7989
      %v7991 = vpop.f32.mrb[0].mxu0
      %v7992 = vadd.f32 0.0, %v7991
      %v7993 = vpop.f32.mrb[0].mxu0
      %7994 = vdwg.mxu0
      %7995 = vmatprep.subr.mxu0 0.0
      %v7996 = vand.u32 %v456, 4294901760
      %v7997 = vsub.f32 %v456, %v7996
      %v7998 = vand.u32 %v7997, 4294901760
      %v7999 = vsub.f32 %v7997, %v7998
      %v8000 = vand.u32 %v7999, 4294901760
      %8001 = vmatpush1.msra.mxu0 %v8000
      %8002 = vmatprep.subr.mxu0 0.0
      %v8003 = vand.u32 %v457, 4294901760
      %v8004 = vsub.f32 %v457, %v8003
      %v8005 = vand.u32 %v8004, 4294901760
      %v8006 = vsub.f32 %v8004, %v8005
      %v8007 = vand.u32 %v8006, 4294901760
      %8008 = vmatpush1.msra.mxu0 %v8007
      %8009 = vmatprep.subr.mxu0 0.0
      %8010 = vmatpush1.msra.mxu0 0.0
      %8011 = vmatprep.subr.mxu0 0.0
      %8012 = vmatpush1.msra.mxu0 0.0
      %8013 = vmatprep.subr.mxu0 0.0
      %8014 = vmatpush1.msra.mxu0 0.0
      %8015 = vmatprep.subr.mxu0 0.0
      %8016 = vmatpush1.msra.mxu0 0.0
      %8017 = vmatprep.subr.mxu0 0.0
      %8018 = vmatpush1.msra.mxu0 0.0
      %8019 = vmatprep.subr.mxu0 0.0
      %8020 = vmatpush1.msra.mxu0 0.0
      %8021 = vmatprep.subr.mxu0 0.0
      %8022 = vmatpush1.msra.mxu0 0.0
      %8023 = vmatprep.subr.mxu0 0.0
      %8024 = vmatpush1.msra.mxu0 0.0
      %8025 = vmatprep.subr.mxu0 0.0
      %8026 = vmatpush1.msra.mxu0 0.0
      %8027 = vmatprep.subr.mxu0 0.0
      %8028 = vmatpush1.msra.mxu0 0.0
      %8029 = vmatprep.subr.mxu0 0.0
      %8030 = vmatpush1.msra.mxu0 0.0
      %8031 = vmatprep.subr.mxu0 0.0
      %8032 = vmatpush1.msra.mxu0 0.0
      %8033 = vmatprep.subr.mxu0 0.0
      %8034 = vmatpush1.msra.mxu0 0.0
      %8035 = vmatprep.subr.mxu0 0.0
      %8036 = vmatpush1.msra.mxu0 0.0
      %8037 = vmatprep.subr.mxu0 0.0
      %8038 = vmatpush1.msra.mxu0 0.0
      %8039 = vmatprep.subr.mxu0 0.0
      %8040 = vmatpush1.msra.mxu0 0.0
      %8041 = vmatprep.subr.mxu0 0.0
      %8042 = vmatpush1.msra.mxu0 0.0
      %8043 = vmatprep.subr.mxu0 0.0
      %8044 = vmatpush1.msra.mxu0 0.0
      %8045 = vmatprep.subr.mxu0 0.0
      %8046 = vmatpush1.msra.mxu0 0.0
      %8047 = vmatprep.subr.mxu0 0.0
      %8048 = vmatpush1.msra.mxu0 0.0
      %8049 = vmatprep.subr.mxu0 0.0
      %8050 = vmatpush1.msra.mxu0 0.0
      %8051 = vmatprep.subr.mxu0 0.0
      %8052 = vmatpush1.msra.mxu0 0.0
      %8053 = vmatprep.subr.mxu0 0.0
      %8054 = vmatpush1.msra.mxu0 0.0
      %8055 = vmatprep.subr.mxu0 0.0
      %8056 = vmatpush1.msra.mxu0 0.0
      %8057 = vmatprep.subr.mxu0 0.0
      %8058 = vmatpush1.msra.mxu0 0.0
      %8059 = vmatprep.subr.mxu0 0.0
      %8060 = vmatpush1.msra.mxu0 0.0
      %8061 = vmatprep.subr.mxu0 0.0
      %8062 = vmatpush1.msra.mxu0 0.0
      %8063 = vmatprep.subr.mxu0 0.0
      %8064 = vmatpush1.msra.mxu0 0.0
      %8065 = vmatprep.subr.mxu0 0.0
      %8066 = vmatpush1.msra.mxu0 0.0
      %8067 = vmatprep.subr.mxu0 0.0
      %8068 = vmatpush1.msra.mxu0 0.0
      %8069 = vmatprep.mubr.f32.mxu0 0.0
      %v8070 = vand.u32 %v7916, 4294901760
      %8071 = vmatmul.mubr.f32.gmra.mrb[0].mxu0 %v8070
      %v8072 = vpop.f32.mrb[0].mxu0
      %v8073 = vadd.f32 %v7992, %v8072
      %v8074 = vpop.f32.mrb[0].mxu0
      %8075 = vdwg.mxu0
      %8076 = vmatprep.subr.mxu0 0.0
      %v8077 = vand.u32 %v456, 4294901760
      %v8078 = vsub.f32 %v456, %v8077
      %8079 = vmatpush1.msra.mxu0 %v8078
      %8080 = vmatprep.subr.mxu0 0.0
      %v8081 = vand.u32 %v457, 4294901760
      %v8082 = vsub.f32 %v457, %v8081
      %8083 = vmatpush1.msra.mxu0 %v8082
      %8084 = vmatprep.subr.mxu0 0.0
      %8085 = vmatpush1.msra.mxu0 0.0
      %8086 = vmatprep.subr.mxu0 0.0
      %8087 = vmatpush1.msra.mxu0 0.0
      %8088 = vmatprep.subr.mxu0 0.0
      %8089 = vmatpush1.msra.mxu0 0.0
      %8090 = vmatprep.subr.mxu0 0.0
      %8091 = vmatpush1.msra.mxu0 0.0
      %8092 = vmatprep.subr.mxu0 0.0
      %8093 = vmatpush1.msra.mxu0 0.0
      %8094 = vmatprep.subr.mxu0 0.0
      %8095 = vmatpush1.msra.mxu0 0.0
      %8096 = vmatprep.subr.mxu0 0.0
      %8097 = vmatpush1.msra.mxu0 0.0
      %8098 = vmatprep.subr.mxu0 0.0
      %8099 = vmatpush1.msra.mxu0 0.0
      %8100 = vmatprep.subr.mxu0 0.0
      %8101 = vmatpush1.msra.mxu0 0.0
      %8102 = vmatprep.subr.mxu0 0.0
      %8103 = vmatpush1.msra.mxu0 0.0
      %8104 = vmatprep.subr.mxu0 0.0
      %8105 = vmatpush1.msra.mxu0 0.0
      %8106 = vmatprep.subr.mxu0 0.0
      %8107 = vmatpush1.msra.mxu0 0.0
      %8108 = vmatprep.subr.mxu0 0.0
      %8109 = vmatpush1.msra.mxu0 0.0
      %8110 = vmatprep.subr.mxu0 0.0
      %8111 = vmatpush1.msra.mxu0 0.0
      %8112 = vmatprep.subr.mxu0 0.0
      %8113 = vmatpush1.msra.mxu0 0.0
      %8114 = vmatprep.subr.mxu0 0.0
      %8115 = vmatpush1.msra.mxu0 0.0
      %8116 = vmatprep.subr.mxu0 0.0
      %8117 = vmatpush1.msra.mxu0 0.0
      %8118 = vmatprep.subr.mxu0 0.0
      %8119 = vmatpush1.msra.mxu0 0.0
      %8120 = vmatprep.subr.mxu0 0.0
      %8121 = vmatpush1.msra.mxu0 0.0
      %8122 = vmatprep.subr.mxu0 0.0
      %8123 = vmatpush1.msra.mxu0 0.0
      %8124 = vmatprep.subr.mxu0 0.0
      %8125 = vmatpush1.msra.mxu0 0.0
      %8126 = vmatprep.subr.mxu0 0.0
      %8127 = vmatpush1.msra.mxu0 0.0
      %8128 = vmatprep.subr.mxu0 0.0
      %8129 = vmatpush1.msra.mxu0 0.0
      %8130 = vmatprep.subr.mxu0 0.0
      %8131 = vmatpush1.msra.mxu0 0.0
      %8132 = vmatprep.subr.mxu0 0.0
      %8133 = vmatpush1.msra.mxu0 0.0
      %8134 = vmatprep.subr.mxu0 0.0
      %8135 = vmatpush1.msra.mxu0 0.0
      %8136 = vmatprep.subr.mxu0 0.0
      %8137 = vmatpush1.msra.mxu0 0.0
      %8138 = vmatprep.subr.mxu0 0.0
      %8139 = vmatpush1.msra.mxu0 0.0
      %8140 = vmatprep.subr.mxu0 0.0
      %8141 = vmatpush1.msra.mxu0 0.0
      %8142 = vmatprep.subr.mxu0 0.0
      %8143 = vmatpush1.msra.mxu0 0.0
      %8144 = vmatprep.mubr.f32.mxu0 0.0
      %v8145 = vand.u32 %v7916, 4294901760
      %v8146 = vsub.f32 %v7916, %v8145
      %8147 = vmatmul.mubr.f32.gmra.mrb[0].mxu0 %v8146
      %v8148 = vpop.f32.mrb[0].mxu0
      %v8149 = vadd.f32 %v8073, %v8148
      %v8150 = vpop.f32.mrb[0].mxu0
      %8151 = vdwg.mxu0
      %8152 = vmatprep.subr.mxu0 0.0
      %v8153 = vand.u32 %v456, 4294901760
      %8154 = vmatpush1.msra.mxu0 %v8153
      %8155 = vmatprep.subr.mxu0 0.0
      %v8156 = vand.u32 %v457, 4294901760
      %8157 = vmatpush1.msra.mxu0 %v8156
      %8158 = vmatprep.subr.mxu0 0.0
      %8159 = vmatpush1.msra.mxu0 0.0
      %8160 = vmatprep.subr.mxu0 0.0
      %8161 = vmatpush1.msra.mxu0 0.0
      %8162 = vmatprep.subr.mxu0 0.0
      %8163 = vmatpush1.msra.mxu0 0.0
      %8164 = vmatprep.subr.mxu0 0.0
      %8165 = vmatpush1.msra.mxu0 0.0
      %8166 = vmatprep.subr.mxu0 0.0
      %8167 = vmatpush1.msra.mxu0 0.0
      %8168 = vmatprep.subr.mxu0 0.0
      %8169 = vmatpush1.msra.mxu0 0.0
      %8170 = vmatprep.subr.mxu0 0.0
      %8171 = vmatpush1.msra.mxu0 0.0
      %8172 = vmatprep.subr.mxu0 0.0
      %8173 = vmatpush1.msra.mxu0 0.0
      %8174 = vmatprep.subr.mxu0 0.0
      %8175 = vmatpush1.msra.mxu0 0.0
      %8176 = vmatprep.subr.mxu0 0.0
      %8177 = vmatpush1.msra.mxu0 0.0
      %8178 = vmatprep.subr.mxu0 0.0
      %8179 = vmatpush1.msra.mxu0 0.0
      %8180 = vmatprep.subr.mxu0 0.0
      %8181 = vmatpush1.msra.mxu0 0.0
      %8182 = vmatprep.subr.mxu0 0.0
      %8183 = vmatpush1.msra.mxu0 0.0
      %8184 = vmatprep.subr.mxu0 0.0
      %8185 = vmatpush1.msra.mxu0 0.0
      %8186 = vmatprep.subr.mxu0 0.0
      %8187 = vmatpush1.msra.mxu0 0.0
      %8188 = vmatprep.subr.mxu0 0.0
      %8189 = vmatpush1.msra.mxu0 0.0
      %8190 = vmatprep.subr.mxu0 0.0
      %8191 = vmatpush1.msra.mxu0 0.0
      %8192 = vmatprep.subr.mxu0 0.0
      %8193 = vmatpush1.msra.mxu0 0.0
      %8194 = vmatprep.subr.mxu0 0.0
      %8195 = vmatpush1.msra.mxu0 0.0
      %8196 = vmatprep.subr.mxu0 0.0
      %8197 = vmatpush1.msra.mxu0 0.0
      %8198 = vmatprep.subr.mxu0 0.0
      %8199 = vmatpush1.msra.mxu0 0.0
      %8200 = vmatprep.subr.mxu0 0.0
      %8201 = vmatpush1.msra.mxu0 0.0
      %8202 = vmatprep.subr.mxu0 0.0
      %8203 = vmatpush1.msra.mxu0 0.0
      %8204 = vmatprep.subr.mxu0 0.0
      %8205 = vmatpush1.msra.mxu0 0.0
      %8206 = vmatprep.subr.mxu0 0.0
      %8207 = vmatpush1.msra.mxu0 0.0
      %8208 = vmatprep.subr.mxu0 0.0
      %8209 = vmatpush1.msra.mxu0 0.0
      %8210 = vmatprep.subr.mxu0 0.0
      %8211 = vmatpush1.msra.mxu0 0.0
      %8212 = vmatprep.subr.mxu0 0.0
      %8213 = vmatpush1.msra.mxu0 0.0
      %8214 = vmatprep.subr.mxu0 0.0
      %8215 = vmatpush1.msra.mxu0 0.0
      %8216 = vmatprep.subr.mxu0 0.0
      %8217 = vmatpush1.msra.mxu0 0.0
      %8218 = vmatprep.mubr.f32.mxu0 0.0
      %v8219 = vand.u32 %v7916, 4294901760
      %v8220 = vsub.f32 %v7916, %v8219
      %v8221 = vand.u32 %v8220, 4294901760
      %8222 = vmatmul.mubr.f32.gmra.mrb[0].mxu0 %v8221
      %v8223 = vpop.f32.mrb[0].mxu0
      %v8224 = vadd.f32 %v8149, %v8223
      %v8225 = vpop.f32.mrb[0].mxu0
      %8226 = vdwg.mxu0
      %8227 = vmatprep.subr.mxu0 0.0
      %v8228 = vand.u32 %v456, 4294901760
      %v8229 = vsub.f32 %v456, %v8228
      %v8230 = vand.u32 %v8229, 4294901760
      %8231 = vmatpush1.msra.mxu0 %v8230
      %8232 = vmatprep.subr.mxu0 0.0
      %v8233 = vand.u32 %v457, 4294901760
      %v8234 = vsub.f32 %v457, %v8233
      %v8235 = vand.u32 %v8234, 4294901760
      %8236 = vmatpush1.msra.mxu0 %v8235
      %8237 = vmatprep.subr.mxu0 0.0
      %8238 = vmatpush1.msra.mxu0 0.0
      %8239 = vmatprep.subr.mxu0 0.0
      %8240 = vmatpush1.msra.mxu0 0.0
      %8241 = vmatprep.subr.mxu0 0.0
      %8242 = vmatpush1.msra.mxu0 0.0
      %8243 = vmatprep.subr.mxu0 0.0
      %8244 = vmatpush1.msra.mxu0 0.0
      %8245 = vmatprep.subr.mxu0 0.0
      %8246 = vmatpush1.msra.mxu0 0.0
      %8247 = vmatprep.subr.mxu0 0.0
      %8248 = vmatpush1.msra.mxu0 0.0
      %8249 = vmatprep.subr.mxu0 0.0
      %8250 = vmatpush1.msra.mxu0 0.0
      %8251 = vmatprep.subr.mxu0 0.0
      %8252 = vmatpush1.msra.mxu0 0.0
      %8253 = vmatprep.subr.mxu0 0.0
      %8254 = vmatpush1.msra.mxu0 0.0
      %8255 = vmatprep.subr.mxu0 0.0
      %8256 = vmatpush1.msra.mxu0 0.0
      %8257 = vmatprep.subr.mxu0 0.0
      %8258 = vmatpush1.msra.mxu0 0.0
      %8259 = vmatprep.subr.mxu0 0.0
      %8260 = vmatpush1.msra.mxu0 0.0
      %8261 = vmatprep.subr.mxu0 0.0
      %8262 = vmatpush1.msra.mxu0 0.0
      %8263 = vmatprep.subr.mxu0 0.0
      %8264 = vmatpush1.msra.mxu0 0.0
      %8265 = vmatprep.subr.mxu0 0.0
      %8266 = vmatpush1.msra.mxu0 0.0
      %8267 = vmatprep.subr.mxu0 0.0
      %8268 = vmatpush1.msra.mxu0 0.0
      %8269 = vmatprep.subr.mxu0 0.0
      %8270 = vmatpush1.msra.mxu0 0.0
      %8271 = vmatprep.subr.mxu0 0.0
      %8272 = vmatpush1.msra.mxu0 0.0
      %8273 = vmatprep.subr.mxu0 0.0
      %8274 = vmatpush1.msra.mxu0 0.0
      %8275 = vmatprep.subr.mxu0 0.0
      %8276 = vmatpush1.msra.mxu0 0.0
      %8277 = vmatprep.subr.mxu0 0.0
      %8278 = vmatpush1.msra.mxu0 0.0
      %8279 = vmatprep.subr.mxu0 0.0
      %8280 = vmatpush1.msra.mxu0 0.0
      %8281 = vmatprep.subr.mxu0 0.0
      %8282 = vmatpush1.msra.mxu0 0.0
      %8283 = vmatprep.subr.mxu0 0.0
      %8284 = vmatpush1.msra.mxu0 0.0
      %8285 = vmatprep.subr.mxu0 0.0
      %8286 = vmatpush1.msra.mxu0 0.0
      %8287 = vmatprep.subr.mxu0 0.0
      %8288 = vmatpush1.msra.mxu0 0.0
      %8289 = vmatprep.subr.mxu0 0.0
      %8290 = vmatpush1.msra.mxu0 0.0
      %8291 = vmatprep.subr.mxu0 0.0
      %8292 = vmatpush1.msra.mxu0 0.0
      %8293 = vmatprep.subr.mxu0 0.0
      %8294 = vmatpush1.msra.mxu0 0.0
      %8295 = vmatprep.subr.mxu0 0.0
      %8296 = vmatpush1.msra.mxu0 0.0
      %8297 = vmatprep.mubr.f32.mxu0 0.0
      %v8298 = vand.u32 %v7916, 4294901760
      %8299 = vmatmul.mubr.f32.gmra.mrb[0].mxu0 %v8298
      %v8300 = vpop.f32.mrb[0].mxu0
      %v8301 = vadd.f32 %v8224, %v8300
      %v8302 = vpop.f32.mrb[0].mxu0
      %8303 = vdwg.mxu0
      %8304 = vmatprep.subr.mxu0 0.0
      %v8305 = vand.u32 %v456, 4294901760
      %8306 = vmatpush1.msra.mxu0 %v8305
      %8307 = vmatprep.subr.mxu0 0.0
      %v8308 = vand.u32 %v457, 4294901760
      %8309 = vmatpush1.msra.mxu0 %v8308
      %8310 = vmatprep.subr.mxu0 0.0
      %8311 = vmatpush1.msra.mxu0 0.0
      %8312 = vmatprep.subr.mxu0 0.0
      %8313 = vmatpush1.msra.mxu0 0.0
      %8314 = vmatprep.subr.mxu0 0.0
      %8315 = vmatpush1.msra.mxu0 0.0
      %8316 = vmatprep.subr.mxu0 0.0
      %8317 = vmatpush1.msra.mxu0 0.0
      %8318 = vmatprep.subr.mxu0 0.0
      %8319 = vmatpush1.msra.mxu0 0.0
      %8320 = vmatprep.subr.mxu0 0.0
      %8321 = vmatpush1.msra.mxu0 0.0
      %8322 = vmatprep.subr.mxu0 0.0
      %8323 = vmatpush1.msra.mxu0 0.0
      %8324 = vmatprep.subr.mxu0 0.0
      %8325 = vmatpush1.msra.mxu0 0.0
      %8326 = vmatprep.subr.mxu0 0.0
      %8327 = vmatpush1.msra.mxu0 0.0
      %8328 = vmatprep.subr.mxu0 0.0
      %8329 = vmatpush1.msra.mxu0 0.0
      %8330 = vmatprep.subr.mxu0 0.0
      %8331 = vmatpush1.msra.mxu0 0.0
      %8332 = vmatprep.subr.mxu0 0.0
      %8333 = vmatpush1.msra.mxu0 0.0
      %8334 = vmatprep.subr.mxu0 0.0
      %8335 = vmatpush1.msra.mxu0 0.0
      %8336 = vmatprep.subr.mxu0 0.0
      %8337 = vmatpush1.msra.mxu0 0.0
      %8338 = vmatprep.subr.mxu0 0.0
      %8339 = vmatpush1.msra.mxu0 0.0
      %8340 = vmatprep.subr.mxu0 0.0
      %8341 = vmatpush1.msra.mxu0 0.0
      %8342 = vmatprep.subr.mxu0 0.0
      %8343 = vmatpush1.msra.mxu0 0.0
      %8344 = vmatprep.subr.mxu0 0.0
      %8345 = vmatpush1.msra.mxu0 0.0
      %8346 = vmatprep.subr.mxu0 0.0
      %8347 = vmatpush1.msra.mxu0 0.0
      %8348 = vmatprep.subr.mxu0 0.0
      %8349 = vmatpush1.msra.mxu0 0.0
      %8350 = vmatprep.subr.mxu0 0.0
      %8351 = vmatpush1.msra.mxu0 0.0
      %8352 = vmatprep.subr.mxu0 0.0
      %8353 = vmatpush1.msra.mxu0 0.0
      %8354 = vmatprep.subr.mxu0 0.0
      %8355 = vmatpush1.msra.mxu0 0.0
      %8356 = vmatprep.subr.mxu0 0.0
      %8357 = vmatpush1.msra.mxu0 0.0
      %8358 = vmatprep.subr.mxu0 0.0
      %8359 = vmatpush1.msra.mxu0 0.0
      %8360 = vmatprep.subr.mxu0 0.0
      %8361 = vmatpush1.msra.mxu0 0.0
      %8362 = vmatprep.subr.mxu0 0.0
      %8363 = vmatpush1.msra.mxu0 0.0
      %8364 = vmatprep.subr.mxu0 0.0
      %8365 = vmatpush1.msra.mxu0 0.0
      %8366 = vmatprep.subr.mxu0 0.0
      %8367 = vmatpush1.msra.mxu0 0.0
      %8368 = vmatprep.subr.mxu0 0.0
      %8369 = vmatpush1.msra.mxu0 0.0
      %8370 = vmatprep.mubr.f32.mxu0 0.0
      %v8371 = vand.u32 %v7916, 4294901760
      %8372 = vmatmul.mubr.f32.gmra.mrb[0].mxu0 %v8371
      %v8373 = vpop.f32.mrb[0].mxu0
      %v8374 = vadd.f32 %v8301, %v8373
      %v8375 = vpop.f32.mrb[0].mxu0
      %8376 = vdwg.mxu0
      %v8378 = vsel %vm1055, %v7914, 0
      %8380 = vmatprep.subr.mxu0 0.0
      %v8381 = vand.u32 %v456, 4294901760
      %8382 = vmatpush1.msra.mxu0 %v8381
      %8383 = vmatprep.subr.mxu0 0.0
      %v8384 = vand.u32 %v457, 4294901760
      %8385 = vmatpush1.msra.mxu0 %v8384
      %8386 = vmatprep.subr.mxu0 0.0
      %8387 = vmatpush1.msra.mxu0 0.0
      %8388 = vmatprep.subr.mxu0 0.0
      %8389 = vmatpush1.msra.mxu0 0.0
      %8390 = vmatprep.subr.mxu0 0.0
      %8391 = vmatpush1.msra.mxu0 0.0
      %8392 = vmatprep.subr.mxu0 0.0
      %8393 = vmatpush1.msra.mxu0 0.0
      %8394 = vmatprep.subr.mxu0 0.0
      %8395 = vmatpush1.msra.mxu0 0.0
      %8396 = vmatprep.subr.mxu0 0.0
      %8397 = vmatpush1.msra.mxu0 0.0
      %8398 = vmatprep.subr.mxu0 0.0
      %8399 = vmatpush1.msra.mxu0 0.0
      %8400 = vmatprep.subr.mxu0 0.0
      %8401 = vmatpush1.msra.mxu0 0.0
      %8402 = vmatprep.subr.mxu0 0.0
      %8403 = vmatpush1.msra.mxu0 0.0
      %8404 = vmatprep.subr.mxu0 0.0
      %8405 = vmatpush1.msra.mxu0 0.0
      %8406 = vmatprep.subr.mxu0 0.0
      %8407 = vmatpush1.msra.mxu0 0.0
      %8408 = vmatprep.subr.mxu0 0.0
      %8409 = vmatpush1.msra.mxu0 0.0
      %8410 = vmatprep.subr.mxu0 0.0
      %8411 = vmatpush1.msra.mxu0 0.0
      %8412 = vmatprep.subr.mxu0 0.0
      %8413 = vmatpush1.msra.mxu0 0.0
      %8414 = vmatprep.subr.mxu0 0.0
      %8415 = vmatpush1.msra.mxu0 0.0
      %8416 = vmatprep.subr.mxu0 0.0
      %8417 = vmatpush1.msra.mxu0 0.0
      %8418 = vmatprep.subr.mxu0 0.0
      %8419 = vmatpush1.msra.mxu0 0.0
      %8420 = vmatprep.subr.mxu0 0.0
      %8421 = vmatpush1.msra.mxu0 0.0
      %8422 = vmatprep.subr.mxu0 0.0
      %8423 = vmatpush1.msra.mxu0 0.0
      %8424 = vmatprep.subr.mxu0 0.0
      %8425 = vmatpush1.msra.mxu0 0.0
      %8426 = vmatprep.subr.mxu0 0.0
      %8427 = vmatpush1.msra.mxu0 0.0
      %8428 = vmatprep.subr.mxu0 0.0
      %8429 = vmatpush1.msra.mxu0 0.0
      %8430 = vmatprep.subr.mxu0 0.0
      %8431 = vmatpush1.msra.mxu0 0.0
      %8432 = vmatprep.subr.mxu0 0.0
      %8433 = vmatpush1.msra.mxu0 0.0
      %8434 = vmatprep.subr.mxu0 0.0
      %8435 = vmatpush1.msra.mxu0 0.0
      %8436 = vmatprep.subr.mxu0 0.0
      %8437 = vmatpush1.msra.mxu0 0.0
      %8438 = vmatprep.subr.mxu0 0.0
      %8439 = vmatpush1.msra.mxu0 0.0
      %8440 = vmatprep.subr.mxu0 0.0
      %8441 = vmatpush1.msra.mxu0 0.0
      %8442 = vmatprep.subr.mxu0 0.0
      %8443 = vmatpush1.msra.mxu0 0.0
      %8444 = vmatprep.subr.mxu0 0.0
      %8445 = vmatpush1.msra.mxu0 0.0
      %8446 = vmatprep.mubr.f32.mxu0 0.0
      %v8447 = vand.u32 %v8378, 4294901760
      %v8448 = vsub.f32 %v8378, %v8447
      %v8449 = vand.u32 %v8448, 4294901760
      %v8450 = vsub.f32 %v8448, %v8449
      %v8451 = vand.u32 %v8450, 4294901760
      %8452 = vmatmul.mubr.f32.gmra.mrb[0].mxu0 %v8451
      %v8453 = vpop.f32.mrb[0].mxu0
      %v8454 = vadd.f32 0.0, %v8453
      %v8455 = vpop.f32.mrb[0].mxu0
      %8456 = vdwg.mxu0
      %8457 = vmatprep.subr.mxu0 0.0
      %v8458 = vand.u32 %v456, 4294901760
      %v8459 = vsub.f32 %v456, %v8458
      %v8460 = vand.u32 %v8459, 4294901760
      %v8461 = vsub.f32 %v8459, %v8460
      %v8462 = vand.u32 %v8461, 4294901760
      %8463 = vmatpush1.msra.mxu0 %v8462
      %8464 = vmatprep.subr.mxu0 0.0
      %v8465 = vand.u32 %v457, 4294901760
      %v8466 = vsub.f32 %v457, %v8465
      %v8467 = vand.u32 %v8466, 4294901760
      %v8468 = vsub.f32 %v8466, %v8467
      %v8469 = vand.u32 %v8468, 4294901760
      %8470 = vmatpush1.msra.mxu0 %v8469
      %8471 = vmatprep.subr.mxu0 0.0
      %8472 = vmatpush1.msra.mxu0 0.0
      %8473 = vmatprep.subr.mxu0 0.0
      %8474 = vmatpush1.msra.mxu0 0.0
      %8475 = vmatprep.subr.mxu0 0.0
      %8476 = vmatpush1.msra.mxu0 0.0
      %8477 = vmatprep.subr.mxu0 0.0
      %8478 = vmatpush1.msra.mxu0 0.0
      %8479 = vmatprep.subr.mxu0 0.0
      %8480 = vmatpush1.msra.mxu0 0.0
      %8481 = vmatprep.subr.mxu0 0.0
      %8482 = vmatpush1.msra.mxu0 0.0
      %8483 = vmatprep.subr.mxu0 0.0
      %8484 = vmatpush1.msra.mxu0 0.0
      %8485 = vmatprep.subr.mxu0 0.0
      %8486 = vmatpush1.msra.mxu0 0.0
      %8487 = vmatprep.subr.mxu0 0.0
      %8488 = vmatpush1.msra.mxu0 0.0
      %8489 = vmatprep.subr.mxu0 0.0
      %8490 = vmatpush1.msra.mxu0 0.0
      %8491 = vmatprep.subr.mxu0 0.0
      %8492 = vmatpush1.msra.mxu0 0.0
      %8493 = vmatprep.subr.mxu0 0.0
      %8494 = vmatpush1.msra.mxu0 0.0
      %8495 = vmatprep.subr.mxu0 0.0
      %8496 = vmatpush1.msra.mxu0 0.0
      %8497 = vmatprep.subr.mxu0 0.0
      %8498 = vmatpush1.msra.mxu0 0.0
      %8499 = vmatprep.subr.mxu0 0.0
      %8500 = vmatpush1.msra.mxu0 0.0
      %8501 = vmatprep.subr.mxu0 0.0
      %8502 = vmatpush1.msra.mxu0 0.0
      %8503 = vmatprep.subr.mxu0 0.0
      %8504 = vmatpush1.msra.mxu0 0.0
      %8505 = vmatprep.subr.mxu0 0.0
      %8506 = vmatpush1.msra.mxu0 0.0
      %8507 = vmatprep.subr.mxu0 0.0
      %8508 = vmatpush1.msra.mxu0 0.0
      %8509 = vmatprep.subr.mxu0 0.0
      %8510 = vmatpush1.msra.mxu0 0.0
      %8511 = vmatprep.subr.mxu0 0.0
      %8512 = vmatpush1.msra.mxu0 0.0
      %8513 = vmatprep.subr.mxu0 0.0
      %8514 = vmatpush1.msra.mxu0 0.0
      %8515 = vmatprep.subr.mxu0 0.0
      %8516 = vmatpush1.msra.mxu0 0.0
      %8517 = vmatprep.subr.mxu0 0.0
      %8518 = vmatpush1.msra.mxu0 0.0
      %8519 = vmatprep.subr.mxu0 0.0
      %8520 = vmatpush1.msra.mxu0 0.0
      %8521 = vmatprep.subr.mxu0 0.0
      %8522 = vmatpush1.msra.mxu0 0.0
      %8523 = vmatprep.subr.mxu0 0.0
      %8524 = vmatpush1.msra.mxu0 0.0
      %8525 = vmatprep.subr.mxu0 0.0
      %8526 = vmatpush1.msra.mxu0 0.0
      %8527 = vmatprep.subr.mxu0 0.0
      %8528 = vmatpush1.msra.mxu0 0.0
      %8529 = vmatprep.subr.mxu0 0.0
      %8530 = vmatpush1.msra.mxu0 0.0
      %8531 = vmatprep.mubr.f32.mxu0 0.0
      %v8532 = vand.u32 %v8378, 4294901760
      %8533 = vmatmul.mubr.f32.gmra.mrb[0].mxu0 %v8532
      %v8534 = vpop.f32.mrb[0].mxu0
      %v8535 = vadd.f32 %v8454, %v8534
      %v8536 = vpop.f32.mrb[0].mxu0
      %8537 = vdwg.mxu0
      %8538 = vmatprep.subr.mxu0 0.0
      %v8539 = vand.u32 %v456, 4294901760
      %v8540 = vsub.f32 %v456, %v8539
      %8541 = vmatpush1.msra.mxu0 %v8540
      %8542 = vmatprep.subr.mxu0 0.0
      %v8543 = vand.u32 %v457, 4294901760
      %v8544 = vsub.f32 %v457, %v8543
      %8545 = vmatpush1.msra.mxu0 %v8544
      %8546 = vmatprep.subr.mxu0 0.0
      %8547 = vmatpush1.msra.mxu0 0.0
      %8548 = vmatprep.subr.mxu0 0.0
      %8549 = vmatpush1.msra.mxu0 0.0
      %8550 = vmatprep.subr.mxu0 0.0
      %8551 = vmatpush1.msra.mxu0 0.0
      %8552 = vmatprep.subr.mxu0 0.0
      %8553 = vmatpush1.msra.mxu0 0.0
      %8554 = vmatprep.subr.mxu0 0.0
      %8555 = vmatpush1.msra.mxu0 0.0
      %8556 = vmatprep.subr.mxu0 0.0
      %8557 = vmatpush1.msra.mxu0 0.0
      %8558 = vmatprep.subr.mxu0 0.0
      %8559 = vmatpush1.msra.mxu0 0.0
      %8560 = vmatprep.subr.mxu0 0.0
      %8561 = vmatpush1.msra.mxu0 0.0
      %8562 = vmatprep.subr.mxu0 0.0
      %8563 = vmatpush1.msra.mxu0 0.0
      %8564 = vmatprep.subr.mxu0 0.0
      %8565 = vmatpush1.msra.mxu0 0.0
      %8566 = vmatprep.subr.mxu0 0.0
      %8567 = vmatpush1.msra.mxu0 0.0
      %8568 = vmatprep.subr.mxu0 0.0
      %8569 = vmatpush1.msra.mxu0 0.0
      %8570 = vmatprep.subr.mxu0 0.0
      %8571 = vmatpush1.msra.mxu0 0.0
      %8572 = vmatprep.subr.mxu0 0.0
      %8573 = vmatpush1.msra.mxu0 0.0
      %8574 = vmatprep.subr.mxu0 0.0
      %8575 = vmatpush1.msra.mxu0 0.0
      %8576 = vmatprep.subr.mxu0 0.0
      %8577 = vmatpush1.msra.mxu0 0.0
      %8578 = vmatprep.subr.mxu0 0.0
      %8579 = vmatpush1.msra.mxu0 0.0
      %8580 = vmatprep.subr.mxu0 0.0
      %8581 = vmatpush1.msra.mxu0 0.0
      %8582 = vmatprep.subr.mxu0 0.0
      %8583 = vmatpush1.msra.mxu0 0.0
      %8584 = vmatprep.subr.mxu0 0.0
      %8585 = vmatpush1.msra.mxu0 0.0
      %8586 = vmatprep.subr.mxu0 0.0
      %8587 = vmatpush1.msra.mxu0 0.0
      %8588 = vmatprep.subr.mxu0 0.0
      %8589 = vmatpush1.msra.mxu0 0.0
      %8590 = vmatprep.subr.mxu0 0.0
      %8591 = vmatpush1.msra.mxu0 0.0
      %8592 = vmatprep.subr.mxu0 0.0
      %8593 = vmatpush1.msra.mxu0 0.0
      %8594 = vmatprep.subr.mxu0 0.0
      %8595 = vmatpush1.msra.mxu0 0.0
      %8596 = vmatprep.subr.mxu0 0.0
      %8597 = vmatpush1.msra.mxu0 0.0
      %8598 = vmatprep.subr.mxu0 0.0
      %8599 = vmatpush1.msra.mxu0 0.0
      %8600 = vmatprep.subr.mxu0 0.0
      %8601 = vmatpush1.msra.mxu0 0.0
      %8602 = vmatprep.subr.mxu0 0.0
      %8603 = vmatpush1.msra.mxu0 0.0
      %8604 = vmatprep.subr.mxu0 0.0
      %8605 = vmatpush1.msra.mxu0 0.0
      %8606 = vmatprep.mubr.f32.mxu0 0.0
      %v8607 = vand.u32 %v8378, 4294901760
      %v8608 = vsub.f32 %v8378, %v8607
      %8609 = vmatmul.mubr.f32.gmra.mrb[0].mxu0 %v8608
      %v8610 = vpop.f32.mrb[0].mxu0
      %v8611 = vadd.f32 %v8535, %v8610
      %v8612 = vpop.f32.mrb[0].mxu0
      %8613 = vdwg.mxu0
      %8614 = vmatprep.subr.mxu0 0.0
      %v8615 = vand.u32 %v456, 4294901760
      %8616 = vmatpush1.msra.mxu0 %v8615
      %8617 = vmatprep.subr.mxu0 0.0
      %v8618 = vand.u32 %v457, 4294901760
      %8619 = vmatpush1.msra.mxu0 %v8618
      %8620 = vmatprep.subr.mxu0 0.0
      %8621 = vmatpush1.msra.mxu0 0.0
      %8622 = vmatprep.subr.mxu0 0.0
      %8623 = vmatpush1.msra.mxu0 0.0
      %8624 = vmatprep.subr.mxu0 0.0
      %8625 = vmatpush1.msra.mxu0 0.0
      %8626 = vmatprep.subr.mxu0 0.0
      %8627 = vmatpush1.msra.mxu0 0.0
      %8628 = vmatprep.subr.mxu0 0.0
      %8629 = vmatpush1.msra.mxu0 0.0
      %8630 = vmatprep.subr.mxu0 0.0
      %8631 = vmatpush1.msra.mxu0 0.0
      %8632 = vmatprep.subr.mxu0 0.0
      %8633 = vmatpush1.msra.mxu0 0.0
      %8634 = vmatprep.subr.mxu0 0.0
      %8635 = vmatpush1.msra.mxu0 0.0
      %8636 = vmatprep.subr.mxu0 0.0
      %8637 = vmatpush1.msra.mxu0 0.0
      %8638 = vmatprep.subr.mxu0 0.0
      %8639 = vmatpush1.msra.mxu0 0.0
      %8640 = vmatprep.subr.mxu0 0.0
      %8641 = vmatpush1.msra.mxu0 0.0
      %8642 = vmatprep.subr.mxu0 0.0
      %8643 = vmatpush1.msra.mxu0 0.0
      %8644 = vmatprep.subr.mxu0 0.0
      %8645 = vmatpush1.msra.mxu0 0.0
      %8646 = vmatprep.subr.mxu0 0.0
      %8647 = vmatpush1.msra.mxu0 0.0
      %8648 = vmatprep.subr.mxu0 0.0
      %8649 = vmatpush1.msra.mxu0 0.0
      %8650 = vmatprep.subr.mxu0 0.0
      %8651 = vmatpush1.msra.mxu0 0.0
      %8652 = vmatprep.subr.mxu0 0.0
      %8653 = vmatpush1.msra.mxu0 0.0
      %8654 = vmatprep.subr.mxu0 0.0
      %8655 = vmatpush1.msra.mxu0 0.0
      %8656 = vmatprep.subr.mxu0 0.0
      %8657 = vmatpush1.msra.mxu0 0.0
      %8658 = vmatprep.subr.mxu0 0.0
      %8659 = vmatpush1.msra.mxu0 0.0
      %8660 = vmatprep.subr.mxu0 0.0
      %8661 = vmatpush1.msra.mxu0 0.0
      %8662 = vmatprep.subr.mxu0 0.0
      %8663 = vmatpush1.msra.mxu0 0.0
      %8664 = vmatprep.subr.mxu0 0.0
      %8665 = vmatpush1.msra.mxu0 0.0
      %8666 = vmatprep.subr.mxu0 0.0
      %8667 = vmatpush1.msra.mxu0 0.0
      %8668 = vmatprep.subr.mxu0 0.0
      %8669 = vmatpush1.msra.mxu0 0.0
      %8670 = vmatprep.subr.mxu0 0.0
      %8671 = vmatpush1.msra.mxu0 0.0
      %8672 = vmatprep.subr.mxu0 0.0
      %8673 = vmatpush1.msra.mxu0 0.0
      %8674 = vmatprep.subr.mxu0 0.0
      %8675 = vmatpush1.msra.mxu0 0.0
      %8676 = vmatprep.subr.mxu0 0.0
      %8677 = vmatpush1.msra.mxu0 0.0
      %8678 = vmatprep.subr.mxu0 0.0
      %8679 = vmatpush1.msra.mxu0 0.0
      %8680 = vmatprep.mubr.f32.mxu0 0.0
      %v8681 = vand.u32 %v8378, 4294901760
      %v8682 = vsub.f32 %v8378, %v8681
      %v8683 = vand.u32 %v8682, 4294901760
      %8684 = vmatmul.mubr.f32.gmra.mrb[0].mxu0 %v8683
      %v8685 = vpop.f32.mrb[0].mxu0
      %v8686 = vadd.f32 %v8611, %v8685
      %v8687 = vpop.f32.mrb[0].mxu0
      %8688 = vdwg.mxu0
      %8689 = vmatprep.subr.mxu0 0.0
      %v8690 = vand.u32 %v456, 4294901760
      %v8691 = vsub.f32 %v456, %v8690
      %v8692 = vand.u32 %v8691, 4294901760
      %8693 = vmatpush1.msra.mxu0 %v8692
      %8694 = vmatprep.subr.mxu0 0.0
      %v8695 = vand.u32 %v457, 4294901760
      %v8696 = vsub.f32 %v457, %v8695
      %v8697 = vand.u32 %v8696, 4294901760
      %8698 = vmatpush1.msra.mxu0 %v8697
      %8699 = vmatprep.subr.mxu0 0.0
      %8700 = vmatpush1.msra.mxu0 0.0
      %8701 = vmatprep.subr.mxu0 0.0
      %8702 = vmatpush1.msra.mxu0 0.0
      %8703 = vmatprep.subr.mxu0 0.0
      %8704 = vmatpush1.msra.mxu0 0.0
      %8705 = vmatprep.subr.mxu0 0.0
      %8706 = vmatpush1.msra.mxu0 0.0
      %8707 = vmatprep.subr.mxu0 0.0
      %8708 = vmatpush1.msra.mxu0 0.0
      %8709 = vmatprep.subr.mxu0 0.0
      %8710 = vmatpush1.msra.mxu0 0.0
      %8711 = vmatprep.subr.mxu0 0.0
      %8712 = vmatpush1.msra.mxu0 0.0
      %8713 = vmatprep.subr.mxu0 0.0
      %8714 = vmatpush1.msra.mxu0 0.0
      %8715 = vmatprep.subr.mxu0 0.0
      %8716 = vmatpush1.msra.mxu0 0.0
      %8717 = vmatprep.subr.mxu0 0.0
      %8718 = vmatpush1.msra.mxu0 0.0
      %8719 = vmatprep.subr.mxu0 0.0
      %8720 = vmatpush1.msra.mxu0 0.0
      %8721 = vmatprep.subr.mxu0 0.0
      %8722 = vmatpush1.msra.mxu0 0.0
      %8723 = vmatprep.subr.mxu0 0.0
      %8724 = vmatpush1.msra.mxu0 0.0
      %8725 = vmatprep.subr.mxu0 0.0
      %8726 = vmatpush1.msra.mxu0 0.0
      %8727 = vmatprep.subr.mxu0 0.0
      %8728 = vmatpush1.msra.mxu0 0.0
      %8729 = vmatprep.subr.mxu0 0.0
      %8730 = vmatpush1.msra.mxu0 0.0
      %8731 = vmatprep.subr.mxu0 0.0
      %8732 = vmatpush1.msra.mxu0 0.0
      %8733 = vmatprep.subr.mxu0 0.0
      %8734 = vmatpush1.msra.mxu0 0.0
      %8735 = vmatprep.subr.mxu0 0.0
      %8736 = vmatpush1.msra.mxu0 0.0
      %8737 = vmatprep.subr.mxu0 0.0
      %8738 = vmatpush1.msra.mxu0 0.0
      %8739 = vmatprep.subr.mxu0 0.0
      %8740 = vmatpush1.msra.mxu0 0.0
      %8741 = vmatprep.subr.mxu0 0.0
      %8742 = vmatpush1.msra.mxu0 0.0
      %8743 = vmatprep.subr.mxu0 0.0
      %8744 = vmatpush1.msra.mxu0 0.0
      %8745 = vmatprep.subr.mxu0 0.0
      %8746 = vmatpush1.msra.mxu0 0.0
      %8747 = vmatprep.subr.mxu0 0.0
      %8748 = vmatpush1.msra.mxu0 0.0
      %8749 = vmatprep.subr.mxu0 0.0
      %8750 = vmatpush1.msra.mxu0 0.0
      %8751 = vmatprep.subr.mxu0 0.0
      %8752 = vmatpush1.msra.mxu0 0.0
      %8753 = vmatprep.subr.mxu0 0.0
      %8754 = vmatpush1.msra.mxu0 0.0
      %8755 = vmatprep.subr.mxu0 0.0
      %8756 = vmatpush1.msra.mxu0 0.0
      %8757 = vmatprep.subr.mxu0 0.0
      %8758 = vmatpush1.msra.mxu0 0.0
      %8759 = vmatprep.mubr.f32.mxu0 0.0
      %v8760 = vand.u32 %v8378, 4294901760
      %8761 = vmatmul.mubr.f32.gmra.mrb[0].mxu0 %v8760
      %v8762 = vpop.f32.mrb[0].mxu0
      %v8763 = vadd.f32 %v8686, %v8762
      %v8764 = vpop.f32.mrb[0].mxu0
      %8765 = vdwg.mxu0
      %8766 = vmatprep.subr.mxu0 0.0
      %v8767 = vand.u32 %v456, 4294901760
      %8768 = vmatpush1.msra.mxu0 %v8767
      %8769 = vmatprep.subr.mxu0 0.0
      %v8770 = vand.u32 %v457, 4294901760
      %8771 = vmatpush1.msra.mxu0 %v8770
      %8772 = vmatprep.subr.mxu0 0.0
      %8773 = vmatpush1.msra.mxu0 0.0
      %8774 = vmatprep.subr.mxu0 0.0
      %8775 = vmatpush1.msra.mxu0 0.0
      %8776 = vmatprep.subr.mxu0 0.0
      %8777 = vmatpush1.msra.mxu0 0.0
      %8778 = vmatprep.subr.mxu0 0.0
      %8779 = vmatpush1.msra.mxu0 0.0
      %8780 = vmatprep.subr.mxu0 0.0
      %8781 = vmatpush1.msra.mxu0 0.0
      %8782 = vmatprep.subr.mxu0 0.0
      %8783 = vmatpush1.msra.mxu0 0.0
      %8784 = vmatprep.subr.mxu0 0.0
      %8785 = vmatpush1.msra.mxu0 0.0
      %8786 = vmatprep.subr.mxu0 0.0
      %8787 = vmatpush1.msra.mxu0 0.0
      %8788 = vmatprep.subr.mxu0 0.0
      %8789 = vmatpush1.msra.mxu0 0.0
      %8790 = vmatprep.subr.mxu0 0.0
      %8791 = vmatpush1.msra.mxu0 0.0
      %8792 = vmatprep.subr.mxu0 0.0
      %8793 = vmatpush1.msra.mxu0 0.0
      %8794 = vmatprep.subr.mxu0 0.0
      %8795 = vmatpush1.msra.mxu0 0.0
      %8796 = vmatprep.subr.mxu0 0.0
      %8797 = vmatpush1.msra.mxu0 0.0
      %8798 = vmatprep.subr.mxu0 0.0
      %8799 = vmatpush1.msra.mxu0 0.0
      %8800 = vmatprep.subr.mxu0 0.0
      %8801 = vmatpush1.msra.mxu0 0.0
      %8802 = vmatprep.subr.mxu0 0.0
      %8803 = vmatpush1.msra.mxu0 0.0
      %8804 = vmatprep.subr.mxu0 0.0
      %8805 = vmatpush1.msra.mxu0 0.0
      %8806 = vmatprep.subr.mxu0 0.0
      %8807 = vmatpush1.msra.mxu0 0.0
      %8808 = vmatprep.subr.mxu0 0.0
      %8809 = vmatpush1.msra.mxu0 0.0
      %8810 = vmatprep.subr.mxu0 0.0
      %8811 = vmatpush1.msra.mxu0 0.0
      %8812 = vmatprep.subr.mxu0 0.0
      %8813 = vmatpush1.msra.mxu0 0.0
      %8814 = vmatprep.subr.mxu0 0.0
      %8815 = vmatpush1.msra.mxu0 0.0
      %8816 = vmatprep.subr.mxu0 0.0
      %8817 = vmatpush1.msra.mxu0 0.0
      %8818 = vmatprep.subr.mxu0 0.0
      %8819 = vmatpush1.msra.mxu0 0.0
      %8820 = vmatprep.subr.mxu0 0.0
      %8821 = vmatpush1.msra.mxu0 0.0
      %8822 = vmatprep.subr.mxu0 0.0
      %8823 = vmatpush1.msra.mxu0 0.0
      %8824 = vmatprep.subr.mxu0 0.0
      %8825 = vmatpush1.msra.mxu0 0.0
      %8826 = vmatprep.subr.mxu0 0.0
      %8827 = vmatpush1.msra.mxu0 0.0
      %8828 = vmatprep.subr.mxu0 0.0
      %8829 = vmatpush1.msra.mxu0 0.0
      %8830 = vmatprep.subr.mxu0 0.0
      %8831 = vmatpush1.msra.mxu0 0.0
      %8832 = vmatprep.mubr.f32.mxu0 0.0
      %v8833 = vand.u32 %v8378, 4294901760
      %8834 = vmatmul.mubr.f32.gmra.mrb[0].mxu0 %v8833
      %v8835 = vpop.f32.mrb[0].mxu0
      %v8836 = vadd.f32 %v8763, %v8835
      %v8837 = vpop.f32.mrb[0].mxu0
      %8838 = vdwg.mxu0
      %v8839 = vmul.f32 %v8374, %v8374
      %v8840 = vsub.f32 %v8836, %v8839
      %v8841 = vadd.f32 %v8840, 1e-05
      %v8842 = vrsqrt.pop %v8841
      %v8844 = vrot.slane %v8842, 4
      %v8846 = vmul.f32 %v458, %v8844
      %v8848 = vrot.slane %v8846, 4
      %v8850 = vmul.f32 %v8374, %v8848
      %v8852 = vrot.slane %v8850, 4
      %v8854 = vsub.f32 %v459, %v8852
      %v8855 = vlaneseq
      %v8856 = vshrl.u32 %v8855, 7
      %v8857 = vsub.s32 4, %v8856
      %v8858 = vrot.slane %v8846, %v8857
      %v8859 = vmul.f32 %v7833, %v8858
      %v8860 = vmul.f32 %v7836, %v8858
      %v8861 = vmul.f32 %v7841, %v8858
      %v8862 = vmul.f32 %v7844, %v8858
      %v8863 = vmul.f32 %v7849, %v8858
      %v8864 = vmul.f32 %v7852, %v8858
      %v8865 = vmul.f32 %v7857, %v8858
      %v8866 = vmul.f32 %v7860, %v8858
      %v8867 = vlaneseq
      %v8868 = vshrl.u32 %v8867, 7
      %v8869 = vsub.s32 4, %v8868
      %v8870 = vrot.slane %v8854, %v8869
      %v8871 = vadd.f32 %v8859, %v8870
      %v8872 = vadd.f32 %v8860, %v8870
      %v8873 = vadd.f32 %v8861, %v8870
      %v8874 = vadd.f32 %v8862, %v8870
      %v8875 = vadd.f32 %v8863, %v8870
      %v8876 = vadd.f32 %v8864, %v8870
      %v8877 = vadd.f32 %v8865, %v8870
      %v8878 = vadd.f32 %v8866, %v8870
      %v8879 = vsub.f32 0.0, %v8871
      %v8880 = vsub.f32 0.0, %v8872
      %v8881 = vsub.f32 0.0, %v8873
      %v8882 = vsub.f32 0.0, %v8874
      %v8883 = vsub.f32 0.0, %v8875
      %v8884 = vsub.f32 0.0, %v8876
      %v8885 = vsub.f32 0.0, %v8877
      %v8886 = vsub.f32 0.0, %v8878
      %v8887 = vmul.f32 %v8879, 1.442695
      %v8888 = vpow.pop %v8887
      %v8889 = vmul.f32 %v8880, 1.442695
      %v8890 = vpow.pop %v8889
      %v8891 = vmul.f32 %v8881, 1.442695
      %v8892 = vpow.pop %v8891
      %v8893 = vmul.f32 %v8882, 1.442695
      %v8894 = vpow.pop %v8893
      %v8895 = vmul.f32 %v8883, 1.442695
      %v8896 = vpow.pop %v8895
      %v8897 = vmul.f32 %v8884, 1.442695
      %v8898 = vpow.pop %v8897
      %v8899 = vmul.f32 %v8885, 1.442695
      %v8900 = vpow.pop %v8899
      %v8901 = vmul.f32 %v8886, 1.442695
      %v8902 = vpow.pop %v8901
      %v8903 = vadd.f32 %v8888, 1.0
      %v8904 = vadd.f32 %v8890, 1.0
      %v8905 = vadd.f32 %v8892, 1.0
      %v8906 = vadd.f32 %v8894, 1.0
      %v8907 = vadd.f32 %v8896, 1.0
      %v8908 = vadd.f32 %v8898, 1.0
      %v8909 = vadd.f32 %v8900, 1.0
      %v8910 = vadd.f32 %v8902, 1.0
      %v8911 = vrcp.pop %v8903
      %v8912 = vrcp.pop %v8904
      %v8913 = vrcp.pop %v8905
      %v8914 = vrcp.pop %v8906
      %v8915 = vrcp.pop %v8907
      %v8916 = vrcp.pop %v8908
      %v8917 = vrcp.pop %v8909
      %v8918 = vrcp.pop %v8910
      %v8919 = vmul.f32 %v8871, %v8911
      %v8920 = vmul.f32 %v8872, %v8912
      %v8921 = vmul.f32 %v8873, %v8913
      %v8922 = vmul.f32 %v8874, %v8914
      %v8923 = vmul.f32 %v8875, %v8915
      %v8924 = vmul.f32 %v8876, %v8916
      %v8925 = vmul.f32 %v8877, %v8917
      %v8926 = vmul.f32 %v8878, %v8918
      %v8927 = vadd.f32 %v5745, %v8919
      %v8928 = vadd.f32 %v5746, %v8920
      %v8929 = vadd.f32 %v5747, %v8921
      %v8930 = vadd.f32 %v5748, %v8922
      %v8931 = vadd.f32 %v5749, %v8923
      %v8932 = vadd.f32 %v5750, %v8924
      %v8933 = vadd.f32 %v5751, %v8925
      %v8934 = vadd.f32 %v5752, %v8926
      %8935 = vxpose.xlu0.b32.start [1/16] %v8927, 128
      %8936 = vxpose.xlu0.b32.cont [2/16] %v8928, 128
      %8937 = vxpose.xlu0.b32.cont [3/16] %v8929, 128
      %8938 = vxpose.xlu0.b32.cont [4/16] %v8930, 128
      %8939 = vxpose.xlu0.b32.cont [5/16] %v8931, 128
      %8940 = vxpose.xlu0.b32.cont [6/16] %v8932, 128
      %8941 = vxpose.xlu0.b32.cont [7/16] %v8933, 128
      %8942 = vxpose.xlu0.b32.cont [8/16] %v8934, 128
      %8943 = vxpose.xlu0.b32.cont [9/16] 0.0, 128
      %8944 = vxpose.xlu0.b32.cont [10/16] 0.0, 128
      %8945 = vxpose.xlu0.b32.cont [11/16] 0.0, 128
      %8946 = vxpose.xlu0.b32.cont [12/16] 0.0, 128
      %8947 = vxpose.xlu0.b32.cont [13/16] 0.0, 128
      %8948 = vxpose.xlu0.b32.cont [14/16] 0.0, 128
      %8949 = vxpose.xlu0.b32.cont [15/16] 0.0, 128
      %8950 = vxpose.xlu0.b32.end [16/16] 0.0, 128
      %v8951 = vpop.trf.xlu0
      %v8952 = vpop.trf.xlu0
      %v8953 = vpop.trf.xlu0
      %v8954 = vpop.trf.xlu0
      %v8955 = vpop.trf.xlu0
      %v8956 = vpop.trf.xlu0
      %v8957 = vpop.trf.xlu0
      %v8958 = vpop.trf.xlu0
      %v8959 = vpop.trf.xlu0
      %v8960 = vpop.trf.xlu0
      %v8961 = vpop.trf.xlu0
      %v8962 = vpop.trf.xlu0
      %v8963 = vpop.trf.xlu0
      %v8964 = vpop.trf.xlu0
      %v8965 = vpop.trf.xlu0
      %v8966 = vpop.trf.xlu0
      %8967 = vst.msk [vmem:[%s454] sm:$0xff] %vm1081, %v8951
      %8968 = vst.msk [vmem:[%s454 + $0x8] sm:$0xff] %vm1081, %v8952
      %p8969 = scmp.lt.s32.totalorder %s24, 1
      %s8970 = scalar_select %p8969, %s24, 1
      %s8971 = smul.addr %s8970, 2
      %s8972 = smul.addr %s8971, 8
      %s8973 = scalar_lea.vmem %s13, %s8972
      // Predicated region
      $region73: #{midblock_forward.1} parent=71 // pred_check
        %p8974 = pneg %p325
      $region74: #{midblock_forward.1} parent=71 // pred_check_branch
        %8976 = sbr.rel (%p8974) target = $region76
      $region75: #{midblock_forward.1} parent=71 // pred_region
        _
      $region76: #{midblock_forward.1} parent=71 // pred_fallthru
        _
    $region72: #{midblock_forward.1} parent=5 // pred_fallthru
      _
    %p8977 = scmp.le.s32.totalorder 2, %s19
    // Predicated region
    $region77: #{midblock_forward.1} parent=5 // pred_check
      %p8978 = pneg %p8977
    $region78: #{midblock_forward.1} parent=5 // pred_check_branch
      %8980 = sbr.rel (%p8978) target = $region80
    $region79: #{midblock_forward.1} parent=5 // pred_region
      %s8981 = ssub.s32 %s19, 2
      // Predicated region
      $region81: #{midblock_forward.1} parent=79 // pred_check
        %p8982 = pneg %p331
      $region82: #{midblock_forward.1} parent=79 // pred_check_branch
        %8984 = sbr.rel (%p8982) target = $region84
      $region83: #{midblock_forward.1} parent=79 // pred_region
        %p8985 = scmp.lt.s32.totalorder %s25, 1
        %s8986 = scalar_select %p8985, %s25, 1
        %s8987 = smul.addr %s8986, 2
        %s8988 = smul.addr %s8987, 8
        %s8989 = scalar_lea.vmem %s13, %s8988
      $region84: #{midblock_forward.1} parent=79 // pred_fallthru
        _
    $region80: #{midblock_forward.1} parent=5 // pred_fallthru
      _
  $region6: #{midblock_forward.1} parent=0 // loop_footer
    %s23 = sadd.s32 1, %s19
  $region7: #{midblock_forward.1} parent=0 // loop_footer_branch
    %18 = sbr.rel target = $region3
  $region8: #{midblock_forward.1} parent=0 // loop_exit
    _

</llo_original>
